<compile_context>
chip_gen: v6e
topology: v6e:2x2x1
jax: 0.10.0
libtpu: 0.0.40
codegen_flags: <defaults>
</compile_context>

<pallas_src>
import functools

import jax
import jax.numpy as jnp
from jax import lax
from jax.experimental import pallas as pl
from jax.experimental.pallas import tpu as pltpu

EPS = 1e-5
TILE_M_TARGET = 1024             # rows per grid step (amortizes ~0.35us/step)
VMEM_LIMIT = 32 * 1024 * 1024    # safe scoped-VMEM budget on v5e/v6e/v7x


# ------------------------------ Pallas kernels ------------------------------

def _conv_bn_stats_kernel(x_ref, w_ref, o_ref, stats_ref):
    """One M-tile of the folded-tap im2col matmul plus fused per-channel
    BatchNorm partial statistics taken straight off the f32 accumulator.
    stats_ref is a sublane-aligned (8, Cout) slab: row0 = sum, row1 = sumsq."""
    acc = jnp.dot(x_ref[...], w_ref[...], preferred_element_type=jnp.float32)
    o_ref[...] = acc
    s = jnp.sum(acc, axis=0, keepdims=True)                     # (1, Cout)
    sq = jnp.sum(acc * acc, axis=0, keepdims=True)              # (1, Cout)
    pad = jnp.zeros((6, acc.shape[1]), jnp.float32)
    stats_ref[...] = jnp.concatenate([s, sq, pad], axis=0)      # (8, Cout)


def _affine_kernel(x_ref, scale_ref, shift_ref, o_ref, *, relu):
    """y = x*scale + shift (folded BN), optional ReLU.  Lane-dense layout."""
    y = x_ref[...].astype(jnp.float32) * scale_ref[...] + shift_ref[...]
    if relu:
        y = jnp.maximum(y, 0.0)
    o_ref[...] = y.astype(o_ref.dtype)


def _affine2_add_relu_kernel(x_ref, sx_ref, bx_ref, r_ref, sr_ref, br_ref,
                             o_ref):
    """y = relu((x*sx + bx) + (r*sr + br)): bn2 + shortcut BN + add + ReLU
    fused in a single lane-dense elementwise pass."""
    y = x_ref[...].astype(jnp.float32) * sx_ref[...] + bx_ref[...]
    r = r_ref[...].astype(jnp.float32) * sr_ref[...] + br_ref[...]
    o_ref[...] = jnp.maximum(y + r, 0.0).astype(o_ref.dtype)


def _pool_linear_kernel(x_ref, w_ref, b_ref, o_ref):
    """Global average pool over the spatial axis + linear classifier head."""
    pooled = jnp.mean(x_ref[...].astype(jnp.float32), axis=1)   # (N, C)
    o_ref[...] = jnp.dot(pooled, w_ref[...],
                         preferred_element_type=jnp.float32) + b_ref[...]


# ------------------------------ Pallas wrappers ------------------------------

def _pick_tile_m(m, target=TILE_M_TARGET):
    """Largest divisor of m that is <= target, a multiple of 8, and <= m//2
    whenever m >= 256 (so nt >= 2: pipelining + v7x dual-TC sharding)."""
    cap = min(target, m)
    if m >= 256:
        cap = min(cap, m // 2)
    cap = max(8, (cap // 8) * 8)
    t = cap
    while t >= 8:
        if m % t == 0:
            return t
        t -= 8
    return m   # fallback: single-tile grid (no pipelining) for awkward shapes


def conv_bn_stats(x2d, w2d):
    """x2d: (M, K) bf16 patch matrix, w2d: (K, Cout) weights.
    Returns (conv_out (M, Cout) f32, per-tile stats slab (nt*8, Cout) f32)."""
    M, K = x2d.shape
    Cout = w2d.shape[-1]
    tm = _pick_tile_m(M)
    nt = M // tm
    wb = w2d.astype(jnp.bfloat16)
    cost = pl.CostEstimate(
        flops=2 * M * K * Cout,
        transcendentals=0,
        bytes_accessed=M * K * 2 + K * Cout * 2 + M * Cout * 4
        + nt * 8 * Cout * 4)
    return pl.pallas_call(
        _conv_bn_stats_kernel,
        grid=(nt,),
        in_specs=[pl.BlockSpec((tm, K), lambda i: (i, 0)),
                  # constant index -> weight slab stays VMEM-resident
                  pl.BlockSpec((K, Cout), lambda i: (0, 0))],
        out_specs=[pl.BlockSpec((tm, Cout), lambda i: (i, 0)),
                   pl.BlockSpec((8, Cout), lambda i: (i, 0))],
        out_shape=(jax.ShapeDtypeStruct((M, Cout), jnp.float32),
                   jax.ShapeDtypeStruct((nt * 8, Cout), jnp.float32)),
        compiler_params=pltpu.CompilerParams(
            dimension_semantics=("parallel",),
            vmem_limit_bytes=VMEM_LIMIT),
        cost_estimate=cost,
    )(x2d, wb)


def _bn_fold(stats, m, gamma, beta):
    """Fold training-mode BN (batch stats, biased var) into scale/shift.
    stats: (nt*8, C) slab; row 0 of each 8-row group = sum, row 1 = sumsq."""
    st = stats.reshape(-1, 8, stats.shape[-1])
    s = jnp.sum(st[:, 0, :], axis=0)
    sq = jnp.sum(st[:, 1, :], axis=0)
    mean = s / m
    # E[x^2]-E[x]^2 clamped at 0 to guard against cancellation (f32 sums).
    var = jnp.maximum(sq / m - mean * mean, 0.0)
    scale = gamma * lax.rsqrt(var + EPS)
    shift = beta - mean * scale
    return scale.astype(jnp.float32), shift.astype(jnp.float32)


def _lane_pack(x2d, vecs):
    """Reshape (M, C) -> (M*C/128, 128) when C divides 128 (lane-dense
    stores), tiling the per-channel vectors to 128 lanes to match."""
    M, C = x2d.shape
    if C < 128 and 128 % C == 0 and (M * C) % 128 == 0:
        rep = 128 // C
        xp = x2d.reshape(M * C // 128, 128)
        vp = [jnp.tile(v.reshape(-1), rep).reshape(1, 128) for v in vecs]
        return xp, vp, (M, C)
    return x2d, [v.reshape(1, C) for v in vecs], (M, C)


def bn_affine(x2d, scale, shift, *, relu, out_dtype=jnp.bfloat16):
    xp, (sp, bp), orig = _lane_pack(x2d, [scale, shift])
    Mp, Cp = xp.shape
    tm = _pick_tile_m(Mp)
    y = pl.pallas_call(
        functools.partial(_affine_kernel, relu=relu),
        grid=(Mp // tm,),
        in_specs=[pl.BlockSpec((tm, Cp), lambda i: (i, 0)),
                  pl.BlockSpec((1, Cp), lambda i: (0, 0)),
                  pl.BlockSpec((1, Cp), lambda i: (0, 0))],
        out_specs=pl.BlockSpec((tm, Cp), lambda i: (i, 0)),
        out_shape=jax.ShapeDtypeStruct((Mp, Cp), out_dtype),
        compiler_params=pltpu.CompilerParams(
            dimension_semantics=("parallel",),
            vmem_limit_bytes=VMEM_LIMIT),
    )(xp, sp, bp)
    return y.reshape(orig)


def bn_affine2_add_relu(x2d, sx, bx, res2d, sr, br, out_dtype=jnp.bfloat16):
    """relu((x*sx + bx) + (res*sr + br)) — bn2 + (shortcut BN) + add + ReLU."""
    xp, (sxp, bxp), orig = _lane_pack(x2d, [sx, bx])
    rp, (srp, brp), _ = _lane_pack(res2d, [sr, br])
    Mp, Cp = xp.shape
    tm = _pick_tile_m(Mp)
    y = pl.pallas_call(
        _affine2_add_relu_kernel,
        grid=(Mp // tm,),
        in_specs=[pl.BlockSpec((tm, Cp), lambda i: (i, 0)),
                  pl.BlockSpec((1, Cp), lambda i: (0, 0)),
                  pl.BlockSpec((1, Cp), lambda i: (0, 0)),
                  pl.BlockSpec((tm, Cp), lambda i: (i, 0)),
                  pl.BlockSpec((1, Cp), lambda i: (0, 0)),
                  pl.BlockSpec((1, Cp), lambda i: (0, 0))],
        out_specs=pl.BlockSpec((tm, Cp), lambda i: (i, 0)),
        out_shape=jax.ShapeDtypeStruct((Mp, Cp), out_dtype),
        compiler_params=pltpu.CompilerParams(
            dimension_semantics=("parallel",),
            vmem_limit_bytes=VMEM_LIMIT),
    )(xp, sxp, bxp, rp, srp, brp)
    return y.reshape(orig)


# ------------------------------ conv glue (JAX) ------------------------------

def _im2col3x3(x_nhwc, stride):
    """3x3 / pad=1 / given stride patch matrix (M, 9*Cin), built in the input
    dtype (bf16).  Stride is applied in the tap indexing: only the strided
    output rows are ever formed."""
    N, H, W, C = x_nhwc.shape
    Ho = (H + 2 - 3) // stride + 1
    Wo = (W + 2 - 3) // stride + 1
    xp = jnp.pad(x_nhwc, ((0, 0), (1, 1), (1, 1), (0, 0)))
    taps = []
    for dy in range(3):
        for dx in range(3):
            taps.append(xp[:, dy:dy + stride * (Ho - 1) + 1:stride,
                           dx:dx + stride * (Wo - 1) + 1:stride, :])
    cols = jnp.concatenate(taps, axis=-1)          # (N, Ho, Wo, 9*C)
    return cols.reshape(N * Ho * Wo, 9 * C), (N, Ho, Wo)


# --------------------------------- network -----------------------------------

def stem_forward(x_nhwc, p):
    cols, (N, Ho, Wo) = _im2col3x3(x_nhwc, 1)
    cout = p["w"].shape[-1]
    out, stats = conv_bn_stats(cols, p["w"].reshape(-1, cout))
    scale, shift = _bn_fold(stats, cols.shape[0], p["g"], p["b"])
    a = bn_affine(out, scale, shift, relu=True)
    return a.reshape(N, Ho, Wo, cout)


def basic_block_forward(x_nhwc, p, stride):
    in_planes = x_nhwc.shape[-1]
    planes = p["w1"].shape[-1]
    has_proj = (stride != 1 or in_planes != planes)

    # conv1 (3x3, stride) with fused BN stats; for projection blocks the 1x1
    # strided shortcut is embedded as the CENTER tap of a zero-padded 3x3
    # weight and run in the SAME matmul (columns [planes:2*planes]).
    cols1, (N, Ho, Wo) = _im2col3x3(x_nhwc, stride)
    M = N * Ho * Wo
    w1_2d = p["w1"].reshape(-1, planes)

    if has_proj:
        ws_emb = jnp.zeros((9 * in_planes, planes), jnp.float32)
        ws_emb = ws_emb.at[4 * in_planes:5 * in_planes].set(p["ws"])
        w_comb = jnp.concatenate([w1_2d, ws_emb], axis=1)     # (9*Cin, 2P)
        o, stats = conv_bn_stats(cols1, w_comb)
        sc1, sh1 = _bn_fold(stats[:, :planes], M, p["g1"], p["b1"])
        scs, shs = _bn_fold(stats[:, planes:], M, p["gs"], p["bs"])
        o1 = o[:, :planes]
        res = o[:, planes:]
    else:
        o1, stats = conv_bn_stats(cols1, w1_2d)
        sc1, sh1 = _bn_fold(stats, M, p["g1"], p["b1"])
        res = x_nhwc.reshape(M, planes)
        scs = jnp.ones((planes,), jnp.float32)
        shs = jnp.zeros((planes,), jnp.float32)

    # bn1 affine + ReLU (lane-dense, bf16 out) feeding conv2's im2col
    a1 = bn_affine(o1, sc1, sh1, relu=True)

    # conv2 (3x3, stride 1) + fused BN stats
    cols2, _ = _im2col3x3(a1.reshape(N, Ho, Wo, planes), 1)
    o2, stats2 = conv_bn_stats(cols2, p["w2"].reshape(-1, planes))
    sc2, sh2 = _bn_fold(stats2, M, p["g2"], p["b2"])

    # bn2 + shortcut BN + add + ReLU in one fused elementwise pass
    out = bn_affine2_add_relu(o2, sc2, sh2, res, scs, shs)
    return out.reshape(N, Ho, Wo, planes)


def head_forward(x_nhwc, p):
    N, H, W, C = x_nhwc.shape
    nc = p["w"].shape[-1]
    return pl.pallas_call(
        _pool_linear_kernel,
        grid=(1,),
        in_specs=[pl.BlockSpec((N, H * W, C), lambda i: (0, 0, 0)),
                  pl.BlockSpec((C, nc), lambda i: (0, 0)),
                  pl.BlockSpec((1, nc), lambda i: (0, 0))],
        out_specs=pl.BlockSpec((N, nc), lambda i: (0, 0)),
        out_shape=jax.ShapeDtypeStruct((N, nc), jnp.float32),
    )(x_nhwc.reshape(N, H * W, C), p["w"], p["b"].reshape(1, nc))


def resnet2_forward(x_nchw, params, block_cfg):
    # NCHW -> NHWC; cast to bf16 ONCE, upstream of every im2col.
    x = jnp.transpose(x_nchw, (0, 2, 3, 1)).astype(jnp.bfloat16)
    x = stem_forward(x, params["stem"])
    for bp, (_, _, stride) in zip(params["blocks"], block_cfg):
        x = basic_block_forward(x, bp, stride)
    return head_forward(x, params["head"])


# ------------------------------ config / params ------------------------------

def make_block_cfg(num_blocks, widths=(16, 32, 64), stage_strides=(1, 2, 2)):
    cfg = []
    in_planes = 16
    for planes, s0, nb in zip(widths, stage_strides, num_blocks):
        for s in [s0] + [1] * (nb - 1):
            cfg.append((in_planes, planes, s))
            in_planes = planes
    return tuple(cfg)


def init_params(key, block_cfg, num_classes):
    keys = iter(jax.random.split(key, 16 + 16 * len(block_cfg)))

    def kaiming_conv(kh, kw, cin, cout):
        return (jax.random.normal(next(keys), (kh, kw, cin, cout), jnp.float32)
                * (2.0 / (kh * kw * cin)) ** 0.5)

    def bn_params(c):   # slight perturbation so the affine path is exercised
        g = 1.0 + 0.1 * jax.random.normal(next(keys), (c,), jnp.float32)
        b = 0.1 * jax.random.normal(next(keys), (c,), jnp.float32)
        return g, b

    g0, b0 = bn_params(16)
    params = {"stem": {"w": kaiming_conv(3, 3, 3, 16), "g": g0, "b": b0},
              "blocks": [], "head": {}}
    for (cin, planes, stride) in block_cfg:
        g1, b1 = bn_params(planes)
        g2, b2 = bn_params(planes)
        bp = {"w1": kaiming_conv(3, 3, cin, planes), "g1": g1, "b1": b1,
              "w2": kaiming_conv(3, 3, planes, planes), "g2": g2, "b2": b2}
        if stride != 1 or cin != planes:
            gs, bs = bn_params(planes)
            bp["ws"] = (jax.random.normal(next(keys), (cin, planes), jnp.float32)
                        * (2.0 / cin) ** 0.5)
            bp["gs"], bp["bs"] = gs, bs
        params["blocks"].append(bp)
    params["head"]["w"] = (jax.random.normal(next(keys), (64, num_classes),
                                             jnp.float32) * (2.0 / 64) ** 0.5)
    params["head"]["b"] = 0.1 * jax.random.normal(next(keys), (num_classes,),
                                                  jnp.float32)
    return params


# ------------------------------ pure-JAX reference ---------------------------

def ref_forward(x, params, block_cfg):
    dn = ("NCHW", "HWIO", "NCHW")

    def conv(x, w, s, pad):
        return lax.conv_general_dilated(x, w, (s, s), pad, dimension_numbers=dn)

    def bn(x, g, b):
        m = jnp.mean(x, axis=(0, 2, 3), keepdims=True)
        v = jnp.var(x, axis=(0, 2, 3), keepdims=True)   # biased (training BN)
        return ((x - m) * lax.rsqrt(v + EPS) * g[None, :, None, None]
                + b[None, :, None, None])

    p = params["stem"]
    o = jax.nn.relu(bn(conv(x, p["w"], 1, ((1, 1), (1, 1))), p["g"], p["b"]))
    for bp, (cin, planes, stride) in zip(params["blocks"], block_cfg):
        h = jax.nn.relu(bn(conv(o, bp["w1"], stride, ((1, 1), (1, 1))),
                           bp["g1"], bp["b1"]))
        h = bn(conv(h, bp["w2"], 1, ((1, 1), (1, 1))), bp["g2"], bp["b2"])
        if stride != 1 or cin != planes:
            ws = bp["ws"].reshape(1, 1, cin, planes)
            sc = bn(conv(o, ws, stride, ((0, 0), (0, 0))), bp["gs"], bp["bs"])
        else:
            sc = o
        o = jax.nn.relu(h + sc)
    pooled = jnp.mean(o, axis=(2, 3))
    return pooled @ params["head"]["w"] + params["head"]["b"]


# ----------------------------------- main ------------------------------------

if __name__ == "__main__":
    key = jax.random.PRNGKey(0)
    N, H, W = 2, 32, 32            # conv1 expects 3 input channels (CIFAR-style)
    num_blocks = [1, 1, 1]         # exercises identity AND projection shortcuts
    num_classes = 10

    block_cfg = make_block_cfg(num_blocks)
    k_param, k_x = jax.random.split(key)
    params = init_params(k_param, block_cfg, num_classes)
    x = jax.random.normal(k_x, (N, 3, H, W), jnp.float32)

    fwd = jax.jit(functools.partial(resnet2_forward, block_cfg=block_cfg))
    out = jax.block_until_ready(fwd(x, params))

    ref = ref_forward(x, params, block_cfg)
    assert out.shape == ref.shape == (N, num_classes)
    err = float(jnp.max(jnp.abs(out - ref)))
    # bf16 MXU operands / bf16 inter-layer activations + training-mode BN
    # through 7 convs vs an f32 XLA reference: mixed abs/rel tolerance.
    tol = 5e-2 * (1.0 + float(jnp.max(jnp.abs(ref))))
    if not (err <= tol):
        raise AssertionError(f"mismatch vs reference: max abs err {err} (tol {tol})")
    print("KERNEL_OK")
</pallas_src>

<mosaic_0001>
module attributes {stable_mosaic.version = 11 : i64} {
  func.func @_conv_bn_stats_kernel(%arg0: i32, %arg1: memref<1024x27xbf16, #tpu.memory_space<vmem>>, %arg2: memref<27x16xbf16, #tpu.memory_space<vmem>>, %arg3: memref<1024x16xf32, #tpu.memory_space<vmem>>, %arg4: memref<8x16xf32, #tpu.memory_space<vmem>>) attributes {dimension_semantics = [#tpu.dimension_semantics<parallel>], iteration_bounds = array<i64: 2>, scalar_prefetch = 0 : i64, scratch_operands = 0 : i64, tpu.core_type = #tpu.core_type<tc>, window_params = [{transform_indices = @transform_0, window_bounds = array<i64: 1024, 27>}, {pipeline_mode = #tpu.pipeline_mode<synchronous>, transform_indices = @transform_1, window_bounds = array<i64: 27, 16>}, {transform_indices = @transform_2, window_bounds = array<i64: 1024, 16>}, {transform_indices = @transform_3, window_bounds = array<i64: 8, 16>}]} {
    %c0 = arith.constant 0 : index
    %c0_0 = arith.constant 0 : index
    %0 = vector.load %arg1[%c0, %c0_0] : memref<1024x27xbf16, #tpu.memory_space<vmem>>, vector<1024x27xbf16>
    %c0_1 = arith.constant 0 : index
    %c0_2 = arith.constant 0 : index
    %1 = vector.load %arg2[%c0_1, %c0_2] : memref<27x16xbf16, #tpu.memory_space<vmem>>, vector<27x16xbf16>
    %cst = arith.constant dense<0.000000e+00> : vector<1024x16xf32>
    %2 = tpu.matmul %0, %1, %cst {dimension_numbers = #tpu.dot_dimension_numbers<[1], [0], [0], [1], [0, 0, 1, 1], [], []>} : vector<1024x27xbf16>, vector<27x16xbf16>, vector<1024x16xf32> -> vector<1024x16xf32>
    %c0_3 = arith.constant 0 : index
    %c0_4 = arith.constant 0 : index
    %3 = vector.load %arg3[%c0_3, %c0_4] : memref<1024x16xf32, #tpu.memory_space<vmem>>, vector<1024x16xf32>
    tpu.vector_store %arg3[%c0_3, %c0_4], %2 {strides = array<i32>} : memref<1024x16xf32, #tpu.memory_space<vmem>>, vector<1024x16xf32>,
    %cst_5 = arith.constant dense<0.000000e+00> : vector<16xf32>
    %4 = vector.multi_reduction <add>, %2, %cst_5 [0] : vector<1024x16xf32> to vector<16xf32>
    %5 = vector.shape_cast %4 : vector<16xf32> to vector<1x16xf32>
    %6 = arith.mulf %2, %2 : vector<1024x16xf32>
    %cst_6 = arith.constant dense<0.000000e+00> : vector<16xf32>
    %7 = vector.multi_reduction <add>, %6, %cst_6 [0] : vector<1024x16xf32> to vector<16xf32>
    %8 = vector.shape_cast %7 : vector<16xf32> to vector<1x16xf32>
    %cst_7 = arith.constant 0.000000e+00 : f32
    %9 = vector.broadcast %cst_7 : f32 to vector<6x16xf32>
    %10 = tpu.concatenate %5, %8, %9 in 0 : vector<1x16xf32>, vector<1x16xf32>, vector<6x16xf32> -> vector<8x16xf32>
    %c0_8 = arith.constant 0 : index
    %c0_9 = arith.constant 0 : index
    %11 = vector.load %arg4[%c0_8, %c0_9] : memref<8x16xf32, #tpu.memory_space<vmem>>, vector<8x16xf32>
    tpu.vector_store %arg4[%c0_8, %c0_9], %10 {strides = array<i32>} : memref<8x16xf32, #tpu.memory_space<vmem>>, vector<8x16xf32>,
    return
  }
  func.func @transform_0(%arg0: i32) -> (i32, i32) {
    %c0_i32 = arith.constant 0 : i32
    %c0_i32_0 = arith.constant 0 : i32
    return %arg0, %c0_i32 : i32, i32
  }
  func.func @transform_1(%arg0: i32) -> (i32, i32) {
    %c0_i32 = arith.constant 0 : i32
    %c0_i32_0 = arith.constant 0 : i32
    %c0_i32_1 = arith.constant 0 : i32
    return %c0_i32, %c0_i32_0 : i32, i32
  }
  func.func @transform_2(%arg0: i32) -> (i32, i32) {
    %c0_i32 = arith.constant 0 : i32
    %c0_i32_0 = arith.constant 0 : i32
    return %arg0, %c0_i32 : i32, i32
  }
  func.func @transform_3(%arg0: i32) -> (i32, i32) {
    %c0_i32 = arith.constant 0 : i32
    %c0_i32_0 = arith.constant 0 : i32
    return %arg0, %c0_i32 : i32, i32
  }
}

module attributes {stable_mosaic.version = 11 : i64} {
  func.func @_affine_kernel(%arg0: i32, %arg1: memref<128x128xf32, #tpu.memory_space<vmem>>, %arg2: memref<1x128xf32, #tpu.memory_space<vmem>>, %arg3: memref<1x128xf32, #tpu.memory_space<vmem>>, %arg4: memref<128x128xbf16, #tpu.memory_space<vmem>>) attributes {dimension_semantics = [#tpu.dimension_semantics<parallel>], iteration_bounds = array<i64: 2>, scalar_prefetch = 0 : i64, scratch_operands = 0 : i64, tpu.core_type = #tpu.core_type<tc>, window_params = [{transform_indices = @transform_0, window_bounds = array<i64: 128, 128>}, {pipeline_mode = #tpu.pipeline_mode<synchronous>, transform_indices = @transform_1, window_bounds = array<i64: 1, 128>}, {pipeline_mode = #tpu.pipeline_mode<synchronous>, transform_indices = @transform_2, window_bounds = array<i64: 1, 128>}, {transform_indices = @transform_3, window_bounds = array<i64: 128, 128>}]} {
    %c0 = arith.constant 0 : index
    %c0_0 = arith.constant 0 : index
    %0 = vector.load %arg1[%c0, %c0_0] : memref<128x128xf32, #tpu.memory_space<vmem>>, vector<128x128xf32>
    %c0_1 = arith.constant 0 : index
    %c0_2 = arith.constant 0 : index
    %1 = vector.load %arg2[%c0_1, %c0_2] : memref<1x128xf32, #tpu.memory_space<vmem>>, vector<1x128xf32>
    %2 = vector.broadcast %1 : vector<1x128xf32> to vector<128x128xf32>
    %3 = arith.mulf %0, %2 : vector<128x128xf32>
    %c0_3 = arith.constant 0 : index
    %c0_4 = arith.constant 0 : index
    %4 = vector.load %arg3[%c0_3, %c0_4] : memref<1x128xf32, #tpu.memory_space<vmem>>, vector<1x128xf32>
    %5 = vector.broadcast %4 : vector<1x128xf32> to vector<128x128xf32>
    %6 = arith.addf %3, %5 : vector<128x128xf32>
    %cst = arith.constant 0.000000e+00 : f32
    %7 = vector.broadcast %cst : f32 to vector<128x128xf32>
    %8 = arith.maximumf %6, %7 : vector<128x128xf32>
    %9 = arith.truncf %8 : vector<128x128xf32> to vector<128x128xbf16>
    %c0_5 = arith.constant 0 : index
    %c0_6 = arith.constant 0 : index
    %10 = vector.load %arg4[%c0_5, %c0_6] : memref<128x128xbf16, #tpu.memory_space<vmem>>, vector<128x128xbf16>
    tpu.vector_store %arg4[%c0_5, %c0_6], %9 {strides = array<i32>} : memref<128x128xbf16, #tpu.memory_space<vmem>>, vector<128x128xbf16>,
    return
  }
  func.func @transform_0(%arg0: i32) -> (i32, i32) {
    %c0_i32 = arith.constant 0 : i32
    %c0_i32_0 = arith.constant 0 : i32
    return %arg0, %c0_i32 : i32, i32
  }
  func.func @transform_1(%arg0: i32) -> (i32, i32) {
    %c0_i32 = arith.constant 0 : i32
    %c0_i32_0 = arith.constant 0 : i32
    %c0_i32_1 = arith.constant 0 : i32
    return %c0_i32, %c0_i32_0 : i32, i32
  }
  func.func @transform_2(%arg0: i32) -> (i32, i32) {
    %c0_i32 = arith.constant 0 : i32
    %c0_i32_0 = arith.constant 0 : i32
    %c0_i32_1 = arith.constant 0 : i32
    return %c0_i32, %c0_i32_0 : i32, i32
  }
  func.func @transform_3(%arg0: i32) -> (i32, i32) {
    %c0_i32 = arith.constant 0 : i32
    %c0_i32_0 = arith.constant 0 : i32
    return %arg0, %c0_i32 : i32, i32
  }
}

module attributes {stable_mosaic.version = 11 : i64} {
  func.func @_conv_bn_stats_kernel(%arg0: i32, %arg1: memref<1024x144xbf16, #tpu.memory_space<vmem>>, %arg2: memref<144x16xbf16, #tpu.memory_space<vmem>>, %arg3: memref<1024x16xf32, #tpu.memory_space<vmem>>, %arg4: memref<8x16xf32, #tpu.memory_space<vmem>>) attributes {dimension_semantics = [#tpu.dimension_semantics<parallel>], iteration_bounds = array<i64: 2>, scalar_prefetch = 0 : i64, scratch_operands = 0 : i64, tpu.core_type = #tpu.core_type<tc>, window_params = [{transform_indices = @transform_0, window_bounds = array<i64: 1024, 144>}, {pipeline_mode = #tpu.pipeline_mode<synchronous>, transform_indices = @transform_1, window_bounds = array<i64: 144, 16>}, {transform_indices = @transform_2, window_bounds = array<i64: 1024, 16>}, {transform_indices = @transform_3, window_bounds = array<i64: 8, 16>}]} {
    %c0 = arith.constant 0 : index
    %c0_0 = arith.constant 0 : index
    %0 = vector.load %arg1[%c0, %c0_0] : memref<1024x144xbf16, #tpu.memory_space<vmem>>, vector<1024x144xbf16>
    %c0_1 = arith.constant 0 : index
    %c0_2 = arith.constant 0 : index
    %1 = vector.load %arg2[%c0_1, %c0_2] : memref<144x16xbf16, #tpu.memory_space<vmem>>, vector<144x16xbf16>
    %cst = arith.constant dense<0.000000e+00> : vector<1024x16xf32>
    %2 = tpu.matmul %0, %1, %cst {dimension_numbers = #tpu.dot_dimension_numbers<[1], [0], [0], [1], [0, 0, 1, 1], [], []>} : vector<1024x144xbf16>, vector<144x16xbf16>, vector<1024x16xf32> -> vector<1024x16xf32>
    %c0_3 = arith.constant 0 : index
    %c0_4 = arith.constant 0 : index
    %3 = vector.load %arg3[%c0_3, %c0_4] : memref<1024x16xf32, #tpu.memory_space<vmem>>, vector<1024x16xf32>
    tpu.vector_store %arg3[%c0_3, %c0_4], %2 {strides = array<i32>} : memref<1024x16xf32, #tpu.memory_space<vmem>>, vector<1024x16xf32>,
    %cst_5 = arith.constant dense<0.000000e+00> : vector<16xf32>
    %4 = vector.multi_reduction <add>, %2, %cst_5 [0] : vector<1024x16xf32> to vector<16xf32>
    %5 = vector.shape_cast %4 : vector<16xf32> to vector<1x16xf32>
    %6 = arith.mulf %2, %2 : vector<1024x16xf32>
    %cst_6 = arith.constant dense<0.000000e+00> : vector<16xf32>
    %7 = vector.multi_reduction <add>, %6, %cst_6 [0] : vector<1024x16xf32> to vector<16xf32>
    %8 = vector.shape_cast %7 : vector<16xf32> to vector<1x16xf32>
    %cst_7 = arith.constant 0.000000e+00 : f32
    %9 = vector.broadcast %cst_7 : f32 to vector<6x16xf32>
    %10 = tpu.concatenate %5, %8, %9 in 0 : vector<1x16xf32>, vector<1x16xf32>, vector<6x16xf32> -> vector<8x16xf32>
    %c0_8 = arith.constant 0 : index
    %c0_9 = arith.constant 0 : index
    %11 = vector.load %arg4[%c0_8, %c0_9] : memref<8x16xf32, #tpu.memory_space<vmem>>, vector<8x16xf32>
    tpu.vector_store %arg4[%c0_8, %c0_9], %10 {strides = array<i32>} : memref<8x16xf32, #tpu.memory_space<vmem>>, vector<8x16xf32>,
    return
  }
  func.func @transform_0(%arg0: i32) -> (i32, i32) {
    %c0_i32 = arith.constant 0 : i32
    %c0_i32_0 = arith.constant 0 : i32
    return %arg0, %c0_i32 : i32, i32
  }
  func.func @transform_1(%arg0: i32) -> (i32, i32) {
    %c0_i32 = arith.constant 0 : i32
    %c0_i32_0 = arith.constant 0 : i32
    %c0_i32_1 = arith.constant 0 : i32
    return %c0_i32, %c0_i32_0 : i32, i32
  }
  func.func @transform_2(%arg0: i32) -> (i32, i32) {
    %c0_i32 = arith.constant 0 : i32
    %c0_i32_0 = arith.constant 0 : i32
    return %arg0, %c0_i32 : i32, i32
  }
  func.func @transform_3(%arg0: i32) -> (i32, i32) {
    %c0_i32 = arith.constant 0 : i32
    %c0_i32_0 = arith.constant 0 : i32
    return %arg0, %c0_i32 : i32, i32
  }
}

module attributes {stable_mosaic.version = 11 : i64} {
  func.func @_affine2_add_relu_kernel(%arg0: i32, %arg1: memref<128x128xf32, #tpu.memory_space<vmem>>, %arg2: memref<1x128xf32, #tpu.memory_space<vmem>>, %arg3: memref<1x128xf32, #tpu.memory_space<vmem>>, %arg4: memref<128x128xbf16, #tpu.memory_space<vmem>>, %arg5: memref<1x128xf32, #tpu.memory_space<vmem>>, %arg6: memref<1x128xf32, #tpu.memory_space<vmem>>, %arg7: memref<128x128xbf16, #tpu.memory_space<vmem>>) attributes {dimension_semantics = [#tpu.dimension_semantics<parallel>], iteration_bounds = array<i64: 2>, scalar_prefetch = 0 : i64, scratch_operands = 0 : i64, tpu.core_type = #tpu.core_type<tc>, window_params = [{transform_indices = @transform_0, window_bounds = array<i64: 128, 128>}, {pipeline_mode = #tpu.pipeline_mode<synchronous>, transform_indices = @transform_1, window_bounds = array<i64: 1, 128>}, {pipeline_mode = #tpu.pipeline_mode<synchronous>, transform_indices = @transform_2, window_bounds = array<i64: 1, 128>}, {transform_indices = @transform_3, window_bounds = array<i64: 128, 128>}, {pipeline_mode = #tpu.pipeline_mode<synchronous>, transform_indices = @transform_4, window_bounds = array<i64: 1, 128>}, {pipeline_mode = #tpu.pipeline_mode<synchronous>, transform_indices = @transform_5, window_bounds = array<i64: 1, 128>}, {transform_indices = @transform_6, window_bounds = array<i64: 128, 128>}]} {
    %c0 = arith.constant 0 : index
    %c0_0 = arith.constant 0 : index
    %0 = vector.load %arg1[%c0, %c0_0] : memref<128x128xf32, #tpu.memory_space<vmem>>, vector<128x128xf32>
    %c0_1 = arith.constant 0 : index
    %c0_2 = arith.constant 0 : index
    %1 = vector.load %arg2[%c0_1, %c0_2] : memref<1x128xf32, #tpu.memory_space<vmem>>, vector<1x128xf32>
    %2 = vector.broadcast %1 : vector<1x128xf32> to vector<128x128xf32>
    %3 = arith.mulf %0, %2 : vector<128x128xf32>
    %c0_3 = arith.constant 0 : index
    %c0_4 = arith.constant 0 : index
    %4 = vector.load %arg3[%c0_3, %c0_4] : memref<1x128xf32, #tpu.memory_space<vmem>>, vector<1x128xf32>
    %5 = vector.broadcast %4 : vector<1x128xf32> to vector<128x128xf32>
    %6 = arith.addf %3, %5 : vector<128x128xf32>
    %c0_5 = arith.constant 0 : index
    %c0_6 = arith.constant 0 : index
    %7 = vector.load %arg4[%c0_5, %c0_6] : memref<128x128xbf16, #tpu.memory_space<vmem>>, vector<128x128xbf16>
    %8 = arith.extf %7 : vector<128x128xbf16> to vector<128x128xf32>
    %c0_7 = arith.constant 0 : index
    %c0_8 = arith.constant 0 : index
    %9 = vector.load %arg5[%c0_7, %c0_8] : memref<1x128xf32, #tpu.memory_space<vmem>>, vector<1x128xf32>
    %10 = vector.broadcast %9 : vector<1x128xf32> to vector<128x128xf32>
    %11 = arith.mulf %8, %10 : vector<128x128xf32>
    %c0_9 = arith.constant 0 : index
    %c0_10 = arith.constant 0 : index
    %12 = vector.load %arg6[%c0_9, %c0_10] : memref<1x128xf32, #tpu.memory_space<vmem>>, vector<1x128xf32>
    %13 = vector.broadcast %12 : vector<1x128xf32> to vector<128x128xf32>
    %14 = arith.addf %11, %13 : vector<128x128xf32>
    %15 = arith.addf %6, %14 : vector<128x128xf32>
    %cst = arith.constant 0.000000e+00 : f32
    %16 = vector.broadcast %cst : f32 to vector<128x128xf32>
    %17 = arith.maximumf %15, %16 : vector<128x128xf32>
    %18 = arith.truncf %17 : vector<128x128xf32> to vector<128x128xbf16>
    %c0_11 = arith.constant 0 : index
    %c0_12 = arith.constant 0 : index
    %19 = vector.load %arg7[%c0_11, %c0_12] : memref<128x128xbf16, #tpu.memory_space<vmem>>, vector<128x128xbf16>
    tpu.vector_store %arg7[%c0_11, %c0_12], %18 {strides = array<i32>} : memref<128x128xbf16, #tpu.memory_space<vmem>>, vector<128x128xbf16>,
    return
  }
  func.func @transform_0(%arg0: i32) -> (i32, i32) {
    %c0_i32 = arith.constant 0 : i32
    %c0_i32_0 = arith.constant 0 : i32
    return %arg0, %c0_i32 : i32, i32
  }
  func.func @transform_1(%arg0: i32) -> (i32, i32) {
    %c0_i32 = arith.constant 0 : i32
    %c0_i32_0 = arith.constant 0 : i32
    %c0_i32_1 = arith.constant 0 : i32
    return %c0_i32, %c0_i32_0 : i32, i32
  }
  func.func @transform_2(%arg0: i32) -> (i32, i32) {
    %c0_i32 = arith.constant 0 : i32
    %c0_i32_0 = arith.constant 0 : i32
    %c0_i32_1 = arith.constant 0 : i32
    return %c0_i32, %c0_i32_0 : i32, i32
  }
  func.func @transform_3(%arg0: i32) -> (i32, i32) {
    %c0_i32 = arith.constant 0 : i32
    %c0_i32_0 = arith.constant 0 : i32
    return %arg0, %c0_i32 : i32, i32
  }
  func.func @transform_4(%arg0: i32) -> (i32, i32) {
    %c0_i32 = arith.constant 0 : i32
    %c0_i32_0 = arith.constant 0 : i32
    %c0_i32_1 = arith.constant 0 : i32
    return %c0_i32, %c0_i32_0 : i32, i32
  }
  func.func @transform_5(%arg0: i32) -> (i32, i32) {
    %c0_i32 = arith.constant 0 : i32
    %c0_i32_0 = arith.constant 0 : i32
    %c0_i32_1 = arith.constant 0 : i32
    return %c0_i32, %c0_i32_0 : i32, i32
  }
  func.func @transform_6(%arg0: i32) -> (i32, i32) {
    %c0_i32 = arith.constant 0 : i32
    %c0_i32_0 = arith.constant 0 : i32
    return %arg0, %c0_i32 : i32, i32
  }
}

module attributes {stable_mosaic.version = 11 : i64} {
  func.func @_conv_bn_stats_kernel(%arg0: i32, %arg1: memref<256x144xbf16, #tpu.memory_space<vmem>>, %arg2: memref<144x64xbf16, #tpu.memory_space<vmem>>, %arg3: memref<256x64xf32, #tpu.memory_space<vmem>>, %arg4: memref<8x64xf32, #tpu.memory_space<vmem>>) attributes {dimension_semantics = [#tpu.dimension_semantics<parallel>], iteration_bounds = array<i64: 2>, scalar_prefetch = 0 : i64, scratch_operands = 0 : i64, tpu.core_type = #tpu.core_type<tc>, window_params = [{transform_indices = @transform_0, window_bounds = array<i64: 256, 144>}, {pipeline_mode = #tpu.pipeline_mode<synchronous>, transform_indices = @transform_1, window_bounds = array<i64: 144, 64>}, {transform_indices = @transform_2, window_bounds = array<i64: 256, 64>}, {transform_indices = @transform_3, window_bounds = array<i64: 8, 64>}]} {
    %c0 = arith.constant 0 : index
    %c0_0 = arith.constant 0 : index
    %0 = vector.load %arg1[%c0, %c0_0] : memref<256x144xbf16, #tpu.memory_space<vmem>>, vector<256x144xbf16>
    %c0_1 = arith.constant 0 : index
    %c0_2 = arith.constant 0 : index
    %1 = vector.load %arg2[%c0_1, %c0_2] : memref<144x64xbf16, #tpu.memory_space<vmem>>, vector<144x64xbf16>
    %cst = arith.constant dense<0.000000e+00> : vector<256x64xf32>
    %2 = tpu.matmul %0, %1, %cst {dimension_numbers = #tpu.dot_dimension_numbers<[1], [0], [0], [1], [0, 0, 1, 1], [], []>} : vector<256x144xbf16>, vector<144x64xbf16>, vector<256x64xf32> -> vector<256x64xf32>
    %c0_3 = arith.constant 0 : index
    %c0_4 = arith.constant 0 : index
    %3 = vector.load %arg3[%c0_3, %c0_4] : memref<256x64xf32, #tpu.memory_space<vmem>>, vector<256x64xf32>
    tpu.vector_store %arg3[%c0_3, %c0_4], %2 {strides = array<i32>} : memref<256x64xf32, #tpu.memory_space<vmem>>, vector<256x64xf32>,
    %cst_5 = arith.constant dense<0.000000e+00> : vector<64xf32>
    %4 = vector.multi_reduction <add>, %2, %cst_5 [0] : vector<256x64xf32> to vector<64xf32>
    %5 = vector.shape_cast %4 : vector<64xf32> to vector<1x64xf32>
    %6 = arith.mulf %2, %2 : vector<256x64xf32>
    %cst_6 = arith.constant dense<0.000000e+00> : vector<64xf32>
    %7 = vector.multi_reduction <add>, %6, %cst_6 [0] : vector<256x64xf32> to vector<64xf32>
    %8 = vector.shape_cast %7 : vector<64xf32> to vector<1x64xf32>
    %cst_7 = arith.constant 0.000000e+00 : f32
    %9 = vector.broadcast %cst_7 : f32 to vector<6x64xf32>
    %10 = tpu.concatenate %5, %8, %9 in 0 : vector<1x64xf32>, vector<1x64xf32>, vector<6x64xf32> -> vector<8x64xf32>
    %c0_8 = arith.constant 0 : index
    %c0_9 = arith.constant 0 : index
    %11 = vector.load %arg4[%c0_8, %c0_9] : memref<8x64xf32, #tpu.memory_space<vmem>>, vector<8x64xf32>
    tpu.vector_store %arg4[%c0_8, %c0_9], %10 {strides = array<i32>} : memref<8x64xf32, #tpu.memory_space<vmem>>, vector<8x64xf32>,
    return
  }
  func.func @transform_0(%arg0: i32) -> (i32, i32) {
    %c0_i32 = arith.constant 0 : i32
    %c0_i32_0 = arith.constant 0 : i32
    return %arg0, %c0_i32 : i32, i32
  }
  func.func @transform_1(%arg0: i32) -> (i32, i32) {
    %c0_i32 = arith.constant 0 : i32
    %c0_i32_0 = arith.constant 0 : i32
    %c0_i32_1 = arith.constant 0 : i32
    return %c0_i32, %c0_i32_0 : i32, i32
  }
  func.func @transform_2(%arg0: i32) -> (i32, i32) {
    %c0_i32 = arith.constant 0 : i32
    %c0_i32_0 = arith.constant 0 : i32
    return %arg0, %c0_i32 : i32, i32
  }
  func.func @transform_3(%arg0: i32) -> (i32, i32) {
    %c0_i32 = arith.constant 0 : i32
    %c0_i32_0 = arith.constant 0 : i32
    return %arg0, %c0_i32 : i32, i32
  }
}

module attributes {stable_mosaic.version = 11 : i64} {
  func.func @_affine_kernel(%arg0: i32, %arg1: memref<128x128xf32, #tpu.memory_space<vmem>>, %arg2: memref<1x128xf32, #tpu.memory_space<vmem>>, %arg3: memref<1x128xf32, #tpu.memory_space<vmem>>, %arg4: memref<128x128xbf16, #tpu.memory_space<vmem>>) attributes {dimension_semantics = [#tpu.dimension_semantics<parallel>], iteration_bounds = array<i64: 1>, scalar_prefetch = 0 : i64, scratch_operands = 0 : i64, tpu.core_type = #tpu.core_type<tc>, window_params = [{transform_indices = @transform_0, window_bounds = array<i64: 128, 128>}, {pipeline_mode = #tpu.pipeline_mode<synchronous>, transform_indices = @transform_1, window_bounds = array<i64: 1, 128>}, {pipeline_mode = #tpu.pipeline_mode<synchronous>, transform_indices = @transform_2, window_bounds = array<i64: 1, 128>}, {transform_indices = @transform_3, window_bounds = array<i64: 128, 128>}]} {
    %c0 = arith.constant 0 : index
    %c0_0 = arith.constant 0 : index
    %0 = vector.load %arg1[%c0, %c0_0] : memref<128x128xf32, #tpu.memory_space<vmem>>, vector<128x128xf32>
    %c0_1 = arith.constant 0 : index
    %c0_2 = arith.constant 0 : index
    %1 = vector.load %arg2[%c0_1, %c0_2] : memref<1x128xf32, #tpu.memory_space<vmem>>, vector<1x128xf32>
    %2 = vector.broadcast %1 : vector<1x128xf32> to vector<128x128xf32>
    %3 = arith.mulf %0, %2 : vector<128x128xf32>
    %c0_3 = arith.constant 0 : index
    %c0_4 = arith.constant 0 : index
    %4 = vector.load %arg3[%c0_3, %c0_4] : memref<1x128xf32, #tpu.memory_space<vmem>>, vector<1x128xf32>
    %5 = vector.broadcast %4 : vector<1x128xf32> to vector<128x128xf32>
    %6 = arith.addf %3, %5 : vector<128x128xf32>
    %cst = arith.constant 0.000000e+00 : f32
    %7 = vector.broadcast %cst : f32 to vector<128x128xf32>
    %8 = arith.maximumf %6, %7 : vector<128x128xf32>
    %9 = arith.truncf %8 : vector<128x128xf32> to vector<128x128xbf16>
    %c0_5 = arith.constant 0 : index
    %c0_6 = arith.constant 0 : index
    %10 = vector.load %arg4[%c0_5, %c0_6] : memref<128x128xbf16, #tpu.memory_space<vmem>>, vector<128x128xbf16>
    tpu.vector_store %arg4[%c0_5, %c0_6], %9 {strides = array<i32>} : memref<128x128xbf16, #tpu.memory_space<vmem>>, vector<128x128xbf16>,
    return
  }
  func.func @transform_0(%arg0: i32) -> (i32, i32) {
    %c0_i32 = arith.constant 0 : i32
    %c0_i32_0 = arith.constant 0 : i32
    return %arg0, %c0_i32 : i32, i32
  }
  func.func @transform_1(%arg0: i32) -> (i32, i32) {
    %c0_i32 = arith.constant 0 : i32
    %c0_i32_0 = arith.constant 0 : i32
    %c0_i32_1 = arith.constant 0 : i32
    return %c0_i32, %c0_i32_0 : i32, i32
  }
  func.func @transform_2(%arg0: i32) -> (i32, i32) {
    %c0_i32 = arith.constant 0 : i32
    %c0_i32_0 = arith.constant 0 : i32
    %c0_i32_1 = arith.constant 0 : i32
    return %c0_i32, %c0_i32_0 : i32, i32
  }
  func.func @transform_3(%arg0: i32) -> (i32, i32) {
    %c0_i32 = arith.constant 0 : i32
    %c0_i32_0 = arith.constant 0 : i32
    return %arg0, %c0_i32 : i32, i32
  }
}

module attributes {stable_mosaic.version = 11 : i64} {
  func.func @_conv_bn_stats_kernel(%arg0: i32, %arg1: memref<256x288xbf16, #tpu.memory_space<vmem>>, %arg2: memref<288x32xbf16, #tpu.memory_space<vmem>>, %arg3: memref<256x32xf32, #tpu.memory_space<vmem>>, %arg4: memref<8x32xf32, #tpu.memory_space<vmem>>) attributes {dimension_semantics = [#tpu.dimension_semantics<parallel>], iteration_bounds = array<i64: 2>, scalar_prefetch = 0 : i64, scratch_operands = 0 : i64, tpu.core_type = #tpu.core_type<tc>, window_params = [{transform_indices = @transform_0, window_bounds = array<i64: 256, 288>}, {pipeline_mode = #tpu.pipeline_mode<synchronous>, transform_indices = @transform_1, window_bounds = array<i64: 288, 32>}, {transform_indices = @transform_2, window_bounds = array<i64: 256, 32>}, {transform_indices = @transform_3, window_bounds = array<i64: 8, 32>}]} {
    %c0 = arith.constant 0 : index
    %c0_0 = arith.constant 0 : index
    %0 = vector.load %arg1[%c0, %c0_0] : memref<256x288xbf16, #tpu.memory_space<vmem>>, vector<256x288xbf16>
    %c0_1 = arith.constant 0 : index
    %c0_2 = arith.constant 0 : index
    %1 = vector.load %arg2[%c0_1, %c0_2] : memref<288x32xbf16, #tpu.memory_space<vmem>>, vector<288x32xbf16>
    %cst = arith.constant dense<0.000000e+00> : vector<256x32xf32>
    %2 = tpu.matmul %0, %1, %cst {dimension_numbers = #tpu.dot_dimension_numbers<[1], [0], [0], [1], [0, 0, 1, 1], [], []>} : vector<256x288xbf16>, vector<288x32xbf16>, vector<256x32xf32> -> vector<256x32xf32>
    %c0_3 = arith.constant 0 : index
    %c0_4 = arith.constant 0 : index
    %3 = vector.load %arg3[%c0_3, %c0_4] : memref<256x32xf32, #tpu.memory_space<vmem>>, vector<256x32xf32>
    tpu.vector_store %arg3[%c0_3, %c0_4], %2 {strides = array<i32>} : memref<256x32xf32, #tpu.memory_space<vmem>>, vector<256x32xf32>,
    %cst_5 = arith.constant dense<0.000000e+00> : vector<32xf32>
    %4 = vector.multi_reduction <add>, %2, %cst_5 [0] : vector<256x32xf32> to vector<32xf32>
    %5 = vector.shape_cast %4 : vector<32xf32> to vector<1x32xf32>
    %6 = arith.mulf %2, %2 : vector<256x32xf32>
    %cst_6 = arith.constant dense<0.000000e+00> : vector<32xf32>
    %7 = vector.multi_reduction <add>, %6, %cst_6 [0] : vector<256x32xf32> to vector<32xf32>
    %8 = vector.shape_cast %7 : vector<32xf32> to vector<1x32xf32>
    %cst_7 = arith.constant 0.000000e+00 : f32
    %9 = vector.broadcast %cst_7 : f32 to vector<6x32xf32>
    %10 = tpu.concatenate %5, %8, %9 in 0 : vector<1x32xf32>, vector<1x32xf32>, vector<6x32xf32> -> vector<8x32xf32>
    %c0_8 = arith.constant 0 : index
    %c0_9 = arith.constant 0 : index
    %11 = vector.load %arg4[%c0_8, %c0_9] : memref<8x32xf32, #tpu.memory_space<vmem>>, vector<8x32xf32>
    tpu.vector_store %arg4[%c0_8, %c0_9], %10 {strides = array<i32>} : memref<8x32xf32, #tpu.memory_space<vmem>>, vector<8x32xf32>,
    return
  }
  func.func @transform_0(%arg0: i32) -> (i32, i32) {
    %c0_i32 = arith.constant 0 : i32
    %c0_i32_0 = arith.constant 0 : i32
    return %arg0, %c0_i32 : i32, i32
  }
  func.func @transform_1(%arg0: i32) -> (i32, i32) {
    %c0_i32 = arith.constant 0 : i32
    %c0_i32_0 = arith.constant 0 : i32
    %c0_i32_1 = arith.constant 0 : i32
    return %c0_i32, %c0_i32_0 : i32, i32
  }
  func.func @transform_2(%arg0: i32) -> (i32, i32) {
    %c0_i32 = arith.constant 0 : i32
    %c0_i32_0 = arith.constant 0 : i32
    return %arg0, %c0_i32 : i32, i32
  }
  func.func @transform_3(%arg0: i32) -> (i32, i32) {
    %c0_i32 = arith.constant 0 : i32
    %c0_i32_0 = arith.constant 0 : i32
    return %arg0, %c0_i32 : i32, i32
  }
}

module attributes {stable_mosaic.version = 11 : i64} {
  func.func @_affine2_add_relu_kernel(%arg0: i32, %arg1: memref<128x128xf32, #tpu.memory_space<vmem>>, %arg2: memref<1x128xf32, #tpu.memory_space<vmem>>, %arg3: memref<1x128xf32, #tpu.memory_space<vmem>>, %arg4: memref<128x128xf32, #tpu.memory_space<vmem>>, %arg5: memref<1x128xf32, #tpu.memory_space<vmem>>, %arg6: memref<1x128xf32, #tpu.memory_space<vmem>>, %arg7: memref<128x128xbf16, #tpu.memory_space<vmem>>) attributes {dimension_semantics = [#tpu.dimension_semantics<parallel>], iteration_bounds = array<i64: 1>, scalar_prefetch = 0 : i64, scratch_operands = 0 : i64, tpu.core_type = #tpu.core_type<tc>, window_params = [{transform_indices = @transform_0, window_bounds = array<i64: 128, 128>}, {pipeline_mode = #tpu.pipeline_mode<synchronous>, transform_indices = @transform_1, window_bounds = array<i64: 1, 128>}, {pipeline_mode = #tpu.pipeline_mode<synchronous>, transform_indices = @transform_2, window_bounds = array<i64: 1, 128>}, {transform_indices = @transform_3, window_bounds = array<i64: 128, 128>}, {pipeline_mode = #tpu.pipeline_mode<synchronous>, transform_indices = @transform_4, window_bounds = array<i64: 1, 128>}, {pipeline_mode = #tpu.pipeline_mode<synchronous>, transform_indices = @transform_5, window_bounds = array<i64: 1, 128>}, {transform_indices = @transform_6, window_bounds = array<i64: 128, 128>}]} {
    %c0 = arith.constant 0 : index
    %c0_0 = arith.constant 0 : index
    %0 = vector.load %arg1[%c0, %c0_0] : memref<128x128xf32, #tpu.memory_space<vmem>>, vector<128x128xf32>
    %c0_1 = arith.constant 0 : index
    %c0_2 = arith.constant 0 : index
    %1 = vector.load %arg2[%c0_1, %c0_2] : memref<1x128xf32, #tpu.memory_space<vmem>>, vector<1x128xf32>
    %2 = vector.broadcast %1 : vector<1x128xf32> to vector<128x128xf32>
    %3 = arith.mulf %0, %2 : vector<128x128xf32>
    %c0_3 = arith.constant 0 : index
    %c0_4 = arith.constant 0 : index
    %4 = vector.load %arg3[%c0_3, %c0_4] : memref<1x128xf32, #tpu.memory_space<vmem>>, vector<1x128xf32>
    %5 = vector.broadcast %4 : vector<1x128xf32> to vector<128x128xf32>
    %6 = arith.addf %3, %5 : vector<128x128xf32>
    %c0_5 = arith.constant 0 : index
    %c0_6 = arith.constant 0 : index
    %7 = vector.load %arg4[%c0_5, %c0_6] : memref<128x128xf32, #tpu.memory_space<vmem>>, vector<128x128xf32>
    %c0_7 = arith.constant 0 : index
    %c0_8 = arith.constant 0 : index
    %8 = vector.load %arg5[%c0_7, %c0_8] : memref<1x128xf32, #tpu.memory_space<vmem>>, vector<1x128xf32>
    %9 = vector.broadcast %8 : vector<1x128xf32> to vector<128x128xf32>
    %10 = arith.mulf %7, %9 : vector<128x128xf32>
    %c0_9 = arith.constant 0 : index
    %c0_10 = arith.constant 0 : index
    %11 = vector.load %arg6[%c0_9, %c0_10] : memref<1x128xf32, #tpu.memory_space<vmem>>, vector<1x128xf32>
    %12 = vector.broadcast %11 : vector<1x128xf32> to vector<128x128xf32>
    %13 = arith.addf %10, %12 : vector<128x128xf32>
    %14 = arith.addf %6, %13 : vector<128x128xf32>
    %cst = arith.constant 0.000000e+00 : f32
    %15 = vector.broadcast %cst : f32 to vector<128x128xf32>
    %16 = arith.maximumf %14, %15 : vector<128x128xf32>
    %17 = arith.truncf %16 : vector<128x128xf32> to vector<128x128xbf16>
    %c0_11 = arith.constant 0 : index
    %c0_12 = arith.constant 0 : index
    %18 = vector.load %arg7[%c0_11, %c0_12] : memref<128x128xbf16, #tpu.memory_space<vmem>>, vector<128x128xbf16>
    tpu.vector_store %arg7[%c0_11, %c0_12], %17 {strides = array<i32>} : memref<128x128xbf16, #tpu.memory_space<vmem>>, vector<128x128xbf16>,
    return
  }
  func.func @transform_0(%arg0: i32) -> (i32, i32) {
    %c0_i32 = arith.constant 0 : i32
    %c0_i32_0 = arith.constant 0 : i32
    return %arg0, %c0_i32 : i32, i32
  }
  func.func @transform_1(%arg0: i32) -> (i32, i32) {
    %c0_i32 = arith.constant 0 : i32
    %c0_i32_0 = arith.constant 0 : i32
    %c0_i32_1 = arith.constant 0 : i32
    return %c0_i32, %c0_i32_0 : i32, i32
  }
  func.func @transform_2(%arg0: i32) -> (i32, i32) {
    %c0_i32 = arith.constant 0 : i32
    %c0_i32_0 = arith.constant 0 : i32
    %c0_i32_1 = arith.constant 0 : i32
    return %c0_i32, %c0_i32_0 : i32, i32
  }
  func.func @transform_3(%arg0: i32) -> (i32, i32) {
    %c0_i32 = arith.constant 0 : i32
    %c0_i32_0 = arith.constant 0 : i32
    return %arg0, %c0_i32 : i32, i32
  }
  func.func @transform_4(%arg0: i32) -> (i32, i32) {
    %c0_i32 = arith.constant 0 : i32
    %c0_i32_0 = arith.constant 0 : i32
    %c0_i32_1 = arith.constant 0 : i32
    return %c0_i32, %c0_i32_0 : i32, i32
  }
  func.func @transform_5(%arg0: i32) -> (i32, i32) {
    %c0_i32 = arith.constant 0 : i32
    %c0_i32_0 = arith.constant 0 : i32
    %c0_i32_1 = arith.constant 0 : i32
    return %c0_i32, %c0_i32_0 : i32, i32
  }
  func.func @transform_6(%arg0: i32) -> (i32, i32) {
    %c0_i32 = arith.constant 0 : i32
    %c0_i32_0 = arith.constant 0 : i32
    return %arg0, %c0_i32 : i32, i32
  }
}

module attributes {stable_mosaic.version = 11 : i64} {
  func.func @_conv_bn_stats_kernel(%arg0: i32, %arg1: memref<128x288xbf16, #tpu.memory_space<vmem>>, %arg2: memref<288x128xbf16, #tpu.memory_space<vmem>>, %arg3: memref<128x128xf32, #tpu.memory_space<vmem>>, %arg4: memref<8x128xf32, #tpu.memory_space<vmem>>) attributes {dimension_semantics = [#tpu.dimension_semantics<parallel>], iteration_bounds = array<i64: 1>, scalar_prefetch = 0 : i64, scratch_operands = 0 : i64, tpu.core_type = #tpu.core_type<tc>, window_params = [{transform_indices = @transform_0, window_bounds = array<i64: 128, 288>}, {pipeline_mode = #tpu.pipeline_mode<synchronous>, transform_indices = @transform_1, window_bounds = array<i64: 288, 128>}, {transform_indices = @transform_2, window_bounds = array<i64: 128, 128>}, {transform_indices = @transform_3, window_bounds = array<i64: 8, 128>}]} {
    %c0 = arith.constant 0 : index
    %c0_0 = arith.constant 0 : index
    %0 = vector.load %arg1[%c0, %c0_0] : memref<128x288xbf16, #tpu.memory_space<vmem>>, vector<128x288xbf16>
    %c0_1 = arith.constant 0 : index
    %c0_2 = arith.constant 0 : index
    %1 = vector.load %arg2[%c0_1, %c0_2] : memref<288x128xbf16, #tpu.memory_space<vmem>>, vector<288x128xbf16>
    %cst = arith.constant dense<0.000000e+00> : vector<128x128xf32>
    %2 = tpu.matmul %0, %1, %cst {dimension_numbers = #tpu.dot_dimension_numbers<[1], [0], [0], [1], [0, 0, 1, 1], [], []>} : vector<128x288xbf16>, vector<288x128xbf16>, vector<128x128xf32> -> vector<128x128xf32>
    %c0_3 = arith.constant 0 : index
    %c0_4 = arith.constant 0 : index
    %3 = vector.load %arg3[%c0_3, %c0_4] : memref<128x128xf32, #tpu.memory_space<vmem>>, vector<128x128xf32>
    tpu.vector_store %arg3[%c0_3, %c0_4], %2 {strides = array<i32>} : memref<128x128xf32, #tpu.memory_space<vmem>>, vector<128x128xf32>,
    %cst_5 = arith.constant dense<0.000000e+00> : vector<128xf32>
    %4 = vector.multi_reduction <add>, %2, %cst_5 [0] : vector<128x128xf32> to vector<128xf32>
    %5 = vector.shape_cast %4 : vector<128xf32> to vector<1x128xf32>
    %6 = arith.mulf %2, %2 : vector<128x128xf32>
    %cst_6 = arith.constant dense<0.000000e+00> : vector<128xf32>
    %7 = vector.multi_reduction <add>, %6, %cst_6 [0] : vector<128x128xf32> to vector<128xf32>
    %8 = vector.shape_cast %7 : vector<128xf32> to vector<1x128xf32>
    %cst_7 = arith.constant 0.000000e+00 : f32
    %9 = vector.broadcast %cst_7 : f32 to vector<6x128xf32>
    %10 = tpu.concatenate %5, %8, %9 in 0 : vector<1x128xf32>, vector<1x128xf32>, vector<6x128xf32> -> vector<8x128xf32>
    %c0_8 = arith.constant 0 : index
    %c0_9 = arith.constant 0 : index
    %11 = vector.load %arg4[%c0_8, %c0_9] : memref<8x128xf32, #tpu.memory_space<vmem>>, vector<8x128xf32>
    tpu.vector_store %arg4[%c0_8, %c0_9], %10 {strides = array<i32>} : memref<8x128xf32, #tpu.memory_space<vmem>>, vector<8x128xf32>,
    return
  }
  func.func @transform_0(%arg0: i32) -> (i32, i32) {
    %c0_i32 = arith.constant 0 : i32
    %c0_i32_0 = arith.constant 0 : i32
    return %arg0, %c0_i32 : i32, i32
  }
  func.func @transform_1(%arg0: i32) -> (i32, i32) {
    %c0_i32 = arith.constant 0 : i32
    %c0_i32_0 = arith.constant 0 : i32
    %c0_i32_1 = arith.constant 0 : i32
    return %c0_i32, %c0_i32_0 : i32, i32
  }
  func.func @transform_2(%arg0: i32) -> (i32, i32) {
    %c0_i32 = arith.constant 0 : i32
    %c0_i32_0 = arith.constant 0 : i32
    return %arg0, %c0_i32 : i32, i32
  }
  func.func @transform_3(%arg0: i32) -> (i32, i32) {
    %c0_i32 = arith.constant 0 : i32
    %c0_i32_0 = arith.constant 0 : i32
    return %arg0, %c0_i32 : i32, i32
  }
}

module attributes {stable_mosaic.version = 11 : i64} {
  func.func @_affine_kernel(%arg0: i32, %arg1: memref<64x128xf32, #tpu.memory_space<vmem>>, %arg2: memref<1x128xf32, #tpu.memory_space<vmem>>, %arg3: memref<1x128xf32, #tpu.memory_space<vmem>>, %arg4: memref<64x128xbf16, #tpu.memory_space<vmem>>) attributes {dimension_semantics = [#tpu.dimension_semantics<parallel>], iteration_bounds = array<i64: 1>, scalar_prefetch = 0 : i64, scratch_operands = 0 : i64, tpu.core_type = #tpu.core_type<tc>, window_params = [{transform_indices = @transform_0, window_bounds = array<i64: 64, 128>}, {pipeline_mode = #tpu.pipeline_mode<synchronous>, transform_indices = @transform_1, window_bounds = array<i64: 1, 128>}, {pipeline_mode = #tpu.pipeline_mode<synchronous>, transform_indices = @transform_2, window_bounds = array<i64: 1, 128>}, {transform_indices = @transform_3, window_bounds = array<i64: 64, 128>}]} {
    %c0 = arith.constant 0 : index
    %c0_0 = arith.constant 0 : index
    %0 = vector.load %arg1[%c0, %c0_0] : memref<64x128xf32, #tpu.memory_space<vmem>>, vector<64x128xf32>
    %c0_1 = arith.constant 0 : index
    %c0_2 = arith.constant 0 : index
    %1 = vector.load %arg2[%c0_1, %c0_2] : memref<1x128xf32, #tpu.memory_space<vmem>>, vector<1x128xf32>
    %2 = vector.broadcast %1 : vector<1x128xf32> to vector<64x128xf32>
    %3 = arith.mulf %0, %2 : vector<64x128xf32>
    %c0_3 = arith.constant 0 : index
    %c0_4 = arith.constant 0 : index
    %4 = vector.load %arg3[%c0_3, %c0_4] : memref<1x128xf32, #tpu.memory_space<vmem>>, vector<1x128xf32>
    %5 = vector.broadcast %4 : vector<1x128xf32> to vector<64x128xf32>
    %6 = arith.addf %3, %5 : vector<64x128xf32>
    %cst = arith.constant 0.000000e+00 : f32
    %7 = vector.broadcast %cst : f32 to vector<64x128xf32>
    %8 = arith.maximumf %6, %7 : vector<64x128xf32>
    %9 = arith.truncf %8 : vector<64x128xf32> to vector<64x128xbf16>
    %c0_5 = arith.constant 0 : index
    %c0_6 = arith.constant 0 : index
    %10 = vector.load %arg4[%c0_5, %c0_6] : memref<64x128xbf16, #tpu.memory_space<vmem>>, vector<64x128xbf16>
    tpu.vector_store %arg4[%c0_5, %c0_6], %9 {strides = array<i32>} : memref<64x128xbf16, #tpu.memory_space<vmem>>, vector<64x128xbf16>,
    return
  }
  func.func @transform_0(%arg0: i32) -> (i32, i32) {
    %c0_i32 = arith.constant 0 : i32
    %c0_i32_0 = arith.constant 0 : i32
    return %arg0, %c0_i32 : i32, i32
  }
  func.func @transform_1(%arg0: i32) -> (i32, i32) {
    %c0_i32 = arith.constant 0 : i32
    %c0_i32_0 = arith.constant 0 : i32
    %c0_i32_1 = arith.constant 0 : i32
    return %c0_i32, %c0_i32_0 : i32, i32
  }
  func.func @transform_2(%arg0: i32) -> (i32, i32) {
    %c0_i32 = arith.constant 0 : i32
    %c0_i32_0 = arith.constant 0 : i32
    %c0_i32_1 = arith.constant 0 : i32
    return %c0_i32, %c0_i32_0 : i32, i32
  }
  func.func @transform_3(%arg0: i32) -> (i32, i32) {
    %c0_i32 = arith.constant 0 : i32
    %c0_i32_0 = arith.constant 0 : i32
    return %arg0, %c0_i32 : i32, i32
  }
}

module attributes {stable_mosaic.version = 11 : i64} {
  func.func @_conv_bn_stats_kernel(%arg0: i32, %arg1: memref<128x576xbf16, #tpu.memory_space<vmem>>, %arg2: memref<576x64xbf16, #tpu.memory_space<vmem>>, %arg3: memref<128x64xf32, #tpu.memory_space<vmem>>, %arg4: memref<8x64xf32, #tpu.memory_space<vmem>>) attributes {dimension_semantics = [#tpu.dimension_semantics<parallel>], iteration_bounds = array<i64: 1>, scalar_prefetch = 0 : i64, scratch_operands = 0 : i64, tpu.core_type = #tpu.core_type<tc>, window_params = [{transform_indices = @transform_0, window_bounds = array<i64: 128, 576>}, {pipeline_mode = #tpu.pipeline_mode<synchronous>, transform_indices = @transform_1, window_bounds = array<i64: 576, 64>}, {transform_indices = @transform_2, window_bounds = array<i64: 128, 64>}, {transform_indices = @transform_3, window_bounds = array<i64: 8, 64>}]} {
    %c0 = arith.constant 0 : index
    %c0_0 = arith.constant 0 : index
    %0 = vector.load %arg1[%c0, %c0_0] : memref<128x576xbf16, #tpu.memory_space<vmem>>, vector<128x576xbf16>
    %c0_1 = arith.constant 0 : index
    %c0_2 = arith.constant 0 : index
    %1 = vector.load %arg2[%c0_1, %c0_2] : memref<576x64xbf16, #tpu.memory_space<vmem>>, vector<576x64xbf16>
    %cst = arith.constant dense<0.000000e+00> : vector<128x64xf32>
    %2 = tpu.matmul %0, %1, %cst {dimension_numbers = #tpu.dot_dimension_numbers<[1], [0], [0], [1], [0, 0, 1, 1], [], []>} : vector<128x576xbf16>, vector<576x64xbf16>, vector<128x64xf32> -> vector<128x64xf32>
    %c0_3 = arith.constant 0 : index
    %c0_4 = arith.constant 0 : index
    %3 = vector.load %arg3[%c0_3, %c0_4] : memref<128x64xf32, #tpu.memory_space<vmem>>, vector<128x64xf32>
    tpu.vector_store %arg3[%c0_3, %c0_4], %2 {strides = array<i32>} : memref<128x64xf32, #tpu.memory_space<vmem>>, vector<128x64xf32>,
    %cst_5 = arith.constant dense<0.000000e+00> : vector<64xf32>
    %4 = vector.multi_reduction <add>, %2, %cst_5 [0] : vector<128x64xf32> to vector<64xf32>
    %5 = vector.shape_cast %4 : vector<64xf32> to vector<1x64xf32>
    %6 = arith.mulf %2, %2 : vector<128x64xf32>
    %cst_6 = arith.constant dense<0.000000e+00> : vector<64xf32>
    %7 = vector.multi_reduction <add>, %6, %cst_6 [0] : vector<128x64xf32> to vector<64xf32>
    %8 = vector.shape_cast %7 : vector<64xf32> to vector<1x64xf32>
    %cst_7 = arith.constant 0.000000e+00 : f32
    %9 = vector.broadcast %cst_7 : f32 to vector<6x64xf32>
    %10 = tpu.concatenate %5, %8, %9 in 0 : vector<1x64xf32>, vector<1x64xf32>, vector<6x64xf32> -> vector<8x64xf32>
    %c0_8 = arith.constant 0 : index
    %c0_9 = arith.constant 0 : index
    %11 = vector.load %arg4[%c0_8, %c0_9] : memref<8x64xf32, #tpu.memory_space<vmem>>, vector<8x64xf32>
    tpu.vector_store %arg4[%c0_8, %c0_9], %10 {strides = array<i32>} : memref<8x64xf32, #tpu.memory_space<vmem>>, vector<8x64xf32>,
    return
  }
  func.func @transform_0(%arg0: i32) -> (i32, i32) {
    %c0_i32 = arith.constant 0 : i32
    %c0_i32_0 = arith.constant 0 : i32
    return %arg0, %c0_i32 : i32, i32
  }
  func.func @transform_1(%arg0: i32) -> (i32, i32) {
    %c0_i32 = arith.constant 0 : i32
    %c0_i32_0 = arith.constant 0 : i32
    %c0_i32_1 = arith.constant 0 : i32
    return %c0_i32, %c0_i32_0 : i32, i32
  }
  func.func @transform_2(%arg0: i32) -> (i32, i32) {
    %c0_i32 = arith.constant 0 : i32
    %c0_i32_0 = arith.constant 0 : i32
    return %arg0, %c0_i32 : i32, i32
  }
  func.func @transform_3(%arg0: i32) -> (i32, i32) {
    %c0_i32 = arith.constant 0 : i32
    %c0_i32_0 = arith.constant 0 : i32
    return %arg0, %c0_i32 : i32, i32
  }
}

module attributes {stable_mosaic.version = 11 : i64} {
  func.func @_affine2_add_relu_kernel(%arg0: i32, %arg1: memref<64x128xf32, #tpu.memory_space<vmem>>, %arg2: memref<1x128xf32, #tpu.memory_space<vmem>>, %arg3: memref<1x128xf32, #tpu.memory_space<vmem>>, %arg4: memref<64x128xf32, #tpu.memory_space<vmem>>, %arg5: memref<1x128xf32, #tpu.memory_space<vmem>>, %arg6: memref<1x128xf32, #tpu.memory_space<vmem>>, %arg7: memref<64x128xbf16, #tpu.memory_space<vmem>>) attributes {dimension_semantics = [#tpu.dimension_semantics<parallel>], iteration_bounds = array<i64: 1>, scalar_prefetch = 0 : i64, scratch_operands = 0 : i64, tpu.core_type = #tpu.core_type<tc>, window_params = [{transform_indices = @transform_0, window_bounds = array<i64: 64, 128>}, {pipeline_mode = #tpu.pipeline_mode<synchronous>, transform_indices = @transform_1, window_bounds = array<i64: 1, 128>}, {pipeline_mode = #tpu.pipeline_mode<synchronous>, transform_indices = @transform_2, window_bounds = array<i64: 1, 128>}, {transform_indices = @transform_3, window_bounds = array<i64: 64, 128>}, {pipeline_mode = #tpu.pipeline_mode<synchronous>, transform_indices = @transform_4, window_bounds = array<i64: 1, 128>}, {pipeline_mode = #tpu.pipeline_mode<synchronous>, transform_indices = @transform_5, window_bounds = array<i64: 1, 128>}, {transform_indices = @transform_6, window_bounds = array<i64: 64, 128>}]} {
    %c0 = arith.constant 0 : index
    %c0_0 = arith.constant 0 : index
    %0 = vector.load %arg1[%c0, %c0_0] : memref<64x128xf32, #tpu.memory_space<vmem>>, vector<64x128xf32>
    %c0_1 = arith.constant 0 : index
    %c0_2 = arith.constant 0 : index
    %1 = vector.load %arg2[%c0_1, %c0_2] : memref<1x128xf32, #tpu.memory_space<vmem>>, vector<1x128xf32>
    %2 = vector.broadcast %1 : vector<1x128xf32> to vector<64x128xf32>
    %3 = arith.mulf %0, %2 : vector<64x128xf32>
    %c0_3 = arith.constant 0 : index
    %c0_4 = arith.constant 0 : index
    %4 = vector.load %arg3[%c0_3, %c0_4] : memref<1x128xf32, #tpu.memory_space<vmem>>, vector<1x128xf32>
    %5 = vector.broadcast %4 : vector<1x128xf32> to vector<64x128xf32>
    %6 = arith.addf %3, %5 : vector<64x128xf32>
    %c0_5 = arith.constant 0 : index
    %c0_6 = arith.constant 0 : index
    %7 = vector.load %arg4[%c0_5, %c0_6] : memref<64x128xf32, #tpu.memory_space<vmem>>, vector<64x128xf32>
    %c0_7 = arith.constant 0 : index
    %c0_8 = arith.constant 0 : index
    %8 = vector.load %arg5[%c0_7, %c0_8] : memref<1x128xf32, #tpu.memory_space<vmem>>, vector<1x128xf32>
    %9 = vector.broadcast %8 : vector<1x128xf32> to vector<64x128xf32>
    %10 = arith.mulf %7, %9 : vector<64x128xf32>
    %c0_9 = arith.constant 0 : index
    %c0_10 = arith.constant 0 : index
    %11 = vector.load %arg6[%c0_9, %c0_10] : memref<1x128xf32, #tpu.memory_space<vmem>>, vector<1x128xf32>
    %12 = vector.broadcast %11 : vector<1x128xf32> to vector<64x128xf32>
    %13 = arith.addf %10, %12 : vector<64x128xf32>
    %14 = arith.addf %6, %13 : vector<64x128xf32>
    %cst = arith.constant 0.000000e+00 : f32
    %15 = vector.broadcast %cst : f32 to vector<64x128xf32>
    %16 = arith.maximumf %14, %15 : vector<64x128xf32>
    %17 = arith.truncf %16 : vector<64x128xf32> to vector<64x128xbf16>
    %c0_11 = arith.constant 0 : index
    %c0_12 = arith.constant 0 : index
    %18 = vector.load %arg7[%c0_11, %c0_12] : memref<64x128xbf16, #tpu.memory_space<vmem>>, vector<64x128xbf16>
    tpu.vector_store %arg7[%c0_11, %c0_12], %17 {strides = array<i32>} : memref<64x128xbf16, #tpu.memory_space<vmem>>, vector<64x128xbf16>,
    return
  }
  func.func @transform_0(%arg0: i32) -> (i32, i32) {
    %c0_i32 = arith.constant 0 : i32
    %c0_i32_0 = arith.constant 0 : i32
    return %arg0, %c0_i32 : i32, i32
  }
  func.func @transform_1(%arg0: i32) -> (i32, i32) {
    %c0_i32 = arith.constant 0 : i32
    %c0_i32_0 = arith.constant 0 : i32
    %c0_i32_1 = arith.constant 0 : i32
    return %c0_i32, %c0_i32_0 : i32, i32
  }
  func.func @transform_2(%arg0: i32) -> (i32, i32) {
    %c0_i32 = arith.constant 0 : i32
    %c0_i32_0 = arith.constant 0 : i32
    %c0_i32_1 = arith.constant 0 : i32
    return %c0_i32, %c0_i32_0 : i32, i32
  }
  func.func @transform_3(%arg0: i32) -> (i32, i32) {
    %c0_i32 = arith.constant 0 : i32
    %c0_i32_0 = arith.constant 0 : i32
    return %arg0, %c0_i32 : i32, i32
  }
  func.func @transform_4(%arg0: i32) -> (i32, i32) {
    %c0_i32 = arith.constant 0 : i32
    %c0_i32_0 = arith.constant 0 : i32
    %c0_i32_1 = arith.constant 0 : i32
    return %c0_i32, %c0_i32_0 : i32, i32
  }
  func.func @transform_5(%arg0: i32) -> (i32, i32) {
    %c0_i32 = arith.constant 0 : i32
    %c0_i32_0 = arith.constant 0 : i32
    %c0_i32_1 = arith.constant 0 : i32
    return %c0_i32, %c0_i32_0 : i32, i32
  }
  func.func @transform_6(%arg0: i32) -> (i32, i32) {
    %c0_i32 = arith.constant 0 : i32
    %c0_i32_0 = arith.constant 0 : i32
    return %arg0, %c0_i32 : i32, i32
  }
}

module attributes {stable_mosaic.version = 11 : i64} {
  func.func @_pool_linear_kernel(%arg0: i32, %arg1: memref<2x64x64xbf16, #tpu.memory_space<vmem>>, %arg2: memref<64x10xf32, #tpu.memory_space<vmem>>, %arg3: memref<1x10xf32, #tpu.memory_space<vmem>>, %arg4: memref<2x10xf32, #tpu.memory_space<vmem>>) attributes {dimension_semantics = [#tpu.dimension_semantics<arbitrary>], iteration_bounds = array<i64: 1>, scalar_prefetch = 0 : i64, scratch_operands = 0 : i64, tpu.core_type = #tpu.core_type<tc>, window_params = [{pipeline_mode = #tpu.pipeline_mode<synchronous>, transform_indices = @transform_0, window_bounds = array<i64: 2, 64, 64>}, {pipeline_mode = #tpu.pipeline_mode<synchronous>, transform_indices = @transform_1, window_bounds = array<i64: 64, 10>}, {pipeline_mode = #tpu.pipeline_mode<synchronous>, transform_indices = @transform_2, window_bounds = array<i64: 1, 10>}, {pipeline_mode = #tpu.pipeline_mode<synchronous>, transform_indices = @transform_3, window_bounds = array<i64: 2, 10>}]} {
    %c0 = arith.constant 0 : index
    %c0_0 = arith.constant 0 : index
    %c0_1 = arith.constant 0 : index
    %0 = vector.load %arg1[%c0, %c0_0, %c0_1] : memref<2x64x64xbf16, #tpu.memory_space<vmem>>, vector<2x64x64xbf16>
    %1 = arith.extf %0 : vector<2x64x64xbf16> to vector<2x64x64xf32>
    %cst = arith.constant dense<0.000000e+00> : vector<2x64xf32>
    %2 = vector.multi_reduction <add>, %1, %cst [1] : vector<2x64x64xf32> to vector<2x64xf32>
    %cst_2 = arith.constant 6.400000e+01 : f32
    %3 = vector.broadcast %cst_2 : f32 to vector<2x64xf32>
    %4 = arith.divf %2, %3 : vector<2x64xf32>
    %c0_3 = arith.constant 0 : index
    %c0_4 = arith.constant 0 : index
    %5 = vector.load %arg2[%c0_3, %c0_4] : memref<64x10xf32, #tpu.memory_space<vmem>>, vector<64x10xf32>
    %cst_5 = arith.constant dense<0.000000e+00> : vector<2x10xf32>
    %6 = tpu.matmul %4, %5, %cst_5 {dimension_numbers = #tpu.dot_dimension_numbers<[1], [0], [0], [1], [0, 0, 1, 1], [], []>} : vector<2x64xf32>, vector<64x10xf32>, vector<2x10xf32> -> vector<2x10xf32>
    %c0_6 = arith.constant 0 : index
    %c0_7 = arith.constant 0 : index
    %7 = vector.load %arg3[%c0_6, %c0_7] : memref<1x10xf32, #tpu.memory_space<vmem>>, vector<1x10xf32>
    %8 = vector.broadcast %7 : vector<1x10xf32> to vector<2x10xf32>
    %9 = arith.addf %6, %8 : vector<2x10xf32>
    %c0_8 = arith.constant 0 : index
    %c0_9 = arith.constant 0 : index
    %10 = vector.load %arg4[%c0_8, %c0_9] : memref<2x10xf32, #tpu.memory_space<vmem>>, vector<2x10xf32>
    tpu.vector_store %arg4[%c0_8, %c0_9], %9 {strides = array<i32>} : memref<2x10xf32, #tpu.memory_space<vmem>>, vector<2x10xf32>,
    return
  }
  func.func @transform_0(%arg0: i32) -> (i32, i32, i32) {
    %c0_i32 = arith.constant 0 : i32
    %c0_i32_0 = arith.constant 0 : i32
    %c0_i32_1 = arith.constant 0 : i32
    %c0_i32_2 = arith.constant 0 : i32
    return %c0_i32, %c0_i32_0, %c0_i32_1 : i32, i32, i32
  }
  func.func @transform_1(%arg0: i32) -> (i32, i32) {
    %c0_i32 = arith.constant 0 : i32
    %c0_i32_0 = arith.constant 0 : i32
    %c0_i32_1 = arith.constant 0 : i32
    return %c0_i32, %c0_i32_0 : i32, i32
  }
  func.func @transform_2(%arg0: i32) -> (i32, i32) {
    %c0_i32 = arith.constant 0 : i32
    %c0_i32_0 = arith.constant 0 : i32
    %c0_i32_1 = arith.constant 0 : i32
    return %c0_i32, %c0_i32_0 : i32, i32
  }
  func.func @transform_3(%arg0: i32) -> (i32, i32) {
    %c0_i32 = arith.constant 0 : i32
    %c0_i32_0 = arith.constant 0 : i32
    %c0_i32_1 = arith.constant 0 : i32
    return %c0_i32, %c0_i32_0 : i32, i32
  }
}

</mosaic_0001>

<llo_original>
// kernel: tile.102
$region0: #{tile.102}
  #allocation0 [shape = 's32[1]{0}', space=sflag, size = 0x4, scoped, tag = 'scoped memory for tile.102']
  %s0 = inlined_call_operand.vmem [shape: f32[16], index: 0, kind: input, shape index: {}]
  %s1 = inlined_call_operand.vmem [shape: f32[8,16], index: 1, kind: output, shape index: {}]
  // Predicated region
  $region2: #{tile.102} parent=0 // pred_check
    _
  $region3: #{tile.102} parent=0 // pred_check_branch
    %3 = sbr.rel (0) target = $region5
  $region4: #{tile.102} parent=0 // pred_region
    _
  $region5: #{tile.102} parent=0 // pred_fallthru
    _
  %v4 = vld [vmem:[%s0] ss:$0 sm:$0xff]
  %5 = vst [vmem:[%s1] sm:$0xff] %v4

// kernel: tile.103
$region0: #{tile.103}
  %s0 = inlined_call_operand.vmem [shape: f32[8,16], index: 0, kind: input, shape index: {}]
  %s1 = inlined_call_operand.vmem [shape: f32[1,128], index: 1, kind: output, shape index: {}]
  $region1: #{tile.103} parent=0
    #allocation0 [shape = 'u8[4096]{0}', space=vmem, size = 0x1000, scoped, tag = 'scoped mem for output reshape']
    %v2 = vld [vmem:[%s0] sm:$0x1]
    %vm3 = vcmask 130048
    %4 = vst.msk [vmem:[#allocation0] sm:$0x1] %vm3, %v2
    %s5 = scalar_lea.vmem %s0, 7
    %v6 = vld [vmem:[%s5] sm:$0x1]
    %7 = vrot.lane.b32.xlu0 %v6, 112
    %v8 = vpop.permute.xlu0 %7
    %vm9 = vcmask 1048448
    %10 = vst.msk [vmem:[#allocation0] sm:$0x1] %vm9, %v8
    %s11 = scalar_lea.vmem %s0, 6
    %v12 = vld [vmem:[%s11] sm:$0x1]
    %13 = vrot.lane.b32.xlu0 %v12, 96
    %v14 = vpop.permute.xlu0 %13
    %vm15 = vcmask 917248
    %16 = vst.msk [vmem:[#allocation0] sm:$0x1] %vm15, %v14
    %s17 = scalar_lea.vmem %s0, 5
    %v18 = vld [vmem:[%s17] sm:$0x1]
    %19 = vrot.lane.b32.xlu0 %v18, 80
    %v20 = vpop.permute.xlu0 %19
    %vm21 = vcmask 786048
    %22 = vst.msk [vmem:[#allocation0] sm:$0x1] %vm21, %v20
    %s23 = scalar_lea.vmem %s0, 4
    %v24 = vld [vmem:[%s23] sm:$0x1]
    %25 = vrot.lane.b32.xlu0 %v24, 64
    %v26 = vpop.permute.xlu0 %25
    %vm27 = vcmask 654848
    %28 = vst.msk [vmem:[#allocation0] sm:$0x1] %vm27, %v26
    %s29 = scalar_lea.vmem %s0, 3
    %v30 = vld [vmem:[%s29] sm:$0x1]
    %31 = vrot.lane.b32.xlu0 %v30, 48
    %v32 = vpop.permute.xlu0 %31
    %vm33 = vcmask 523648
    %34 = vst.msk [vmem:[#allocation0] sm:$0x1] %vm33, %v32
    %s35 = scalar_lea.vmem %s0, 2
    %v36 = vld [vmem:[%s35] sm:$0x1]
    %37 = vrot.lane.b32.xlu0 %v36, 32
    %v38 = vpop.permute.xlu0 %37
    %vm39 = vcmask 392448
    %40 = vst.msk [vmem:[#allocation0] sm:$0x1] %vm39, %v38
    %s41 = scalar_lea.vmem %s0, 1
    %v42 = vld [vmem:[%s41] sm:$0x1]
    %43 = vrot.lane.b32.xlu0 %v42, 16
    %v44 = vpop.permute.xlu0 %43
    %vm45 = vcmask 261248
    %46 = vst.msk [vmem:[#allocation0] sm:$0x1] %vm45, %v44
    %s48 = sshll.u32 1, 1
    %s49 = ssub.s32 %s48, 1
    %v51 = vld [vmem:[#allocation0] sm:%s49]
    %s52 = sshll.u32 1, 1
    %s53 = ssub.s32 %s52, 1
    %54 = vst [vmem:[%s1] sm:%s53] %v51

// kernel: resnet2_forward.16
$region0: #{resnet2_forward.16}
  #allocation0 [shape = 'u32[]', space=smem, size = 0x4, offset = 0x4, fixed_abs, tag = 'smem constant byte address 0x4 - core index']
  #allocation1 [shape = 'u32[144,128]{1,0:T(1,128)}', space=vmem, size = 0x12000, scoped, tag = 'internal scratch']
  %s0 = inlined_call_operand.vmem [shape: f32[256,128], index: 0, kind: input, shape index: {}]
  %s1 = inlined_call_operand.vmem [shape: f32[1,128], index: 1, kind: input, shape index: {}]
  %s2 = inlined_call_operand.vmem [shape: f32[1,128], index: 2, kind: input, shape index: {}]
  %s3 = inlined_call_operand.vmem [shape: bf16[256,128], index: 3, kind: output, shape index: {}]
  %s4 = sld [smem:[#allocation0]]
  $region45: #{resnet2_forward.16} parent=0
    _
  %s6 = ssub.s32 1, %s4
  %s7 = scalar_select 0, %s6, %s4
  loop: start=0, step=1, limit=4
  $region2: #{resnet2_forward.16} parent=0 // loop_pre_header
    _
  $region3: #{resnet2_forward.16} parent=0 // loop_header
    %s9 = sphi 0, %s13
    %p10 = scmp.ge.s32.totalorder %s9, 4
    %s19 = sphi 0, %s21
    %s22 = sphi 0, %s19
    %s23 = sphi 0, %s22
    %s39 = sphi 0, %s23
    %s43 = sphi 0, %s43
    %s45 = sphi 0, %s43
    %s46 = sphi 0, %s45
    %s60 = sphi 0, %s46
    %s64 = sphi 0, %s64
    %s66 = sphi 0, %s64
    %s67 = sphi 0, %s66
    %s81 = sphi 0, %s67
    %s87 = sphi 0, %s89
    %s90 = sphi 0, %s87
    %s91 = sphi 0, %s90
    %s107 = sphi 0, %s91
  $region4: #{resnet2_forward.16} parent=0 // loop_header_branch
    %12 = sbr.rel (%p10) target = $region8
  $region5: #{resnet2_forward.16} parent=0 // loop_body
    %s14 = ssub.s32 %s9, 1
    %s15 = ssub.s32 %s9, 2
    %s16 = sadd.s32 %s9, 1
    %s17 = ssub.s32 %s9, %s16
    %p18 = scmp.eq.s32.totalorder %s17, 0
    %s20 = sadd.s32 %s19, 1
    %s21 = scalar_select %p18, %s19, %s20
    %p24 = pneg %p18
    %p25 = scmp.eq.s32.totalorder %s9, 1
    %p26 = por %p24, %p25
    %p27 = scmp.ne.s32.totalorder %s19, %s22
    %p28 = scmp.eq.s32.totalorder %s9, 0
    %p29 = por %p27, %p28
    %p30 = scmp.ne.s32.totalorder %s19, %s22
    %p31 = scmp.eq.s32.totalorder %s14, 1
    %p32 = por %p30, %p31
    %p33 = scmp.ne.s32.totalorder %s22, %s23
    %p34 = scmp.eq.s32.totalorder %s14, 0
    %p35 = por %p33, %p34
    %p36 = scmp.ne.s32.totalorder %s22, %s23
    %p37 = scmp.eq.s32.totalorder %s15, 1
    %p38 = por %p36, %p37
    %p40 = scmp.ne.s32.totalorder %s23, %s39
    %p41 = scmp.eq.s32.totalorder %s15, 0
    %p42 = por %p40, %p41
    %s44 = sadd.s32 %s43, 1
    %p47 = scmp.eq.s32.totalorder %s9, 1
    %p48 = scmp.ne.s32.totalorder %s43, %s45
    %p49 = scmp.eq.s32.totalorder %s9, 0
    %p50 = por %p48, %p49
    %p51 = scmp.ne.s32.totalorder %s43, %s45
    %p52 = scmp.eq.s32.totalorder %s14, 1
    %p53 = por %p51, %p52
    %p54 = scmp.ne.s32.totalorder %s45, %s46
    %p55 = scmp.eq.s32.totalorder %s14, 0
    %p56 = por %p54, %p55
    %p57 = scmp.ne.s32.totalorder %s45, %s46
    %p58 = scmp.eq.s32.totalorder %s15, 1
    %p59 = por %p57, %p58
    %p61 = scmp.ne.s32.totalorder %s46, %s60
    %p62 = scmp.eq.s32.totalorder %s15, 0
    %p63 = por %p61, %p62
    %s65 = sadd.s32 %s64, 1
    %p68 = scmp.eq.s32.totalorder %s9, 1
    %p69 = scmp.ne.s32.totalorder %s64, %s66
    %p70 = scmp.eq.s32.totalorder %s9, 0
    %p71 = por %p69, %p70
    %p72 = scmp.ne.s32.totalorder %s64, %s66
    %p73 = scmp.eq.s32.totalorder %s14, 1
    %p74 = por %p72, %p73
    %p75 = scmp.ne.s32.totalorder %s66, %s67
    %p76 = scmp.eq.s32.totalorder %s14, 0
    %p77 = por %p75, %p76
    %p78 = scmp.ne.s32.totalorder %s66, %s67
    %p79 = scmp.eq.s32.totalorder %s15, 1
    %p80 = por %p78, %p79
    %p82 = scmp.ne.s32.totalorder %s67, %s81
    %p83 = scmp.eq.s32.totalorder %s15, 0
    %p84 = por %p82, %p83
    %s85 = ssub.s32 %s9, %s16
    %p86 = scmp.eq.s32.totalorder %s85, 0
    %s88 = sadd.s32 %s87, 1
    %s89 = scalar_select %p86, %s87, %s88
    %p92 = pneg %p86
    %p93 = scmp.eq.s32.totalorder %s9, 1
    %p94 = por %p92, %p93
    %p95 = scmp.ne.s32.totalorder %s87, %s90
    %p96 = scmp.eq.s32.totalorder %s9, 0
    %p97 = por %p95, %p96
    %p98 = scmp.ne.s32.totalorder %s87, %s90
    %p99 = scmp.eq.s32.totalorder %s14, 1
    %p100 = por %p98, %p99
    %p101 = scmp.ne.s32.totalorder %s90, %s91
    %p102 = scmp.eq.s32.totalorder %s14, 0
    %p103 = por %p101, %p102
    %p104 = scmp.ne.s32.totalorder %s90, %s91
    %p105 = scmp.eq.s32.totalorder %s15, 1
    %p106 = por %p104, %p105
    %p108 = scmp.ne.s32.totalorder %s91, %s107
    %p109 = scmp.eq.s32.totalorder %s15, 0
    %p110 = por %p108, %p109
    %p111 = scmp.le.s32.totalorder 1, %s9
    %p112 = scmp.lt.s32.totalorder %s9, 3
    %p113 = pnand %p111, %p112
    %p114 = pneg %p113
    // Predicated region
    $region9: #{resnet2_forward.16} parent=5 // pred_check
      _
    $region10: #{resnet2_forward.16} parent=5 // pred_check_branch
      %116 = sbr.rel (%p113) target = $region12
    $region11: #{resnet2_forward.16} parent=5 // pred_region
      %s117 = ssub.s32 %s9, 1
      // Predicated region
      $region13: #{resnet2_forward.16} parent=11 // pred_check
        %p118 = pneg %p56
      $region14: #{resnet2_forward.16} parent=11 // pred_check_branch
        %120 = sbr.rel (%p118) target = $region16
      $region15: #{resnet2_forward.16} parent=11 // pred_region
        _
      $region16: #{resnet2_forward.16} parent=11 // pred_fallthru
        _
      // Predicated region
      $region17: #{resnet2_forward.16} parent=11 // pred_check
        %p121 = pneg %p77
      $region18: #{resnet2_forward.16} parent=11 // pred_check_branch
        %123 = sbr.rel (%p121) target = $region20
      $region19: #{resnet2_forward.16} parent=11 // pred_region
        _
      $region20: #{resnet2_forward.16} parent=11 // pred_fallthru
        _
    $region12: #{resnet2_forward.16} parent=5 // pred_fallthru
      _
    %p124 = scmp.lt.s32.totalorder %s9, 2
    // Predicated region
    $region21: #{resnet2_forward.16} parent=5 // pred_check
      %p125 = pneg %p124
    $region22: #{resnet2_forward.16} parent=5 // pred_check_branch
      %127 = sbr.rel (%p125) target = $region24
    $region23: #{resnet2_forward.16} parent=5 // pred_region
      // Predicated region
      $region25: #{resnet2_forward.16} parent=23 // pred_check
        %p128 = pneg %p29
      $region26: #{resnet2_forward.16} parent=23 // pred_check_branch
        %130 = sbr.rel (%p128) target = $region28
      $region27: #{resnet2_forward.16} parent=23 // pred_region
        %s131 = smul.u32 16, %s9
        %p132 = scmp.lt.s32.totalorder %s131, 31
        %s133 = scalar_select %p132, %s131, 31
        %s134 = smul.addr %s133, 8
        %s135 = scalar_lea.vmem %s0, %s134
        %s136 = smul.u32 16, %s9
      $region28: #{resnet2_forward.16} parent=23 // pred_fallthru
        _
    $region24: #{resnet2_forward.16} parent=5 // pred_fallthru
      _
    %p137 = scmp.le.s32.totalorder 1, %s9
    %p138 = scmp.lt.s32.totalorder %s9, 3
    %p139 = pnand %p137, %p138
    %p140 = pneg %p139
    // Predicated region
    $region29: #{resnet2_forward.16} parent=5 // pred_check
      _
    $region30: #{resnet2_forward.16} parent=5 // pred_check_branch
      %142 = sbr.rel (%p139) target = $region32
    $region31: #{resnet2_forward.16} parent=5 // pred_region
      %s143 = ssub.s32 %s9, 1
      %s144 = smul.u32 16, %s14
      %p145 = scmp.lt.s32.totalorder %s144, 31
      %s146 = scalar_select %p145, %s144, 31
      %s147 = smul.addr %s146, 8
      %s148 = scalar_lea.vmem %s0, %s147
      %p149 = pneg %p35
      %p150 = pneg %p32
      %p151 = pneg %p56
      %p152 = pneg %p53
      %p153 = pneg %p77
      %p154 = pneg %p74
      %p155 = pneg %p103
      %p156 = pneg %p100
      %s157 = smul.u32 16, %s14
      %p158 = scmp.lt.s32.totalorder %s157, 31
      %s159 = scalar_select %p158, %s157, 31
      %s160 = smul.addr %s159, 4
      %s161 = scalar_lea.vmem %s3, %s160
      %s162 = smul.u32 16, %s14
      %p163 = scmp.lt.s32.totalorder %s162, 31
      %s164 = scalar_select %p163, %s162, 31
      %s165 = smul.addr %s164, 8
      %s166 = scalar_lea.vmem %s0, %s165
      %s167 = smul.u32 16, %s14
      %s168 = smul.u32 16, %s14
      %p169 = scmp.lt.s32.totalorder %s168, 31
      %s170 = scalar_select %p169, %s168, 31
      %s171 = smul.addr %s170, 4
      %s172 = scalar_lea.vmem %s3, %s171
      %s173 = smul.u32 16, %s14
      %v174 = vld [vmem:[%s166] sm:$0xff]
      %v175 = vld [vmem:[%s166 + $0x8] sm:$0xff]
      %v176 = vld [vmem:[%s166 + $0x10] sm:$0xff]
      %v177 = vld [vmem:[%s166 + $0x18] sm:$0xff]
      %v178 = vld [vmem:[%s166 + $0x20] sm:$0xff]
      %v179 = vld [vmem:[%s166 + $0x28] sm:$0xff]
      %v180 = vld [vmem:[%s166 + $0x30] sm:$0xff]
      %v181 = vld [vmem:[%s166 + $0x38] sm:$0xff]
      %v182 = vld [vmem:[%s166 + $0x40] sm:$0xff]
      %v183 = vld [vmem:[%s166 + $0x48] sm:$0xff]
      %v184 = vld [vmem:[%s166 + $0x50] sm:$0xff]
      %v185 = vld [vmem:[%s166 + $0x58] sm:$0xff]
      %v186 = vld [vmem:[%s166 + $0x60] sm:$0xff]
      %v187 = vld [vmem:[%s166 + $0x68] sm:$0xff]
      %v188 = vld [vmem:[%s166 + $0x70] sm:$0xff]
      %v189 = vld [vmem:[%s166 + $0x78] sm:$0xff]
      %v190 = vld [vmem:[%s1] sm:$0x1]
      %v192 = vlaneseq
      %v193 = vshrl.u32 %v192, 7
      %v194 = vsub.s32 0, %v193
      %v195 = vrot.slane %v190, %v194
      %v197 = vmul.f32 %v174, %v195
      %v198 = vmul.f32 %v175, %v195
      %v199 = vmul.f32 %v176, %v195
      %v200 = vmul.f32 %v177, %v195
      %v201 = vmul.f32 %v178, %v195
      %v202 = vmul.f32 %v179, %v195
      %v203 = vmul.f32 %v180, %v195
      %v204 = vmul.f32 %v181, %v195
      %v205 = vmul.f32 %v182, %v195
      %v206 = vmul.f32 %v183, %v195
      %v207 = vmul.f32 %v184, %v195
      %v208 = vmul.f32 %v185, %v195
      %v209 = vmul.f32 %v186, %v195
      %v210 = vmul.f32 %v187, %v195
      %v211 = vmul.f32 %v188, %v195
      %v212 = vmul.f32 %v189, %v195
      %v213 = vld [vmem:[%s2] sm:$0x1]
      %v215 = vlaneseq
      %v216 = vshrl.u32 %v215, 7
      %v217 = vsub.s32 0, %v216
      %v218 = vrot.slane %v213, %v217
      %v220 = vadd.f32 %v197, %v218
      %v221 = vadd.f32 %v198, %v218
      %v222 = vadd.f32 %v199, %v218
      %v223 = vadd.f32 %v200, %v218
      %v224 = vadd.f32 %v201, %v218
      %v225 = vadd.f32 %v202, %v218
      %v226 = vadd.f32 %v203, %v218
      %v227 = vadd.f32 %v204, %v218
      %v228 = vadd.f32 %v205, %v218
      %v229 = vadd.f32 %v206, %v218
      %v230 = vadd.f32 %v207, %v218
      %v231 = vadd.f32 %v208, %v218
      %v232 = vadd.f32 %v209, %v218
      %v233 = vadd.f32 %v210, %v218
      %v234 = vadd.f32 %v211, %v218
      %v235 = vadd.f32 %v212, %v218
      %v236 = vmax.f32 %v220, 0.0
      %v237 = vmax.f32 %v221, 0.0
      %v238 = vmax.f32 %v222, 0.0
      %v239 = vmax.f32 %v223, 0.0
      %v240 = vmax.f32 %v224, 0.0
      %v241 = vmax.f32 %v225, 0.0
      %v242 = vmax.f32 %v226, 0.0
      %v243 = vmax.f32 %v227, 0.0
      %v244 = vmax.f32 %v228, 0.0
      %v245 = vmax.f32 %v229, 0.0
      %v246 = vmax.f32 %v230, 0.0
      %v247 = vmax.f32 %v231, 0.0
      %v248 = vmax.f32 %v232, 0.0
      %v249 = vmax.f32 %v233, 0.0
      %v250 = vmax.f32 %v234, 0.0
      %v251 = vmax.f32 %v235, 0.0
      %v252 = vpack.c.bf16 %v237, %v236
      %v253 = vpack.c.bf16 %v239, %v238
      %v254 = vpack.c.bf16 %v241, %v240
      %v255 = vpack.c.bf16 %v243, %v242
      %v256 = vpack.c.bf16 %v245, %v244
      %v257 = vpack.c.bf16 %v247, %v246
      %v258 = vpack.c.bf16 %v249, %v248
      %v259 = vpack.c.bf16 %v251, %v250
      %v268 = vunpack.c.l.b16 %v252
      %v269 = vunpack.c.h.b16 %v252
      %v270 = vunpack.c.l.b16 %v253
      %v271 = vunpack.c.h.b16 %v253
      %v272 = vunpack.c.l.b16 %v254
      %v273 = vunpack.c.h.b16 %v254
      %v274 = vunpack.c.l.b16 %v255
      %v275 = vunpack.c.h.b16 %v255
      %v276 = vunpack.c.l.b16 %v256
      %v277 = vunpack.c.h.b16 %v256
      %v278 = vunpack.c.l.b16 %v257
      %v279 = vunpack.c.h.b16 %v257
      %v280 = vunpack.c.l.b16 %v258
      %v281 = vunpack.c.h.b16 %v258
      %v282 = vunpack.c.l.b16 %v259
      %v283 = vunpack.c.h.b16 %v259
      %v284 = vpack.c.b16 %v268, %v268
      %v285 = vpack.c.b16 %v269, %v269
      %v286 = vpack.c.b16 %v270, %v270
      %v287 = vpack.c.b16 %v271, %v271
      %v288 = vpack.c.b16 %v272, %v272
      %v289 = vpack.c.b16 %v273, %v273
      %v290 = vpack.c.b16 %v274, %v274
      %v291 = vpack.c.b16 %v275, %v275
      %v292 = vpack.c.b16 %v276, %v276
      %v293 = vpack.c.b16 %v277, %v277
      %v294 = vpack.c.b16 %v278, %v278
      %v295 = vpack.c.b16 %v279, %v279
      %v296 = vpack.c.b16 %v280, %v280
      %v297 = vpack.c.b16 %v281, %v281
      %v298 = vpack.c.b16 %v282, %v282
      %v299 = vpack.c.b16 %v283, %v283
      %316 = vst [vmem:[%s172] sm:$0xf] %v284
      %317 = vst [vmem:[%s172 + $0x4] sm:$0xf] %v285
      %318 = vst [vmem:[%s172 + $0x8] sm:$0xf] %v286
      %319 = vst [vmem:[%s172 + $0xc] sm:$0xf] %v287
      %320 = vst [vmem:[%s172 + $0x10] sm:$0xf] %v288
      %321 = vst [vmem:[%s172 + $0x14] sm:$0xf] %v289
      %322 = vst [vmem:[%s172 + $0x18] sm:$0xf] %v290
      %323 = vst [vmem:[%s172 + $0x1c] sm:$0xf] %v291
      %324 = vst [vmem:[%s172 + $0x20] sm:$0xf] %v292
      %325 = vst [vmem:[%s172 + $0x24] sm:$0xf] %v293
      %326 = vst [vmem:[%s172 + $0x28] sm:$0xf] %v294
      %327 = vst [vmem:[%s172 + $0x2c] sm:$0xf] %v295
      %328 = vst [vmem:[%s172 + $0x30] sm:$0xf] %v296
      %329 = vst [vmem:[%s172 + $0x34] sm:$0xf] %v297
      %330 = vst [vmem:[%s172 + $0x38] sm:$0xf] %v298
      %331 = vst [vmem:[%s172 + $0x3c] sm:$0xf] %v299
      %s332 = smul.u32 16, %s14
      %p333 = scmp.lt.s32.totalorder %s332, 31
      %s334 = scalar_select %p333, %s332, 31
      %s335 = smul.addr %s334, 4
      %s336 = scalar_lea.vmem %s3, %s335
      // Predicated region
      $region33: #{resnet2_forward.16} parent=31 // pred_check
        %p337 = pneg %p100
      $region34: #{resnet2_forward.16} parent=31 // pred_check_branch
        %339 = sbr.rel (%p337) target = $region36
      $region35: #{resnet2_forward.16} parent=31 // pred_region
        %s340 = smul.u32 16, %s14
      $region36: #{resnet2_forward.16} parent=31 // pred_fallthru
        _
    $region32: #{resnet2_forward.16} parent=5 // pred_fallthru
      _
    %p341 = scmp.le.s32.totalorder 2, %s9
    // Predicated region
    $region37: #{resnet2_forward.16} parent=5 // pred_check
      %p342 = pneg %p341
    $region38: #{resnet2_forward.16} parent=5 // pred_check_branch
      %344 = sbr.rel (%p342) target = $region40
    $region39: #{resnet2_forward.16} parent=5 // pred_region
      %s345 = ssub.s32 %s9, 2
      // Predicated region
      $region41: #{resnet2_forward.16} parent=39 // pred_check
        %p346 = pneg %p106
      $region42: #{resnet2_forward.16} parent=39 // pred_check_branch
        %348 = sbr.rel (%p346) target = $region44
      $region43: #{resnet2_forward.16} parent=39 // pred_region
        %s349 = smul.u32 16, %s15
        %p350 = scmp.lt.s32.totalorder %s349, 31
        %s351 = scalar_select %p350, %s349, 31
        %s352 = smul.addr %s351, 4
        %s353 = scalar_lea.vmem %s3, %s352
      $region44: #{resnet2_forward.16} parent=39 // pred_fallthru
        _
    $region40: #{resnet2_forward.16} parent=5 // pred_fallthru
      _
  $region6: #{resnet2_forward.16} parent=0 // loop_footer
    %s13 = sadd.s32 1, %s9
  $region7: #{resnet2_forward.16} parent=0 // loop_footer_branch
    %8 = sbr.rel target = $region3
  $region8: #{resnet2_forward.16} parent=0 // loop_exit
    _

// kernel: resnet2_forward.15
$region0: #{resnet2_forward.15}
  #allocation0 [shape = 'u32[]', space=smem, size = 0x4, offset = 0x4, fixed_abs, tag = 'smem constant byte address 0x4 - core index']
  #allocation1 [shape = 'u32[144,128]{1,0:T(1,128)}', space=vmem, size = 0x12000, scoped, tag = 'internal scratch']
  %s0 = inlined_call_operand.vmem [shape: bf16[2048,27], index: 0, kind: input, shape index: {}]
  %s1 = inlined_call_operand.vmem [shape: bf16[27,16], index: 1, kind: input, shape index: {}]
  %s2 = inlined_call_operand.vmem [shape: f32[2048,16], index: 2, kind: output, shape index: {0}]
  %s3 = inlined_call_operand.vmem [shape: f32[16,16], index: 3, kind: output, shape index: {1}]
  %4 = xla_tuple %s2, %s3
  %s5 = sld [smem:[#allocation0]]
  $region49: #{resnet2_forward.15} parent=0
    _
  %s7 = ssub.s32 1, %s5
  %s8 = scalar_select 0, %s7, %s5
  loop: start=0, step=1, limit=4
  $region2: #{resnet2_forward.15} parent=0 // loop_pre_header
    _
  $region3: #{resnet2_forward.15} parent=0 // loop_header
    %s10 = sphi 0, %s14
    %p11 = scmp.ge.s32.totalorder %s10, 4
    %s20 = sphi 0, %s22
    %s23 = sphi 0, %s20
    %s24 = sphi 0, %s23
    %s40 = sphi 0, %s24
    %s44 = sphi 0, %s44
    %s46 = sphi 0, %s44
    %s47 = sphi 0, %s46
    %s61 = sphi 0, %s47
    %s67 = sphi 0, %s69
    %s70 = sphi 0, %s67
    %s71 = sphi 0, %s70
    %s87 = sphi 0, %s71
    %s93 = sphi 0, %s95
    %s96 = sphi 0, %s93
    %s97 = sphi 0, %s96
    %s113 = sphi 0, %s97
  $region4: #{resnet2_forward.15} parent=0 // loop_header_branch
    %13 = sbr.rel (%p11) target = $region8
  $region5: #{resnet2_forward.15} parent=0 // loop_body
    %s15 = ssub.s32 %s10, 1
    %s16 = ssub.s32 %s10, 2
    %s17 = sadd.s32 %s10, 1
    %s18 = ssub.s32 %s10, %s17
    %p19 = scmp.eq.s32.totalorder %s18, 0
    %s21 = sadd.s32 %s20, 1
    %s22 = scalar_select %p19, %s20, %s21
    %p25 = pneg %p19
    %p26 = scmp.eq.s32.totalorder %s10, 1
    %p27 = por %p25, %p26
    %p28 = scmp.ne.s32.totalorder %s20, %s23
    %p29 = scmp.eq.s32.totalorder %s10, 0
    %p30 = por %p28, %p29
    %p31 = scmp.ne.s32.totalorder %s20, %s23
    %p32 = scmp.eq.s32.totalorder %s15, 1
    %p33 = por %p31, %p32
    %p34 = scmp.ne.s32.totalorder %s23, %s24
    %p35 = scmp.eq.s32.totalorder %s15, 0
    %p36 = por %p34, %p35
    %p37 = scmp.ne.s32.totalorder %s23, %s24
    %p38 = scmp.eq.s32.totalorder %s16, 1
    %p39 = por %p37, %p38
    %p41 = scmp.ne.s32.totalorder %s24, %s40
    %p42 = scmp.eq.s32.totalorder %s16, 0
    %p43 = por %p41, %p42
    %s45 = sadd.s32 %s44, 1
    %p48 = scmp.eq.s32.totalorder %s10, 1
    %p49 = scmp.ne.s32.totalorder %s44, %s46
    %p50 = scmp.eq.s32.totalorder %s10, 0
    %p51 = por %p49, %p50
    %p52 = scmp.ne.s32.totalorder %s44, %s46
    %p53 = scmp.eq.s32.totalorder %s15, 1
    %p54 = por %p52, %p53
    %p55 = scmp.ne.s32.totalorder %s46, %s47
    %p56 = scmp.eq.s32.totalorder %s15, 0
    %p57 = por %p55, %p56
    %p58 = scmp.ne.s32.totalorder %s46, %s47
    %p59 = scmp.eq.s32.totalorder %s16, 1
    %p60 = por %p58, %p59
    %p62 = scmp.ne.s32.totalorder %s47, %s61
    %p63 = scmp.eq.s32.totalorder %s16, 0
    %p64 = por %p62, %p63
    %s65 = ssub.s32 %s10, %s17
    %p66 = scmp.eq.s32.totalorder %s65, 0
    %s68 = sadd.s32 %s67, 1
    %s69 = scalar_select %p66, %s67, %s68
    %p72 = pneg %p66
    %p73 = scmp.eq.s32.totalorder %s10, 1
    %p74 = por %p72, %p73
    %p75 = scmp.ne.s32.totalorder %s67, %s70
    %p76 = scmp.eq.s32.totalorder %s10, 0
    %p77 = por %p75, %p76
    %p78 = scmp.ne.s32.totalorder %s67, %s70
    %p79 = scmp.eq.s32.totalorder %s15, 1
    %p80 = por %p78, %p79
    %p81 = scmp.ne.s32.totalorder %s70, %s71
    %p82 = scmp.eq.s32.totalorder %s15, 0
    %p83 = por %p81, %p82
    %p84 = scmp.ne.s32.totalorder %s70, %s71
    %p85 = scmp.eq.s32.totalorder %s16, 1
    %p86 = por %p84, %p85
    %p88 = scmp.ne.s32.totalorder %s71, %s87
    %p89 = scmp.eq.s32.totalorder %s16, 0
    %p90 = por %p88, %p89
    %s91 = ssub.s32 %s10, %s17
    %p92 = scmp.eq.s32.totalorder %s91, 0
    %s94 = sadd.s32 %s93, 1
    %s95 = scalar_select %p92, %s93, %s94
    %p98 = pneg %p92
    %p99 = scmp.eq.s32.totalorder %s10, 1
    %p100 = por %p98, %p99
    %p101 = scmp.ne.s32.totalorder %s93, %s96
    %p102 = scmp.eq.s32.totalorder %s10, 0
    %p103 = por %p101, %p102
    %p104 = scmp.ne.s32.totalorder %s93, %s96
    %p105 = scmp.eq.s32.totalorder %s15, 1
    %p106 = por %p104, %p105
    %p107 = scmp.ne.s32.totalorder %s96, %s97
    %p108 = scmp.eq.s32.totalorder %s15, 0
    %p109 = por %p107, %p108
    %p110 = scmp.ne.s32.totalorder %s96, %s97
    %p111 = scmp.eq.s32.totalorder %s16, 1
    %p112 = por %p110, %p111
    %p114 = scmp.ne.s32.totalorder %s97, %s113
    %p115 = scmp.eq.s32.totalorder %s16, 0
    %p116 = por %p114, %p115
    %p117 = scmp.le.s32.totalorder 1, %s10
    %p118 = scmp.lt.s32.totalorder %s10, 3
    %p119 = pnand %p117, %p118
    %p120 = pneg %p119
    // Predicated region
    $region9: #{resnet2_forward.15} parent=5 // pred_check
      _
    $region10: #{resnet2_forward.15} parent=5 // pred_check_branch
      %122 = sbr.rel (%p119) target = $region12
    $region11: #{resnet2_forward.15} parent=5 // pred_region
      %s123 = ssub.s32 %s10, 1
      // Predicated region
      $region13: #{resnet2_forward.15} parent=11 // pred_check
        %p124 = pneg %p57
      $region14: #{resnet2_forward.15} parent=11 // pred_check_branch
        %126 = sbr.rel (%p124) target = $region16
      $region15: #{resnet2_forward.15} parent=11 // pred_region
        _
      $region16: #{resnet2_forward.15} parent=11 // pred_fallthru
        _
    $region12: #{resnet2_forward.15} parent=5 // pred_fallthru
      _
    %p127 = scmp.lt.s32.totalorder %s10, 2
    // Predicated region
    $region17: #{resnet2_forward.15} parent=5 // pred_check
      %p128 = pneg %p127
    $region18: #{resnet2_forward.15} parent=5 // pred_check_branch
      %130 = sbr.rel (%p128) target = $region20
    $region19: #{resnet2_forward.15} parent=5 // pred_region
      // Predicated region
      $region21: #{resnet2_forward.15} parent=19 // pred_check
        %p131 = pneg %p30
      $region22: #{resnet2_forward.15} parent=19 // pred_check_branch
        %133 = sbr.rel (%p131) target = $region24
      $region23: #{resnet2_forward.15} parent=19 // pred_region
        %s134 = smul.u32 128, %s10
        %p135 = scmp.lt.s32.totalorder %s134, 255
        %s136 = scalar_select %p135, %s134, 255
        %s137 = smul.addr %s136, 4
        %s138 = scalar_lea.vmem %s0, %s137
        %s139 = smul.u32 128, %s10
      $region24: #{resnet2_forward.15} parent=19 // pred_fallthru
        _
    $region20: #{resnet2_forward.15} parent=5 // pred_fallthru
      _
    %p140 = scmp.le.s32.totalorder 1, %s10
    %p141 = scmp.lt.s32.totalorder %s10, 3
    %p142 = pnand %p140, %p141
    %p143 = pneg %p142
    // Predicated region
    $region25: #{resnet2_forward.15} parent=5 // pred_check
      _
    $region26: #{resnet2_forward.15} parent=5 // pred_check_branch
      %145 = sbr.rel (%p142) target = $region28
    $region27: #{resnet2_forward.15} parent=5 // pred_region
      %s146 = ssub.s32 %s10, 1
      %s147 = smul.u32 128, %s15
      %p148 = scmp.lt.s32.totalorder %s147, 255
      %s149 = scalar_select %p148, %s147, 255
      %s150 = smul.addr %s149, 4
      %s151 = scalar_lea.vmem %s0, %s150
      %p152 = pneg %p36
      %p153 = pneg %p33
      %p154 = pneg %p57
      %p155 = pneg %p54
      %p156 = pneg %p83
      %p157 = pneg %p80
      %s158 = smul.u32 128, %s15
      %p159 = scmp.lt.s32.totalorder %s158, 255
      %s160 = scalar_select %p159, %s158, 255
      %s161 = smul.addr %s160, 8
      %s162 = scalar_lea.vmem %s2, %s161
      %p163 = pneg %p109
      %p164 = pneg %p106
      %p165 = scmp.lt.s32.totalorder %s15, 1
      %s166 = scalar_select %p165, %s15, 1
      %s167 = smul.addr %s166, 8
      %s168 = scalar_lea.vmem %s3, %s167
      %s169 = smul.u32 128, %s15
      %p170 = scmp.lt.s32.totalorder %s169, 255
      %s171 = scalar_select %p170, %s169, 255
      %s172 = smul.addr %s171, 4
      %s173 = scalar_lea.vmem %s0, %s172
      %s174 = smul.u32 128, %s15
      %s175 = smul.u32 128, %s15
      %p176 = scmp.lt.s32.totalorder %s175, 255
      %s177 = scalar_select %p176, %s175, 255
      %s178 = smul.addr %s177, 8
      %s179 = scalar_lea.vmem %s2, %s178
      %s180 = smul.u32 128, %s15
      %p181 = scmp.lt.s32.totalorder %s15, 1
      %s182 = scalar_select %p181, %s15, 1
      %s183 = smul.addr %s182, 8
      %s184 = scalar_lea.vmem %s3, %s183
      %v186 = vld [vmem:[%s173] sm:$0xf]
      %v187 = vld [vmem:[%s173 + $0x4] sm:$0xf]
      %v188 = vld [vmem:[%s173 + $0x8] sm:$0xf]
      %v189 = vld [vmem:[%s173 + $0xc] sm:$0xf]
      %v190 = vld [vmem:[%s173 + $0x10] sm:$0xf]
      %v191 = vld [vmem:[%s173 + $0x14] sm:$0xf]
      %v192 = vld [vmem:[%s173 + $0x18] sm:$0xf]
      %v193 = vld [vmem:[%s173 + $0x1c] sm:$0xf]
      %v194 = vld [vmem:[%s173 + $0x20] sm:$0xf]
      %v195 = vld [vmem:[%s173 + $0x24] sm:$0xf]
      %v196 = vld [vmem:[%s173 + $0x28] sm:$0xf]
      %v197 = vld [vmem:[%s173 + $0x2c] sm:$0xf]
      %v198 = vld [vmem:[%s173 + $0x30] sm:$0xf]
      %v199 = vld [vmem:[%s173 + $0x34] sm:$0xf]
      %v200 = vld [vmem:[%s173 + $0x38] sm:$0xf]
      %v201 = vld [vmem:[%s173 + $0x3c] sm:$0xf]
      %v202 = vld [vmem:[%s173 + $0x40] sm:$0xf]
      %v203 = vld [vmem:[%s173 + $0x44] sm:$0xf]
      %v204 = vld [vmem:[%s173 + $0x48] sm:$0xf]
      %v205 = vld [vmem:[%s173 + $0x4c] sm:$0xf]
      %v206 = vld [vmem:[%s173 + $0x50] sm:$0xf]
      %v207 = vld [vmem:[%s173 + $0x54] sm:$0xf]
      %v208 = vld [vmem:[%s173 + $0x58] sm:$0xf]
      %v209 = vld [vmem:[%s173 + $0x5c] sm:$0xf]
      %v210 = vld [vmem:[%s173 + $0x60] sm:$0xf]
      %v211 = vld [vmem:[%s173 + $0x64] sm:$0xf]
      %v212 = vld [vmem:[%s173 + $0x68] sm:$0xf]
      %v213 = vld [vmem:[%s173 + $0x6c] sm:$0xf]
      %v214 = vld [vmem:[%s173 + $0x70] sm:$0xf]
      %v215 = vld [vmem:[%s173 + $0x74] sm:$0xf]
      %v216 = vld [vmem:[%s173 + $0x78] sm:$0xf]
      %v217 = vld [vmem:[%s173 + $0x7c] sm:$0xf]
      %v218 = vld [vmem:[%s173 + $0x80] sm:$0xf]
      %v219 = vld [vmem:[%s173 + $0x84] sm:$0xf]
      %v220 = vld [vmem:[%s173 + $0x88] sm:$0xf]
      %v221 = vld [vmem:[%s173 + $0x8c] sm:$0xf]
      %v222 = vld [vmem:[%s173 + $0x90] sm:$0xf]
      %v223 = vld [vmem:[%s173 + $0x94] sm:$0xf]
      %v224 = vld [vmem:[%s173 + $0x98] sm:$0xf]
      %v225 = vld [vmem:[%s173 + $0x9c] sm:$0xf]
      %v226 = vld [vmem:[%s173 + $0xa0] sm:$0xf]
      %v227 = vld [vmem:[%s173 + $0xa4] sm:$0xf]
      %v228 = vld [vmem:[%s173 + $0xa8] sm:$0xf]
      %v229 = vld [vmem:[%s173 + $0xac] sm:$0xf]
      %v230 = vld [vmem:[%s173 + $0xb0] sm:$0xf]
      %v231 = vld [vmem:[%s173 + $0xb4] sm:$0xf]
      %v232 = vld [vmem:[%s173 + $0xb8] sm:$0xf]
      %v233 = vld [vmem:[%s173 + $0xbc] sm:$0xf]
      %v234 = vld [vmem:[%s173 + $0xc0] sm:$0xf]
      %v235 = vld [vmem:[%s173 + $0xc4] sm:$0xf]
      %v236 = vld [vmem:[%s173 + $0xc8] sm:$0xf]
      %v237 = vld [vmem:[%s173 + $0xcc] sm:$0xf]
      %v238 = vld [vmem:[%s173 + $0xd0] sm:$0xf]
      %v239 = vld [vmem:[%s173 + $0xd4] sm:$0xf]
      %v240 = vld [vmem:[%s173 + $0xd8] sm:$0xf]
      %v241 = vld [vmem:[%s173 + $0xdc] sm:$0xf]
      %v242 = vld [vmem:[%s173 + $0xe0] sm:$0xf]
      %v243 = vld [vmem:[%s173 + $0xe4] sm:$0xf]
      %v244 = vld [vmem:[%s173 + $0xe8] sm:$0xf]
      %v245 = vld [vmem:[%s173 + $0xec] sm:$0xf]
      %v246 = vld [vmem:[%s173 + $0xf0] sm:$0xf]
      %v247 = vld [vmem:[%s173 + $0xf4] sm:$0xf]
      %v248 = vld [vmem:[%s173 + $0xf8] sm:$0xf]
      %v249 = vld [vmem:[%s173 + $0xfc] sm:$0xf]
      %v250 = vld [vmem:[%s173 + $0x100] sm:$0xf]
      %v251 = vld [vmem:[%s173 + $0x104] sm:$0xf]
      %v252 = vld [vmem:[%s173 + $0x108] sm:$0xf]
      %v253 = vld [vmem:[%s173 + $0x10c] sm:$0xf]
      %v254 = vld [vmem:[%s173 + $0x110] sm:$0xf]
      %v255 = vld [vmem:[%s173 + $0x114] sm:$0xf]
      %v256 = vld [vmem:[%s173 + $0x118] sm:$0xf]
      %v257 = vld [vmem:[%s173 + $0x11c] sm:$0xf]
      %v258 = vld [vmem:[%s173 + $0x120] sm:$0xf]
      %v259 = vld [vmem:[%s173 + $0x124] sm:$0xf]
      %v260 = vld [vmem:[%s173 + $0x128] sm:$0xf]
      %v261 = vld [vmem:[%s173 + $0x12c] sm:$0xf]
      %v262 = vld [vmem:[%s173 + $0x130] sm:$0xf]
      %v263 = vld [vmem:[%s173 + $0x134] sm:$0xf]
      %v264 = vld [vmem:[%s173 + $0x138] sm:$0xf]
      %v265 = vld [vmem:[%s173 + $0x13c] sm:$0xf]
      %v266 = vld [vmem:[%s173 + $0x140] sm:$0xf]
      %v267 = vld [vmem:[%s173 + $0x144] sm:$0xf]
      %v268 = vld [vmem:[%s173 + $0x148] sm:$0xf]
      %v269 = vld [vmem:[%s173 + $0x14c] sm:$0xf]
      %v270 = vld [vmem:[%s173 + $0x150] sm:$0xf]
      %v271 = vld [vmem:[%s173 + $0x154] sm:$0xf]
      %v272 = vld [vmem:[%s173 + $0x158] sm:$0xf]
      %v273 = vld [vmem:[%s173 + $0x15c] sm:$0xf]
      %v274 = vld [vmem:[%s173 + $0x160] sm:$0xf]
      %v275 = vld [vmem:[%s173 + $0x164] sm:$0xf]
      %v276 = vld [vmem:[%s173 + $0x168] sm:$0xf]
      %v277 = vld [vmem:[%s173 + $0x16c] sm:$0xf]
      %v278 = vld [vmem:[%s173 + $0x170] sm:$0xf]
      %v279 = vld [vmem:[%s173 + $0x174] sm:$0xf]
      %v280 = vld [vmem:[%s173 + $0x178] sm:$0xf]
      %v281 = vld [vmem:[%s173 + $0x17c] sm:$0xf]
      %v282 = vld [vmem:[%s173 + $0x180] sm:$0xf]
      %v283 = vld [vmem:[%s173 + $0x184] sm:$0xf]
      %v284 = vld [vmem:[%s173 + $0x188] sm:$0xf]
      %v285 = vld [vmem:[%s173 + $0x18c] sm:$0xf]
      %v286 = vld [vmem:[%s173 + $0x190] sm:$0xf]
      %v287 = vld [vmem:[%s173 + $0x194] sm:$0xf]
      %v288 = vld [vmem:[%s173 + $0x198] sm:$0xf]
      %v289 = vld [vmem:[%s173 + $0x19c] sm:$0xf]
      %v290 = vld [vmem:[%s173 + $0x1a0] sm:$0xf]
      %v291 = vld [vmem:[%s173 + $0x1a4] sm:$0xf]
      %v292 = vld [vmem:[%s173 + $0x1a8] sm:$0xf]
      %v293 = vld [vmem:[%s173 + $0x1ac] sm:$0xf]
      %v294 = vld [vmem:[%s173 + $0x1b0] sm:$0xf]
      %v295 = vld [vmem:[%s173 + $0x1b4] sm:$0xf]
      %v296 = vld [vmem:[%s173 + $0x1b8] sm:$0xf]
      %v297 = vld [vmem:[%s173 + $0x1bc] sm:$0xf]
      %v298 = vld [vmem:[%s173 + $0x1c0] sm:$0xf]
      %v299 = vld [vmem:[%s173 + $0x1c4] sm:$0xf]
      %v300 = vld [vmem:[%s173 + $0x1c8] sm:$0xf]
      %v301 = vld [vmem:[%s173 + $0x1cc] sm:$0xf]
      %v302 = vld [vmem:[%s173 + $0x1d0] sm:$0xf]
      %v303 = vld [vmem:[%s173 + $0x1d4] sm:$0xf]
      %v304 = vld [vmem:[%s173 + $0x1d8] sm:$0xf]
      %v305 = vld [vmem:[%s173 + $0x1dc] sm:$0xf]
      %v306 = vld [vmem:[%s173 + $0x1e0] sm:$0xf]
      %v307 = vld [vmem:[%s173 + $0x1e4] sm:$0xf]
      %v308 = vld [vmem:[%s173 + $0x1e8] sm:$0xf]
      %v309 = vld [vmem:[%s173 + $0x1ec] sm:$0xf]
      %v310 = vld [vmem:[%s173 + $0x1f0] sm:$0xf]
      %v311 = vld [vmem:[%s173 + $0x1f4] sm:$0xf]
      %v312 = vld [vmem:[%s173 + $0x1f8] sm:$0xf]
      %v313 = vld [vmem:[%s173 + $0x1fc] sm:$0xf]
      %v314 = vld [vmem:[%s1] sm:$0xf]
      %v315 = vld [vmem:[%s1 + $0x4] sm:$0xf]
      %v316 = vld [vmem:[%s1 + $0x8] sm:$0xf]
      %v317 = vld [vmem:[%s1 + $0xc] sm:$0x3]
      %v446 = vunpack.c.l.b16 %v186
      %v447 = vunpack.c.l.b16 %v187
      %v448 = vunpack.c.l.b16 %v188
      %v449 = vunpack.c.l.b16 %v189
      %v450 = vunpack.c.l.b16 %v190
      %v451 = vunpack.c.l.b16 %v191
      %v452 = vunpack.c.l.b16 %v192
      %v453 = vunpack.c.l.b16 %v193
      %v454 = vunpack.c.l.b16 %v194
      %v455 = vunpack.c.l.b16 %v195
      %v456 = vunpack.c.l.b16 %v196
      %v457 = vunpack.c.l.b16 %v197
      %v458 = vunpack.c.l.b16 %v198
      %v459 = vunpack.c.l.b16 %v199
      %v460 = vunpack.c.l.b16 %v200
      %v461 = vunpack.c.l.b16 %v201
      %v462 = vunpack.c.l.b16 %v202
      %v463 = vunpack.c.l.b16 %v203
      %v464 = vunpack.c.l.b16 %v204
      %v465 = vunpack.c.l.b16 %v205
      %v466 = vunpack.c.l.b16 %v206
      %v467 = vunpack.c.l.b16 %v207
      %v468 = vunpack.c.l.b16 %v208
      %v469 = vunpack.c.l.b16 %v209
      %v470 = vunpack.c.l.b16 %v210
      %v471 = vunpack.c.l.b16 %v211
      %v472 = vunpack.c.l.b16 %v212
      %v473 = vunpack.c.l.b16 %v213
      %v474 = vunpack.c.l.b16 %v214
      %v475 = vunpack.c.l.b16 %v215
      %v476 = vunpack.c.l.b16 %v216
      %v477 = vunpack.c.l.b16 %v217
      %v478 = vunpack.c.l.b16 %v218
      %v479 = vunpack.c.l.b16 %v219
      %v480 = vunpack.c.l.b16 %v220
      %v481 = vunpack.c.l.b16 %v221
      %v482 = vunpack.c.l.b16 %v222
      %v483 = vunpack.c.l.b16 %v223
      %v484 = vunpack.c.l.b16 %v224
      %v485 = vunpack.c.l.b16 %v225
      %v486 = vunpack.c.l.b16 %v226
      %v487 = vunpack.c.l.b16 %v227
      %v488 = vunpack.c.l.b16 %v228
      %v489 = vunpack.c.l.b16 %v229
      %v490 = vunpack.c.l.b16 %v230
      %v491 = vunpack.c.l.b16 %v231
      %v492 = vunpack.c.l.b16 %v232
      %v493 = vunpack.c.l.b16 %v233
      %v494 = vunpack.c.l.b16 %v234
      %v495 = vunpack.c.l.b16 %v235
      %v496 = vunpack.c.l.b16 %v236
      %v497 = vunpack.c.l.b16 %v237
      %v498 = vunpack.c.l.b16 %v238
      %v499 = vunpack.c.l.b16 %v239
      %v500 = vunpack.c.l.b16 %v240
      %v501 = vunpack.c.l.b16 %v241
      %v502 = vunpack.c.l.b16 %v242
      %v503 = vunpack.c.l.b16 %v243
      %v504 = vunpack.c.l.b16 %v244
      %v505 = vunpack.c.l.b16 %v245
      %v506 = vunpack.c.l.b16 %v246
      %v507 = vunpack.c.l.b16 %v247
      %v508 = vunpack.c.l.b16 %v248
      %v509 = vunpack.c.l.b16 %v249
      %v510 = vunpack.c.l.b16 %v250
      %v511 = vunpack.c.l.b16 %v251
      %v512 = vunpack.c.l.b16 %v252
      %v513 = vunpack.c.l.b16 %v253
      %v514 = vunpack.c.l.b16 %v254
      %v515 = vunpack.c.l.b16 %v255
      %v516 = vunpack.c.l.b16 %v256
      %v517 = vunpack.c.l.b16 %v257
      %v518 = vunpack.c.l.b16 %v258
      %v519 = vunpack.c.l.b16 %v259
      %v520 = vunpack.c.l.b16 %v260
      %v521 = vunpack.c.l.b16 %v261
      %v522 = vunpack.c.l.b16 %v262
      %v523 = vunpack.c.l.b16 %v263
      %v524 = vunpack.c.l.b16 %v264
      %v525 = vunpack.c.l.b16 %v265
      %v526 = vunpack.c.l.b16 %v266
      %v527 = vunpack.c.l.b16 %v267
      %v528 = vunpack.c.l.b16 %v268
      %v529 = vunpack.c.l.b16 %v269
      %v530 = vunpack.c.l.b16 %v270
      %v531 = vunpack.c.l.b16 %v271
      %v532 = vunpack.c.l.b16 %v272
      %v533 = vunpack.c.l.b16 %v273
      %v534 = vunpack.c.l.b16 %v274
      %v535 = vunpack.c.l.b16 %v275
      %v536 = vunpack.c.l.b16 %v276
      %v537 = vunpack.c.l.b16 %v277
      %v538 = vunpack.c.l.b16 %v278
      %v539 = vunpack.c.l.b16 %v279
      %v540 = vunpack.c.l.b16 %v280
      %v541 = vunpack.c.l.b16 %v281
      %v542 = vunpack.c.l.b16 %v282
      %v543 = vunpack.c.l.b16 %v283
      %v544 = vunpack.c.l.b16 %v284
      %v545 = vunpack.c.l.b16 %v285
      %v546 = vunpack.c.l.b16 %v286
      %v547 = vunpack.c.l.b16 %v287
      %v548 = vunpack.c.l.b16 %v288
      %v549 = vunpack.c.l.b16 %v289
      %v550 = vunpack.c.l.b16 %v290
      %v551 = vunpack.c.l.b16 %v291
      %v552 = vunpack.c.l.b16 %v292
      %v553 = vunpack.c.l.b16 %v293
      %v554 = vunpack.c.l.b16 %v294
      %v555 = vunpack.c.l.b16 %v295
      %v556 = vunpack.c.l.b16 %v296
      %v557 = vunpack.c.l.b16 %v297
      %v558 = vunpack.c.l.b16 %v298
      %v559 = vunpack.c.l.b16 %v299
      %v560 = vunpack.c.l.b16 %v300
      %v561 = vunpack.c.l.b16 %v301
      %v562 = vunpack.c.l.b16 %v302
      %v563 = vunpack.c.l.b16 %v303
      %v564 = vunpack.c.l.b16 %v304
      %v565 = vunpack.c.l.b16 %v305
      %v566 = vunpack.c.l.b16 %v306
      %v567 = vunpack.c.l.b16 %v307
      %v568 = vunpack.c.l.b16 %v308
      %v569 = vunpack.c.l.b16 %v309
      %v570 = vunpack.c.l.b16 %v310
      %v571 = vunpack.c.l.b16 %v311
      %v572 = vunpack.c.l.b16 %v312
      %v573 = vunpack.c.l.b16 %v313
      %v574 = vpack.c.b16 %v447, %v446
      %v575 = vpack.c.b16 %v449, %v448
      %v576 = vpack.c.b16 %v451, %v450
      %v577 = vpack.c.b16 %v453, %v452
      %v578 = vpack.c.b16 %v455, %v454
      %v579 = vpack.c.b16 %v457, %v456
      %v580 = vpack.c.b16 %v459, %v458
      %v581 = vpack.c.b16 %v461, %v460
      %v582 = vpack.c.b16 %v463, %v462
      %v583 = vpack.c.b16 %v465, %v464
      %v584 = vpack.c.b16 %v467, %v466
      %v585 = vpack.c.b16 %v469, %v468
      %v586 = vpack.c.b16 %v471, %v470
      %v587 = vpack.c.b16 %v473, %v472
      %v588 = vpack.c.b16 %v475, %v474
      %v589 = vpack.c.b16 %v477, %v476
      %v590 = vpack.c.b16 %v479, %v478
      %v591 = vpack.c.b16 %v481, %v480
      %v592 = vpack.c.b16 %v483, %v482
      %v593 = vpack.c.b16 %v485, %v484
      %v594 = vpack.c.b16 %v487, %v486
      %v595 = vpack.c.b16 %v489, %v488
      %v596 = vpack.c.b16 %v491, %v490
      %v597 = vpack.c.b16 %v493, %v492
      %v598 = vpack.c.b16 %v495, %v494
      %v599 = vpack.c.b16 %v497, %v496
      %v600 = vpack.c.b16 %v499, %v498
      %v601 = vpack.c.b16 %v501, %v500
      %v602 = vpack.c.b16 %v503, %v502
      %v603 = vpack.c.b16 %v505, %v504
      %v604 = vpack.c.b16 %v507, %v506
      %v605 = vpack.c.b16 %v509, %v508
      %v606 = vpack.c.b16 %v511, %v510
      %v607 = vpack.c.b16 %v513, %v512
      %v608 = vpack.c.b16 %v515, %v514
      %v609 = vpack.c.b16 %v517, %v516
      %v610 = vpack.c.b16 %v519, %v518
      %v611 = vpack.c.b16 %v521, %v520
      %v612 = vpack.c.b16 %v523, %v522
      %v613 = vpack.c.b16 %v525, %v524
      %v614 = vpack.c.b16 %v527, %v526
      %v615 = vpack.c.b16 %v529, %v528
      %v616 = vpack.c.b16 %v531, %v530
      %v617 = vpack.c.b16 %v533, %v532
      %v618 = vpack.c.b16 %v535, %v534
      %v619 = vpack.c.b16 %v537, %v536
      %v620 = vpack.c.b16 %v539, %v538
      %v621 = vpack.c.b16 %v541, %v540
      %v622 = vpack.c.b16 %v543, %v542
      %v623 = vpack.c.b16 %v545, %v544
      %v624 = vpack.c.b16 %v547, %v546
      %v625 = vpack.c.b16 %v549, %v548
      %v626 = vpack.c.b16 %v551, %v550
      %v627 = vpack.c.b16 %v553, %v552
      %v628 = vpack.c.b16 %v555, %v554
      %v629 = vpack.c.b16 %v557, %v556
      %v630 = vpack.c.b16 %v559, %v558
      %v631 = vpack.c.b16 %v561, %v560
      %v632 = vpack.c.b16 %v563, %v562
      %v633 = vpack.c.b16 %v565, %v564
      %v634 = vpack.c.b16 %v567, %v566
      %v635 = vpack.c.b16 %v569, %v568
      %v636 = vpack.c.b16 %v571, %v570
      %v637 = vpack.c.b16 %v573, %v572
      %v642 = vunpack.c.l.b16 %v314
      %v643 = vunpack.c.l.b16 %v315
      %v644 = vunpack.c.l.b16 %v316
      %v645 = vunpack.c.l.b16 %v317
      %v646 = vpack.c.b16 %v643, %v642
      %v647 = vpack.c.b16 %v645, %v644
      %vm649 = vcmask 220160
      %v651 = vsel %vm649, %v574, 0
      %v654 = vsel %vm649, %v575, 0
      %v657 = vsel %vm649, %v576, 0
      %v660 = vsel %vm649, %v577, 0
      %v663 = vsel %vm649, %v578, 0
      %v666 = vsel %vm649, %v579, 0
      %v669 = vsel %vm649, %v580, 0
      %v672 = vsel %vm649, %v581, 0
      %v675 = vsel %vm649, %v582, 0
      %v678 = vsel %vm649, %v583, 0
      %v681 = vsel %vm649, %v584, 0
      %v684 = vsel %vm649, %v585, 0
      %v687 = vsel %vm649, %v586, 0
      %v690 = vsel %vm649, %v587, 0
      %v693 = vsel %vm649, %v588, 0
      %v696 = vsel %vm649, %v589, 0
      %v699 = vsel %vm649, %v590, 0
      %v702 = vsel %vm649, %v591, 0
      %v705 = vsel %vm649, %v592, 0
      %v708 = vsel %vm649, %v593, 0
      %v711 = vsel %vm649, %v594, 0
      %v714 = vsel %vm649, %v595, 0
      %v717 = vsel %vm649, %v596, 0
      %v720 = vsel %vm649, %v597, 0
      %v723 = vsel %vm649, %v598, 0
      %v726 = vsel %vm649, %v599, 0
      %v729 = vsel %vm649, %v600, 0
      %v732 = vsel %vm649, %v601, 0
      %v735 = vsel %vm649, %v602, 0
      %v738 = vsel %vm649, %v603, 0
      %v741 = vsel %vm649, %v604, 0
      %v744 = vsel %vm649, %v605, 0
      %v747 = vsel %vm649, %v606, 0
      %v750 = vsel %vm649, %v607, 0
      %v753 = vsel %vm649, %v608, 0
      %v756 = vsel %vm649, %v609, 0
      %v759 = vsel %vm649, %v610, 0
      %v762 = vsel %vm649, %v611, 0
      %v765 = vsel %vm649, %v612, 0
      %v768 = vsel %vm649, %v613, 0
      %v771 = vsel %vm649, %v614, 0
      %v774 = vsel %vm649, %v615, 0
      %v777 = vsel %vm649, %v616, 0
      %v780 = vsel %vm649, %v617, 0
      %v783 = vsel %vm649, %v618, 0
      %v786 = vsel %vm649, %v619, 0
      %v789 = vsel %vm649, %v620, 0
      %v792 = vsel %vm649, %v621, 0
      %v795 = vsel %vm649, %v622, 0
      %v798 = vsel %vm649, %v623, 0
      %v801 = vsel %vm649, %v624, 0
      %v804 = vsel %vm649, %v625, 0
      %v807 = vsel %vm649, %v626, 0
      %v810 = vsel %vm649, %v627, 0
      %v813 = vsel %vm649, %v628, 0
      %v816 = vsel %vm649, %v629, 0
      %v819 = vsel %vm649, %v630, 0
      %v822 = vsel %vm649, %v631, 0
      %v825 = vsel %vm649, %v632, 0
      %v828 = vsel %vm649, %v633, 0
      %v831 = vsel %vm649, %v634, 0
      %v834 = vsel %vm649, %v635, 0
      %v837 = vsel %vm649, %v636, 0
      %v840 = vsel %vm649, %v637, 0
      %vm842 = vcmask 1044480
      %vm843 = vcmask 1045504
      %v844 = vsel %vm842, 4294967295, 65535
      %v845 = vsel %vm843, %v844, 0
      %v847 = vand.u32 %v647, %v845
      %849 = vmatprep.subr.bf16.mxu0 0
      %850 = vmatpush1.bf16.msra.mxu0 0
      %851 = vmatprep.subr.bf16.mxu0 0
      %852 = vmatpush1.bf16.msra.mxu0 0
      %853 = vmatprep.subr.bf16.mxu0 0
      %854 = vmatpush1.bf16.msra.mxu0 0
      %855 = vmatprep.subr.bf16.mxu0 0
      %856 = vmatpush1.bf16.msra.mxu0 0
      %857 = vmatprep.subr.bf16.mxu0 0
      %858 = vmatpush1.bf16.msra.mxu0 0
      %859 = vmatprep.subr.bf16.mxu0 0
      %860 = vmatpush1.bf16.msra.mxu0 0
      %861 = vmatprep.subr.bf16.mxu0 0
      %862 = vmatpush1.bf16.msra.mxu0 %v847
      %863 = vmatprep.subr.bf16.mxu0 0
      %864 = vmatpush1.bf16.msra.mxu0 %v646
      %865 = vmatprep.subr.bf16.mxu0 0
      %866 = vmatpush2.bf16.msra.mxu0 0
      %867 = vmatprep.subr.bf16.mxu0 0
      %868 = vmatpush2.bf16.msra.mxu0 0
      %869 = vmatprep.subr.bf16.mxu0 0
      %870 = vmatpush2.bf16.msra.mxu0 0
      %871 = vmatprep.subr.bf16.mxu0 0
      %872 = vmatpush2.bf16.msra.mxu0 0
      %873 = vmatprep.subr.bf16.mxu0 0
      %874 = vmatpush2.bf16.msra.mxu0 0
      %875 = vmatprep.subr.bf16.mxu0 0
      %876 = vmatpush2.bf16.msra.mxu0 0
      %877 = vmatprep.subr.bf16.mxu0 0
      %878 = vmatpush2.bf16.msra.mxu0 0
      %879 = vmatprep.subr.bf16.mxu0 0
      %880 = vmatpush2.bf16.msra.mxu0 0
      %881 = vmatprep.mubr.bf16.mxu0 0
      %882 = vmatmul.mubr.bf16.gmra.mxu0 %v651
      %v883 = vpop.f32.mrf.mxu0
      %v884 = vadd.f32 0.0, %v883
      %v885 = vpop.f32.mrf.mxu0
      %v886 = vpop.f32.mrf.mxu0
      %v887 = vadd.f32 0.0, %v886
      %v888 = vpop.f32.mrf.mxu0
      %889 = vmatprep.mubr.bf16.mxu0 0
      %890 = vmatmul.mubr.bf16.gmra.mxu0 %v654
      %v891 = vpop.f32.mrf.mxu0
      %v892 = vadd.f32 0.0, %v891
      %v893 = vpop.f32.mrf.mxu0
      %v894 = vpop.f32.mrf.mxu0
      %v895 = vadd.f32 0.0, %v894
      %v896 = vpop.f32.mrf.mxu0
      %897 = vmatprep.mubr.bf16.mxu0 0
      %898 = vmatmul.mubr.bf16.gmra.mxu0 %v657
      %v899 = vpop.f32.mrf.mxu0
      %v900 = vadd.f32 0.0, %v899
      %v901 = vpop.f32.mrf.mxu0
      %v902 = vpop.f32.mrf.mxu0
      %v903 = vadd.f32 0.0, %v902
      %v904 = vpop.f32.mrf.mxu0
      %905 = vmatprep.mubr.bf16.mxu0 0
      %906 = vmatmul.mubr.bf16.gmra.mxu0 %v660
      %v907 = vpop.f32.mrf.mxu0
      %v908 = vadd.f32 0.0, %v907
      %v909 = vpop.f32.mrf.mxu0
      %v910 = vpop.f32.mrf.mxu0
      %v911 = vadd.f32 0.0, %v910
      %v912 = vpop.f32.mrf.mxu0
      %913 = vmatprep.mubr.bf16.mxu0 0
      %914 = vmatmul.mubr.bf16.gmra.mxu0 %v663
      %v915 = vpop.f32.mrf.mxu0
      %v916 = vadd.f32 0.0, %v915
      %v917 = vpop.f32.mrf.mxu0
      %v918 = vpop.f32.mrf.mxu0
      %v919 = vadd.f32 0.0, %v918
      %v920 = vpop.f32.mrf.mxu0
      %921 = vmatprep.mubr.bf16.mxu0 0
      %922 = vmatmul.mubr.bf16.gmra.mxu0 %v666
      %v923 = vpop.f32.mrf.mxu0
      %v924 = vadd.f32 0.0, %v923
      %v925 = vpop.f32.mrf.mxu0
      %v926 = vpop.f32.mrf.mxu0
      %v927 = vadd.f32 0.0, %v926
      %v928 = vpop.f32.mrf.mxu0
      %929 = vmatprep.mubr.bf16.mxu0 0
      %930 = vmatmul.mubr.bf16.gmra.mxu0 %v669
      %v931 = vpop.f32.mrf.mxu0
      %v932 = vadd.f32 0.0, %v931
      %v933 = vpop.f32.mrf.mxu0
      %v934 = vpop.f32.mrf.mxu0
      %v935 = vadd.f32 0.0, %v934
      %v936 = vpop.f32.mrf.mxu0
      %937 = vmatprep.mubr.bf16.mxu0 0
      %938 = vmatmul.mubr.bf16.gmra.mxu0 %v672
      %v939 = vpop.f32.mrf.mxu0
      %v940 = vadd.f32 0.0, %v939
      %v941 = vpop.f32.mrf.mxu0
      %v942 = vpop.f32.mrf.mxu0
      %v943 = vadd.f32 0.0, %v942
      %v944 = vpop.f32.mrf.mxu0
      %945 = vmatprep.mubr.bf16.mxu0 0
      %946 = vmatmul.mubr.bf16.gmra.mxu0 %v675
      %v947 = vpop.f32.mrf.mxu0
      %v948 = vadd.f32 0.0, %v947
      %v949 = vpop.f32.mrf.mxu0
      %v950 = vpop.f32.mrf.mxu0
      %v951 = vadd.f32 0.0, %v950
      %v952 = vpop.f32.mrf.mxu0
      %953 = vmatprep.mubr.bf16.mxu0 0
      %954 = vmatmul.mubr.bf16.gmra.mxu0 %v678
      %v955 = vpop.f32.mrf.mxu0
      %v956 = vadd.f32 0.0, %v955
      %v957 = vpop.f32.mrf.mxu0
      %v958 = vpop.f32.mrf.mxu0
      %v959 = vadd.f32 0.0, %v958
      %v960 = vpop.f32.mrf.mxu0
      %961 = vmatprep.mubr.bf16.mxu0 0
      %962 = vmatmul.mubr.bf16.gmra.mxu0 %v681
      %v963 = vpop.f32.mrf.mxu0
      %v964 = vadd.f32 0.0, %v963
      %v965 = vpop.f32.mrf.mxu0
      %v966 = vpop.f32.mrf.mxu0
      %v967 = vadd.f32 0.0, %v966
      %v968 = vpop.f32.mrf.mxu0
      %969 = vmatprep.mubr.bf16.mxu0 0
      %970 = vmatmul.mubr.bf16.gmra.mxu0 %v684
      %v971 = vpop.f32.mrf.mxu0
      %v972 = vadd.f32 0.0, %v971
      %v973 = vpop.f32.mrf.mxu0
      %v974 = vpop.f32.mrf.mxu0
      %v975 = vadd.f32 0.0, %v974
      %v976 = vpop.f32.mrf.mxu0
      %977 = vmatprep.mubr.bf16.mxu0 0
      %978 = vmatmul.mubr.bf16.gmra.mxu0 %v687
      %v979 = vpop.f32.mrf.mxu0
      %v980 = vadd.f32 0.0, %v979
      %v981 = vpop.f32.mrf.mxu0
      %v982 = vpop.f32.mrf.mxu0
      %v983 = vadd.f32 0.0, %v982
      %v984 = vpop.f32.mrf.mxu0
      %985 = vmatprep.mubr.bf16.mxu0 0
      %986 = vmatmul.mubr.bf16.gmra.mxu0 %v690
      %v987 = vpop.f32.mrf.mxu0
      %v988 = vadd.f32 0.0, %v987
      %v989 = vpop.f32.mrf.mxu0
      %v990 = vpop.f32.mrf.mxu0
      %v991 = vadd.f32 0.0, %v990
      %v992 = vpop.f32.mrf.mxu0
      %993 = vmatprep.mubr.bf16.mxu0 0
      %994 = vmatmul.mubr.bf16.gmra.mxu0 %v693
      %v995 = vpop.f32.mrf.mxu0
      %v996 = vadd.f32 0.0, %v995
      %v997 = vpop.f32.mrf.mxu0
      %v998 = vpop.f32.mrf.mxu0
      %v999 = vadd.f32 0.0, %v998
      %v1000 = vpop.f32.mrf.mxu0
      %1001 = vmatprep.mubr.bf16.mxu0 0
      %1002 = vmatmul.mubr.bf16.gmra.mxu0 %v696
      %v1003 = vpop.f32.mrf.mxu0
      %v1004 = vadd.f32 0.0, %v1003
      %v1005 = vpop.f32.mrf.mxu0
      %v1006 = vpop.f32.mrf.mxu0
      %v1007 = vadd.f32 0.0, %v1006
      %v1008 = vpop.f32.mrf.mxu0
      %1009 = vmatprep.mubr.bf16.mxu0 0
      %1010 = vmatmul.mubr.bf16.gmra.mxu0 %v699
      %v1011 = vpop.f32.mrf.mxu0
      %v1012 = vadd.f32 0.0, %v1011
      %v1013 = vpop.f32.mrf.mxu0
      %v1014 = vpop.f32.mrf.mxu0
      %v1015 = vadd.f32 0.0, %v1014
      %v1016 = vpop.f32.mrf.mxu0
      %1017 = vmatprep.mubr.bf16.mxu0 0
      %1018 = vmatmul.mubr.bf16.gmra.mxu0 %v702
      %v1019 = vpop.f32.mrf.mxu0
      %v1020 = vadd.f32 0.0, %v1019
      %v1021 = vpop.f32.mrf.mxu0
      %v1022 = vpop.f32.mrf.mxu0
      %v1023 = vadd.f32 0.0, %v1022
      %v1024 = vpop.f32.mrf.mxu0
      %1025 = vmatprep.mubr.bf16.mxu0 0
      %1026 = vmatmul.mubr.bf16.gmra.mxu0 %v705
      %v1027 = vpop.f32.mrf.mxu0
      %v1028 = vadd.f32 0.0, %v1027
      %v1029 = vpop.f32.mrf.mxu0
      %v1030 = vpop.f32.mrf.mxu0
      %v1031 = vadd.f32 0.0, %v1030
      %v1032 = vpop.f32.mrf.mxu0
      %1033 = vmatprep.mubr.bf16.mxu0 0
      %1034 = vmatmul.mubr.bf16.gmra.mxu0 %v708
      %v1035 = vpop.f32.mrf.mxu0
      %v1036 = vadd.f32 0.0, %v1035
      %v1037 = vpop.f32.mrf.mxu0
      %v1038 = vpop.f32.mrf.mxu0
      %v1039 = vadd.f32 0.0, %v1038
      %v1040 = vpop.f32.mrf.mxu0
      %1041 = vmatprep.mubr.bf16.mxu0 0
      %1042 = vmatmul.mubr.bf16.gmra.mxu0 %v711
      %v1043 = vpop.f32.mrf.mxu0
      %v1044 = vadd.f32 0.0, %v1043
      %v1045 = vpop.f32.mrf.mxu0
      %v1046 = vpop.f32.mrf.mxu0
      %v1047 = vadd.f32 0.0, %v1046
      %v1048 = vpop.f32.mrf.mxu0
      %1049 = vmatprep.mubr.bf16.mxu0 0
      %1050 = vmatmul.mubr.bf16.gmra.mxu0 %v714
      %v1051 = vpop.f32.mrf.mxu0
      %v1052 = vadd.f32 0.0, %v1051
      %v1053 = vpop.f32.mrf.mxu0
      %v1054 = vpop.f32.mrf.mxu0
      %v1055 = vadd.f32 0.0, %v1054
      %v1056 = vpop.f32.mrf.mxu0
      %1057 = vmatprep.mubr.bf16.mxu0 0
      %1058 = vmatmul.mubr.bf16.gmra.mxu0 %v717
      %v1059 = vpop.f32.mrf.mxu0
      %v1060 = vadd.f32 0.0, %v1059
      %v1061 = vpop.f32.mrf.mxu0
      %v1062 = vpop.f32.mrf.mxu0
      %v1063 = vadd.f32 0.0, %v1062
      %v1064 = vpop.f32.mrf.mxu0
      %1065 = vmatprep.mubr.bf16.mxu0 0
      %1066 = vmatmul.mubr.bf16.gmra.mxu0 %v720
      %v1067 = vpop.f32.mrf.mxu0
      %v1068 = vadd.f32 0.0, %v1067
      %v1069 = vpop.f32.mrf.mxu0
      %v1070 = vpop.f32.mrf.mxu0
      %v1071 = vadd.f32 0.0, %v1070
      %v1072 = vpop.f32.mrf.mxu0
      %1073 = vmatprep.mubr.bf16.mxu0 0
      %1074 = vmatmul.mubr.bf16.gmra.mxu0 %v723
      %v1075 = vpop.f32.mrf.mxu0
      %v1076 = vadd.f32 0.0, %v1075
      %v1077 = vpop.f32.mrf.mxu0
      %v1078 = vpop.f32.mrf.mxu0
      %v1079 = vadd.f32 0.0, %v1078
      %v1080 = vpop.f32.mrf.mxu0
      %1081 = vmatprep.mubr.bf16.mxu0 0
      %1082 = vmatmul.mubr.bf16.gmra.mxu0 %v726
      %v1083 = vpop.f32.mrf.mxu0
      %v1084 = vadd.f32 0.0, %v1083
      %v1085 = vpop.f32.mrf.mxu0
      %v1086 = vpop.f32.mrf.mxu0
      %v1087 = vadd.f32 0.0, %v1086
      %v1088 = vpop.f32.mrf.mxu0
      %1089 = vmatprep.mubr.bf16.mxu0 0
      %1090 = vmatmul.mubr.bf16.gmra.mxu0 %v729
      %v1091 = vpop.f32.mrf.mxu0
      %v1092 = vadd.f32 0.0, %v1091
      %v1093 = vpop.f32.mrf.mxu0
      %v1094 = vpop.f32.mrf.mxu0
      %v1095 = vadd.f32 0.0, %v1094
      %v1096 = vpop.f32.mrf.mxu0
      %1097 = vmatprep.mubr.bf16.mxu0 0
      %1098 = vmatmul.mubr.bf16.gmra.mxu0 %v732
      %v1099 = vpop.f32.mrf.mxu0
      %v1100 = vadd.f32 0.0, %v1099
      %v1101 = vpop.f32.mrf.mxu0
      %v1102 = vpop.f32.mrf.mxu0
      %v1103 = vadd.f32 0.0, %v1102
      %v1104 = vpop.f32.mrf.mxu0
      %1105 = vmatprep.mubr.bf16.mxu0 0
      %1106 = vmatmul.mubr.bf16.gmra.mxu0 %v735
      %v1107 = vpop.f32.mrf.mxu0
      %v1108 = vadd.f32 0.0, %v1107
      %v1109 = vpop.f32.mrf.mxu0
      %v1110 = vpop.f32.mrf.mxu0
      %v1111 = vadd.f32 0.0, %v1110
      %v1112 = vpop.f32.mrf.mxu0
      %1113 = vmatprep.mubr.bf16.mxu0 0
      %1114 = vmatmul.mubr.bf16.gmra.mxu0 %v738
      %v1115 = vpop.f32.mrf.mxu0
      %v1116 = vadd.f32 0.0, %v1115
      %v1117 = vpop.f32.mrf.mxu0
      %v1118 = vpop.f32.mrf.mxu0
      %v1119 = vadd.f32 0.0, %v1118
      %v1120 = vpop.f32.mrf.mxu0
      %1121 = vmatprep.mubr.bf16.mxu0 0
      %1122 = vmatmul.mubr.bf16.gmra.mxu0 %v741
      %v1123 = vpop.f32.mrf.mxu0
      %v1124 = vadd.f32 0.0, %v1123
      %v1125 = vpop.f32.mrf.mxu0
      %v1126 = vpop.f32.mrf.mxu0
      %v1127 = vadd.f32 0.0, %v1126
      %v1128 = vpop.f32.mrf.mxu0
      %1129 = vmatprep.mubr.bf16.mxu0 0
      %1130 = vmatmul.mubr.bf16.gmra.mxu0 %v744
      %v1131 = vpop.f32.mrf.mxu0
      %v1132 = vadd.f32 0.0, %v1131
      %v1133 = vpop.f32.mrf.mxu0
      %v1134 = vpop.f32.mrf.mxu0
      %v1135 = vadd.f32 0.0, %v1134
      %v1136 = vpop.f32.mrf.mxu0
      %1137 = vmatprep.mubr.bf16.mxu0 0
      %1138 = vmatmul.mubr.bf16.gmra.mxu0 %v747
      %v1139 = vpop.f32.mrf.mxu0
      %v1140 = vadd.f32 0.0, %v1139
      %v1141 = vpop.f32.mrf.mxu0
      %v1142 = vpop.f32.mrf.mxu0
      %v1143 = vadd.f32 0.0, %v1142
      %v1144 = vpop.f32.mrf.mxu0
      %1145 = vmatprep.mubr.bf16.mxu0 0
      %1146 = vmatmul.mubr.bf16.gmra.mxu0 %v750
      %v1147 = vpop.f32.mrf.mxu0
      %v1148 = vadd.f32 0.0, %v1147
      %v1149 = vpop.f32.mrf.mxu0
      %v1150 = vpop.f32.mrf.mxu0
      %v1151 = vadd.f32 0.0, %v1150
      %v1152 = vpop.f32.mrf.mxu0
      %1153 = vmatprep.mubr.bf16.mxu0 0
      %1154 = vmatmul.mubr.bf16.gmra.mxu0 %v753
      %v1155 = vpop.f32.mrf.mxu0
      %v1156 = vadd.f32 0.0, %v1155
      %v1157 = vpop.f32.mrf.mxu0
      %v1158 = vpop.f32.mrf.mxu0
      %v1159 = vadd.f32 0.0, %v1158
      %v1160 = vpop.f32.mrf.mxu0
      %1161 = vmatprep.mubr.bf16.mxu0 0
      %1162 = vmatmul.mubr.bf16.gmra.mxu0 %v756
      %v1163 = vpop.f32.mrf.mxu0
      %v1164 = vadd.f32 0.0, %v1163
      %v1165 = vpop.f32.mrf.mxu0
      %v1166 = vpop.f32.mrf.mxu0
      %v1167 = vadd.f32 0.0, %v1166
      %v1168 = vpop.f32.mrf.mxu0
      %1169 = vmatprep.mubr.bf16.mxu0 0
      %1170 = vmatmul.mubr.bf16.gmra.mxu0 %v759
      %v1171 = vpop.f32.mrf.mxu0
      %v1172 = vadd.f32 0.0, %v1171
      %v1173 = vpop.f32.mrf.mxu0
      %v1174 = vpop.f32.mrf.mxu0
      %v1175 = vadd.f32 0.0, %v1174
      %v1176 = vpop.f32.mrf.mxu0
      %1177 = vmatprep.mubr.bf16.mxu0 0
      %1178 = vmatmul.mubr.bf16.gmra.mxu0 %v762
      %v1179 = vpop.f32.mrf.mxu0
      %v1180 = vadd.f32 0.0, %v1179
      %v1181 = vpop.f32.mrf.mxu0
      %v1182 = vpop.f32.mrf.mxu0
      %v1183 = vadd.f32 0.0, %v1182
      %v1184 = vpop.f32.mrf.mxu0
      %1185 = vmatprep.mubr.bf16.mxu0 0
      %1186 = vmatmul.mubr.bf16.gmra.mxu0 %v765
      %v1187 = vpop.f32.mrf.mxu0
      %v1188 = vadd.f32 0.0, %v1187
      %v1189 = vpop.f32.mrf.mxu0
      %v1190 = vpop.f32.mrf.mxu0
      %v1191 = vadd.f32 0.0, %v1190
      %v1192 = vpop.f32.mrf.mxu0
      %1193 = vmatprep.mubr.bf16.mxu0 0
      %1194 = vmatmul.mubr.bf16.gmra.mxu0 %v768
      %v1195 = vpop.f32.mrf.mxu0
      %v1196 = vadd.f32 0.0, %v1195
      %v1197 = vpop.f32.mrf.mxu0
      %v1198 = vpop.f32.mrf.mxu0
      %v1199 = vadd.f32 0.0, %v1198
      %v1200 = vpop.f32.mrf.mxu0
      %1201 = vmatprep.mubr.bf16.mxu0 0
      %1202 = vmatmul.mubr.bf16.gmra.mxu0 %v771
      %v1203 = vpop.f32.mrf.mxu0
      %v1204 = vadd.f32 0.0, %v1203
      %v1205 = vpop.f32.mrf.mxu0
      %v1206 = vpop.f32.mrf.mxu0
      %v1207 = vadd.f32 0.0, %v1206
      %v1208 = vpop.f32.mrf.mxu0
      %1209 = vmatprep.mubr.bf16.mxu0 0
      %1210 = vmatmul.mubr.bf16.gmra.mxu0 %v774
      %v1211 = vpop.f32.mrf.mxu0
      %v1212 = vadd.f32 0.0, %v1211
      %v1213 = vpop.f32.mrf.mxu0
      %v1214 = vpop.f32.mrf.mxu0
      %v1215 = vadd.f32 0.0, %v1214
      %v1216 = vpop.f32.mrf.mxu0
      %1217 = vmatprep.mubr.bf16.mxu0 0
      %1218 = vmatmul.mubr.bf16.gmra.mxu0 %v777
      %v1219 = vpop.f32.mrf.mxu0
      %v1220 = vadd.f32 0.0, %v1219
      %v1221 = vpop.f32.mrf.mxu0
      %v1222 = vpop.f32.mrf.mxu0
      %v1223 = vadd.f32 0.0, %v1222
      %v1224 = vpop.f32.mrf.mxu0
      %1225 = vmatprep.mubr.bf16.mxu0 0
      %1226 = vmatmul.mubr.bf16.gmra.mxu0 %v780
      %v1227 = vpop.f32.mrf.mxu0
      %v1228 = vadd.f32 0.0, %v1227
      %v1229 = vpop.f32.mrf.mxu0
      %v1230 = vpop.f32.mrf.mxu0
      %v1231 = vadd.f32 0.0, %v1230
      %v1232 = vpop.f32.mrf.mxu0
      %1233 = vmatprep.mubr.bf16.mxu0 0
      %1234 = vmatmul.mubr.bf16.gmra.mxu0 %v783
      %v1235 = vpop.f32.mrf.mxu0
      %v1236 = vadd.f32 0.0, %v1235
      %v1237 = vpop.f32.mrf.mxu0
      %v1238 = vpop.f32.mrf.mxu0
      %v1239 = vadd.f32 0.0, %v1238
      %v1240 = vpop.f32.mrf.mxu0
      %1241 = vmatprep.mubr.bf16.mxu0 0
      %1242 = vmatmul.mubr.bf16.gmra.mxu0 %v786
      %v1243 = vpop.f32.mrf.mxu0
      %v1244 = vadd.f32 0.0, %v1243
      %v1245 = vpop.f32.mrf.mxu0
      %v1246 = vpop.f32.mrf.mxu0
      %v1247 = vadd.f32 0.0, %v1246
      %v1248 = vpop.f32.mrf.mxu0
      %1249 = vmatprep.mubr.bf16.mxu0 0
      %1250 = vmatmul.mubr.bf16.gmra.mxu0 %v789
      %v1251 = vpop.f32.mrf.mxu0
      %v1252 = vadd.f32 0.0, %v1251
      %v1253 = vpop.f32.mrf.mxu0
      %v1254 = vpop.f32.mrf.mxu0
      %v1255 = vadd.f32 0.0, %v1254
      %v1256 = vpop.f32.mrf.mxu0
      %1257 = vmatprep.mubr.bf16.mxu0 0
      %1258 = vmatmul.mubr.bf16.gmra.mxu0 %v792
      %v1259 = vpop.f32.mrf.mxu0
      %v1260 = vadd.f32 0.0, %v1259
      %v1261 = vpop.f32.mrf.mxu0
      %v1262 = vpop.f32.mrf.mxu0
      %v1263 = vadd.f32 0.0, %v1262
      %v1264 = vpop.f32.mrf.mxu0
      %1265 = vmatprep.mubr.bf16.mxu0 0
      %1266 = vmatmul.mubr.bf16.gmra.mxu0 %v795
      %v1267 = vpop.f32.mrf.mxu0
      %v1268 = vadd.f32 0.0, %v1267
      %v1269 = vpop.f32.mrf.mxu0
      %v1270 = vpop.f32.mrf.mxu0
      %v1271 = vadd.f32 0.0, %v1270
      %v1272 = vpop.f32.mrf.mxu0
      %1273 = vmatprep.mubr.bf16.mxu0 0
      %1274 = vmatmul.mubr.bf16.gmra.mxu0 %v798
      %v1275 = vpop.f32.mrf.mxu0
      %v1276 = vadd.f32 0.0, %v1275
      %v1277 = vpop.f32.mrf.mxu0
      %v1278 = vpop.f32.mrf.mxu0
      %v1279 = vadd.f32 0.0, %v1278
      %v1280 = vpop.f32.mrf.mxu0
      %1281 = vmatprep.mubr.bf16.mxu0 0
      %1282 = vmatmul.mubr.bf16.gmra.mxu0 %v801
      %v1283 = vpop.f32.mrf.mxu0
      %v1284 = vadd.f32 0.0, %v1283
      %v1285 = vpop.f32.mrf.mxu0
      %v1286 = vpop.f32.mrf.mxu0
      %v1287 = vadd.f32 0.0, %v1286
      %v1288 = vpop.f32.mrf.mxu0
      %1289 = vmatprep.mubr.bf16.mxu0 0
      %1290 = vmatmul.mubr.bf16.gmra.mxu0 %v804
      %v1291 = vpop.f32.mrf.mxu0
      %v1292 = vadd.f32 0.0, %v1291
      %v1293 = vpop.f32.mrf.mxu0
      %v1294 = vpop.f32.mrf.mxu0
      %v1295 = vadd.f32 0.0, %v1294
      %v1296 = vpop.f32.mrf.mxu0
      %1297 = vmatprep.mubr.bf16.mxu0 0
      %1298 = vmatmul.mubr.bf16.gmra.mxu0 %v807
      %v1299 = vpop.f32.mrf.mxu0
      %v1300 = vadd.f32 0.0, %v1299
      %v1301 = vpop.f32.mrf.mxu0
      %v1302 = vpop.f32.mrf.mxu0
      %v1303 = vadd.f32 0.0, %v1302
      %v1304 = vpop.f32.mrf.mxu0
      %1305 = vmatprep.mubr.bf16.mxu0 0
      %1306 = vmatmul.mubr.bf16.gmra.mxu0 %v810
      %v1307 = vpop.f32.mrf.mxu0
      %v1308 = vadd.f32 0.0, %v1307
      %v1309 = vpop.f32.mrf.mxu0
      %v1310 = vpop.f32.mrf.mxu0
      %v1311 = vadd.f32 0.0, %v1310
      %v1312 = vpop.f32.mrf.mxu0
      %1313 = vmatprep.mubr.bf16.mxu0 0
      %1314 = vmatmul.mubr.bf16.gmra.mxu0 %v813
      %v1315 = vpop.f32.mrf.mxu0
      %v1316 = vadd.f32 0.0, %v1315
      %v1317 = vpop.f32.mrf.mxu0
      %v1318 = vpop.f32.mrf.mxu0
      %v1319 = vadd.f32 0.0, %v1318
      %v1320 = vpop.f32.mrf.mxu0
      %1321 = vmatprep.mubr.bf16.mxu0 0
      %1322 = vmatmul.mubr.bf16.gmra.mxu0 %v816
      %v1323 = vpop.f32.mrf.mxu0
      %v1324 = vadd.f32 0.0, %v1323
      %v1325 = vpop.f32.mrf.mxu0
      %v1326 = vpop.f32.mrf.mxu0
      %v1327 = vadd.f32 0.0, %v1326
      %v1328 = vpop.f32.mrf.mxu0
      %1329 = vmatprep.mubr.bf16.mxu0 0
      %1330 = vmatmul.mubr.bf16.gmra.mxu0 %v819
      %v1331 = vpop.f32.mrf.mxu0
      %v1332 = vadd.f32 0.0, %v1331
      %v1333 = vpop.f32.mrf.mxu0
      %v1334 = vpop.f32.mrf.mxu0
      %v1335 = vadd.f32 0.0, %v1334
      %v1336 = vpop.f32.mrf.mxu0
      %1337 = vmatprep.mubr.bf16.mxu0 0
      %1338 = vmatmul.mubr.bf16.gmra.mxu0 %v822
      %v1339 = vpop.f32.mrf.mxu0
      %v1340 = vadd.f32 0.0, %v1339
      %v1341 = vpop.f32.mrf.mxu0
      %v1342 = vpop.f32.mrf.mxu0
      %v1343 = vadd.f32 0.0, %v1342
      %v1344 = vpop.f32.mrf.mxu0
      %1345 = vmatprep.mubr.bf16.mxu0 0
      %1346 = vmatmul.mubr.bf16.gmra.mxu0 %v825
      %v1347 = vpop.f32.mrf.mxu0
      %v1348 = vadd.f32 0.0, %v1347
      %v1349 = vpop.f32.mrf.mxu0
      %v1350 = vpop.f32.mrf.mxu0
      %v1351 = vadd.f32 0.0, %v1350
      %v1352 = vpop.f32.mrf.mxu0
      %1353 = vmatprep.mubr.bf16.mxu0 0
      %1354 = vmatmul.mubr.bf16.gmra.mxu0 %v828
      %v1355 = vpop.f32.mrf.mxu0
      %v1356 = vadd.f32 0.0, %v1355
      %v1357 = vpop.f32.mrf.mxu0
      %v1358 = vpop.f32.mrf.mxu0
      %v1359 = vadd.f32 0.0, %v1358
      %v1360 = vpop.f32.mrf.mxu0
      %1361 = vmatprep.mubr.bf16.mxu0 0
      %1362 = vmatmul.mubr.bf16.gmra.mxu0 %v831
      %v1363 = vpop.f32.mrf.mxu0
      %v1364 = vadd.f32 0.0, %v1363
      %v1365 = vpop.f32.mrf.mxu0
      %v1366 = vpop.f32.mrf.mxu0
      %v1367 = vadd.f32 0.0, %v1366
      %v1368 = vpop.f32.mrf.mxu0
      %1369 = vmatprep.mubr.bf16.mxu0 0
      %1370 = vmatmul.mubr.bf16.gmra.mxu0 %v834
      %v1371 = vpop.f32.mrf.mxu0
      %v1372 = vadd.f32 0.0, %v1371
      %v1373 = vpop.f32.mrf.mxu0
      %v1374 = vpop.f32.mrf.mxu0
      %v1375 = vadd.f32 0.0, %v1374
      %v1376 = vpop.f32.mrf.mxu0
      %1377 = vmatprep.mubr.bf16.mxu0 0
      %1378 = vmatmul.mubr.bf16.gmra.mxu0 %v837
      %v1379 = vpop.f32.mrf.mxu0
      %v1380 = vadd.f32 0.0, %v1379
      %v1381 = vpop.f32.mrf.mxu0
      %v1382 = vpop.f32.mrf.mxu0
      %v1383 = vadd.f32 0.0, %v1382
      %v1384 = vpop.f32.mrf.mxu0
      %1385 = vmatprep.mubr.bf16.mxu0 0
      %1386 = vmatmul.mubr.bf16.gmra.mxu0 %v840
      %v1387 = vpop.f32.mrf.mxu0
      %v1388 = vadd.f32 0.0, %v1387
      %v1389 = vpop.f32.mrf.mxu0
      %v1390 = vpop.f32.mrf.mxu0
      %v1391 = vadd.f32 0.0, %v1390
      %v1392 = vpop.f32.mrf.mxu0
      %1393 = vdwg.mxu0
      %vm1394 = vcmask 130048
      %1395 = vst.msk [vmem:[%s179] sm:$0xff] %vm1394, %v884
      %1396 = vst.msk [vmem:[%s179 + $0x8] sm:$0xff] %vm1394, %v887
      %1397 = vst.msk [vmem:[%s179 + $0x10] sm:$0xff] %vm1394, %v892
      %1398 = vst.msk [vmem:[%s179 + $0x18] sm:$0xff] %vm1394, %v895
      %1399 = vst.msk [vmem:[%s179 + $0x20] sm:$0xff] %vm1394, %v900
      %1400 = vst.msk [vmem:[%s179 + $0x28] sm:$0xff] %vm1394, %v903
      %1401 = vst.msk [vmem:[%s179 + $0x30] sm:$0xff] %vm1394, %v908
      %1402 = vst.msk [vmem:[%s179 + $0x38] sm:$0xff] %vm1394, %v911
      %1403 = vst.msk [vmem:[%s179 + $0x40] sm:$0xff] %vm1394, %v916
      %1404 = vst.msk [vmem:[%s179 + $0x48] sm:$0xff] %vm1394, %v919
      %1405 = vst.msk [vmem:[%s179 + $0x50] sm:$0xff] %vm1394, %v924
      %1406 = vst.msk [vmem:[%s179 + $0x58] sm:$0xff] %vm1394, %v927
      %1407 = vst.msk [vmem:[%s179 + $0x60] sm:$0xff] %vm1394, %v932
      %1408 = vst.msk [vmem:[%s179 + $0x68] sm:$0xff] %vm1394, %v935
      %1409 = vst.msk [vmem:[%s179 + $0x70] sm:$0xff] %vm1394, %v940
      %1410 = vst.msk [vmem:[%s179 + $0x78] sm:$0xff] %vm1394, %v943
      %1411 = vst.msk [vmem:[%s179 + $0x80] sm:$0xff] %vm1394, %v948
      %1412 = vst.msk [vmem:[%s179 + $0x88] sm:$0xff] %vm1394, %v951
      %1413 = vst.msk [vmem:[%s179 + $0x90] sm:$0xff] %vm1394, %v956
      %1414 = vst.msk [vmem:[%s179 + $0x98] sm:$0xff] %vm1394, %v959
      %1415 = vst.msk [vmem:[%s179 + $0xa0] sm:$0xff] %vm1394, %v964
      %1416 = vst.msk [vmem:[%s179 + $0xa8] sm:$0xff] %vm1394, %v967
      %1417 = vst.msk [vmem:[%s179 + $0xb0] sm:$0xff] %vm1394, %v972
      %1418 = vst.msk [vmem:[%s179 + $0xb8] sm:$0xff] %vm1394, %v975
      %1419 = vst.msk [vmem:[%s179 + $0xc0] sm:$0xff] %vm1394, %v980
      %1420 = vst.msk [vmem:[%s179 + $0xc8] sm:$0xff] %vm1394, %v983
      %1421 = vst.msk [vmem:[%s179 + $0xd0] sm:$0xff] %vm1394, %v988
      %1422 = vst.msk [vmem:[%s179 + $0xd8] sm:$0xff] %vm1394, %v991
      %1423 = vst.msk [vmem:[%s179 + $0xe0] sm:$0xff] %vm1394, %v996
      %1424 = vst.msk [vmem:[%s179 + $0xe8] sm:$0xff] %vm1394, %v999
      %1425 = vst.msk [vmem:[%s179 + $0xf0] sm:$0xff] %vm1394, %v1004
      %1426 = vst.msk [vmem:[%s179 + $0xf8] sm:$0xff] %vm1394, %v1007
      %1427 = vst.msk [vmem:[%s179 + $0x100] sm:$0xff] %vm1394, %v1012
      %1428 = vst.msk [vmem:[%s179 + $0x108] sm:$0xff] %vm1394, %v1015
      %1429 = vst.msk [vmem:[%s179 + $0x110] sm:$0xff] %vm1394, %v1020
      %1430 = vst.msk [vmem:[%s179 + $0x118] sm:$0xff] %vm1394, %v1023
      %1431 = vst.msk [vmem:[%s179 + $0x120] sm:$0xff] %vm1394, %v1028
      %1432 = vst.msk [vmem:[%s179 + $0x128] sm:$0xff] %vm1394, %v1031
      %1433 = vst.msk [vmem:[%s179 + $0x130] sm:$0xff] %vm1394, %v1036
      %1434 = vst.msk [vmem:[%s179 + $0x138] sm:$0xff] %vm1394, %v1039
      %1435 = vst.msk [vmem:[%s179 + $0x140] sm:$0xff] %vm1394, %v1044
      %1436 = vst.msk [vmem:[%s179 + $0x148] sm:$0xff] %vm1394, %v1047
      %1437 = vst.msk [vmem:[%s179 + $0x150] sm:$0xff] %vm1394, %v1052
      %1438 = vst.msk [vmem:[%s179 + $0x158] sm:$0xff] %vm1394, %v1055
      %1439 = vst.msk [vmem:[%s179 + $0x160] sm:$0xff] %vm1394, %v1060
      %1440 = vst.msk [vmem:[%s179 + $0x168] sm:$0xff] %vm1394, %v1063
      %1441 = vst.msk [vmem:[%s179 + $0x170] sm:$0xff] %vm1394, %v1068
      %1442 = vst.msk [vmem:[%s179 + $0x178] sm:$0xff] %vm1394, %v1071
      %1443 = vst.msk [vmem:[%s179 + $0x180] sm:$0xff] %vm1394, %v1076
      %1444 = vst.msk [vmem:[%s179 + $0x188] sm:$0xff] %vm1394, %v1079
      %1445 = vst.msk [vmem:[%s179 + $0x190] sm:$0xff] %vm1394, %v1084
      %1446 = vst.msk [vmem:[%s179 + $0x198] sm:$0xff] %vm1394, %v1087
      %1447 = vst.msk [vmem:[%s179 + $0x1a0] sm:$0xff] %vm1394, %v1092
      %1448 = vst.msk [vmem:[%s179 + $0x1a8] sm:$0xff] %vm1394, %v1095
      %1449 = vst.msk [vmem:[%s179 + $0x1b0] sm:$0xff] %vm1394, %v1100
      %1450 = vst.msk [vmem:[%s179 + $0x1b8] sm:$0xff] %vm1394, %v1103
      %1451 = vst.msk [vmem:[%s179 + $0x1c0] sm:$0xff] %vm1394, %v1108
      %1452 = vst.msk [vmem:[%s179 + $0x1c8] sm:$0xff] %vm1394, %v1111
      %1453 = vst.msk [vmem:[%s179 + $0x1d0] sm:$0xff] %vm1394, %v1116
      %1454 = vst.msk [vmem:[%s179 + $0x1d8] sm:$0xff] %vm1394, %v1119
      %1455 = vst.msk [vmem:[%s179 + $0x1e0] sm:$0xff] %vm1394, %v1124
      %1456 = vst.msk [vmem:[%s179 + $0x1e8] sm:$0xff] %vm1394, %v1127
      %1457 = vst.msk [vmem:[%s179 + $0x1f0] sm:$0xff] %vm1394, %v1132
      %1458 = vst.msk [vmem:[%s179 + $0x1f8] sm:$0xff] %vm1394, %v1135
      %1459 = vst.msk [vmem:[%s179 + $0x200] sm:$0xff] %vm1394, %v1140
      %1460 = vst.msk [vmem:[%s179 + $0x208] sm:$0xff] %vm1394, %v1143
      %1461 = vst.msk [vmem:[%s179 + $0x210] sm:$0xff] %vm1394, %v1148
      %1462 = vst.msk [vmem:[%s179 + $0x218] sm:$0xff] %vm1394, %v1151
      %1463 = vst.msk [vmem:[%s179 + $0x220] sm:$0xff] %vm1394, %v1156
      %1464 = vst.msk [vmem:[%s179 + $0x228] sm:$0xff] %vm1394, %v1159
      %1465 = vst.msk [vmem:[%s179 + $0x230] sm:$0xff] %vm1394, %v1164
      %1466 = vst.msk [vmem:[%s179 + $0x238] sm:$0xff] %vm1394, %v1167
      %1467 = vst.msk [vmem:[%s179 + $0x240] sm:$0xff] %vm1394, %v1172
      %1468 = vst.msk [vmem:[%s179 + $0x248] sm:$0xff] %vm1394, %v1175
      %1469 = vst.msk [vmem:[%s179 + $0x250] sm:$0xff] %vm1394, %v1180
      %1470 = vst.msk [vmem:[%s179 + $0x258] sm:$0xff] %vm1394, %v1183
      %1471 = vst.msk [vmem:[%s179 + $0x260] sm:$0xff] %vm1394, %v1188
      %1472 = vst.msk [vmem:[%s179 + $0x268] sm:$0xff] %vm1394, %v1191
      %1473 = vst.msk [vmem:[%s179 + $0x270] sm:$0xff] %vm1394, %v1196
      %1474 = vst.msk [vmem:[%s179 + $0x278] sm:$0xff] %vm1394, %v1199
      %1475 = vst.msk [vmem:[%s179 + $0x280] sm:$0xff] %vm1394, %v1204
      %1476 = vst.msk [vmem:[%s179 + $0x288] sm:$0xff] %vm1394, %v1207
      %1477 = vst.msk [vmem:[%s179 + $0x290] sm:$0xff] %vm1394, %v1212
      %1478 = vst.msk [vmem:[%s179 + $0x298] sm:$0xff] %vm1394, %v1215
      %1479 = vst.msk [vmem:[%s179 + $0x2a0] sm:$0xff] %vm1394, %v1220
      %1480 = vst.msk [vmem:[%s179 + $0x2a8] sm:$0xff] %vm1394, %v1223
      %1481 = vst.msk [vmem:[%s179 + $0x2b0] sm:$0xff] %vm1394, %v1228
      %1482 = vst.msk [vmem:[%s179 + $0x2b8] sm:$0xff] %vm1394, %v1231
      %1483 = vst.msk [vmem:[%s179 + $0x2c0] sm:$0xff] %vm1394, %v1236
      %1484 = vst.msk [vmem:[%s179 + $0x2c8] sm:$0xff] %vm1394, %v1239
      %1485 = vst.msk [vmem:[%s179 + $0x2d0] sm:$0xff] %vm1394, %v1244
      %1486 = vst.msk [vmem:[%s179 + $0x2d8] sm:$0xff] %vm1394, %v1247
      %1487 = vst.msk [vmem:[%s179 + $0x2e0] sm:$0xff] %vm1394, %v1252
      %1488 = vst.msk [vmem:[%s179 + $0x2e8] sm:$0xff] %vm1394, %v1255
      %1489 = vst.msk [vmem:[%s179 + $0x2f0] sm:$0xff] %vm1394, %v1260
      %1490 = vst.msk [vmem:[%s179 + $0x2f8] sm:$0xff] %vm1394, %v1263
      %1491 = vst.msk [vmem:[%s179 + $0x300] sm:$0xff] %vm1394, %v1268
      %1492 = vst.msk [vmem:[%s179 + $0x308] sm:$0xff] %vm1394, %v1271
      %1493 = vst.msk [vmem:[%s179 + $0x310] sm:$0xff] %vm1394, %v1276
      %1494 = vst.msk [vmem:[%s179 + $0x318] sm:$0xff] %vm1394, %v1279
      %1495 = vst.msk [vmem:[%s179 + $0x320] sm:$0xff] %vm1394, %v1284
      %1496 = vst.msk [vmem:[%s179 + $0x328] sm:$0xff] %vm1394, %v1287
      %1497 = vst.msk [vmem:[%s179 + $0x330] sm:$0xff] %vm1394, %v1292
      %1498 = vst.msk [vmem:[%s179 + $0x338] sm:$0xff] %vm1394, %v1295
      %1499 = vst.msk [vmem:[%s179 + $0x340] sm:$0xff] %vm1394, %v1300
      %1500 = vst.msk [vmem:[%s179 + $0x348] sm:$0xff] %vm1394, %v1303
      %1501 = vst.msk [vmem:[%s179 + $0x350] sm:$0xff] %vm1394, %v1308
      %1502 = vst.msk [vmem:[%s179 + $0x358] sm:$0xff] %vm1394, %v1311
      %1503 = vst.msk [vmem:[%s179 + $0x360] sm:$0xff] %vm1394, %v1316
      %1504 = vst.msk [vmem:[%s179 + $0x368] sm:$0xff] %vm1394, %v1319
      %1505 = vst.msk [vmem:[%s179 + $0x370] sm:$0xff] %vm1394, %v1324
      %1506 = vst.msk [vmem:[%s179 + $0x378] sm:$0xff] %vm1394, %v1327
      %1507 = vst.msk [vmem:[%s179 + $0x380] sm:$0xff] %vm1394, %v1332
      %1508 = vst.msk [vmem:[%s179 + $0x388] sm:$0xff] %vm1394, %v1335
      %1509 = vst.msk [vmem:[%s179 + $0x390] sm:$0xff] %vm1394, %v1340
      %1510 = vst.msk [vmem:[%s179 + $0x398] sm:$0xff] %vm1394, %v1343
      %1511 = vst.msk [vmem:[%s179 + $0x3a0] sm:$0xff] %vm1394, %v1348
      %1512 = vst.msk [vmem:[%s179 + $0x3a8] sm:$0xff] %vm1394, %v1351
      %1513 = vst.msk [vmem:[%s179 + $0x3b0] sm:$0xff] %vm1394, %v1356
      %1514 = vst.msk [vmem:[%s179 + $0x3b8] sm:$0xff] %vm1394, %v1359
      %1515 = vst.msk [vmem:[%s179 + $0x3c0] sm:$0xff] %vm1394, %v1364
      %1516 = vst.msk [vmem:[%s179 + $0x3c8] sm:$0xff] %vm1394, %v1367
      %1517 = vst.msk [vmem:[%s179 + $0x3d0] sm:$0xff] %vm1394, %v1372
      %1518 = vst.msk [vmem:[%s179 + $0x3d8] sm:$0xff] %vm1394, %v1375
      %1519 = vst.msk [vmem:[%s179 + $0x3e0] sm:$0xff] %vm1394, %v1380
      %1520 = vst.msk [vmem:[%s179 + $0x3e8] sm:$0xff] %vm1394, %v1383
      %1521 = vst.msk [vmem:[%s179 + $0x3f0] sm:$0xff] %vm1394, %v1388
      %1522 = vst.msk [vmem:[%s179 + $0x3f8] sm:$0xff] %vm1394, %v1391
      %v1523 = vsel %vm1394, %v884, 0.0
      %v1524 = vsel %vm1394, %v887, 0.0
      %v1525 = vadd.f32 %v1523, %v1524
      %v1526 = vsel %vm1394, %v892, 0.0
      %v1527 = vadd.f32 %v1525, %v1526
      %v1528 = vsel %vm1394, %v895, 0.0
      %v1529 = vadd.f32 %v1527, %v1528
      %v1530 = vsel %vm1394, %v900, 0.0
      %v1531 = vadd.f32 %v1529, %v1530
      %v1532 = vsel %vm1394, %v903, 0.0
      %v1533 = vadd.f32 %v1531, %v1532
      %v1534 = vsel %vm1394, %v908, 0.0
      %v1535 = vadd.f32 %v1533, %v1534
      %v1536 = vsel %vm1394, %v911, 0.0
      %v1537 = vadd.f32 %v1535, %v1536
      %v1538 = vsel %vm1394, %v916, 0.0
      %v1539 = vadd.f32 %v1537, %v1538
      %v1540 = vsel %vm1394, %v919, 0.0
      %v1541 = vadd.f32 %v1539, %v1540
      %v1542 = vsel %vm1394, %v924, 0.0
      %v1543 = vadd.f32 %v1541, %v1542
      %v1544 = vsel %vm1394, %v927, 0.0
      %v1545 = vadd.f32 %v1543, %v1544
      %v1546 = vsel %vm1394, %v932, 0.0
      %v1547 = vadd.f32 %v1545, %v1546
      %v1548 = vsel %vm1394, %v935, 0.0
      %v1549 = vadd.f32 %v1547, %v1548
      %v1550 = vsel %vm1394, %v940, 0.0
      %v1551 = vadd.f32 %v1549, %v1550
      %v1552 = vsel %vm1394, %v943, 0.0
      %v1553 = vadd.f32 %v1551, %v1552
      %v1554 = vsel %vm1394, %v948, 0.0
      %v1555 = vadd.f32 %v1553, %v1554
      %v1556 = vsel %vm1394, %v951, 0.0
      %v1557 = vadd.f32 %v1555, %v1556
      %v1558 = vsel %vm1394, %v956, 0.0
      %v1559 = vadd.f32 %v1557, %v1558
      %v1560 = vsel %vm1394, %v959, 0.0
      %v1561 = vadd.f32 %v1559, %v1560
      %v1562 = vsel %vm1394, %v964, 0.0
      %v1563 = vadd.f32 %v1561, %v1562
      %v1564 = vsel %vm1394, %v967, 0.0
      %v1565 = vadd.f32 %v1563, %v1564
      %v1566 = vsel %vm1394, %v972, 0.0
      %v1567 = vadd.f32 %v1565, %v1566
      %v1568 = vsel %vm1394, %v975, 0.0
      %v1569 = vadd.f32 %v1567, %v1568
      %v1570 = vsel %vm1394, %v980, 0.0
      %v1571 = vadd.f32 %v1569, %v1570
      %v1572 = vsel %vm1394, %v983, 0.0
      %v1573 = vadd.f32 %v1571, %v1572
      %v1574 = vsel %vm1394, %v988, 0.0
      %v1575 = vadd.f32 %v1573, %v1574
      %v1576 = vsel %vm1394, %v991, 0.0
      %v1577 = vadd.f32 %v1575, %v1576
      %v1578 = vsel %vm1394, %v996, 0.0
      %v1579 = vadd.f32 %v1577, %v1578
      %v1580 = vsel %vm1394, %v999, 0.0
      %v1581 = vadd.f32 %v1579, %v1580
      %v1582 = vsel %vm1394, %v1004, 0.0
      %v1583 = vadd.f32 %v1581, %v1582
      %v1584 = vsel %vm1394, %v1007, 0.0
      %v1585 = vadd.f32 %v1583, %v1584
      %v1586 = vsel %vm1394, %v1012, 0.0
      %v1587 = vadd.f32 %v1585, %v1586
      %v1588 = vsel %vm1394, %v1015, 0.0
      %v1589 = vadd.f32 %v1587, %v1588
      %v1590 = vsel %vm1394, %v1020, 0.0
      %v1591 = vadd.f32 %v1589, %v1590
      %v1592 = vsel %vm1394, %v1023, 0.0
      %v1593 = vadd.f32 %v1591, %v1592
      %v1594 = vsel %vm1394, %v1028, 0.0
      %v1595 = vadd.f32 %v1593, %v1594
      %v1596 = vsel %vm1394, %v1031, 0.0
      %v1597 = vadd.f32 %v1595, %v1596
      %v1598 = vsel %vm1394, %v1036, 0.0
      %v1599 = vadd.f32 %v1597, %v1598
      %v1600 = vsel %vm1394, %v1039, 0.0
      %v1601 = vadd.f32 %v1599, %v1600
      %v1602 = vsel %vm1394, %v1044, 0.0
      %v1603 = vadd.f32 %v1601, %v1602
      %v1604 = vsel %vm1394, %v1047, 0.0
      %v1605 = vadd.f32 %v1603, %v1604
      %v1606 = vsel %vm1394, %v1052, 0.0
      %v1607 = vadd.f32 %v1605, %v1606
      %v1608 = vsel %vm1394, %v1055, 0.0
      %v1609 = vadd.f32 %v1607, %v1608
      %v1610 = vsel %vm1394, %v1060, 0.0
      %v1611 = vadd.f32 %v1609, %v1610
      %v1612 = vsel %vm1394, %v1063, 0.0
      %v1613 = vadd.f32 %v1611, %v1612
      %v1614 = vsel %vm1394, %v1068, 0.0
      %v1615 = vadd.f32 %v1613, %v1614
      %v1616 = vsel %vm1394, %v1071, 0.0
      %v1617 = vadd.f32 %v1615, %v1616
      %v1618 = vsel %vm1394, %v1076, 0.0
      %v1619 = vadd.f32 %v1617, %v1618
      %v1620 = vsel %vm1394, %v1079, 0.0
      %v1621 = vadd.f32 %v1619, %v1620
      %v1622 = vsel %vm1394, %v1084, 0.0
      %v1623 = vadd.f32 %v1621, %v1622
      %v1624 = vsel %vm1394, %v1087, 0.0
      %v1625 = vadd.f32 %v1623, %v1624
      %v1626 = vsel %vm1394, %v1092, 0.0
      %v1627 = vadd.f32 %v1625, %v1626
      %v1628 = vsel %vm1394, %v1095, 0.0
      %v1629 = vadd.f32 %v1627, %v1628
      %v1630 = vsel %vm1394, %v1100, 0.0
      %v1631 = vadd.f32 %v1629, %v1630
      %v1632 = vsel %vm1394, %v1103, 0.0
      %v1633 = vadd.f32 %v1631, %v1632
      %v1634 = vsel %vm1394, %v1108, 0.0
      %v1635 = vadd.f32 %v1633, %v1634
      %v1636 = vsel %vm1394, %v1111, 0.0
      %v1637 = vadd.f32 %v1635, %v1636
      %v1638 = vsel %vm1394, %v1116, 0.0
      %v1639 = vadd.f32 %v1637, %v1638
      %v1640 = vsel %vm1394, %v1119, 0.0
      %v1641 = vadd.f32 %v1639, %v1640
      %v1642 = vsel %vm1394, %v1124, 0.0
      %v1643 = vadd.f32 %v1641, %v1642
      %v1644 = vsel %vm1394, %v1127, 0.0
      %v1645 = vadd.f32 %v1643, %v1644
      %v1646 = vsel %vm1394, %v1132, 0.0
      %v1647 = vadd.f32 %v1645, %v1646
      %v1648 = vsel %vm1394, %v1135, 0.0
      %v1649 = vadd.f32 %v1647, %v1648
      %v1650 = vsel %vm1394, %v1140, 0.0
      %v1651 = vadd.f32 %v1649, %v1650
      %v1652 = vsel %vm1394, %v1143, 0.0
      %v1653 = vadd.f32 %v1651, %v1652
      %v1654 = vsel %vm1394, %v1148, 0.0
      %v1655 = vadd.f32 %v1653, %v1654
      %v1656 = vsel %vm1394, %v1151, 0.0
      %v1657 = vadd.f32 %v1655, %v1656
      %v1658 = vsel %vm1394, %v1156, 0.0
      %v1659 = vadd.f32 %v1657, %v1658
      %v1660 = vsel %vm1394, %v1159, 0.0
      %v1661 = vadd.f32 %v1659, %v1660
      %v1662 = vsel %vm1394, %v1164, 0.0
      %v1663 = vadd.f32 %v1661, %v1662
      %v1664 = vsel %vm1394, %v1167, 0.0
      %v1665 = vadd.f32 %v1663, %v1664
      %v1666 = vsel %vm1394, %v1172, 0.0
      %v1667 = vadd.f32 %v1665, %v1666
      %v1668 = vsel %vm1394, %v1175, 0.0
      %v1669 = vadd.f32 %v1667, %v1668
      %v1670 = vsel %vm1394, %v1180, 0.0
      %v1671 = vadd.f32 %v1669, %v1670
      %v1672 = vsel %vm1394, %v1183, 0.0
      %v1673 = vadd.f32 %v1671, %v1672
      %v1674 = vsel %vm1394, %v1188, 0.0
      %v1675 = vadd.f32 %v1673, %v1674
      %v1676 = vsel %vm1394, %v1191, 0.0
      %v1677 = vadd.f32 %v1675, %v1676
      %v1678 = vsel %vm1394, %v1196, 0.0
      %v1679 = vadd.f32 %v1677, %v1678
      %v1680 = vsel %vm1394, %v1199, 0.0
      %v1681 = vadd.f32 %v1679, %v1680
      %v1682 = vsel %vm1394, %v1204, 0.0
      %v1683 = vadd.f32 %v1681, %v1682
      %v1684 = vsel %vm1394, %v1207, 0.0
      %v1685 = vadd.f32 %v1683, %v1684
      %v1686 = vsel %vm1394, %v1212, 0.0
      %v1687 = vadd.f32 %v1685, %v1686
      %v1688 = vsel %vm1394, %v1215, 0.0
      %v1689 = vadd.f32 %v1687, %v1688
      %v1690 = vsel %vm1394, %v1220, 0.0
      %v1691 = vadd.f32 %v1689, %v1690
      %v1692 = vsel %vm1394, %v1223, 0.0
      %v1693 = vadd.f32 %v1691, %v1692
      %v1694 = vsel %vm1394, %v1228, 0.0
      %v1695 = vadd.f32 %v1693, %v1694
      %v1696 = vsel %vm1394, %v1231, 0.0
      %v1697 = vadd.f32 %v1695, %v1696
      %v1698 = vsel %vm1394, %v1236, 0.0
      %v1699 = vadd.f32 %v1697, %v1698
      %v1700 = vsel %vm1394, %v1239, 0.0
      %v1701 = vadd.f32 %v1699, %v1700
      %v1702 = vsel %vm1394, %v1244, 0.0
      %v1703 = vadd.f32 %v1701, %v1702
      %v1704 = vsel %vm1394, %v1247, 0.0
      %v1705 = vadd.f32 %v1703, %v1704
      %v1706 = vsel %vm1394, %v1252, 0.0
      %v1707 = vadd.f32 %v1705, %v1706
      %v1708 = vsel %vm1394, %v1255, 0.0
      %v1709 = vadd.f32 %v1707, %v1708
      %v1710 = vsel %vm1394, %v1260, 0.0
      %v1711 = vadd.f32 %v1709, %v1710
      %v1712 = vsel %vm1394, %v1263, 0.0
      %v1713 = vadd.f32 %v1711, %v1712
      %v1714 = vsel %vm1394, %v1268, 0.0
      %v1715 = vadd.f32 %v1713, %v1714
      %v1716 = vsel %vm1394, %v1271, 0.0
      %v1717 = vadd.f32 %v1715, %v1716
      %v1718 = vsel %vm1394, %v1276, 0.0
      %v1719 = vadd.f32 %v1717, %v1718
      %v1720 = vsel %vm1394, %v1279, 0.0
      %v1721 = vadd.f32 %v1719, %v1720
      %v1722 = vsel %vm1394, %v1284, 0.0
      %v1723 = vadd.f32 %v1721, %v1722
      %v1724 = vsel %vm1394, %v1287, 0.0
      %v1725 = vadd.f32 %v1723, %v1724
      %v1726 = vsel %vm1394, %v1292, 0.0
      %v1727 = vadd.f32 %v1725, %v1726
      %v1728 = vsel %vm1394, %v1295, 0.0
      %v1729 = vadd.f32 %v1727, %v1728
      %v1730 = vsel %vm1394, %v1300, 0.0
      %v1731 = vadd.f32 %v1729, %v1730
      %v1732 = vsel %vm1394, %v1303, 0.0
      %v1733 = vadd.f32 %v1731, %v1732
      %v1734 = vsel %vm1394, %v1308, 0.0
      %v1735 = vadd.f32 %v1733, %v1734
      %v1736 = vsel %vm1394, %v1311, 0.0
      %v1737 = vadd.f32 %v1735, %v1736
      %v1738 = vsel %vm1394, %v1316, 0.0
      %v1739 = vadd.f32 %v1737, %v1738
      %v1740 = vsel %vm1394, %v1319, 0.0
      %v1741 = vadd.f32 %v1739, %v1740
      %v1742 = vsel %vm1394, %v1324, 0.0
      %v1743 = vadd.f32 %v1741, %v1742
      %v1744 = vsel %vm1394, %v1327, 0.0
      %v1745 = vadd.f32 %v1743, %v1744
      %v1746 = vsel %vm1394, %v1332, 0.0
      %v1747 = vadd.f32 %v1745, %v1746
      %v1748 = vsel %vm1394, %v1335, 0.0
      %v1749 = vadd.f32 %v1747, %v1748
      %v1750 = vsel %vm1394, %v1340, 0.0
      %v1751 = vadd.f32 %v1749, %v1750
      %v1752 = vsel %vm1394, %v1343, 0.0
      %v1753 = vadd.f32 %v1751, %v1752
      %v1754 = vsel %vm1394, %v1348, 0.0
      %v1755 = vadd.f32 %v1753, %v1754
      %v1756 = vsel %vm1394, %v1351, 0.0
      %v1757 = vadd.f32 %v1755, %v1756
      %v1758 = vsel %vm1394, %v1356, 0.0
      %v1759 = vadd.f32 %v1757, %v1758
      %v1760 = vsel %vm1394, %v1359, 0.0
      %v1761 = vadd.f32 %v1759, %v1760
      %v1762 = vsel %vm1394, %v1364, 0.0
      %v1763 = vadd.f32 %v1761, %v1762
      %v1764 = vsel %vm1394, %v1367, 0.0
      %v1765 = vadd.f32 %v1763, %v1764
      %v1766 = vsel %vm1394, %v1372, 0.0
      %v1767 = vadd.f32 %v1765, %v1766
      %v1768 = vsel %vm1394, %v1375, 0.0
      %v1769 = vadd.f32 %v1767, %v1768
      %v1770 = vsel %vm1394, %v1380, 0.0
      %v1771 = vadd.f32 %v1769, %v1770
      %v1772 = vsel %vm1394, %v1383, 0.0
      %v1773 = vadd.f32 %v1771, %v1772
      %v1774 = vsel %vm1394, %v1388, 0.0
      %v1775 = vadd.f32 %v1773, %v1774
      %v1776 = vsel %vm1394, %v1391, 0.0
      %v1777 = vadd.f32 %v1775, %v1776
      %v1778 = vrot.slane %v1777, 4
      %v1779 = vadd.f32 %v1777, %v1778
      %v1780 = vrot.slane %v1779, 2
      %v1781 = vadd.f32 %v1779, %v1780
      %v1782 = vrot.slane %v1781, 1
      %v1783 = vadd.f32 %v1781, %v1782
      %v1784 = vmul.f32 %v884, %v884
      %v1785 = vmul.f32 %v887, %v887
      %v1786 = vmul.f32 %v892, %v892
      %v1787 = vmul.f32 %v895, %v895
      %v1788 = vmul.f32 %v900, %v900
      %v1789 = vmul.f32 %v903, %v903
      %v1790 = vmul.f32 %v908, %v908
      %v1791 = vmul.f32 %v911, %v911
      %v1792 = vmul.f32 %v916, %v916
      %v1793 = vmul.f32 %v919, %v919
      %v1794 = vmul.f32 %v924, %v924
      %v1795 = vmul.f32 %v927, %v927
      %v1796 = vmul.f32 %v932, %v932
      %v1797 = vmul.f32 %v935, %v935
      %v1798 = vmul.f32 %v940, %v940
      %v1799 = vmul.f32 %v943, %v943
      %v1800 = vmul.f32 %v948, %v948
      %v1801 = vmul.f32 %v951, %v951
      %v1802 = vmul.f32 %v956, %v956
      %v1803 = vmul.f32 %v959, %v959
      %v1804 = vmul.f32 %v964, %v964
      %v1805 = vmul.f32 %v967, %v967
      %v1806 = vmul.f32 %v972, %v972
      %v1807 = vmul.f32 %v975, %v975
      %v1808 = vmul.f32 %v980, %v980
      %v1809 = vmul.f32 %v983, %v983
      %v1810 = vmul.f32 %v988, %v988
      %v1811 = vmul.f32 %v991, %v991
      %v1812 = vmul.f32 %v996, %v996
      %v1813 = vmul.f32 %v999, %v999
      %v1814 = vmul.f32 %v1004, %v1004
      %v1815 = vmul.f32 %v1007, %v1007
      %v1816 = vmul.f32 %v1012, %v1012
      %v1817 = vmul.f32 %v1015, %v1015
      %v1818 = vmul.f32 %v1020, %v1020
      %v1819 = vmul.f32 %v1023, %v1023
      %v1820 = vmul.f32 %v1028, %v1028
      %v1821 = vmul.f32 %v1031, %v1031
      %v1822 = vmul.f32 %v1036, %v1036
      %v1823 = vmul.f32 %v1039, %v1039
      %v1824 = vmul.f32 %v1044, %v1044
      %v1825 = vmul.f32 %v1047, %v1047
      %v1826 = vmul.f32 %v1052, %v1052
      %v1827 = vmul.f32 %v1055, %v1055
      %v1828 = vmul.f32 %v1060, %v1060
      %v1829 = vmul.f32 %v1063, %v1063
      %v1830 = vmul.f32 %v1068, %v1068
      %v1831 = vmul.f32 %v1071, %v1071
      %v1832 = vmul.f32 %v1076, %v1076
      %v1833 = vmul.f32 %v1079, %v1079
      %v1834 = vmul.f32 %v1084, %v1084
      %v1835 = vmul.f32 %v1087, %v1087
      %v1836 = vmul.f32 %v1092, %v1092
      %v1837 = vmul.f32 %v1095, %v1095
      %v1838 = vmul.f32 %v1100, %v1100
      %v1839 = vmul.f32 %v1103, %v1103
      %v1840 = vmul.f32 %v1108, %v1108
      %v1841 = vmul.f32 %v1111, %v1111
      %v1842 = vmul.f32 %v1116, %v1116
      %v1843 = vmul.f32 %v1119, %v1119
      %v1844 = vmul.f32 %v1124, %v1124
      %v1845 = vmul.f32 %v1127, %v1127
      %v1846 = vmul.f32 %v1132, %v1132
      %v1847 = vmul.f32 %v1135, %v1135
      %v1848 = vmul.f32 %v1140, %v1140
      %v1849 = vmul.f32 %v1143, %v1143
      %v1850 = vmul.f32 %v1148, %v1148
      %v1851 = vmul.f32 %v1151, %v1151
      %v1852 = vmul.f32 %v1156, %v1156
      %v1853 = vmul.f32 %v1159, %v1159
      %v1854 = vmul.f32 %v1164, %v1164
      %v1855 = vmul.f32 %v1167, %v1167
      %v1856 = vmul.f32 %v1172, %v1172
      %v1857 = vmul.f32 %v1175, %v1175
      %v1858 = vmul.f32 %v1180, %v1180
      %v1859 = vmul.f32 %v1183, %v1183
      %v1860 = vmul.f32 %v1188, %v1188
      %v1861 = vmul.f32 %v1191, %v1191
      %v1862 = vmul.f32 %v1196, %v1196
      %v1863 = vmul.f32 %v1199, %v1199
      %v1864 = vmul.f32 %v1204, %v1204
      %v1865 = vmul.f32 %v1207, %v1207
      %v1866 = vmul.f32 %v1212, %v1212
      %v1867 = vmul.f32 %v1215, %v1215
      %v1868 = vmul.f32 %v1220, %v1220
      %v1869 = vmul.f32 %v1223, %v1223
      %v1870 = vmul.f32 %v1228, %v1228
      %v1871 = vmul.f32 %v1231, %v1231
      %v1872 = vmul.f32 %v1236, %v1236
      %v1873 = vmul.f32 %v1239, %v1239
      %v1874 = vmul.f32 %v1244, %v1244
      %v1875 = vmul.f32 %v1247, %v1247
      %v1876 = vmul.f32 %v1252, %v1252
      %v1877 = vmul.f32 %v1255, %v1255
      %v1878 = vmul.f32 %v1260, %v1260
      %v1879 = vmul.f32 %v1263, %v1263
      %v1880 = vmul.f32 %v1268, %v1268
      %v1881 = vmul.f32 %v1271, %v1271
      %v1882 = vmul.f32 %v1276, %v1276
      %v1883 = vmul.f32 %v1279, %v1279
      %v1884 = vmul.f32 %v1284, %v1284
      %v1885 = vmul.f32 %v1287, %v1287
      %v1886 = vmul.f32 %v1292, %v1292
      %v1887 = vmul.f32 %v1295, %v1295
      %v1888 = vmul.f32 %v1300, %v1300
      %v1889 = vmul.f32 %v1303, %v1303
      %v1890 = vmul.f32 %v1308, %v1308
      %v1891 = vmul.f32 %v1311, %v1311
      %v1892 = vmul.f32 %v1316, %v1316
      %v1893 = vmul.f32 %v1319, %v1319
      %v1894 = vmul.f32 %v1324, %v1324
      %v1895 = vmul.f32 %v1327, %v1327
      %v1896 = vmul.f32 %v1332, %v1332
      %v1897 = vmul.f32 %v1335, %v1335
      %v1898 = vmul.f32 %v1340, %v1340
      %v1899 = vmul.f32 %v1343, %v1343
      %v1900 = vmul.f32 %v1348, %v1348
      %v1901 = vmul.f32 %v1351, %v1351
      %v1902 = vmul.f32 %v1356, %v1356
      %v1903 = vmul.f32 %v1359, %v1359
      %v1904 = vmul.f32 %v1364, %v1364
      %v1905 = vmul.f32 %v1367, %v1367
      %v1906 = vmul.f32 %v1372, %v1372
      %v1907 = vmul.f32 %v1375, %v1375
      %v1908 = vmul.f32 %v1380, %v1380
      %v1909 = vmul.f32 %v1383, %v1383
      %v1910 = vmul.f32 %v1388, %v1388
      %v1911 = vmul.f32 %v1391, %v1391
      %v1912 = vsel %vm1394, %v1784, 0.0
      %v1913 = vsel %vm1394, %v1785, 0.0
      %v1914 = vadd.f32 %v1912, %v1913
      %v1915 = vsel %vm1394, %v1786, 0.0
      %v1916 = vadd.f32 %v1914, %v1915
      %v1917 = vsel %vm1394, %v1787, 0.0
      %v1918 = vadd.f32 %v1916, %v1917
      %v1919 = vsel %vm1394, %v1788, 0.0
      %v1920 = vadd.f32 %v1918, %v1919
      %v1921 = vsel %vm1394, %v1789, 0.0
      %v1922 = vadd.f32 %v1920, %v1921
      %v1923 = vsel %vm1394, %v1790, 0.0
      %v1924 = vadd.f32 %v1922, %v1923
      %v1925 = vsel %vm1394, %v1791, 0.0
      %v1926 = vadd.f32 %v1924, %v1925
      %v1927 = vsel %vm1394, %v1792, 0.0
      %v1928 = vadd.f32 %v1926, %v1927
      %v1929 = vsel %vm1394, %v1793, 0.0
      %v1930 = vadd.f32 %v1928, %v1929
      %v1931 = vsel %vm1394, %v1794, 0.0
      %v1932 = vadd.f32 %v1930, %v1931
      %v1933 = vsel %vm1394, %v1795, 0.0
      %v1934 = vadd.f32 %v1932, %v1933
      %v1935 = vsel %vm1394, %v1796, 0.0
      %v1936 = vadd.f32 %v1934, %v1935
      %v1937 = vsel %vm1394, %v1797, 0.0
      %v1938 = vadd.f32 %v1936, %v1937
      %v1939 = vsel %vm1394, %v1798, 0.0
      %v1940 = vadd.f32 %v1938, %v1939
      %v1941 = vsel %vm1394, %v1799, 0.0
      %v1942 = vadd.f32 %v1940, %v1941
      %v1943 = vsel %vm1394, %v1800, 0.0
      %v1944 = vadd.f32 %v1942, %v1943
      %v1945 = vsel %vm1394, %v1801, 0.0
      %v1946 = vadd.f32 %v1944, %v1945
      %v1947 = vsel %vm1394, %v1802, 0.0
      %v1948 = vadd.f32 %v1946, %v1947
      %v1949 = vsel %vm1394, %v1803, 0.0
      %v1950 = vadd.f32 %v1948, %v1949
      %v1951 = vsel %vm1394, %v1804, 0.0
      %v1952 = vadd.f32 %v1950, %v1951
      %v1953 = vsel %vm1394, %v1805, 0.0
      %v1954 = vadd.f32 %v1952, %v1953
      %v1955 = vsel %vm1394, %v1806, 0.0
      %v1956 = vadd.f32 %v1954, %v1955
      %v1957 = vsel %vm1394, %v1807, 0.0
      %v1958 = vadd.f32 %v1956, %v1957
      %v1959 = vsel %vm1394, %v1808, 0.0
      %v1960 = vadd.f32 %v1958, %v1959
      %v1961 = vsel %vm1394, %v1809, 0.0
      %v1962 = vadd.f32 %v1960, %v1961
      %v1963 = vsel %vm1394, %v1810, 0.0
      %v1964 = vadd.f32 %v1962, %v1963
      %v1965 = vsel %vm1394, %v1811, 0.0
      %v1966 = vadd.f32 %v1964, %v1965
      %v1967 = vsel %vm1394, %v1812, 0.0
      %v1968 = vadd.f32 %v1966, %v1967
      %v1969 = vsel %vm1394, %v1813, 0.0
      %v1970 = vadd.f32 %v1968, %v1969
      %v1971 = vsel %vm1394, %v1814, 0.0
      %v1972 = vadd.f32 %v1970, %v1971
      %v1973 = vsel %vm1394, %v1815, 0.0
      %v1974 = vadd.f32 %v1972, %v1973
      %v1975 = vsel %vm1394, %v1816, 0.0
      %v1976 = vadd.f32 %v1974, %v1975
      %v1977 = vsel %vm1394, %v1817, 0.0
      %v1978 = vadd.f32 %v1976, %v1977
      %v1979 = vsel %vm1394, %v1818, 0.0
      %v1980 = vadd.f32 %v1978, %v1979
      %v1981 = vsel %vm1394, %v1819, 0.0
      %v1982 = vadd.f32 %v1980, %v1981
      %v1983 = vsel %vm1394, %v1820, 0.0
      %v1984 = vadd.f32 %v1982, %v1983
      %v1985 = vsel %vm1394, %v1821, 0.0
      %v1986 = vadd.f32 %v1984, %v1985
      %v1987 = vsel %vm1394, %v1822, 0.0
      %v1988 = vadd.f32 %v1986, %v1987
      %v1989 = vsel %vm1394, %v1823, 0.0
      %v1990 = vadd.f32 %v1988, %v1989
      %v1991 = vsel %vm1394, %v1824, 0.0
      %v1992 = vadd.f32 %v1990, %v1991
      %v1993 = vsel %vm1394, %v1825, 0.0
      %v1994 = vadd.f32 %v1992, %v1993
      %v1995 = vsel %vm1394, %v1826, 0.0
      %v1996 = vadd.f32 %v1994, %v1995
      %v1997 = vsel %vm1394, %v1827, 0.0
      %v1998 = vadd.f32 %v1996, %v1997
      %v1999 = vsel %vm1394, %v1828, 0.0
      %v2000 = vadd.f32 %v1998, %v1999
      %v2001 = vsel %vm1394, %v1829, 0.0
      %v2002 = vadd.f32 %v2000, %v2001
      %v2003 = vsel %vm1394, %v1830, 0.0
      %v2004 = vadd.f32 %v2002, %v2003
      %v2005 = vsel %vm1394, %v1831, 0.0
      %v2006 = vadd.f32 %v2004, %v2005
      %v2007 = vsel %vm1394, %v1832, 0.0
      %v2008 = vadd.f32 %v2006, %v2007
      %v2009 = vsel %vm1394, %v1833, 0.0
      %v2010 = vadd.f32 %v2008, %v2009
      %v2011 = vsel %vm1394, %v1834, 0.0
      %v2012 = vadd.f32 %v2010, %v2011
      %v2013 = vsel %vm1394, %v1835, 0.0
      %v2014 = vadd.f32 %v2012, %v2013
      %v2015 = vsel %vm1394, %v1836, 0.0
      %v2016 = vadd.f32 %v2014, %v2015
      %v2017 = vsel %vm1394, %v1837, 0.0
      %v2018 = vadd.f32 %v2016, %v2017
      %v2019 = vsel %vm1394, %v1838, 0.0
      %v2020 = vadd.f32 %v2018, %v2019
      %v2021 = vsel %vm1394, %v1839, 0.0
      %v2022 = vadd.f32 %v2020, %v2021
      %v2023 = vsel %vm1394, %v1840, 0.0
      %v2024 = vadd.f32 %v2022, %v2023
      %v2025 = vsel %vm1394, %v1841, 0.0
      %v2026 = vadd.f32 %v2024, %v2025
      %v2027 = vsel %vm1394, %v1842, 0.0
      %v2028 = vadd.f32 %v2026, %v2027
      %v2029 = vsel %vm1394, %v1843, 0.0
      %v2030 = vadd.f32 %v2028, %v2029
      %v2031 = vsel %vm1394, %v1844, 0.0
      %v2032 = vadd.f32 %v2030, %v2031
      %v2033 = vsel %vm1394, %v1845, 0.0
      %v2034 = vadd.f32 %v2032, %v2033
      %v2035 = vsel %vm1394, %v1846, 0.0
      %v2036 = vadd.f32 %v2034, %v2035
      %v2037 = vsel %vm1394, %v1847, 0.0
      %v2038 = vadd.f32 %v2036, %v2037
      %v2039 = vsel %vm1394, %v1848, 0.0
      %v2040 = vadd.f32 %v2038, %v2039
      %v2041 = vsel %vm1394, %v1849, 0.0
      %v2042 = vadd.f32 %v2040, %v2041
      %v2043 = vsel %vm1394, %v1850, 0.0
      %v2044 = vadd.f32 %v2042, %v2043
      %v2045 = vsel %vm1394, %v1851, 0.0
      %v2046 = vadd.f32 %v2044, %v2045
      %v2047 = vsel %vm1394, %v1852, 0.0
      %v2048 = vadd.f32 %v2046, %v2047
      %v2049 = vsel %vm1394, %v1853, 0.0
      %v2050 = vadd.f32 %v2048, %v2049
      %v2051 = vsel %vm1394, %v1854, 0.0
      %v2052 = vadd.f32 %v2050, %v2051
      %v2053 = vsel %vm1394, %v1855, 0.0
      %v2054 = vadd.f32 %v2052, %v2053
      %v2055 = vsel %vm1394, %v1856, 0.0
      %v2056 = vadd.f32 %v2054, %v2055
      %v2057 = vsel %vm1394, %v1857, 0.0
      %v2058 = vadd.f32 %v2056, %v2057
      %v2059 = vsel %vm1394, %v1858, 0.0
      %v2060 = vadd.f32 %v2058, %v2059
      %v2061 = vsel %vm1394, %v1859, 0.0
      %v2062 = vadd.f32 %v2060, %v2061
      %v2063 = vsel %vm1394, %v1860, 0.0
      %v2064 = vadd.f32 %v2062, %v2063
      %v2065 = vsel %vm1394, %v1861, 0.0
      %v2066 = vadd.f32 %v2064, %v2065
      %v2067 = vsel %vm1394, %v1862, 0.0
      %v2068 = vadd.f32 %v2066, %v2067
      %v2069 = vsel %vm1394, %v1863, 0.0
      %v2070 = vadd.f32 %v2068, %v2069
      %v2071 = vsel %vm1394, %v1864, 0.0
      %v2072 = vadd.f32 %v2070, %v2071
      %v2073 = vsel %vm1394, %v1865, 0.0
      %v2074 = vadd.f32 %v2072, %v2073
      %v2075 = vsel %vm1394, %v1866, 0.0
      %v2076 = vadd.f32 %v2074, %v2075
      %v2077 = vsel %vm1394, %v1867, 0.0
      %v2078 = vadd.f32 %v2076, %v2077
      %v2079 = vsel %vm1394, %v1868, 0.0
      %v2080 = vadd.f32 %v2078, %v2079
      %v2081 = vsel %vm1394, %v1869, 0.0
      %v2082 = vadd.f32 %v2080, %v2081
      %v2083 = vsel %vm1394, %v1870, 0.0
      %v2084 = vadd.f32 %v2082, %v2083
      %v2085 = vsel %vm1394, %v1871, 0.0
      %v2086 = vadd.f32 %v2084, %v2085
      %v2087 = vsel %vm1394, %v1872, 0.0
      %v2088 = vadd.f32 %v2086, %v2087
      %v2089 = vsel %vm1394, %v1873, 0.0
      %v2090 = vadd.f32 %v2088, %v2089
      %v2091 = vsel %vm1394, %v1874, 0.0
      %v2092 = vadd.f32 %v2090, %v2091
      %v2093 = vsel %vm1394, %v1875, 0.0
      %v2094 = vadd.f32 %v2092, %v2093
      %v2095 = vsel %vm1394, %v1876, 0.0
      %v2096 = vadd.f32 %v2094, %v2095
      %v2097 = vsel %vm1394, %v1877, 0.0
      %v2098 = vadd.f32 %v2096, %v2097
      %v2099 = vsel %vm1394, %v1878, 0.0
      %v2100 = vadd.f32 %v2098, %v2099
      %v2101 = vsel %vm1394, %v1879, 0.0
      %v2102 = vadd.f32 %v2100, %v2101
      %v2103 = vsel %vm1394, %v1880, 0.0
      %v2104 = vadd.f32 %v2102, %v2103
      %v2105 = vsel %vm1394, %v1881, 0.0
      %v2106 = vadd.f32 %v2104, %v2105
      %v2107 = vsel %vm1394, %v1882, 0.0
      %v2108 = vadd.f32 %v2106, %v2107
      %v2109 = vsel %vm1394, %v1883, 0.0
      %v2110 = vadd.f32 %v2108, %v2109
      %v2111 = vsel %vm1394, %v1884, 0.0
      %v2112 = vadd.f32 %v2110, %v2111
      %v2113 = vsel %vm1394, %v1885, 0.0
      %v2114 = vadd.f32 %v2112, %v2113
      %v2115 = vsel %vm1394, %v1886, 0.0
      %v2116 = vadd.f32 %v2114, %v2115
      %v2117 = vsel %vm1394, %v1887, 0.0
      %v2118 = vadd.f32 %v2116, %v2117
      %v2119 = vsel %vm1394, %v1888, 0.0
      %v2120 = vadd.f32 %v2118, %v2119
      %v2121 = vsel %vm1394, %v1889, 0.0
      %v2122 = vadd.f32 %v2120, %v2121
      %v2123 = vsel %vm1394, %v1890, 0.0
      %v2124 = vadd.f32 %v2122, %v2123
      %v2125 = vsel %vm1394, %v1891, 0.0
      %v2126 = vadd.f32 %v2124, %v2125
      %v2127 = vsel %vm1394, %v1892, 0.0
      %v2128 = vadd.f32 %v2126, %v2127
      %v2129 = vsel %vm1394, %v1893, 0.0
      %v2130 = vadd.f32 %v2128, %v2129
      %v2131 = vsel %vm1394, %v1894, 0.0
      %v2132 = vadd.f32 %v2130, %v2131
      %v2133 = vsel %vm1394, %v1895, 0.0
      %v2134 = vadd.f32 %v2132, %v2133
      %v2135 = vsel %vm1394, %v1896, 0.0
      %v2136 = vadd.f32 %v2134, %v2135
      %v2137 = vsel %vm1394, %v1897, 0.0
      %v2138 = vadd.f32 %v2136, %v2137
      %v2139 = vsel %vm1394, %v1898, 0.0
      %v2140 = vadd.f32 %v2138, %v2139
      %v2141 = vsel %vm1394, %v1899, 0.0
      %v2142 = vadd.f32 %v2140, %v2141
      %v2143 = vsel %vm1394, %v1900, 0.0
      %v2144 = vadd.f32 %v2142, %v2143
      %v2145 = vsel %vm1394, %v1901, 0.0
      %v2146 = vadd.f32 %v2144, %v2145
      %v2147 = vsel %vm1394, %v1902, 0.0
      %v2148 = vadd.f32 %v2146, %v2147
      %v2149 = vsel %vm1394, %v1903, 0.0
      %v2150 = vadd.f32 %v2148, %v2149
      %v2151 = vsel %vm1394, %v1904, 0.0
      %v2152 = vadd.f32 %v2150, %v2151
      %v2153 = vsel %vm1394, %v1905, 0.0
      %v2154 = vadd.f32 %v2152, %v2153
      %v2155 = vsel %vm1394, %v1906, 0.0
      %v2156 = vadd.f32 %v2154, %v2155
      %v2157 = vsel %vm1394, %v1907, 0.0
      %v2158 = vadd.f32 %v2156, %v2157
      %v2159 = vsel %vm1394, %v1908, 0.0
      %v2160 = vadd.f32 %v2158, %v2159
      %v2161 = vsel %vm1394, %v1909, 0.0
      %v2162 = vadd.f32 %v2160, %v2161
      %v2163 = vsel %vm1394, %v1910, 0.0
      %v2164 = vadd.f32 %v2162, %v2163
      %v2165 = vsel %vm1394, %v1911, 0.0
      %v2166 = vadd.f32 %v2164, %v2165
      %v2167 = vrot.slane %v2166, 4
      %v2168 = vadd.f32 %v2166, %v2167
      %v2169 = vrot.slane %v2168, 2
      %v2170 = vadd.f32 %v2168, %v2169
      %v2171 = vrot.slane %v2170, 1
      %v2172 = vadd.f32 %v2170, %v2171
      %vm2173 = vcmask 1040384
      %v2174 = vsel %vm2173, %v1783, %v2172
      %vm2175 = vcmask 1041408
      %v2176 = vsel %vm2175, %v2174, 0.0
      %2177 = vst.msk [vmem:[%s184] sm:$0xff] %vm1394, %v2176
      %s2178 = smul.u32 128, %s15
      %p2179 = scmp.lt.s32.totalorder %s2178, 255
      %s2180 = scalar_select %p2179, %s2178, 255
      %s2181 = smul.addr %s2180, 8
      %s2182 = scalar_lea.vmem %s2, %s2181
      %p2183 = scmp.lt.s32.totalorder %s15, 1
      %s2184 = scalar_select %p2183, %s15, 1
      %s2185 = smul.addr %s2184, 8
      %s2186 = scalar_lea.vmem %s3, %s2185
      // Predicated region
      $region29: #{resnet2_forward.15} parent=27 // pred_check
        %p2187 = pneg %p80
      $region30: #{resnet2_forward.15} parent=27 // pred_check_branch
        %2189 = sbr.rel (%p2187) target = $region32
      $region31: #{resnet2_forward.15} parent=27 // pred_region
        %s2190 = smul.u32 128, %s15
      $region32: #{resnet2_forward.15} parent=27 // pred_fallthru
        _
      // Predicated region
      $region33: #{resnet2_forward.15} parent=27 // pred_check
        %p2191 = pneg %p106
      $region34: #{resnet2_forward.15} parent=27 // pred_check_branch
        %2193 = sbr.rel (%p2191) target = $region36
      $region35: #{resnet2_forward.15} parent=27 // pred_region
        _
      $region36: #{resnet2_forward.15} parent=27 // pred_fallthru
        _
    $region28: #{resnet2_forward.15} parent=5 // pred_fallthru
      _
    %p2194 = scmp.le.s32.totalorder 2, %s10
    // Predicated region
    $region37: #{resnet2_forward.15} parent=5 // pred_check
      %p2195 = pneg %p2194
    $region38: #{resnet2_forward.15} parent=5 // pred_check_branch
      %2197 = sbr.rel (%p2195) target = $region40
    $region39: #{resnet2_forward.15} parent=5 // pred_region
      %s2198 = ssub.s32 %s10, 2
      // Predicated region
      $region41: #{resnet2_forward.15} parent=39 // pred_check
        %p2199 = pneg %p86
      $region42: #{resnet2_forward.15} parent=39 // pred_check_branch
        %2201 = sbr.rel (%p2199) target = $region44
      $region43: #{resnet2_forward.15} parent=39 // pred_region
        %s2202 = smul.u32 128, %s16
        %p2203 = scmp.lt.s32.totalorder %s2202, 255
        %s2204 = scalar_select %p2203, %s2202, 255
        %s2205 = smul.addr %s2204, 8
        %s2206 = scalar_lea.vmem %s2, %s2205
      $region44: #{resnet2_forward.15} parent=39 // pred_fallthru
        _
      // Predicated region
      $region45: #{resnet2_forward.15} parent=39 // pred_check
        %p2207 = pneg %p112
      $region46: #{resnet2_forward.15} parent=39 // pred_check_branch
        %2209 = sbr.rel (%p2207) target = $region48
      $region47: #{resnet2_forward.15} parent=39 // pred_region
        %p2210 = scmp.lt.s32.totalorder %s16, 1
        %s2211 = scalar_select %p2210, %s16, 1
        %s2212 = smul.addr %s2211, 8
        %s2213 = scalar_lea.vmem %s3, %s2212
      $region48: #{resnet2_forward.15} parent=39 // pred_fallthru
        _
    $region40: #{resnet2_forward.15} parent=5 // pred_fallthru
      _
  $region6: #{resnet2_forward.15} parent=0 // loop_footer
    %s14 = sadd.s32 1, %s10
  $region7: #{resnet2_forward.15} parent=0 // loop_footer_branch
    %9 = sbr.rel target = $region3
  $region8: #{resnet2_forward.15} parent=0 // loop_exit
    _

// kernel: resnet2_forward.17
$region0: #{resnet2_forward.17}
  #allocation0 [shape = 'u32[]', space=smem, size = 0x4, offset = 0x4, fixed_abs, tag = 'smem constant byte address 0x4 - core index']
  #allocation1 [shape = 'u32[144,128]{1,0:T(1,128)}', space=vmem, size = 0x12000, scoped, tag = 'internal scratch']
  %s0 = inlined_call_operand.vmem [shape: bf16[2048,144], index: 0, kind: input, shape index: {}]
  %s1 = inlined_call_operand.vmem [shape: bf16[144,16], index: 1, kind: input, shape index: {}]
  %s2 = inlined_call_operand.vmem [shape: f32[2048,16], index: 2, kind: output, shape index: {0}]
  %s3 = inlined_call_operand.vmem [shape: f32[16,16], index: 3, kind: output, shape index: {1}]
  %4 = xla_tuple %s2, %s3
  %s5 = sld [smem:[#allocation0]]
  $region49: #{resnet2_forward.17} parent=0
    _
  %s7 = ssub.s32 1, %s5
  %s8 = scalar_select 0, %s7, %s5
  loop: start=0, step=1, limit=4
  $region2: #{resnet2_forward.17} parent=0 // loop_pre_header
    _
  $region3: #{resnet2_forward.17} parent=0 // loop_header
    %s10 = sphi 0, %s14
    %p11 = scmp.ge.s32.totalorder %s10, 4
    %s20 = sphi 0, %s22
    %s23 = sphi 0, %s20
    %s24 = sphi 0, %s23
    %s40 = sphi 0, %s24
    %s44 = sphi 0, %s44
    %s46 = sphi 0, %s44
    %s47 = sphi 0, %s46
    %s61 = sphi 0, %s47
    %s67 = sphi 0, %s69
    %s70 = sphi 0, %s67
    %s71 = sphi 0, %s70
    %s87 = sphi 0, %s71
    %s93 = sphi 0, %s95
    %s96 = sphi 0, %s93
    %s97 = sphi 0, %s96
    %s113 = sphi 0, %s97
  $region4: #{resnet2_forward.17} parent=0 // loop_header_branch
    %13 = sbr.rel (%p11) target = $region8
  $region5: #{resnet2_forward.17} parent=0 // loop_body
    %s15 = ssub.s32 %s10, 1
    %s16 = ssub.s32 %s10, 2
    %s17 = sadd.s32 %s10, 1
    %s18 = ssub.s32 %s10, %s17
    %p19 = scmp.eq.s32.totalorder %s18, 0
    %s21 = sadd.s32 %s20, 1
    %s22 = scalar_select %p19, %s20, %s21
    %p25 = pneg %p19
    %p26 = scmp.eq.s32.totalorder %s10, 1
    %p27 = por %p25, %p26
    %p28 = scmp.ne.s32.totalorder %s20, %s23
    %p29 = scmp.eq.s32.totalorder %s10, 0
    %p30 = por %p28, %p29
    %p31 = scmp.ne.s32.totalorder %s20, %s23
    %p32 = scmp.eq.s32.totalorder %s15, 1
    %p33 = por %p31, %p32
    %p34 = scmp.ne.s32.totalorder %s23, %s24
    %p35 = scmp.eq.s32.totalorder %s15, 0
    %p36 = por %p34, %p35
    %p37 = scmp.ne.s32.totalorder %s23, %s24
    %p38 = scmp.eq.s32.totalorder %s16, 1
    %p39 = por %p37, %p38
    %p41 = scmp.ne.s32.totalorder %s24, %s40
    %p42 = scmp.eq.s32.totalorder %s16, 0
    %p43 = por %p41, %p42
    %s45 = sadd.s32 %s44, 1
    %p48 = scmp.eq.s32.totalorder %s10, 1
    %p49 = scmp.ne.s32.totalorder %s44, %s46
    %p50 = scmp.eq.s32.totalorder %s10, 0
    %p51 = por %p49, %p50
    %p52 = scmp.ne.s32.totalorder %s44, %s46
    %p53 = scmp.eq.s32.totalorder %s15, 1
    %p54 = por %p52, %p53
    %p55 = scmp.ne.s32.totalorder %s46, %s47
    %p56 = scmp.eq.s32.totalorder %s15, 0
    %p57 = por %p55, %p56
    %p58 = scmp.ne.s32.totalorder %s46, %s47
    %p59 = scmp.eq.s32.totalorder %s16, 1
    %p60 = por %p58, %p59
    %p62 = scmp.ne.s32.totalorder %s47, %s61
    %p63 = scmp.eq.s32.totalorder %s16, 0
    %p64 = por %p62, %p63
    %s65 = ssub.s32 %s10, %s17
    %p66 = scmp.eq.s32.totalorder %s65, 0
    %s68 = sadd.s32 %s67, 1
    %s69 = scalar_select %p66, %s67, %s68
    %p72 = pneg %p66
    %p73 = scmp.eq.s32.totalorder %s10, 1
    %p74 = por %p72, %p73
    %p75 = scmp.ne.s32.totalorder %s67, %s70
    %p76 = scmp.eq.s32.totalorder %s10, 0
    %p77 = por %p75, %p76
    %p78 = scmp.ne.s32.totalorder %s67, %s70
    %p79 = scmp.eq.s32.totalorder %s15, 1
    %p80 = por %p78, %p79
    %p81 = scmp.ne.s32.totalorder %s70, %s71
    %p82 = scmp.eq.s32.totalorder %s15, 0
    %p83 = por %p81, %p82
    %p84 = scmp.ne.s32.totalorder %s70, %s71
    %p85 = scmp.eq.s32.totalorder %s16, 1
    %p86 = por %p84, %p85
    %p88 = scmp.ne.s32.totalorder %s71, %s87
    %p89 = scmp.eq.s32.totalorder %s16, 0
    %p90 = por %p88, %p89
    %s91 = ssub.s32 %s10, %s17
    %p92 = scmp.eq.s32.totalorder %s91, 0
    %s94 = sadd.s32 %s93, 1
    %s95 = scalar_select %p92, %s93, %s94
    %p98 = pneg %p92
    %p99 = scmp.eq.s32.totalorder %s10, 1
    %p100 = por %p98, %p99
    %p101 = scmp.ne.s32.totalorder %s93, %s96
    %p102 = scmp.eq.s32.totalorder %s10, 0
    %p103 = por %p101, %p102
    %p104 = scmp.ne.s32.totalorder %s93, %s96
    %p105 = scmp.eq.s32.totalorder %s15, 1
    %p106 = por %p104, %p105
    %p107 = scmp.ne.s32.totalorder %s96, %s97
    %p108 = scmp.eq.s32.totalorder %s15, 0
    %p109 = por %p107, %p108
    %p110 = scmp.ne.s32.totalorder %s96, %s97
    %p111 = scmp.eq.s32.totalorder %s16, 1
    %p112 = por %p110, %p111
    %p114 = scmp.ne.s32.totalorder %s97, %s113
    %p115 = scmp.eq.s32.totalorder %s16, 0
    %p116 = por %p114, %p115
    %p117 = scmp.le.s32.totalorder 1, %s10
    %p118 = scmp.lt.s32.totalorder %s10, 3
    %p119 = pnand %p117, %p118
    %p120 = pneg %p119
    // Predicated region
    $region9: #{resnet2_forward.17} parent=5 // pred_check
      _
    $region10: #{resnet2_forward.17} parent=5 // pred_check_branch
      %122 = sbr.rel (%p119) target = $region12
    $region11: #{resnet2_forward.17} parent=5 // pred_region
      %s123 = ssub.s32 %s10, 1
      // Predicated region
      $region13: #{resnet2_forward.17} parent=11 // pred_check
        %p124 = pneg %p57
      $region14: #{resnet2_forward.17} parent=11 // pred_check_branch
        %126 = sbr.rel (%p124) target = $region16
      $region15: #{resnet2_forward.17} parent=11 // pred_region
        _
      $region16: #{resnet2_forward.17} parent=11 // pred_fallthru
        _
    $region12: #{resnet2_forward.17} parent=5 // pred_fallthru
      _
    %p127 = scmp.lt.s32.totalorder %s10, 2
    // Predicated region
    $region17: #{resnet2_forward.17} parent=5 // pred_check
      %p128 = pneg %p127
    $region18: #{resnet2_forward.17} parent=5 // pred_check_branch
      %130 = sbr.rel (%p128) target = $region20
    $region19: #{resnet2_forward.17} parent=5 // pred_region
      // Predicated region
      $region21: #{resnet2_forward.17} parent=19 // pred_check
        %p131 = pneg %p30
      $region22: #{resnet2_forward.17} parent=19 // pred_check_branch
        %133 = sbr.rel (%p131) target = $region24
      $region23: #{resnet2_forward.17} parent=19 // pred_region
        %s134 = smul.u32 128, %s10
        %p135 = scmp.lt.s32.totalorder %s134, 255
        %s136 = scalar_select %p135, %s134, 255
        %s137 = smul.addr %s136, 2
        %s138 = smul.addr %s137, 4
        %s139 = scalar_lea.vmem %s0, %s138
        %s140 = smul.u32 128, %s10
      $region24: #{resnet2_forward.17} parent=19 // pred_fallthru
        _
    $region20: #{resnet2_forward.17} parent=5 // pred_fallthru
      _
    %p141 = scmp.le.s32.totalorder 1, %s10
    %p142 = scmp.lt.s32.totalorder %s10, 3
    %p143 = pnand %p141, %p142
    %p144 = pneg %p143
    // Predicated region
    $region25: #{resnet2_forward.17} parent=5 // pred_check
      _
    $region26: #{resnet2_forward.17} parent=5 // pred_check_branch
      %146 = sbr.rel (%p143) target = $region28
    $region27: #{resnet2_forward.17} parent=5 // pred_region
      %s147 = ssub.s32 %s10, 1
      %s148 = smul.u32 128, %s15
      %p149 = scmp.lt.s32.totalorder %s148, 255
      %s150 = scalar_select %p149, %s148, 255
      %s151 = smul.addr %s150, 2
      %s152 = smul.addr %s151, 4
      %s153 = scalar_lea.vmem %s0, %s152
      %p154 = pneg %p36
      %p155 = pneg %p33
      %p156 = pneg %p57
      %p157 = pneg %p54
      %p158 = pneg %p83
      %p159 = pneg %p80
      %s160 = smul.u32 128, %s15
      %p161 = scmp.lt.s32.totalorder %s160, 255
      %s162 = scalar_select %p161, %s160, 255
      %s163 = smul.addr %s162, 8
      %s164 = scalar_lea.vmem %s2, %s163
      %p165 = pneg %p109
      %p166 = pneg %p106
      %p167 = scmp.lt.s32.totalorder %s15, 1
      %s168 = scalar_select %p167, %s15, 1
      %s169 = smul.addr %s168, 8
      %s170 = scalar_lea.vmem %s3, %s169
      %s171 = smul.u32 128, %s15
      %p172 = scmp.lt.s32.totalorder %s171, 255
      %s173 = scalar_select %p172, %s171, 255
      %s174 = smul.addr %s173, 2
      %s175 = smul.addr %s174, 4
      %s176 = scalar_lea.vmem %s0, %s175
      %s177 = smul.u32 128, %s15
      %s178 = smul.u32 128, %s15
      %p179 = scmp.lt.s32.totalorder %s178, 255
      %s180 = scalar_select %p179, %s178, 255
      %s181 = smul.addr %s180, 8
      %s182 = scalar_lea.vmem %s2, %s181
      %s183 = smul.u32 128, %s15
      %p184 = scmp.lt.s32.totalorder %s15, 1
      %s185 = scalar_select %p184, %s15, 1
      %s186 = smul.addr %s185, 8
      %s187 = scalar_lea.vmem %s3, %s186
      %v189 = vld [vmem:[%s176] sm:$0xff]
      %v190 = vld [vmem:[%s176 + $0x8] sm:$0xff]
      %v191 = vld [vmem:[%s176 + $0x10] sm:$0xff]
      %v192 = vld [vmem:[%s176 + $0x18] sm:$0xff]
      %v193 = vld [vmem:[%s176 + $0x20] sm:$0xff]
      %v194 = vld [vmem:[%s176 + $0x28] sm:$0xff]
      %v195 = vld [vmem:[%s176 + $0x30] sm:$0xff]
      %v196 = vld [vmem:[%s176 + $0x38] sm:$0xff]
      %v197 = vld [vmem:[%s176 + $0x40] sm:$0xff]
      %v198 = vld [vmem:[%s176 + $0x48] sm:$0xff]
      %v199 = vld [vmem:[%s176 + $0x50] sm:$0xff]
      %v200 = vld [vmem:[%s176 + $0x58] sm:$0xff]
      %v201 = vld [vmem:[%s176 + $0x60] sm:$0xff]
      %v202 = vld [vmem:[%s176 + $0x68] sm:$0xff]
      %v203 = vld [vmem:[%s176 + $0x70] sm:$0xff]
      %v204 = vld [vmem:[%s176 + $0x78] sm:$0xff]
      %v205 = vld [vmem:[%s176 + $0x80] sm:$0xff]
      %v206 = vld [vmem:[%s176 + $0x88] sm:$0xff]
      %v207 = vld [vmem:[%s176 + $0x90] sm:$0xff]
      %v208 = vld [vmem:[%s176 + $0x98] sm:$0xff]
      %v209 = vld [vmem:[%s176 + $0xa0] sm:$0xff]
      %v210 = vld [vmem:[%s176 + $0xa8] sm:$0xff]
      %v211 = vld [vmem:[%s176 + $0xb0] sm:$0xff]
      %v212 = vld [vmem:[%s176 + $0xb8] sm:$0xff]
      %v213 = vld [vmem:[%s176 + $0xc0] sm:$0xff]
      %v214 = vld [vmem:[%s176 + $0xc8] sm:$0xff]
      %v215 = vld [vmem:[%s176 + $0xd0] sm:$0xff]
      %v216 = vld [vmem:[%s176 + $0xd8] sm:$0xff]
      %v217 = vld [vmem:[%s176 + $0xe0] sm:$0xff]
      %v218 = vld [vmem:[%s176 + $0xe8] sm:$0xff]
      %v219 = vld [vmem:[%s176 + $0xf0] sm:$0xff]
      %v220 = vld [vmem:[%s176 + $0xf8] sm:$0xff]
      %v221 = vld [vmem:[%s176 + $0x100] sm:$0xff]
      %v222 = vld [vmem:[%s176 + $0x108] sm:$0xff]
      %v223 = vld [vmem:[%s176 + $0x110] sm:$0xff]
      %v224 = vld [vmem:[%s176 + $0x118] sm:$0xff]
      %v225 = vld [vmem:[%s176 + $0x120] sm:$0xff]
      %v226 = vld [vmem:[%s176 + $0x128] sm:$0xff]
      %v227 = vld [vmem:[%s176 + $0x130] sm:$0xff]
      %v228 = vld [vmem:[%s176 + $0x138] sm:$0xff]
      %v229 = vld [vmem:[%s176 + $0x140] sm:$0xff]
      %v230 = vld [vmem:[%s176 + $0x148] sm:$0xff]
      %v231 = vld [vmem:[%s176 + $0x150] sm:$0xff]
      %v232 = vld [vmem:[%s176 + $0x158] sm:$0xff]
      %v233 = vld [vmem:[%s176 + $0x160] sm:$0xff]
      %v234 = vld [vmem:[%s176 + $0x168] sm:$0xff]
      %v235 = vld [vmem:[%s176 + $0x170] sm:$0xff]
      %v236 = vld [vmem:[%s176 + $0x178] sm:$0xff]
      %v237 = vld [vmem:[%s176 + $0x180] sm:$0xff]
      %v238 = vld [vmem:[%s176 + $0x188] sm:$0xff]
      %v239 = vld [vmem:[%s176 + $0x190] sm:$0xff]
      %v240 = vld [vmem:[%s176 + $0x198] sm:$0xff]
      %v241 = vld [vmem:[%s176 + $0x1a0] sm:$0xff]
      %v242 = vld [vmem:[%s176 + $0x1a8] sm:$0xff]
      %v243 = vld [vmem:[%s176 + $0x1b0] sm:$0xff]
      %v244 = vld [vmem:[%s176 + $0x1b8] sm:$0xff]
      %v245 = vld [vmem:[%s176 + $0x1c0] sm:$0xff]
      %v246 = vld [vmem:[%s176 + $0x1c8] sm:$0xff]
      %v247 = vld [vmem:[%s176 + $0x1d0] sm:$0xff]
      %v248 = vld [vmem:[%s176 + $0x1d8] sm:$0xff]
      %v249 = vld [vmem:[%s176 + $0x1e0] sm:$0xff]
      %v250 = vld [vmem:[%s176 + $0x1e8] sm:$0xff]
      %v251 = vld [vmem:[%s176 + $0x1f0] sm:$0xff]
      %v252 = vld [vmem:[%s176 + $0x1f8] sm:$0xff]
      %v253 = vld [vmem:[%s176 + $0x200] sm:$0xff]
      %v254 = vld [vmem:[%s176 + $0x208] sm:$0xff]
      %v255 = vld [vmem:[%s176 + $0x210] sm:$0xff]
      %v256 = vld [vmem:[%s176 + $0x218] sm:$0xff]
      %v257 = vld [vmem:[%s176 + $0x220] sm:$0xff]
      %v258 = vld [vmem:[%s176 + $0x228] sm:$0xff]
      %v259 = vld [vmem:[%s176 + $0x230] sm:$0xff]
      %v260 = vld [vmem:[%s176 + $0x238] sm:$0xff]
      %v261 = vld [vmem:[%s176 + $0x240] sm:$0xff]
      %v262 = vld [vmem:[%s176 + $0x248] sm:$0xff]
      %v263 = vld [vmem:[%s176 + $0x250] sm:$0xff]
      %v264 = vld [vmem:[%s176 + $0x258] sm:$0xff]
      %v265 = vld [vmem:[%s176 + $0x260] sm:$0xff]
      %v266 = vld [vmem:[%s176 + $0x268] sm:$0xff]
      %v267 = vld [vmem:[%s176 + $0x270] sm:$0xff]
      %v268 = vld [vmem:[%s176 + $0x278] sm:$0xff]
      %v269 = vld [vmem:[%s176 + $0x280] sm:$0xff]
      %v270 = vld [vmem:[%s176 + $0x288] sm:$0xff]
      %v271 = vld [vmem:[%s176 + $0x290] sm:$0xff]
      %v272 = vld [vmem:[%s176 + $0x298] sm:$0xff]
      %v273 = vld [vmem:[%s176 + $0x2a0] sm:$0xff]
      %v274 = vld [vmem:[%s176 + $0x2a8] sm:$0xff]
      %v275 = vld [vmem:[%s176 + $0x2b0] sm:$0xff]
      %v276 = vld [vmem:[%s176 + $0x2b8] sm:$0xff]
      %v277 = vld [vmem:[%s176 + $0x2c0] sm:$0xff]
      %v278 = vld [vmem:[%s176 + $0x2c8] sm:$0xff]
      %v279 = vld [vmem:[%s176 + $0x2d0] sm:$0xff]
      %v280 = vld [vmem:[%s176 + $0x2d8] sm:$0xff]
      %v281 = vld [vmem:[%s176 + $0x2e0] sm:$0xff]
      %v282 = vld [vmem:[%s176 + $0x2e8] sm:$0xff]
      %v283 = vld [vmem:[%s176 + $0x2f0] sm:$0xff]
      %v284 = vld [vmem:[%s176 + $0x2f8] sm:$0xff]
      %v285 = vld [vmem:[%s176 + $0x300] sm:$0xff]
      %v286 = vld [vmem:[%s176 + $0x308] sm:$0xff]
      %v287 = vld [vmem:[%s176 + $0x310] sm:$0xff]
      %v288 = vld [vmem:[%s176 + $0x318] sm:$0xff]
      %v289 = vld [vmem:[%s176 + $0x320] sm:$0xff]
      %v290 = vld [vmem:[%s176 + $0x328] sm:$0xff]
      %v291 = vld [vmem:[%s176 + $0x330] sm:$0xff]
      %v292 = vld [vmem:[%s176 + $0x338] sm:$0xff]
      %v293 = vld [vmem:[%s176 + $0x340] sm:$0xff]
      %v294 = vld [vmem:[%s176 + $0x348] sm:$0xff]
      %v295 = vld [vmem:[%s176 + $0x350] sm:$0xff]
      %v296 = vld [vmem:[%s176 + $0x358] sm:$0xff]
      %v297 = vld [vmem:[%s176 + $0x360] sm:$0xff]
      %v298 = vld [vmem:[%s176 + $0x368] sm:$0xff]
      %v299 = vld [vmem:[%s176 + $0x370] sm:$0xff]
      %v300 = vld [vmem:[%s176 + $0x378] sm:$0xff]
      %v301 = vld [vmem:[%s176 + $0x380] sm:$0xff]
      %v302 = vld [vmem:[%s176 + $0x388] sm:$0xff]
      %v303 = vld [vmem:[%s176 + $0x390] sm:$0xff]
      %v304 = vld [vmem:[%s176 + $0x398] sm:$0xff]
      %v305 = vld [vmem:[%s176 + $0x3a0] sm:$0xff]
      %v306 = vld [vmem:[%s176 + $0x3a8] sm:$0xff]
      %v307 = vld [vmem:[%s176 + $0x3b0] sm:$0xff]
      %v308 = vld [vmem:[%s176 + $0x3b8] sm:$0xff]
      %v309 = vld [vmem:[%s176 + $0x3c0] sm:$0xff]
      %v310 = vld [vmem:[%s176 + $0x3c8] sm:$0xff]
      %v311 = vld [vmem:[%s176 + $0x3d0] sm:$0xff]
      %v312 = vld [vmem:[%s176 + $0x3d8] sm:$0xff]
      %v313 = vld [vmem:[%s176 + $0x3e0] sm:$0xff]
      %v314 = vld [vmem:[%s176 + $0x3e8] sm:$0xff]
      %v315 = vld [vmem:[%s176 + $0x3f0] sm:$0xff]
      %v316 = vld [vmem:[%s176 + $0x3f8] sm:$0xff]
      %v317 = vld [vmem:[%s1] sm:$0xf]
      %v318 = vld [vmem:[%s1 + $0x4] sm:$0xf]
      %v319 = vld [vmem:[%s1 + $0x8] sm:$0xf]
      %v320 = vld [vmem:[%s1 + $0xc] sm:$0xf]
      %v321 = vld [vmem:[%s1 + $0x10] sm:$0xf]
      %v322 = vld [vmem:[%s1 + $0x14] sm:$0xf]
      %v323 = vld [vmem:[%s1 + $0x18] sm:$0xf]
      %v324 = vld [vmem:[%s1 + $0x1c] sm:$0xf]
      %v325 = vld [vmem:[%s1 + $0x20] sm:$0xf]
      %v326 = vld [vmem:[%s1 + $0x24] sm:$0xf]
      %v327 = vld [vmem:[%s1 + $0x28] sm:$0xf]
      %v328 = vld [vmem:[%s1 + $0x2c] sm:$0xf]
      %v329 = vld [vmem:[%s1 + $0x30] sm:$0xf]
      %v330 = vld [vmem:[%s1 + $0x34] sm:$0xf]
      %v331 = vld [vmem:[%s1 + $0x38] sm:$0xf]
      %v332 = vld [vmem:[%s1 + $0x3c] sm:$0xf]
      %v333 = vld [vmem:[%s1 + $0x40] sm:$0xf]
      %v334 = vld [vmem:[%s1 + $0x44] sm:$0xf]
      %v463 = vunpack.c.l.b16 %v189
      %v464 = vunpack.c.h.b16 %v189
      %v465 = vunpack.c.l.b16 %v190
      %v466 = vunpack.c.h.b16 %v190
      %v467 = vunpack.c.l.b16 %v191
      %v468 = vunpack.c.h.b16 %v191
      %v469 = vunpack.c.l.b16 %v192
      %v470 = vunpack.c.h.b16 %v192
      %v471 = vunpack.c.l.b16 %v193
      %v472 = vunpack.c.h.b16 %v193
      %v473 = vunpack.c.l.b16 %v194
      %v474 = vunpack.c.h.b16 %v194
      %v475 = vunpack.c.l.b16 %v195
      %v476 = vunpack.c.h.b16 %v195
      %v477 = vunpack.c.l.b16 %v196
      %v478 = vunpack.c.h.b16 %v196
      %v479 = vunpack.c.l.b16 %v197
      %v480 = vunpack.c.h.b16 %v197
      %v481 = vunpack.c.l.b16 %v198
      %v482 = vunpack.c.h.b16 %v198
      %v483 = vunpack.c.l.b16 %v199
      %v484 = vunpack.c.h.b16 %v199
      %v485 = vunpack.c.l.b16 %v200
      %v486 = vunpack.c.h.b16 %v200
      %v487 = vunpack.c.l.b16 %v201
      %v488 = vunpack.c.h.b16 %v201
      %v489 = vunpack.c.l.b16 %v202
      %v490 = vunpack.c.h.b16 %v202
      %v491 = vunpack.c.l.b16 %v203
      %v492 = vunpack.c.h.b16 %v203
      %v493 = vunpack.c.l.b16 %v204
      %v494 = vunpack.c.h.b16 %v204
      %v495 = vunpack.c.l.b16 %v205
      %v496 = vunpack.c.h.b16 %v205
      %v497 = vunpack.c.l.b16 %v206
      %v498 = vunpack.c.h.b16 %v206
      %v499 = vunpack.c.l.b16 %v207
      %v500 = vunpack.c.h.b16 %v207
      %v501 = vunpack.c.l.b16 %v208
      %v502 = vunpack.c.h.b16 %v208
      %v503 = vunpack.c.l.b16 %v209
      %v504 = vunpack.c.h.b16 %v209
      %v505 = vunpack.c.l.b16 %v210
      %v506 = vunpack.c.h.b16 %v210
      %v507 = vunpack.c.l.b16 %v211
      %v508 = vunpack.c.h.b16 %v211
      %v509 = vunpack.c.l.b16 %v212
      %v510 = vunpack.c.h.b16 %v212
      %v511 = vunpack.c.l.b16 %v213
      %v512 = vunpack.c.h.b16 %v213
      %v513 = vunpack.c.l.b16 %v214
      %v514 = vunpack.c.h.b16 %v214
      %v515 = vunpack.c.l.b16 %v215
      %v516 = vunpack.c.h.b16 %v215
      %v517 = vunpack.c.l.b16 %v216
      %v518 = vunpack.c.h.b16 %v216
      %v519 = vunpack.c.l.b16 %v217
      %v520 = vunpack.c.h.b16 %v217
      %v521 = vunpack.c.l.b16 %v218
      %v522 = vunpack.c.h.b16 %v218
      %v523 = vunpack.c.l.b16 %v219
      %v524 = vunpack.c.h.b16 %v219
      %v525 = vunpack.c.l.b16 %v220
      %v526 = vunpack.c.h.b16 %v220
      %v527 = vunpack.c.l.b16 %v221
      %v528 = vunpack.c.h.b16 %v221
      %v529 = vunpack.c.l.b16 %v222
      %v530 = vunpack.c.h.b16 %v222
      %v531 = vunpack.c.l.b16 %v223
      %v532 = vunpack.c.h.b16 %v223
      %v533 = vunpack.c.l.b16 %v224
      %v534 = vunpack.c.h.b16 %v224
      %v535 = vunpack.c.l.b16 %v225
      %v536 = vunpack.c.h.b16 %v225
      %v537 = vunpack.c.l.b16 %v226
      %v538 = vunpack.c.h.b16 %v226
      %v539 = vunpack.c.l.b16 %v227
      %v540 = vunpack.c.h.b16 %v227
      %v541 = vunpack.c.l.b16 %v228
      %v542 = vunpack.c.h.b16 %v228
      %v543 = vunpack.c.l.b16 %v229
      %v544 = vunpack.c.h.b16 %v229
      %v545 = vunpack.c.l.b16 %v230
      %v546 = vunpack.c.h.b16 %v230
      %v547 = vunpack.c.l.b16 %v231
      %v548 = vunpack.c.h.b16 %v231
      %v549 = vunpack.c.l.b16 %v232
      %v550 = vunpack.c.h.b16 %v232
      %v551 = vunpack.c.l.b16 %v233
      %v552 = vunpack.c.h.b16 %v233
      %v553 = vunpack.c.l.b16 %v234
      %v554 = vunpack.c.h.b16 %v234
      %v555 = vunpack.c.l.b16 %v235
      %v556 = vunpack.c.h.b16 %v235
      %v557 = vunpack.c.l.b16 %v236
      %v558 = vunpack.c.h.b16 %v236
      %v559 = vunpack.c.l.b16 %v237
      %v560 = vunpack.c.h.b16 %v237
      %v561 = vunpack.c.l.b16 %v238
      %v562 = vunpack.c.h.b16 %v238
      %v563 = vunpack.c.l.b16 %v239
      %v564 = vunpack.c.h.b16 %v239
      %v565 = vunpack.c.l.b16 %v240
      %v566 = vunpack.c.h.b16 %v240
      %v567 = vunpack.c.l.b16 %v241
      %v568 = vunpack.c.h.b16 %v241
      %v569 = vunpack.c.l.b16 %v242
      %v570 = vunpack.c.h.b16 %v242
      %v571 = vunpack.c.l.b16 %v243
      %v572 = vunpack.c.h.b16 %v243
      %v573 = vunpack.c.l.b16 %v244
      %v574 = vunpack.c.h.b16 %v244
      %v575 = vunpack.c.l.b16 %v245
      %v576 = vunpack.c.h.b16 %v245
      %v577 = vunpack.c.l.b16 %v246
      %v578 = vunpack.c.h.b16 %v246
      %v579 = vunpack.c.l.b16 %v247
      %v580 = vunpack.c.h.b16 %v247
      %v581 = vunpack.c.l.b16 %v248
      %v582 = vunpack.c.h.b16 %v248
      %v583 = vunpack.c.l.b16 %v249
      %v584 = vunpack.c.h.b16 %v249
      %v585 = vunpack.c.l.b16 %v250
      %v586 = vunpack.c.h.b16 %v250
      %v587 = vunpack.c.l.b16 %v251
      %v588 = vunpack.c.h.b16 %v251
      %v589 = vunpack.c.l.b16 %v252
      %v590 = vunpack.c.h.b16 %v252
      %v591 = vunpack.c.l.b16 %v253
      %v592 = vunpack.c.h.b16 %v253
      %v593 = vunpack.c.l.b16 %v254
      %v594 = vunpack.c.h.b16 %v254
      %v595 = vunpack.c.l.b16 %v255
      %v596 = vunpack.c.h.b16 %v255
      %v597 = vunpack.c.l.b16 %v256
      %v598 = vunpack.c.h.b16 %v256
      %v599 = vunpack.c.l.b16 %v257
      %v600 = vunpack.c.h.b16 %v257
      %v601 = vunpack.c.l.b16 %v258
      %v602 = vunpack.c.h.b16 %v258
      %v603 = vunpack.c.l.b16 %v259
      %v604 = vunpack.c.h.b16 %v259
      %v605 = vunpack.c.l.b16 %v260
      %v606 = vunpack.c.h.b16 %v260
      %v607 = vunpack.c.l.b16 %v261
      %v608 = vunpack.c.h.b16 %v261
      %v609 = vunpack.c.l.b16 %v262
      %v610 = vunpack.c.h.b16 %v262
      %v611 = vunpack.c.l.b16 %v263
      %v612 = vunpack.c.h.b16 %v263
      %v613 = vunpack.c.l.b16 %v264
      %v614 = vunpack.c.h.b16 %v264
      %v615 = vunpack.c.l.b16 %v265
      %v616 = vunpack.c.h.b16 %v265
      %v617 = vunpack.c.l.b16 %v266
      %v618 = vunpack.c.h.b16 %v266
      %v619 = vunpack.c.l.b16 %v267
      %v620 = vunpack.c.h.b16 %v267
      %v621 = vunpack.c.l.b16 %v268
      %v622 = vunpack.c.h.b16 %v268
      %v623 = vunpack.c.l.b16 %v269
      %v624 = vunpack.c.h.b16 %v269
      %v625 = vunpack.c.l.b16 %v270
      %v626 = vunpack.c.h.b16 %v270
      %v627 = vunpack.c.l.b16 %v271
      %v628 = vunpack.c.h.b16 %v271
      %v629 = vunpack.c.l.b16 %v272
      %v630 = vunpack.c.h.b16 %v272
      %v631 = vunpack.c.l.b16 %v273
      %v632 = vunpack.c.h.b16 %v273
      %v633 = vunpack.c.l.b16 %v274
      %v634 = vunpack.c.h.b16 %v274
      %v635 = vunpack.c.l.b16 %v275
      %v636 = vunpack.c.h.b16 %v275
      %v637 = vunpack.c.l.b16 %v276
      %v638 = vunpack.c.h.b16 %v276
      %v639 = vunpack.c.l.b16 %v277
      %v640 = vunpack.c.h.b16 %v277
      %v641 = vunpack.c.l.b16 %v278
      %v642 = vunpack.c.h.b16 %v278
      %v643 = vunpack.c.l.b16 %v279
      %v644 = vunpack.c.h.b16 %v279
      %v645 = vunpack.c.l.b16 %v280
      %v646 = vunpack.c.h.b16 %v280
      %v647 = vunpack.c.l.b16 %v281
      %v648 = vunpack.c.h.b16 %v281
      %v649 = vunpack.c.l.b16 %v282
      %v650 = vunpack.c.h.b16 %v282
      %v651 = vunpack.c.l.b16 %v283
      %v652 = vunpack.c.h.b16 %v283
      %v653 = vunpack.c.l.b16 %v284
      %v654 = vunpack.c.h.b16 %v284
      %v655 = vunpack.c.l.b16 %v285
      %v656 = vunpack.c.h.b16 %v285
      %v657 = vunpack.c.l.b16 %v286
      %v658 = vunpack.c.h.b16 %v286
      %v659 = vunpack.c.l.b16 %v287
      %v660 = vunpack.c.h.b16 %v287
      %v661 = vunpack.c.l.b16 %v288
      %v662 = vunpack.c.h.b16 %v288
      %v663 = vunpack.c.l.b16 %v289
      %v664 = vunpack.c.h.b16 %v289
      %v665 = vunpack.c.l.b16 %v290
      %v666 = vunpack.c.h.b16 %v290
      %v667 = vunpack.c.l.b16 %v291
      %v668 = vunpack.c.h.b16 %v291
      %v669 = vunpack.c.l.b16 %v292
      %v670 = vunpack.c.h.b16 %v292
      %v671 = vunpack.c.l.b16 %v293
      %v672 = vunpack.c.h.b16 %v293
      %v673 = vunpack.c.l.b16 %v294
      %v674 = vunpack.c.h.b16 %v294
      %v675 = vunpack.c.l.b16 %v295
      %v676 = vunpack.c.h.b16 %v295
      %v677 = vunpack.c.l.b16 %v296
      %v678 = vunpack.c.h.b16 %v296
      %v679 = vunpack.c.l.b16 %v297
      %v680 = vunpack.c.h.b16 %v297
      %v681 = vunpack.c.l.b16 %v298
      %v682 = vunpack.c.h.b16 %v298
      %v683 = vunpack.c.l.b16 %v299
      %v684 = vunpack.c.h.b16 %v299
      %v685 = vunpack.c.l.b16 %v300
      %v686 = vunpack.c.h.b16 %v300
      %v687 = vunpack.c.l.b16 %v301
      %v688 = vunpack.c.h.b16 %v301
      %v689 = vunpack.c.l.b16 %v302
      %v690 = vunpack.c.h.b16 %v302
      %v691 = vunpack.c.l.b16 %v303
      %v692 = vunpack.c.h.b16 %v303
      %v693 = vunpack.c.l.b16 %v304
      %v694 = vunpack.c.h.b16 %v304
      %v695 = vunpack.c.l.b16 %v305
      %v696 = vunpack.c.h.b16 %v305
      %v697 = vunpack.c.l.b16 %v306
      %v698 = vunpack.c.h.b16 %v306
      %v699 = vunpack.c.l.b16 %v307
      %v700 = vunpack.c.h.b16 %v307
      %v701 = vunpack.c.l.b16 %v308
      %v702 = vunpack.c.h.b16 %v308
      %v703 = vunpack.c.l.b16 %v309
      %v704 = vunpack.c.h.b16 %v309
      %v705 = vunpack.c.l.b16 %v310
      %v706 = vunpack.c.h.b16 %v310
      %v707 = vunpack.c.l.b16 %v311
      %v708 = vunpack.c.h.b16 %v311
      %v709 = vunpack.c.l.b16 %v312
      %v710 = vunpack.c.h.b16 %v312
      %v711 = vunpack.c.l.b16 %v313
      %v712 = vunpack.c.h.b16 %v313
      %v713 = vunpack.c.l.b16 %v314
      %v714 = vunpack.c.h.b16 %v314
      %v715 = vunpack.c.l.b16 %v315
      %v716 = vunpack.c.h.b16 %v315
      %v717 = vunpack.c.l.b16 %v316
      %v718 = vunpack.c.h.b16 %v316
      %v719 = vpack.c.b16 %v465, %v463
      %v720 = vpack.c.b16 %v466, %v464
      %v721 = vpack.c.b16 %v469, %v467
      %v722 = vpack.c.b16 %v470, %v468
      %v723 = vpack.c.b16 %v473, %v471
      %v724 = vpack.c.b16 %v474, %v472
      %v725 = vpack.c.b16 %v477, %v475
      %v726 = vpack.c.b16 %v478, %v476
      %v727 = vpack.c.b16 %v481, %v479
      %v728 = vpack.c.b16 %v482, %v480
      %v729 = vpack.c.b16 %v485, %v483
      %v730 = vpack.c.b16 %v486, %v484
      %v731 = vpack.c.b16 %v489, %v487
      %v732 = vpack.c.b16 %v490, %v488
      %v733 = vpack.c.b16 %v493, %v491
      %v734 = vpack.c.b16 %v494, %v492
      %v735 = vpack.c.b16 %v497, %v495
      %v736 = vpack.c.b16 %v498, %v496
      %v737 = vpack.c.b16 %v501, %v499
      %v738 = vpack.c.b16 %v502, %v500
      %v739 = vpack.c.b16 %v505, %v503
      %v740 = vpack.c.b16 %v506, %v504
      %v741 = vpack.c.b16 %v509, %v507
      %v742 = vpack.c.b16 %v510, %v508
      %v743 = vpack.c.b16 %v513, %v511
      %v744 = vpack.c.b16 %v514, %v512
      %v745 = vpack.c.b16 %v517, %v515
      %v746 = vpack.c.b16 %v518, %v516
      %v747 = vpack.c.b16 %v521, %v519
      %v748 = vpack.c.b16 %v522, %v520
      %v749 = vpack.c.b16 %v525, %v523
      %v750 = vpack.c.b16 %v526, %v524
      %v751 = vpack.c.b16 %v529, %v527
      %v752 = vpack.c.b16 %v530, %v528
      %v753 = vpack.c.b16 %v533, %v531
      %v754 = vpack.c.b16 %v534, %v532
      %v755 = vpack.c.b16 %v537, %v535
      %v756 = vpack.c.b16 %v538, %v536
      %v757 = vpack.c.b16 %v541, %v539
      %v758 = vpack.c.b16 %v542, %v540
      %v759 = vpack.c.b16 %v545, %v543
      %v760 = vpack.c.b16 %v546, %v544
      %v761 = vpack.c.b16 %v549, %v547
      %v762 = vpack.c.b16 %v550, %v548
      %v763 = vpack.c.b16 %v553, %v551
      %v764 = vpack.c.b16 %v554, %v552
      %v765 = vpack.c.b16 %v557, %v555
      %v766 = vpack.c.b16 %v558, %v556
      %v767 = vpack.c.b16 %v561, %v559
      %v768 = vpack.c.b16 %v562, %v560
      %v769 = vpack.c.b16 %v565, %v563
      %v770 = vpack.c.b16 %v566, %v564
      %v771 = vpack.c.b16 %v569, %v567
      %v772 = vpack.c.b16 %v570, %v568
      %v773 = vpack.c.b16 %v573, %v571
      %v774 = vpack.c.b16 %v574, %v572
      %v775 = vpack.c.b16 %v577, %v575
      %v776 = vpack.c.b16 %v578, %v576
      %v777 = vpack.c.b16 %v581, %v579
      %v778 = vpack.c.b16 %v582, %v580
      %v779 = vpack.c.b16 %v585, %v583
      %v780 = vpack.c.b16 %v586, %v584
      %v781 = vpack.c.b16 %v589, %v587
      %v782 = vpack.c.b16 %v590, %v588
      %v783 = vpack.c.b16 %v593, %v591
      %v784 = vpack.c.b16 %v594, %v592
      %v785 = vpack.c.b16 %v597, %v595
      %v786 = vpack.c.b16 %v598, %v596
      %v787 = vpack.c.b16 %v601, %v599
      %v788 = vpack.c.b16 %v602, %v600
      %v789 = vpack.c.b16 %v605, %v603
      %v790 = vpack.c.b16 %v606, %v604
      %v791 = vpack.c.b16 %v609, %v607
      %v792 = vpack.c.b16 %v610, %v608
      %v793 = vpack.c.b16 %v613, %v611
      %v794 = vpack.c.b16 %v614, %v612
      %v795 = vpack.c.b16 %v617, %v615
      %v796 = vpack.c.b16 %v618, %v616
      %v797 = vpack.c.b16 %v621, %v619
      %v798 = vpack.c.b16 %v622, %v620
      %v799 = vpack.c.b16 %v625, %v623
      %v800 = vpack.c.b16 %v626, %v624
      %v801 = vpack.c.b16 %v629, %v627
      %v802 = vpack.c.b16 %v630, %v628
      %v803 = vpack.c.b16 %v633, %v631
      %v804 = vpack.c.b16 %v634, %v632
      %v805 = vpack.c.b16 %v637, %v635
      %v806 = vpack.c.b16 %v638, %v636
      %v807 = vpack.c.b16 %v641, %v639
      %v808 = vpack.c.b16 %v642, %v640
      %v809 = vpack.c.b16 %v645, %v643
      %v810 = vpack.c.b16 %v646, %v644
      %v811 = vpack.c.b16 %v649, %v647
      %v812 = vpack.c.b16 %v650, %v648
      %v813 = vpack.c.b16 %v653, %v651
      %v814 = vpack.c.b16 %v654, %v652
      %v815 = vpack.c.b16 %v657, %v655
      %v816 = vpack.c.b16 %v658, %v656
      %v817 = vpack.c.b16 %v661, %v659
      %v818 = vpack.c.b16 %v662, %v660
      %v819 = vpack.c.b16 %v665, %v663
      %v820 = vpack.c.b16 %v666, %v664
      %v821 = vpack.c.b16 %v669, %v667
      %v822 = vpack.c.b16 %v670, %v668
      %v823 = vpack.c.b16 %v673, %v671
      %v824 = vpack.c.b16 %v674, %v672
      %v825 = vpack.c.b16 %v677, %v675
      %v826 = vpack.c.b16 %v678, %v676
      %v827 = vpack.c.b16 %v681, %v679
      %v828 = vpack.c.b16 %v682, %v680
      %v829 = vpack.c.b16 %v685, %v683
      %v830 = vpack.c.b16 %v686, %v684
      %v831 = vpack.c.b16 %v689, %v687
      %v832 = vpack.c.b16 %v690, %v688
      %v833 = vpack.c.b16 %v693, %v691
      %v834 = vpack.c.b16 %v694, %v692
      %v835 = vpack.c.b16 %v697, %v695
      %v836 = vpack.c.b16 %v698, %v696
      %v837 = vpack.c.b16 %v701, %v699
      %v838 = vpack.c.b16 %v702, %v700
      %v839 = vpack.c.b16 %v705, %v703
      %v840 = vpack.c.b16 %v706, %v704
      %v841 = vpack.c.b16 %v709, %v707
      %v842 = vpack.c.b16 %v710, %v708
      %v843 = vpack.c.b16 %v713, %v711
      %v844 = vpack.c.b16 %v714, %v712
      %v845 = vpack.c.b16 %v717, %v715
      %v846 = vpack.c.b16 %v718, %v716
      %v929 = vunpack.c.l.b16 %v317
      %v930 = vunpack.c.l.b16 %v318
      %v931 = vunpack.c.l.b16 %v319
      %v932 = vunpack.c.l.b16 %v320
      %v933 = vunpack.c.l.b16 %v321
      %v934 = vunpack.c.l.b16 %v322
      %v935 = vunpack.c.l.b16 %v323
      %v936 = vunpack.c.l.b16 %v324
      %v937 = vunpack.c.l.b16 %v325
      %v938 = vunpack.c.l.b16 %v326
      %v939 = vunpack.c.l.b16 %v327
      %v940 = vunpack.c.l.b16 %v328
      %v941 = vunpack.c.l.b16 %v329
      %v942 = vunpack.c.l.b16 %v330
      %v943 = vunpack.c.l.b16 %v331
      %v944 = vunpack.c.l.b16 %v332
      %v945 = vunpack.c.l.b16 %v333
      %v946 = vunpack.c.l.b16 %v334
      %v947 = vpack.c.b16 %v930, %v929
      %v948 = vpack.c.b16 %v932, %v931
      %v949 = vpack.c.b16 %v934, %v933
      %v950 = vpack.c.b16 %v936, %v935
      %v951 = vpack.c.b16 %v938, %v937
      %v952 = vpack.c.b16 %v940, %v939
      %v953 = vpack.c.b16 %v942, %v941
      %v954 = vpack.c.b16 %v944, %v943
      %v955 = vpack.c.b16 %v946, %v945
      %vm965 = vcmask 130048
      %v967 = vsel %vm965, %v720, 0
      %v970 = vsel %vm965, %v722, 0
      %v973 = vsel %vm965, %v724, 0
      %v976 = vsel %vm965, %v726, 0
      %v979 = vsel %vm965, %v728, 0
      %v982 = vsel %vm965, %v730, 0
      %v985 = vsel %vm965, %v732, 0
      %v988 = vsel %vm965, %v734, 0
      %v991 = vsel %vm965, %v736, 0
      %v994 = vsel %vm965, %v738, 0
      %v997 = vsel %vm965, %v740, 0
      %v1000 = vsel %vm965, %v742, 0
      %v1003 = vsel %vm965, %v744, 0
      %v1006 = vsel %vm965, %v746, 0
      %v1009 = vsel %vm965, %v748, 0
      %v1012 = vsel %vm965, %v750, 0
      %v1015 = vsel %vm965, %v752, 0
      %v1018 = vsel %vm965, %v754, 0
      %v1021 = vsel %vm965, %v756, 0
      %v1024 = vsel %vm965, %v758, 0
      %v1027 = vsel %vm965, %v760, 0
      %v1030 = vsel %vm965, %v762, 0
      %v1033 = vsel %vm965, %v764, 0
      %v1036 = vsel %vm965, %v766, 0
      %v1039 = vsel %vm965, %v768, 0
      %v1042 = vsel %vm965, %v770, 0
      %v1045 = vsel %vm965, %v772, 0
      %v1048 = vsel %vm965, %v774, 0
      %v1051 = vsel %vm965, %v776, 0
      %v1054 = vsel %vm965, %v778, 0
      %v1057 = vsel %vm965, %v780, 0
      %v1060 = vsel %vm965, %v782, 0
      %v1063 = vsel %vm965, %v784, 0
      %v1066 = vsel %vm965, %v786, 0
      %v1069 = vsel %vm965, %v788, 0
      %v1072 = vsel %vm965, %v790, 0
      %v1075 = vsel %vm965, %v792, 0
      %v1078 = vsel %vm965, %v794, 0
      %v1081 = vsel %vm965, %v796, 0
      %v1084 = vsel %vm965, %v798, 0
      %v1087 = vsel %vm965, %v800, 0
      %v1090 = vsel %vm965, %v802, 0
      %v1093 = vsel %vm965, %v804, 0
      %v1096 = vsel %vm965, %v806, 0
      %v1099 = vsel %vm965, %v808, 0
      %v1102 = vsel %vm965, %v810, 0
      %v1105 = vsel %vm965, %v812, 0
      %v1108 = vsel %vm965, %v814, 0
      %v1111 = vsel %vm965, %v816, 0
      %v1114 = vsel %vm965, %v818, 0
      %v1117 = vsel %vm965, %v820, 0
      %v1120 = vsel %vm965, %v822, 0
      %v1123 = vsel %vm965, %v824, 0
      %v1126 = vsel %vm965, %v826, 0
      %v1129 = vsel %vm965, %v828, 0
      %v1132 = vsel %vm965, %v830, 0
      %v1135 = vsel %vm965, %v832, 0
      %v1138 = vsel %vm965, %v834, 0
      %v1141 = vsel %vm965, %v836, 0
      %v1144 = vsel %vm965, %v838, 0
      %v1147 = vsel %vm965, %v840, 0
      %v1150 = vsel %vm965, %v842, 0
      %v1153 = vsel %vm965, %v844, 0
      %v1156 = vsel %vm965, %v846, 0
      %1158 = vmatprep.subr.bf16.mxu0 0
      %1159 = vmatpush1.bf16.msra.mxu0 %v954
      %1160 = vmatprep.subr.bf16.mxu0 0
      %1161 = vmatpush1.bf16.msra.mxu0 %v953
      %1162 = vmatprep.subr.bf16.mxu0 0
      %1163 = vmatpush1.bf16.msra.mxu0 %v952
      %1164 = vmatprep.subr.bf16.mxu0 0
      %1165 = vmatpush1.bf16.msra.mxu0 %v951
      %1166 = vmatprep.subr.bf16.mxu0 0
      %1167 = vmatpush1.bf16.msra.mxu0 %v950
      %1168 = vmatprep.subr.bf16.mxu0 0
      %1169 = vmatpush1.bf16.msra.mxu0 %v949
      %1170 = vmatprep.subr.bf16.mxu0 0
      %1171 = vmatpush1.bf16.msra.mxu0 %v948
      %1172 = vmatprep.subr.bf16.mxu0 0
      %1173 = vmatpush1.bf16.msra.mxu0 %v947
      %1174 = vmatprep.subr.bf16.mxu0 0
      %1175 = vmatpush2.bf16.msra.mxu0 0
      %1176 = vmatprep.subr.bf16.mxu0 0
      %1177 = vmatpush2.bf16.msra.mxu0 0
      %1178 = vmatprep.subr.bf16.mxu0 0
      %1179 = vmatpush2.bf16.msra.mxu0 0
      %1180 = vmatprep.subr.bf16.mxu0 0
      %1181 = vmatpush2.bf16.msra.mxu0 0
      %1182 = vmatprep.subr.bf16.mxu0 0
      %1183 = vmatpush2.bf16.msra.mxu0 0
      %1184 = vmatprep.subr.bf16.mxu0 0
      %1185 = vmatpush2.bf16.msra.mxu0 0
      %1186 = vmatprep.subr.bf16.mxu0 0
      %1187 = vmatpush2.bf16.msra.mxu0 0
      %1188 = vmatprep.subr.bf16.mxu0 0
      %1189 = vmatpush2.bf16.msra.mxu0 %v955
      %1190 = vmatprep.mubr.bf16.mxu0 %v967
      %1191 = vmatmul.mubr.bf16.gmra.mxu0 %v719
      %v1192 = vpop.f32.mrf.mxu0
      %v1193 = vadd.f32 0.0, %v1192
      %v1194 = vpop.f32.mrf.mxu0
      %v1195 = vpop.f32.mrf.mxu0
      %v1196 = vadd.f32 0.0, %v1195
      %v1197 = vpop.f32.mrf.mxu0
      %1198 = vmatprep.mubr.bf16.mxu0 %v970
      %1199 = vmatmul.mubr.bf16.gmra.mxu0 %v721
      %v1200 = vpop.f32.mrf.mxu0
      %v1201 = vadd.f32 0.0, %v1200
      %v1202 = vpop.f32.mrf.mxu0
      %v1203 = vpop.f32.mrf.mxu0
      %v1204 = vadd.f32 0.0, %v1203
      %v1205 = vpop.f32.mrf.mxu0
      %1206 = vmatprep.mubr.bf16.mxu0 %v973
      %1207 = vmatmul.mubr.bf16.gmra.mxu0 %v723
      %v1208 = vpop.f32.mrf.mxu0
      %v1209 = vadd.f32 0.0, %v1208
      %v1210 = vpop.f32.mrf.mxu0
      %v1211 = vpop.f32.mrf.mxu0
      %v1212 = vadd.f32 0.0, %v1211
      %v1213 = vpop.f32.mrf.mxu0
      %1214 = vmatprep.mubr.bf16.mxu0 %v976
      %1215 = vmatmul.mubr.bf16.gmra.mxu0 %v725
      %v1216 = vpop.f32.mrf.mxu0
      %v1217 = vadd.f32 0.0, %v1216
      %v1218 = vpop.f32.mrf.mxu0
      %v1219 = vpop.f32.mrf.mxu0
      %v1220 = vadd.f32 0.0, %v1219
      %v1221 = vpop.f32.mrf.mxu0
      %1222 = vmatprep.mubr.bf16.mxu0 %v979
      %1223 = vmatmul.mubr.bf16.gmra.mxu0 %v727
      %v1224 = vpop.f32.mrf.mxu0
      %v1225 = vadd.f32 0.0, %v1224
      %v1226 = vpop.f32.mrf.mxu0
      %v1227 = vpop.f32.mrf.mxu0
      %v1228 = vadd.f32 0.0, %v1227
      %v1229 = vpop.f32.mrf.mxu0
      %1230 = vmatprep.mubr.bf16.mxu0 %v982
      %1231 = vmatmul.mubr.bf16.gmra.mxu0 %v729
      %v1232 = vpop.f32.mrf.mxu0
      %v1233 = vadd.f32 0.0, %v1232
      %v1234 = vpop.f32.mrf.mxu0
      %v1235 = vpop.f32.mrf.mxu0
      %v1236 = vadd.f32 0.0, %v1235
      %v1237 = vpop.f32.mrf.mxu0
      %1238 = vmatprep.mubr.bf16.mxu0 %v985
      %1239 = vmatmul.mubr.bf16.gmra.mxu0 %v731
      %v1240 = vpop.f32.mrf.mxu0
      %v1241 = vadd.f32 0.0, %v1240
      %v1242 = vpop.f32.mrf.mxu0
      %v1243 = vpop.f32.mrf.mxu0
      %v1244 = vadd.f32 0.0, %v1243
      %v1245 = vpop.f32.mrf.mxu0
      %1246 = vmatprep.mubr.bf16.mxu0 %v988
      %1247 = vmatmul.mubr.bf16.gmra.mxu0 %v733
      %v1248 = vpop.f32.mrf.mxu0
      %v1249 = vadd.f32 0.0, %v1248
      %v1250 = vpop.f32.mrf.mxu0
      %v1251 = vpop.f32.mrf.mxu0
      %v1252 = vadd.f32 0.0, %v1251
      %v1253 = vpop.f32.mrf.mxu0
      %1254 = vmatprep.mubr.bf16.mxu0 %v991
      %1255 = vmatmul.mubr.bf16.gmra.mxu0 %v735
      %v1256 = vpop.f32.mrf.mxu0
      %v1257 = vadd.f32 0.0, %v1256
      %v1258 = vpop.f32.mrf.mxu0
      %v1259 = vpop.f32.mrf.mxu0
      %v1260 = vadd.f32 0.0, %v1259
      %v1261 = vpop.f32.mrf.mxu0
      %1262 = vmatprep.mubr.bf16.mxu0 %v994
      %1263 = vmatmul.mubr.bf16.gmra.mxu0 %v737
      %v1264 = vpop.f32.mrf.mxu0
      %v1265 = vadd.f32 0.0, %v1264
      %v1266 = vpop.f32.mrf.mxu0
      %v1267 = vpop.f32.mrf.mxu0
      %v1268 = vadd.f32 0.0, %v1267
      %v1269 = vpop.f32.mrf.mxu0
      %1270 = vmatprep.mubr.bf16.mxu0 %v997
      %1271 = vmatmul.mubr.bf16.gmra.mxu0 %v739
      %v1272 = vpop.f32.mrf.mxu0
      %v1273 = vadd.f32 0.0, %v1272
      %v1274 = vpop.f32.mrf.mxu0
      %v1275 = vpop.f32.mrf.mxu0
      %v1276 = vadd.f32 0.0, %v1275
      %v1277 = vpop.f32.mrf.mxu0
      %1278 = vmatprep.mubr.bf16.mxu0 %v1000
      %1279 = vmatmul.mubr.bf16.gmra.mxu0 %v741
      %v1280 = vpop.f32.mrf.mxu0
      %v1281 = vadd.f32 0.0, %v1280
      %v1282 = vpop.f32.mrf.mxu0
      %v1283 = vpop.f32.mrf.mxu0
      %v1284 = vadd.f32 0.0, %v1283
      %v1285 = vpop.f32.mrf.mxu0
      %1286 = vmatprep.mubr.bf16.mxu0 %v1003
      %1287 = vmatmul.mubr.bf16.gmra.mxu0 %v743
      %v1288 = vpop.f32.mrf.mxu0
      %v1289 = vadd.f32 0.0, %v1288
      %v1290 = vpop.f32.mrf.mxu0
      %v1291 = vpop.f32.mrf.mxu0
      %v1292 = vadd.f32 0.0, %v1291
      %v1293 = vpop.f32.mrf.mxu0
      %1294 = vmatprep.mubr.bf16.mxu0 %v1006
      %1295 = vmatmul.mubr.bf16.gmra.mxu0 %v745
      %v1296 = vpop.f32.mrf.mxu0
      %v1297 = vadd.f32 0.0, %v1296
      %v1298 = vpop.f32.mrf.mxu0
      %v1299 = vpop.f32.mrf.mxu0
      %v1300 = vadd.f32 0.0, %v1299
      %v1301 = vpop.f32.mrf.mxu0
      %1302 = vmatprep.mubr.bf16.mxu0 %v1009
      %1303 = vmatmul.mubr.bf16.gmra.mxu0 %v747
      %v1304 = vpop.f32.mrf.mxu0
      %v1305 = vadd.f32 0.0, %v1304
      %v1306 = vpop.f32.mrf.mxu0
      %v1307 = vpop.f32.mrf.mxu0
      %v1308 = vadd.f32 0.0, %v1307
      %v1309 = vpop.f32.mrf.mxu0
      %1310 = vmatprep.mubr.bf16.mxu0 %v1012
      %1311 = vmatmul.mubr.bf16.gmra.mxu0 %v749
      %v1312 = vpop.f32.mrf.mxu0
      %v1313 = vadd.f32 0.0, %v1312
      %v1314 = vpop.f32.mrf.mxu0
      %v1315 = vpop.f32.mrf.mxu0
      %v1316 = vadd.f32 0.0, %v1315
      %v1317 = vpop.f32.mrf.mxu0
      %1318 = vmatprep.mubr.bf16.mxu0 %v1015
      %1319 = vmatmul.mubr.bf16.gmra.mxu0 %v751
      %v1320 = vpop.f32.mrf.mxu0
      %v1321 = vadd.f32 0.0, %v1320
      %v1322 = vpop.f32.mrf.mxu0
      %v1323 = vpop.f32.mrf.mxu0
      %v1324 = vadd.f32 0.0, %v1323
      %v1325 = vpop.f32.mrf.mxu0
      %1326 = vmatprep.mubr.bf16.mxu0 %v1018
      %1327 = vmatmul.mubr.bf16.gmra.mxu0 %v753
      %v1328 = vpop.f32.mrf.mxu0
      %v1329 = vadd.f32 0.0, %v1328
      %v1330 = vpop.f32.mrf.mxu0
      %v1331 = vpop.f32.mrf.mxu0
      %v1332 = vadd.f32 0.0, %v1331
      %v1333 = vpop.f32.mrf.mxu0
      %1334 = vmatprep.mubr.bf16.mxu0 %v1021
      %1335 = vmatmul.mubr.bf16.gmra.mxu0 %v755
      %v1336 = vpop.f32.mrf.mxu0
      %v1337 = vadd.f32 0.0, %v1336
      %v1338 = vpop.f32.mrf.mxu0
      %v1339 = vpop.f32.mrf.mxu0
      %v1340 = vadd.f32 0.0, %v1339
      %v1341 = vpop.f32.mrf.mxu0
      %1342 = vmatprep.mubr.bf16.mxu0 %v1024
      %1343 = vmatmul.mubr.bf16.gmra.mxu0 %v757
      %v1344 = vpop.f32.mrf.mxu0
      %v1345 = vadd.f32 0.0, %v1344
      %v1346 = vpop.f32.mrf.mxu0
      %v1347 = vpop.f32.mrf.mxu0
      %v1348 = vadd.f32 0.0, %v1347
      %v1349 = vpop.f32.mrf.mxu0
      %1350 = vmatprep.mubr.bf16.mxu0 %v1027
      %1351 = vmatmul.mubr.bf16.gmra.mxu0 %v759
      %v1352 = vpop.f32.mrf.mxu0
      %v1353 = vadd.f32 0.0, %v1352
      %v1354 = vpop.f32.mrf.mxu0
      %v1355 = vpop.f32.mrf.mxu0
      %v1356 = vadd.f32 0.0, %v1355
      %v1357 = vpop.f32.mrf.mxu0
      %1358 = vmatprep.mubr.bf16.mxu0 %v1030
      %1359 = vmatmul.mubr.bf16.gmra.mxu0 %v761
      %v1360 = vpop.f32.mrf.mxu0
      %v1361 = vadd.f32 0.0, %v1360
      %v1362 = vpop.f32.mrf.mxu0
      %v1363 = vpop.f32.mrf.mxu0
      %v1364 = vadd.f32 0.0, %v1363
      %v1365 = vpop.f32.mrf.mxu0
      %1366 = vmatprep.mubr.bf16.mxu0 %v1033
      %1367 = vmatmul.mubr.bf16.gmra.mxu0 %v763
      %v1368 = vpop.f32.mrf.mxu0
      %v1369 = vadd.f32 0.0, %v1368
      %v1370 = vpop.f32.mrf.mxu0
      %v1371 = vpop.f32.mrf.mxu0
      %v1372 = vadd.f32 0.0, %v1371
      %v1373 = vpop.f32.mrf.mxu0
      %1374 = vmatprep.mubr.bf16.mxu0 %v1036
      %1375 = vmatmul.mubr.bf16.gmra.mxu0 %v765
      %v1376 = vpop.f32.mrf.mxu0
      %v1377 = vadd.f32 0.0, %v1376
      %v1378 = vpop.f32.mrf.mxu0
      %v1379 = vpop.f32.mrf.mxu0
      %v1380 = vadd.f32 0.0, %v1379
      %v1381 = vpop.f32.mrf.mxu0
      %1382 = vmatprep.mubr.bf16.mxu0 %v1039
      %1383 = vmatmul.mubr.bf16.gmra.mxu0 %v767
      %v1384 = vpop.f32.mrf.mxu0
      %v1385 = vadd.f32 0.0, %v1384
      %v1386 = vpop.f32.mrf.mxu0
      %v1387 = vpop.f32.mrf.mxu0
      %v1388 = vadd.f32 0.0, %v1387
      %v1389 = vpop.f32.mrf.mxu0
      %1390 = vmatprep.mubr.bf16.mxu0 %v1042
      %1391 = vmatmul.mubr.bf16.gmra.mxu0 %v769
      %v1392 = vpop.f32.mrf.mxu0
      %v1393 = vadd.f32 0.0, %v1392
      %v1394 = vpop.f32.mrf.mxu0
      %v1395 = vpop.f32.mrf.mxu0
      %v1396 = vadd.f32 0.0, %v1395
      %v1397 = vpop.f32.mrf.mxu0
      %1398 = vmatprep.mubr.bf16.mxu0 %v1045
      %1399 = vmatmul.mubr.bf16.gmra.mxu0 %v771
      %v1400 = vpop.f32.mrf.mxu0
      %v1401 = vadd.f32 0.0, %v1400
      %v1402 = vpop.f32.mrf.mxu0
      %v1403 = vpop.f32.mrf.mxu0
      %v1404 = vadd.f32 0.0, %v1403
      %v1405 = vpop.f32.mrf.mxu0
      %1406 = vmatprep.mubr.bf16.mxu0 %v1048
      %1407 = vmatmul.mubr.bf16.gmra.mxu0 %v773
      %v1408 = vpop.f32.mrf.mxu0
      %v1409 = vadd.f32 0.0, %v1408
      %v1410 = vpop.f32.mrf.mxu0
      %v1411 = vpop.f32.mrf.mxu0
      %v1412 = vadd.f32 0.0, %v1411
      %v1413 = vpop.f32.mrf.mxu0
      %1414 = vmatprep.mubr.bf16.mxu0 %v1051
      %1415 = vmatmul.mubr.bf16.gmra.mxu0 %v775
      %v1416 = vpop.f32.mrf.mxu0
      %v1417 = vadd.f32 0.0, %v1416
      %v1418 = vpop.f32.mrf.mxu0
      %v1419 = vpop.f32.mrf.mxu0
      %v1420 = vadd.f32 0.0, %v1419
      %v1421 = vpop.f32.mrf.mxu0
      %1422 = vmatprep.mubr.bf16.mxu0 %v1054
      %1423 = vmatmul.mubr.bf16.gmra.mxu0 %v777
      %v1424 = vpop.f32.mrf.mxu0
      %v1425 = vadd.f32 0.0, %v1424
      %v1426 = vpop.f32.mrf.mxu0
      %v1427 = vpop.f32.mrf.mxu0
      %v1428 = vadd.f32 0.0, %v1427
      %v1429 = vpop.f32.mrf.mxu0
      %1430 = vmatprep.mubr.bf16.mxu0 %v1057
      %1431 = vmatmul.mubr.bf16.gmra.mxu0 %v779
      %v1432 = vpop.f32.mrf.mxu0
      %v1433 = vadd.f32 0.0, %v1432
      %v1434 = vpop.f32.mrf.mxu0
      %v1435 = vpop.f32.mrf.mxu0
      %v1436 = vadd.f32 0.0, %v1435
      %v1437 = vpop.f32.mrf.mxu0
      %1438 = vmatprep.mubr.bf16.mxu0 %v1060
      %1439 = vmatmul.mubr.bf16.gmra.mxu0 %v781
      %v1440 = vpop.f32.mrf.mxu0
      %v1441 = vadd.f32 0.0, %v1440
      %v1442 = vpop.f32.mrf.mxu0
      %v1443 = vpop.f32.mrf.mxu0
      %v1444 = vadd.f32 0.0, %v1443
      %v1445 = vpop.f32.mrf.mxu0
      %1446 = vmatprep.mubr.bf16.mxu0 %v1063
      %1447 = vmatmul.mubr.bf16.gmra.mxu0 %v783
      %v1448 = vpop.f32.mrf.mxu0
      %v1449 = vadd.f32 0.0, %v1448
      %v1450 = vpop.f32.mrf.mxu0
      %v1451 = vpop.f32.mrf.mxu0
      %v1452 = vadd.f32 0.0, %v1451
      %v1453 = vpop.f32.mrf.mxu0
      %1454 = vmatprep.mubr.bf16.mxu0 %v1066
      %1455 = vmatmul.mubr.bf16.gmra.mxu0 %v785
      %v1456 = vpop.f32.mrf.mxu0
      %v1457 = vadd.f32 0.0, %v1456
      %v1458 = vpop.f32.mrf.mxu0
      %v1459 = vpop.f32.mrf.mxu0
      %v1460 = vadd.f32 0.0, %v1459
      %v1461 = vpop.f32.mrf.mxu0
      %1462 = vmatprep.mubr.bf16.mxu0 %v1069
      %1463 = vmatmul.mubr.bf16.gmra.mxu0 %v787
      %v1464 = vpop.f32.mrf.mxu0
      %v1465 = vadd.f32 0.0, %v1464
      %v1466 = vpop.f32.mrf.mxu0
      %v1467 = vpop.f32.mrf.mxu0
      %v1468 = vadd.f32 0.0, %v1467
      %v1469 = vpop.f32.mrf.mxu0
      %1470 = vmatprep.mubr.bf16.mxu0 %v1072
      %1471 = vmatmul.mubr.bf16.gmra.mxu0 %v789
      %v1472 = vpop.f32.mrf.mxu0
      %v1473 = vadd.f32 0.0, %v1472
      %v1474 = vpop.f32.mrf.mxu0
      %v1475 = vpop.f32.mrf.mxu0
      %v1476 = vadd.f32 0.0, %v1475
      %v1477 = vpop.f32.mrf.mxu0
      %1478 = vmatprep.mubr.bf16.mxu0 %v1075
      %1479 = vmatmul.mubr.bf16.gmra.mxu0 %v791
      %v1480 = vpop.f32.mrf.mxu0
      %v1481 = vadd.f32 0.0, %v1480
      %v1482 = vpop.f32.mrf.mxu0
      %v1483 = vpop.f32.mrf.mxu0
      %v1484 = vadd.f32 0.0, %v1483
      %v1485 = vpop.f32.mrf.mxu0
      %1486 = vmatprep.mubr.bf16.mxu0 %v1078
      %1487 = vmatmul.mubr.bf16.gmra.mxu0 %v793
      %v1488 = vpop.f32.mrf.mxu0
      %v1489 = vadd.f32 0.0, %v1488
      %v1490 = vpop.f32.mrf.mxu0
      %v1491 = vpop.f32.mrf.mxu0
      %v1492 = vadd.f32 0.0, %v1491
      %v1493 = vpop.f32.mrf.mxu0
      %1494 = vmatprep.mubr.bf16.mxu0 %v1081
      %1495 = vmatmul.mubr.bf16.gmra.mxu0 %v795
      %v1496 = vpop.f32.mrf.mxu0
      %v1497 = vadd.f32 0.0, %v1496
      %v1498 = vpop.f32.mrf.mxu0
      %v1499 = vpop.f32.mrf.mxu0
      %v1500 = vadd.f32 0.0, %v1499
      %v1501 = vpop.f32.mrf.mxu0
      %1502 = vmatprep.mubr.bf16.mxu0 %v1084
      %1503 = vmatmul.mubr.bf16.gmra.mxu0 %v797
      %v1504 = vpop.f32.mrf.mxu0
      %v1505 = vadd.f32 0.0, %v1504
      %v1506 = vpop.f32.mrf.mxu0
      %v1507 = vpop.f32.mrf.mxu0
      %v1508 = vadd.f32 0.0, %v1507
      %v1509 = vpop.f32.mrf.mxu0
      %1510 = vmatprep.mubr.bf16.mxu0 %v1087
      %1511 = vmatmul.mubr.bf16.gmra.mxu0 %v799
      %v1512 = vpop.f32.mrf.mxu0
      %v1513 = vadd.f32 0.0, %v1512
      %v1514 = vpop.f32.mrf.mxu0
      %v1515 = vpop.f32.mrf.mxu0
      %v1516 = vadd.f32 0.0, %v1515
      %v1517 = vpop.f32.mrf.mxu0
      %1518 = vmatprep.mubr.bf16.mxu0 %v1090
      %1519 = vmatmul.mubr.bf16.gmra.mxu0 %v801
      %v1520 = vpop.f32.mrf.mxu0
      %v1521 = vadd.f32 0.0, %v1520
      %v1522 = vpop.f32.mrf.mxu0
      %v1523 = vpop.f32.mrf.mxu0
      %v1524 = vadd.f32 0.0, %v1523
      %v1525 = vpop.f32.mrf.mxu0
      %1526 = vmatprep.mubr.bf16.mxu0 %v1093
      %1527 = vmatmul.mubr.bf16.gmra.mxu0 %v803
      %v1528 = vpop.f32.mrf.mxu0
      %v1529 = vadd.f32 0.0, %v1528
      %v1530 = vpop.f32.mrf.mxu0
      %v1531 = vpop.f32.mrf.mxu0
      %v1532 = vadd.f32 0.0, %v1531
      %v1533 = vpop.f32.mrf.mxu0
      %1534 = vmatprep.mubr.bf16.mxu0 %v1096
      %1535 = vmatmul.mubr.bf16.gmra.mxu0 %v805
      %v1536 = vpop.f32.mrf.mxu0
      %v1537 = vadd.f32 0.0, %v1536
      %v1538 = vpop.f32.mrf.mxu0
      %v1539 = vpop.f32.mrf.mxu0
      %v1540 = vadd.f32 0.0, %v1539
      %v1541 = vpop.f32.mrf.mxu0
      %1542 = vmatprep.mubr.bf16.mxu0 %v1099
      %1543 = vmatmul.mubr.bf16.gmra.mxu0 %v807
      %v1544 = vpop.f32.mrf.mxu0
      %v1545 = vadd.f32 0.0, %v1544
      %v1546 = vpop.f32.mrf.mxu0
      %v1547 = vpop.f32.mrf.mxu0
      %v1548 = vadd.f32 0.0, %v1547
      %v1549 = vpop.f32.mrf.mxu0
      %1550 = vmatprep.mubr.bf16.mxu0 %v1102
      %1551 = vmatmul.mubr.bf16.gmra.mxu0 %v809
      %v1552 = vpop.f32.mrf.mxu0
      %v1553 = vadd.f32 0.0, %v1552
      %v1554 = vpop.f32.mrf.mxu0
      %v1555 = vpop.f32.mrf.mxu0
      %v1556 = vadd.f32 0.0, %v1555
      %v1557 = vpop.f32.mrf.mxu0
      %1558 = vmatprep.mubr.bf16.mxu0 %v1105
      %1559 = vmatmul.mubr.bf16.gmra.mxu0 %v811
      %v1560 = vpop.f32.mrf.mxu0
      %v1561 = vadd.f32 0.0, %v1560
      %v1562 = vpop.f32.mrf.mxu0
      %v1563 = vpop.f32.mrf.mxu0
      %v1564 = vadd.f32 0.0, %v1563
      %v1565 = vpop.f32.mrf.mxu0
      %1566 = vmatprep.mubr.bf16.mxu0 %v1108
      %1567 = vmatmul.mubr.bf16.gmra.mxu0 %v813
      %v1568 = vpop.f32.mrf.mxu0
      %v1569 = vadd.f32 0.0, %v1568
      %v1570 = vpop.f32.mrf.mxu0
      %v1571 = vpop.f32.mrf.mxu0
      %v1572 = vadd.f32 0.0, %v1571
      %v1573 = vpop.f32.mrf.mxu0
      %1574 = vmatprep.mubr.bf16.mxu0 %v1111
      %1575 = vmatmul.mubr.bf16.gmra.mxu0 %v815
      %v1576 = vpop.f32.mrf.mxu0
      %v1577 = vadd.f32 0.0, %v1576
      %v1578 = vpop.f32.mrf.mxu0
      %v1579 = vpop.f32.mrf.mxu0
      %v1580 = vadd.f32 0.0, %v1579
      %v1581 = vpop.f32.mrf.mxu0
      %1582 = vmatprep.mubr.bf16.mxu0 %v1114
      %1583 = vmatmul.mubr.bf16.gmra.mxu0 %v817
      %v1584 = vpop.f32.mrf.mxu0
      %v1585 = vadd.f32 0.0, %v1584
      %v1586 = vpop.f32.mrf.mxu0
      %v1587 = vpop.f32.mrf.mxu0
      %v1588 = vadd.f32 0.0, %v1587
      %v1589 = vpop.f32.mrf.mxu0
      %1590 = vmatprep.mubr.bf16.mxu0 %v1117
      %1591 = vmatmul.mubr.bf16.gmra.mxu0 %v819
      %v1592 = vpop.f32.mrf.mxu0
      %v1593 = vadd.f32 0.0, %v1592
      %v1594 = vpop.f32.mrf.mxu0
      %v1595 = vpop.f32.mrf.mxu0
      %v1596 = vadd.f32 0.0, %v1595
      %v1597 = vpop.f32.mrf.mxu0
      %1598 = vmatprep.mubr.bf16.mxu0 %v1120
      %1599 = vmatmul.mubr.bf16.gmra.mxu0 %v821
      %v1600 = vpop.f32.mrf.mxu0
      %v1601 = vadd.f32 0.0, %v1600
      %v1602 = vpop.f32.mrf.mxu0
      %v1603 = vpop.f32.mrf.mxu0
      %v1604 = vadd.f32 0.0, %v1603
      %v1605 = vpop.f32.mrf.mxu0
      %1606 = vmatprep.mubr.bf16.mxu0 %v1123
      %1607 = vmatmul.mubr.bf16.gmra.mxu0 %v823
      %v1608 = vpop.f32.mrf.mxu0
      %v1609 = vadd.f32 0.0, %v1608
      %v1610 = vpop.f32.mrf.mxu0
      %v1611 = vpop.f32.mrf.mxu0
      %v1612 = vadd.f32 0.0, %v1611
      %v1613 = vpop.f32.mrf.mxu0
      %1614 = vmatprep.mubr.bf16.mxu0 %v1126
      %1615 = vmatmul.mubr.bf16.gmra.mxu0 %v825
      %v1616 = vpop.f32.mrf.mxu0
      %v1617 = vadd.f32 0.0, %v1616
      %v1618 = vpop.f32.mrf.mxu0
      %v1619 = vpop.f32.mrf.mxu0
      %v1620 = vadd.f32 0.0, %v1619
      %v1621 = vpop.f32.mrf.mxu0
      %1622 = vmatprep.mubr.bf16.mxu0 %v1129
      %1623 = vmatmul.mubr.bf16.gmra.mxu0 %v827
      %v1624 = vpop.f32.mrf.mxu0
      %v1625 = vadd.f32 0.0, %v1624
      %v1626 = vpop.f32.mrf.mxu0
      %v1627 = vpop.f32.mrf.mxu0
      %v1628 = vadd.f32 0.0, %v1627
      %v1629 = vpop.f32.mrf.mxu0
      %1630 = vmatprep.mubr.bf16.mxu0 %v1132
      %1631 = vmatmul.mubr.bf16.gmra.mxu0 %v829
      %v1632 = vpop.f32.mrf.mxu0
      %v1633 = vadd.f32 0.0, %v1632
      %v1634 = vpop.f32.mrf.mxu0
      %v1635 = vpop.f32.mrf.mxu0
      %v1636 = vadd.f32 0.0, %v1635
      %v1637 = vpop.f32.mrf.mxu0
      %1638 = vmatprep.mubr.bf16.mxu0 %v1135
      %1639 = vmatmul.mubr.bf16.gmra.mxu0 %v831
      %v1640 = vpop.f32.mrf.mxu0
      %v1641 = vadd.f32 0.0, %v1640
      %v1642 = vpop.f32.mrf.mxu0
      %v1643 = vpop.f32.mrf.mxu0
      %v1644 = vadd.f32 0.0, %v1643
      %v1645 = vpop.f32.mrf.mxu0
      %1646 = vmatprep.mubr.bf16.mxu0 %v1138
      %1647 = vmatmul.mubr.bf16.gmra.mxu0 %v833
      %v1648 = vpop.f32.mrf.mxu0
      %v1649 = vadd.f32 0.0, %v1648
      %v1650 = vpop.f32.mrf.mxu0
      %v1651 = vpop.f32.mrf.mxu0
      %v1652 = vadd.f32 0.0, %v1651
      %v1653 = vpop.f32.mrf.mxu0
      %1654 = vmatprep.mubr.bf16.mxu0 %v1141
      %1655 = vmatmul.mubr.bf16.gmra.mxu0 %v835
      %v1656 = vpop.f32.mrf.mxu0
      %v1657 = vadd.f32 0.0, %v1656
      %v1658 = vpop.f32.mrf.mxu0
      %v1659 = vpop.f32.mrf.mxu0
      %v1660 = vadd.f32 0.0, %v1659
      %v1661 = vpop.f32.mrf.mxu0
      %1662 = vmatprep.mubr.bf16.mxu0 %v1144
      %1663 = vmatmul.mubr.bf16.gmra.mxu0 %v837
      %v1664 = vpop.f32.mrf.mxu0
      %v1665 = vadd.f32 0.0, %v1664
      %v1666 = vpop.f32.mrf.mxu0
      %v1667 = vpop.f32.mrf.mxu0
      %v1668 = vadd.f32 0.0, %v1667
      %v1669 = vpop.f32.mrf.mxu0
      %1670 = vmatprep.mubr.bf16.mxu0 %v1147
      %1671 = vmatmul.mubr.bf16.gmra.mxu0 %v839
      %v1672 = vpop.f32.mrf.mxu0
      %v1673 = vadd.f32 0.0, %v1672
      %v1674 = vpop.f32.mrf.mxu0
      %v1675 = vpop.f32.mrf.mxu0
      %v1676 = vadd.f32 0.0, %v1675
      %v1677 = vpop.f32.mrf.mxu0
      %1678 = vmatprep.mubr.bf16.mxu0 %v1150
      %1679 = vmatmul.mubr.bf16.gmra.mxu0 %v841
      %v1680 = vpop.f32.mrf.mxu0
      %v1681 = vadd.f32 0.0, %v1680
      %v1682 = vpop.f32.mrf.mxu0
      %v1683 = vpop.f32.mrf.mxu0
      %v1684 = vadd.f32 0.0, %v1683
      %v1685 = vpop.f32.mrf.mxu0
      %1686 = vmatprep.mubr.bf16.mxu0 %v1153
      %1687 = vmatmul.mubr.bf16.gmra.mxu0 %v843
      %v1688 = vpop.f32.mrf.mxu0
      %v1689 = vadd.f32 0.0, %v1688
      %v1690 = vpop.f32.mrf.mxu0
      %v1691 = vpop.f32.mrf.mxu0
      %v1692 = vadd.f32 0.0, %v1691
      %v1693 = vpop.f32.mrf.mxu0
      %1694 = vmatprep.mubr.bf16.mxu0 %v1156
      %1695 = vmatmul.mubr.bf16.gmra.mxu0 %v845
      %v1696 = vpop.f32.mrf.mxu0
      %v1697 = vadd.f32 0.0, %v1696
      %v1698 = vpop.f32.mrf.mxu0
      %v1699 = vpop.f32.mrf.mxu0
      %v1700 = vadd.f32 0.0, %v1699
      %v1701 = vpop.f32.mrf.mxu0
      %1702 = vdwg.mxu0
      %1703 = vst.msk [vmem:[%s182] sm:$0xff] %vm965, %v1193
      %1704 = vst.msk [vmem:[%s182 + $0x8] sm:$0xff] %vm965, %v1196
      %1705 = vst.msk [vmem:[%s182 + $0x10] sm:$0xff] %vm965, %v1201
      %1706 = vst.msk [vmem:[%s182 + $0x18] sm:$0xff] %vm965, %v1204
      %1707 = vst.msk [vmem:[%s182 + $0x20] sm:$0xff] %vm965, %v1209
      %1708 = vst.msk [vmem:[%s182 + $0x28] sm:$0xff] %vm965, %v1212
      %1709 = vst.msk [vmem:[%s182 + $0x30] sm:$0xff] %vm965, %v1217
      %1710 = vst.msk [vmem:[%s182 + $0x38] sm:$0xff] %vm965, %v1220
      %1711 = vst.msk [vmem:[%s182 + $0x40] sm:$0xff] %vm965, %v1225
      %1712 = vst.msk [vmem:[%s182 + $0x48] sm:$0xff] %vm965, %v1228
      %1713 = vst.msk [vmem:[%s182 + $0x50] sm:$0xff] %vm965, %v1233
      %1714 = vst.msk [vmem:[%s182 + $0x58] sm:$0xff] %vm965, %v1236
      %1715 = vst.msk [vmem:[%s182 + $0x60] sm:$0xff] %vm965, %v1241
      %1716 = vst.msk [vmem:[%s182 + $0x68] sm:$0xff] %vm965, %v1244
      %1717 = vst.msk [vmem:[%s182 + $0x70] sm:$0xff] %vm965, %v1249
      %1718 = vst.msk [vmem:[%s182 + $0x78] sm:$0xff] %vm965, %v1252
      %1719 = vst.msk [vmem:[%s182 + $0x80] sm:$0xff] %vm965, %v1257
      %1720 = vst.msk [vmem:[%s182 + $0x88] sm:$0xff] %vm965, %v1260
      %1721 = vst.msk [vmem:[%s182 + $0x90] sm:$0xff] %vm965, %v1265
      %1722 = vst.msk [vmem:[%s182 + $0x98] sm:$0xff] %vm965, %v1268
      %1723 = vst.msk [vmem:[%s182 + $0xa0] sm:$0xff] %vm965, %v1273
      %1724 = vst.msk [vmem:[%s182 + $0xa8] sm:$0xff] %vm965, %v1276
      %1725 = vst.msk [vmem:[%s182 + $0xb0] sm:$0xff] %vm965, %v1281
      %1726 = vst.msk [vmem:[%s182 + $0xb8] sm:$0xff] %vm965, %v1284
      %1727 = vst.msk [vmem:[%s182 + $0xc0] sm:$0xff] %vm965, %v1289
      %1728 = vst.msk [vmem:[%s182 + $0xc8] sm:$0xff] %vm965, %v1292
      %1729 = vst.msk [vmem:[%s182 + $0xd0] sm:$0xff] %vm965, %v1297
      %1730 = vst.msk [vmem:[%s182 + $0xd8] sm:$0xff] %vm965, %v1300
      %1731 = vst.msk [vmem:[%s182 + $0xe0] sm:$0xff] %vm965, %v1305
      %1732 = vst.msk [vmem:[%s182 + $0xe8] sm:$0xff] %vm965, %v1308
      %1733 = vst.msk [vmem:[%s182 + $0xf0] sm:$0xff] %vm965, %v1313
      %1734 = vst.msk [vmem:[%s182 + $0xf8] sm:$0xff] %vm965, %v1316
      %1735 = vst.msk [vmem:[%s182 + $0x100] sm:$0xff] %vm965, %v1321
      %1736 = vst.msk [vmem:[%s182 + $0x108] sm:$0xff] %vm965, %v1324
      %1737 = vst.msk [vmem:[%s182 + $0x110] sm:$0xff] %vm965, %v1329
      %1738 = vst.msk [vmem:[%s182 + $0x118] sm:$0xff] %vm965, %v1332
      %1739 = vst.msk [vmem:[%s182 + $0x120] sm:$0xff] %vm965, %v1337
      %1740 = vst.msk [vmem:[%s182 + $0x128] sm:$0xff] %vm965, %v1340
      %1741 = vst.msk [vmem:[%s182 + $0x130] sm:$0xff] %vm965, %v1345
      %1742 = vst.msk [vmem:[%s182 + $0x138] sm:$0xff] %vm965, %v1348
      %1743 = vst.msk [vmem:[%s182 + $0x140] sm:$0xff] %vm965, %v1353
      %1744 = vst.msk [vmem:[%s182 + $0x148] sm:$0xff] %vm965, %v1356
      %1745 = vst.msk [vmem:[%s182 + $0x150] sm:$0xff] %vm965, %v1361
      %1746 = vst.msk [vmem:[%s182 + $0x158] sm:$0xff] %vm965, %v1364
      %1747 = vst.msk [vmem:[%s182 + $0x160] sm:$0xff] %vm965, %v1369
      %1748 = vst.msk [vmem:[%s182 + $0x168] sm:$0xff] %vm965, %v1372
      %1749 = vst.msk [vmem:[%s182 + $0x170] sm:$0xff] %vm965, %v1377
      %1750 = vst.msk [vmem:[%s182 + $0x178] sm:$0xff] %vm965, %v1380
      %1751 = vst.msk [vmem:[%s182 + $0x180] sm:$0xff] %vm965, %v1385
      %1752 = vst.msk [vmem:[%s182 + $0x188] sm:$0xff] %vm965, %v1388
      %1753 = vst.msk [vmem:[%s182 + $0x190] sm:$0xff] %vm965, %v1393
      %1754 = vst.msk [vmem:[%s182 + $0x198] sm:$0xff] %vm965, %v1396
      %1755 = vst.msk [vmem:[%s182 + $0x1a0] sm:$0xff] %vm965, %v1401
      %1756 = vst.msk [vmem:[%s182 + $0x1a8] sm:$0xff] %vm965, %v1404
      %1757 = vst.msk [vmem:[%s182 + $0x1b0] sm:$0xff] %vm965, %v1409
      %1758 = vst.msk [vmem:[%s182 + $0x1b8] sm:$0xff] %vm965, %v1412
      %1759 = vst.msk [vmem:[%s182 + $0x1c0] sm:$0xff] %vm965, %v1417
      %1760 = vst.msk [vmem:[%s182 + $0x1c8] sm:$0xff] %vm965, %v1420
      %1761 = vst.msk [vmem:[%s182 + $0x1d0] sm:$0xff] %vm965, %v1425
      %1762 = vst.msk [vmem:[%s182 + $0x1d8] sm:$0xff] %vm965, %v1428
      %1763 = vst.msk [vmem:[%s182 + $0x1e0] sm:$0xff] %vm965, %v1433
      %1764 = vst.msk [vmem:[%s182 + $0x1e8] sm:$0xff] %vm965, %v1436
      %1765 = vst.msk [vmem:[%s182 + $0x1f0] sm:$0xff] %vm965, %v1441
      %1766 = vst.msk [vmem:[%s182 + $0x1f8] sm:$0xff] %vm965, %v1444
      %1767 = vst.msk [vmem:[%s182 + $0x200] sm:$0xff] %vm965, %v1449
      %1768 = vst.msk [vmem:[%s182 + $0x208] sm:$0xff] %vm965, %v1452
      %1769 = vst.msk [vmem:[%s182 + $0x210] sm:$0xff] %vm965, %v1457
      %1770 = vst.msk [vmem:[%s182 + $0x218] sm:$0xff] %vm965, %v1460
      %1771 = vst.msk [vmem:[%s182 + $0x220] sm:$0xff] %vm965, %v1465
      %1772 = vst.msk [vmem:[%s182 + $0x228] sm:$0xff] %vm965, %v1468
      %1773 = vst.msk [vmem:[%s182 + $0x230] sm:$0xff] %vm965, %v1473
      %1774 = vst.msk [vmem:[%s182 + $0x238] sm:$0xff] %vm965, %v1476
      %1775 = vst.msk [vmem:[%s182 + $0x240] sm:$0xff] %vm965, %v1481
      %1776 = vst.msk [vmem:[%s182 + $0x248] sm:$0xff] %vm965, %v1484
      %1777 = vst.msk [vmem:[%s182 + $0x250] sm:$0xff] %vm965, %v1489
      %1778 = vst.msk [vmem:[%s182 + $0x258] sm:$0xff] %vm965, %v1492
      %1779 = vst.msk [vmem:[%s182 + $0x260] sm:$0xff] %vm965, %v1497
      %1780 = vst.msk [vmem:[%s182 + $0x268] sm:$0xff] %vm965, %v1500
      %1781 = vst.msk [vmem:[%s182 + $0x270] sm:$0xff] %vm965, %v1505
      %1782 = vst.msk [vmem:[%s182 + $0x278] sm:$0xff] %vm965, %v1508
      %1783 = vst.msk [vmem:[%s182 + $0x280] sm:$0xff] %vm965, %v1513
      %1784 = vst.msk [vmem:[%s182 + $0x288] sm:$0xff] %vm965, %v1516
      %1785 = vst.msk [vmem:[%s182 + $0x290] sm:$0xff] %vm965, %v1521
      %1786 = vst.msk [vmem:[%s182 + $0x298] sm:$0xff] %vm965, %v1524
      %1787 = vst.msk [vmem:[%s182 + $0x2a0] sm:$0xff] %vm965, %v1529
      %1788 = vst.msk [vmem:[%s182 + $0x2a8] sm:$0xff] %vm965, %v1532
      %1789 = vst.msk [vmem:[%s182 + $0x2b0] sm:$0xff] %vm965, %v1537
      %1790 = vst.msk [vmem:[%s182 + $0x2b8] sm:$0xff] %vm965, %v1540
      %1791 = vst.msk [vmem:[%s182 + $0x2c0] sm:$0xff] %vm965, %v1545
      %1792 = vst.msk [vmem:[%s182 + $0x2c8] sm:$0xff] %vm965, %v1548
      %1793 = vst.msk [vmem:[%s182 + $0x2d0] sm:$0xff] %vm965, %v1553
      %1794 = vst.msk [vmem:[%s182 + $0x2d8] sm:$0xff] %vm965, %v1556
      %1795 = vst.msk [vmem:[%s182 + $0x2e0] sm:$0xff] %vm965, %v1561
      %1796 = vst.msk [vmem:[%s182 + $0x2e8] sm:$0xff] %vm965, %v1564
      %1797 = vst.msk [vmem:[%s182 + $0x2f0] sm:$0xff] %vm965, %v1569
      %1798 = vst.msk [vmem:[%s182 + $0x2f8] sm:$0xff] %vm965, %v1572
      %1799 = vst.msk [vmem:[%s182 + $0x300] sm:$0xff] %vm965, %v1577
      %1800 = vst.msk [vmem:[%s182 + $0x308] sm:$0xff] %vm965, %v1580
      %1801 = vst.msk [vmem:[%s182 + $0x310] sm:$0xff] %vm965, %v1585
      %1802 = vst.msk [vmem:[%s182 + $0x318] sm:$0xff] %vm965, %v1588
      %1803 = vst.msk [vmem:[%s182 + $0x320] sm:$0xff] %vm965, %v1593
      %1804 = vst.msk [vmem:[%s182 + $0x328] sm:$0xff] %vm965, %v1596
      %1805 = vst.msk [vmem:[%s182 + $0x330] sm:$0xff] %vm965, %v1601
      %1806 = vst.msk [vmem:[%s182 + $0x338] sm:$0xff] %vm965, %v1604
      %1807 = vst.msk [vmem:[%s182 + $0x340] sm:$0xff] %vm965, %v1609
      %1808 = vst.msk [vmem:[%s182 + $0x348] sm:$0xff] %vm965, %v1612
      %1809 = vst.msk [vmem:[%s182 + $0x350] sm:$0xff] %vm965, %v1617
      %1810 = vst.msk [vmem:[%s182 + $0x358] sm:$0xff] %vm965, %v1620
      %1811 = vst.msk [vmem:[%s182 + $0x360] sm:$0xff] %vm965, %v1625
      %1812 = vst.msk [vmem:[%s182 + $0x368] sm:$0xff] %vm965, %v1628
      %1813 = vst.msk [vmem:[%s182 + $0x370] sm:$0xff] %vm965, %v1633
      %1814 = vst.msk [vmem:[%s182 + $0x378] sm:$0xff] %vm965, %v1636
      %1815 = vst.msk [vmem:[%s182 + $0x380] sm:$0xff] %vm965, %v1641
      %1816 = vst.msk [vmem:[%s182 + $0x388] sm:$0xff] %vm965, %v1644
      %1817 = vst.msk [vmem:[%s182 + $0x390] sm:$0xff] %vm965, %v1649
      %1818 = vst.msk [vmem:[%s182 + $0x398] sm:$0xff] %vm965, %v1652
      %1819 = vst.msk [vmem:[%s182 + $0x3a0] sm:$0xff] %vm965, %v1657
      %1820 = vst.msk [vmem:[%s182 + $0x3a8] sm:$0xff] %vm965, %v1660
      %1821 = vst.msk [vmem:[%s182 + $0x3b0] sm:$0xff] %vm965, %v1665
      %1822 = vst.msk [vmem:[%s182 + $0x3b8] sm:$0xff] %vm965, %v1668
      %1823 = vst.msk [vmem:[%s182 + $0x3c0] sm:$0xff] %vm965, %v1673
      %1824 = vst.msk [vmem:[%s182 + $0x3c8] sm:$0xff] %vm965, %v1676
      %1825 = vst.msk [vmem:[%s182 + $0x3d0] sm:$0xff] %vm965, %v1681
      %1826 = vst.msk [vmem:[%s182 + $0x3d8] sm:$0xff] %vm965, %v1684
      %1827 = vst.msk [vmem:[%s182 + $0x3e0] sm:$0xff] %vm965, %v1689
      %1828 = vst.msk [vmem:[%s182 + $0x3e8] sm:$0xff] %vm965, %v1692
      %1829 = vst.msk [vmem:[%s182 + $0x3f0] sm:$0xff] %vm965, %v1697
      %1830 = vst.msk [vmem:[%s182 + $0x3f8] sm:$0xff] %vm965, %v1700
      %v1831 = vsel %vm965, %v1193, 0.0
      %v1832 = vsel %vm965, %v1196, 0.0
      %v1833 = vadd.f32 %v1831, %v1832
      %v1834 = vsel %vm965, %v1201, 0.0
      %v1835 = vadd.f32 %v1833, %v1834
      %v1836 = vsel %vm965, %v1204, 0.0
      %v1837 = vadd.f32 %v1835, %v1836
      %v1838 = vsel %vm965, %v1209, 0.0
      %v1839 = vadd.f32 %v1837, %v1838
      %v1840 = vsel %vm965, %v1212, 0.0
      %v1841 = vadd.f32 %v1839, %v1840
      %v1842 = vsel %vm965, %v1217, 0.0
      %v1843 = vadd.f32 %v1841, %v1842
      %v1844 = vsel %vm965, %v1220, 0.0
      %v1845 = vadd.f32 %v1843, %v1844
      %v1846 = vsel %vm965, %v1225, 0.0
      %v1847 = vadd.f32 %v1845, %v1846
      %v1848 = vsel %vm965, %v1228, 0.0
      %v1849 = vadd.f32 %v1847, %v1848
      %v1850 = vsel %vm965, %v1233, 0.0
      %v1851 = vadd.f32 %v1849, %v1850
      %v1852 = vsel %vm965, %v1236, 0.0
      %v1853 = vadd.f32 %v1851, %v1852
      %v1854 = vsel %vm965, %v1241, 0.0
      %v1855 = vadd.f32 %v1853, %v1854
      %v1856 = vsel %vm965, %v1244, 0.0
      %v1857 = vadd.f32 %v1855, %v1856
      %v1858 = vsel %vm965, %v1249, 0.0
      %v1859 = vadd.f32 %v1857, %v1858
      %v1860 = vsel %vm965, %v1252, 0.0
      %v1861 = vadd.f32 %v1859, %v1860
      %v1862 = vsel %vm965, %v1257, 0.0
      %v1863 = vadd.f32 %v1861, %v1862
      %v1864 = vsel %vm965, %v1260, 0.0
      %v1865 = vadd.f32 %v1863, %v1864
      %v1866 = vsel %vm965, %v1265, 0.0
      %v1867 = vadd.f32 %v1865, %v1866
      %v1868 = vsel %vm965, %v1268, 0.0
      %v1869 = vadd.f32 %v1867, %v1868
      %v1870 = vsel %vm965, %v1273, 0.0
      %v1871 = vadd.f32 %v1869, %v1870
      %v1872 = vsel %vm965, %v1276, 0.0
      %v1873 = vadd.f32 %v1871, %v1872
      %v1874 = vsel %vm965, %v1281, 0.0
      %v1875 = vadd.f32 %v1873, %v1874
      %v1876 = vsel %vm965, %v1284, 0.0
      %v1877 = vadd.f32 %v1875, %v1876
      %v1878 = vsel %vm965, %v1289, 0.0
      %v1879 = vadd.f32 %v1877, %v1878
      %v1880 = vsel %vm965, %v1292, 0.0
      %v1881 = vadd.f32 %v1879, %v1880
      %v1882 = vsel %vm965, %v1297, 0.0
      %v1883 = vadd.f32 %v1881, %v1882
      %v1884 = vsel %vm965, %v1300, 0.0
      %v1885 = vadd.f32 %v1883, %v1884
      %v1886 = vsel %vm965, %v1305, 0.0
      %v1887 = vadd.f32 %v1885, %v1886
      %v1888 = vsel %vm965, %v1308, 0.0
      %v1889 = vadd.f32 %v1887, %v1888
      %v1890 = vsel %vm965, %v1313, 0.0
      %v1891 = vadd.f32 %v1889, %v1890
      %v1892 = vsel %vm965, %v1316, 0.0
      %v1893 = vadd.f32 %v1891, %v1892
      %v1894 = vsel %vm965, %v1321, 0.0
      %v1895 = vadd.f32 %v1893, %v1894
      %v1896 = vsel %vm965, %v1324, 0.0
      %v1897 = vadd.f32 %v1895, %v1896
      %v1898 = vsel %vm965, %v1329, 0.0
      %v1899 = vadd.f32 %v1897, %v1898
      %v1900 = vsel %vm965, %v1332, 0.0
      %v1901 = vadd.f32 %v1899, %v1900
      %v1902 = vsel %vm965, %v1337, 0.0
      %v1903 = vadd.f32 %v1901, %v1902
      %v1904 = vsel %vm965, %v1340, 0.0
      %v1905 = vadd.f32 %v1903, %v1904
      %v1906 = vsel %vm965, %v1345, 0.0
      %v1907 = vadd.f32 %v1905, %v1906
      %v1908 = vsel %vm965, %v1348, 0.0
      %v1909 = vadd.f32 %v1907, %v1908
      %v1910 = vsel %vm965, %v1353, 0.0
      %v1911 = vadd.f32 %v1909, %v1910
      %v1912 = vsel %vm965, %v1356, 0.0
      %v1913 = vadd.f32 %v1911, %v1912
      %v1914 = vsel %vm965, %v1361, 0.0
      %v1915 = vadd.f32 %v1913, %v1914
      %v1916 = vsel %vm965, %v1364, 0.0
      %v1917 = vadd.f32 %v1915, %v1916
      %v1918 = vsel %vm965, %v1369, 0.0
      %v1919 = vadd.f32 %v1917, %v1918
      %v1920 = vsel %vm965, %v1372, 0.0
      %v1921 = vadd.f32 %v1919, %v1920
      %v1922 = vsel %vm965, %v1377, 0.0
      %v1923 = vadd.f32 %v1921, %v1922
      %v1924 = vsel %vm965, %v1380, 0.0
      %v1925 = vadd.f32 %v1923, %v1924
      %v1926 = vsel %vm965, %v1385, 0.0
      %v1927 = vadd.f32 %v1925, %v1926
      %v1928 = vsel %vm965, %v1388, 0.0
      %v1929 = vadd.f32 %v1927, %v1928
      %v1930 = vsel %vm965, %v1393, 0.0
      %v1931 = vadd.f32 %v1929, %v1930
      %v1932 = vsel %vm965, %v1396, 0.0
      %v1933 = vadd.f32 %v1931, %v1932
      %v1934 = vsel %vm965, %v1401, 0.0
      %v1935 = vadd.f32 %v1933, %v1934
      %v1936 = vsel %vm965, %v1404, 0.0
      %v1937 = vadd.f32 %v1935, %v1936
      %v1938 = vsel %vm965, %v1409, 0.0
      %v1939 = vadd.f32 %v1937, %v1938
      %v1940 = vsel %vm965, %v1412, 0.0
      %v1941 = vadd.f32 %v1939, %v1940
      %v1942 = vsel %vm965, %v1417, 0.0
      %v1943 = vadd.f32 %v1941, %v1942
      %v1944 = vsel %vm965, %v1420, 0.0
      %v1945 = vadd.f32 %v1943, %v1944
      %v1946 = vsel %vm965, %v1425, 0.0
      %v1947 = vadd.f32 %v1945, %v1946
      %v1948 = vsel %vm965, %v1428, 0.0
      %v1949 = vadd.f32 %v1947, %v1948
      %v1950 = vsel %vm965, %v1433, 0.0
      %v1951 = vadd.f32 %v1949, %v1950
      %v1952 = vsel %vm965, %v1436, 0.0
      %v1953 = vadd.f32 %v1951, %v1952
      %v1954 = vsel %vm965, %v1441, 0.0
      %v1955 = vadd.f32 %v1953, %v1954
      %v1956 = vsel %vm965, %v1444, 0.0
      %v1957 = vadd.f32 %v1955, %v1956
      %v1958 = vsel %vm965, %v1449, 0.0
      %v1959 = vadd.f32 %v1957, %v1958
      %v1960 = vsel %vm965, %v1452, 0.0
      %v1961 = vadd.f32 %v1959, %v1960
      %v1962 = vsel %vm965, %v1457, 0.0
      %v1963 = vadd.f32 %v1961, %v1962
      %v1964 = vsel %vm965, %v1460, 0.0
      %v1965 = vadd.f32 %v1963, %v1964
      %v1966 = vsel %vm965, %v1465, 0.0
      %v1967 = vadd.f32 %v1965, %v1966
      %v1968 = vsel %vm965, %v1468, 0.0
      %v1969 = vadd.f32 %v1967, %v1968
      %v1970 = vsel %vm965, %v1473, 0.0
      %v1971 = vadd.f32 %v1969, %v1970
      %v1972 = vsel %vm965, %v1476, 0.0
      %v1973 = vadd.f32 %v1971, %v1972
      %v1974 = vsel %vm965, %v1481, 0.0
      %v1975 = vadd.f32 %v1973, %v1974
      %v1976 = vsel %vm965, %v1484, 0.0
      %v1977 = vadd.f32 %v1975, %v1976
      %v1978 = vsel %vm965, %v1489, 0.0
      %v1979 = vadd.f32 %v1977, %v1978
      %v1980 = vsel %vm965, %v1492, 0.0
      %v1981 = vadd.f32 %v1979, %v1980
      %v1982 = vsel %vm965, %v1497, 0.0
      %v1983 = vadd.f32 %v1981, %v1982
      %v1984 = vsel %vm965, %v1500, 0.0
      %v1985 = vadd.f32 %v1983, %v1984
      %v1986 = vsel %vm965, %v1505, 0.0
      %v1987 = vadd.f32 %v1985, %v1986
      %v1988 = vsel %vm965, %v1508, 0.0
      %v1989 = vadd.f32 %v1987, %v1988
      %v1990 = vsel %vm965, %v1513, 0.0
      %v1991 = vadd.f32 %v1989, %v1990
      %v1992 = vsel %vm965, %v1516, 0.0
      %v1993 = vadd.f32 %v1991, %v1992
      %v1994 = vsel %vm965, %v1521, 0.0
      %v1995 = vadd.f32 %v1993, %v1994
      %v1996 = vsel %vm965, %v1524, 0.0
      %v1997 = vadd.f32 %v1995, %v1996
      %v1998 = vsel %vm965, %v1529, 0.0
      %v1999 = vadd.f32 %v1997, %v1998
      %v2000 = vsel %vm965, %v1532, 0.0
      %v2001 = vadd.f32 %v1999, %v2000
      %v2002 = vsel %vm965, %v1537, 0.0
      %v2003 = vadd.f32 %v2001, %v2002
      %v2004 = vsel %vm965, %v1540, 0.0
      %v2005 = vadd.f32 %v2003, %v2004
      %v2006 = vsel %vm965, %v1545, 0.0
      %v2007 = vadd.f32 %v2005, %v2006
      %v2008 = vsel %vm965, %v1548, 0.0
      %v2009 = vadd.f32 %v2007, %v2008
      %v2010 = vsel %vm965, %v1553, 0.0
      %v2011 = vadd.f32 %v2009, %v2010
      %v2012 = vsel %vm965, %v1556, 0.0
      %v2013 = vadd.f32 %v2011, %v2012
      %v2014 = vsel %vm965, %v1561, 0.0
      %v2015 = vadd.f32 %v2013, %v2014
      %v2016 = vsel %vm965, %v1564, 0.0
      %v2017 = vadd.f32 %v2015, %v2016
      %v2018 = vsel %vm965, %v1569, 0.0
      %v2019 = vadd.f32 %v2017, %v2018
      %v2020 = vsel %vm965, %v1572, 0.0
      %v2021 = vadd.f32 %v2019, %v2020
      %v2022 = vsel %vm965, %v1577, 0.0
      %v2023 = vadd.f32 %v2021, %v2022
      %v2024 = vsel %vm965, %v1580, 0.0
      %v2025 = vadd.f32 %v2023, %v2024
      %v2026 = vsel %vm965, %v1585, 0.0
      %v2027 = vadd.f32 %v2025, %v2026
      %v2028 = vsel %vm965, %v1588, 0.0
      %v2029 = vadd.f32 %v2027, %v2028
      %v2030 = vsel %vm965, %v1593, 0.0
      %v2031 = vadd.f32 %v2029, %v2030
      %v2032 = vsel %vm965, %v1596, 0.0
      %v2033 = vadd.f32 %v2031, %v2032
      %v2034 = vsel %vm965, %v1601, 0.0
      %v2035 = vadd.f32 %v2033, %v2034
      %v2036 = vsel %vm965, %v1604, 0.0
      %v2037 = vadd.f32 %v2035, %v2036
      %v2038 = vsel %vm965, %v1609, 0.0
      %v2039 = vadd.f32 %v2037, %v2038
      %v2040 = vsel %vm965, %v1612, 0.0
      %v2041 = vadd.f32 %v2039, %v2040
      %v2042 = vsel %vm965, %v1617, 0.0
      %v2043 = vadd.f32 %v2041, %v2042
      %v2044 = vsel %vm965, %v1620, 0.0
      %v2045 = vadd.f32 %v2043, %v2044
      %v2046 = vsel %vm965, %v1625, 0.0
      %v2047 = vadd.f32 %v2045, %v2046
      %v2048 = vsel %vm965, %v1628, 0.0
      %v2049 = vadd.f32 %v2047, %v2048
      %v2050 = vsel %vm965, %v1633, 0.0
      %v2051 = vadd.f32 %v2049, %v2050
      %v2052 = vsel %vm965, %v1636, 0.0
      %v2053 = vadd.f32 %v2051, %v2052
      %v2054 = vsel %vm965, %v1641, 0.0
      %v2055 = vadd.f32 %v2053, %v2054
      %v2056 = vsel %vm965, %v1644, 0.0
      %v2057 = vadd.f32 %v2055, %v2056
      %v2058 = vsel %vm965, %v1649, 0.0
      %v2059 = vadd.f32 %v2057, %v2058
      %v2060 = vsel %vm965, %v1652, 0.0
      %v2061 = vadd.f32 %v2059, %v2060
      %v2062 = vsel %vm965, %v1657, 0.0
      %v2063 = vadd.f32 %v2061, %v2062
      %v2064 = vsel %vm965, %v1660, 0.0
      %v2065 = vadd.f32 %v2063, %v2064
      %v2066 = vsel %vm965, %v1665, 0.0
      %v2067 = vadd.f32 %v2065, %v2066
      %v2068 = vsel %vm965, %v1668, 0.0
      %v2069 = vadd.f32 %v2067, %v2068
      %v2070 = vsel %vm965, %v1673, 0.0
      %v2071 = vadd.f32 %v2069, %v2070
      %v2072 = vsel %vm965, %v1676, 0.0
      %v2073 = vadd.f32 %v2071, %v2072
      %v2074 = vsel %vm965, %v1681, 0.0
      %v2075 = vadd.f32 %v2073, %v2074
      %v2076 = vsel %vm965, %v1684, 0.0
      %v2077 = vadd.f32 %v2075, %v2076
      %v2078 = vsel %vm965, %v1689, 0.0
      %v2079 = vadd.f32 %v2077, %v2078
      %v2080 = vsel %vm965, %v1692, 0.0
      %v2081 = vadd.f32 %v2079, %v2080
      %v2082 = vsel %vm965, %v1697, 0.0
      %v2083 = vadd.f32 %v2081, %v2082
      %v2084 = vsel %vm965, %v1700, 0.0
      %v2085 = vadd.f32 %v2083, %v2084
      %v2086 = vrot.slane %v2085, 4
      %v2087 = vadd.f32 %v2085, %v2086
      %v2088 = vrot.slane %v2087, 2
      %v2089 = vadd.f32 %v2087, %v2088
      %v2090 = vrot.slane %v2089, 1
      %v2091 = vadd.f32 %v2089, %v2090
      %v2092 = vmul.f32 %v1193, %v1193
      %v2093 = vmul.f32 %v1196, %v1196
      %v2094 = vmul.f32 %v1201, %v1201
      %v2095 = vmul.f32 %v1204, %v1204
      %v2096 = vmul.f32 %v1209, %v1209
      %v2097 = vmul.f32 %v1212, %v1212
      %v2098 = vmul.f32 %v1217, %v1217
      %v2099 = vmul.f32 %v1220, %v1220
      %v2100 = vmul.f32 %v1225, %v1225
      %v2101 = vmul.f32 %v1228, %v1228
      %v2102 = vmul.f32 %v1233, %v1233
      %v2103 = vmul.f32 %v1236, %v1236
      %v2104 = vmul.f32 %v1241, %v1241
      %v2105 = vmul.f32 %v1244, %v1244
      %v2106 = vmul.f32 %v1249, %v1249
      %v2107 = vmul.f32 %v1252, %v1252
      %v2108 = vmul.f32 %v1257, %v1257
      %v2109 = vmul.f32 %v1260, %v1260
      %v2110 = vmul.f32 %v1265, %v1265
      %v2111 = vmul.f32 %v1268, %v1268
      %v2112 = vmul.f32 %v1273, %v1273
      %v2113 = vmul.f32 %v1276, %v1276
      %v2114 = vmul.f32 %v1281, %v1281
      %v2115 = vmul.f32 %v1284, %v1284
      %v2116 = vmul.f32 %v1289, %v1289
      %v2117 = vmul.f32 %v1292, %v1292
      %v2118 = vmul.f32 %v1297, %v1297
      %v2119 = vmul.f32 %v1300, %v1300
      %v2120 = vmul.f32 %v1305, %v1305
      %v2121 = vmul.f32 %v1308, %v1308
      %v2122 = vmul.f32 %v1313, %v1313
      %v2123 = vmul.f32 %v1316, %v1316
      %v2124 = vmul.f32 %v1321, %v1321
      %v2125 = vmul.f32 %v1324, %v1324
      %v2126 = vmul.f32 %v1329, %v1329
      %v2127 = vmul.f32 %v1332, %v1332
      %v2128 = vmul.f32 %v1337, %v1337
      %v2129 = vmul.f32 %v1340, %v1340
      %v2130 = vmul.f32 %v1345, %v1345
      %v2131 = vmul.f32 %v1348, %v1348
      %v2132 = vmul.f32 %v1353, %v1353
      %v2133 = vmul.f32 %v1356, %v1356
      %v2134 = vmul.f32 %v1361, %v1361
      %v2135 = vmul.f32 %v1364, %v1364
      %v2136 = vmul.f32 %v1369, %v1369
      %v2137 = vmul.f32 %v1372, %v1372
      %v2138 = vmul.f32 %v1377, %v1377
      %v2139 = vmul.f32 %v1380, %v1380
      %v2140 = vmul.f32 %v1385, %v1385
      %v2141 = vmul.f32 %v1388, %v1388
      %v2142 = vmul.f32 %v1393, %v1393
      %v2143 = vmul.f32 %v1396, %v1396
      %v2144 = vmul.f32 %v1401, %v1401
      %v2145 = vmul.f32 %v1404, %v1404
      %v2146 = vmul.f32 %v1409, %v1409
      %v2147 = vmul.f32 %v1412, %v1412
      %v2148 = vmul.f32 %v1417, %v1417
      %v2149 = vmul.f32 %v1420, %v1420
      %v2150 = vmul.f32 %v1425, %v1425
      %v2151 = vmul.f32 %v1428, %v1428
      %v2152 = vmul.f32 %v1433, %v1433
      %v2153 = vmul.f32 %v1436, %v1436
      %v2154 = vmul.f32 %v1441, %v1441
      %v2155 = vmul.f32 %v1444, %v1444
      %v2156 = vmul.f32 %v1449, %v1449
      %v2157 = vmul.f32 %v1452, %v1452
      %v2158 = vmul.f32 %v1457, %v1457
      %v2159 = vmul.f32 %v1460, %v1460
      %v2160 = vmul.f32 %v1465, %v1465
      %v2161 = vmul.f32 %v1468, %v1468
      %v2162 = vmul.f32 %v1473, %v1473
      %v2163 = vmul.f32 %v1476, %v1476
      %v2164 = vmul.f32 %v1481, %v1481
      %v2165 = vmul.f32 %v1484, %v1484
      %v2166 = vmul.f32 %v1489, %v1489
      %v2167 = vmul.f32 %v1492, %v1492
      %v2168 = vmul.f32 %v1497, %v1497
      %v2169 = vmul.f32 %v1500, %v1500
      %v2170 = vmul.f32 %v1505, %v1505
      %v2171 = vmul.f32 %v1508, %v1508
      %v2172 = vmul.f32 %v1513, %v1513
      %v2173 = vmul.f32 %v1516, %v1516
      %v2174 = vmul.f32 %v1521, %v1521
      %v2175 = vmul.f32 %v1524, %v1524
      %v2176 = vmul.f32 %v1529, %v1529
      %v2177 = vmul.f32 %v1532, %v1532
      %v2178 = vmul.f32 %v1537, %v1537
      %v2179 = vmul.f32 %v1540, %v1540
      %v2180 = vmul.f32 %v1545, %v1545
      %v2181 = vmul.f32 %v1548, %v1548
      %v2182 = vmul.f32 %v1553, %v1553
      %v2183 = vmul.f32 %v1556, %v1556
      %v2184 = vmul.f32 %v1561, %v1561
      %v2185 = vmul.f32 %v1564, %v1564
      %v2186 = vmul.f32 %v1569, %v1569
      %v2187 = vmul.f32 %v1572, %v1572
      %v2188 = vmul.f32 %v1577, %v1577
      %v2189 = vmul.f32 %v1580, %v1580
      %v2190 = vmul.f32 %v1585, %v1585
      %v2191 = vmul.f32 %v1588, %v1588
      %v2192 = vmul.f32 %v1593, %v1593
      %v2193 = vmul.f32 %v1596, %v1596
      %v2194 = vmul.f32 %v1601, %v1601
      %v2195 = vmul.f32 %v1604, %v1604
      %v2196 = vmul.f32 %v1609, %v1609
      %v2197 = vmul.f32 %v1612, %v1612
      %v2198 = vmul.f32 %v1617, %v1617
      %v2199 = vmul.f32 %v1620, %v1620
      %v2200 = vmul.f32 %v1625, %v1625
      %v2201 = vmul.f32 %v1628, %v1628
      %v2202 = vmul.f32 %v1633, %v1633
      %v2203 = vmul.f32 %v1636, %v1636
      %v2204 = vmul.f32 %v1641, %v1641
      %v2205 = vmul.f32 %v1644, %v1644
      %v2206 = vmul.f32 %v1649, %v1649
      %v2207 = vmul.f32 %v1652, %v1652
      %v2208 = vmul.f32 %v1657, %v1657
      %v2209 = vmul.f32 %v1660, %v1660
      %v2210 = vmul.f32 %v1665, %v1665
      %v2211 = vmul.f32 %v1668, %v1668
      %v2212 = vmul.f32 %v1673, %v1673
      %v2213 = vmul.f32 %v1676, %v1676
      %v2214 = vmul.f32 %v1681, %v1681
      %v2215 = vmul.f32 %v1684, %v1684
      %v2216 = vmul.f32 %v1689, %v1689
      %v2217 = vmul.f32 %v1692, %v1692
      %v2218 = vmul.f32 %v1697, %v1697
      %v2219 = vmul.f32 %v1700, %v1700
      %v2220 = vsel %vm965, %v2092, 0.0
      %v2221 = vsel %vm965, %v2093, 0.0
      %v2222 = vadd.f32 %v2220, %v2221
      %v2223 = vsel %vm965, %v2094, 0.0
      %v2224 = vadd.f32 %v2222, %v2223
      %v2225 = vsel %vm965, %v2095, 0.0
      %v2226 = vadd.f32 %v2224, %v2225
      %v2227 = vsel %vm965, %v2096, 0.0
      %v2228 = vadd.f32 %v2226, %v2227
      %v2229 = vsel %vm965, %v2097, 0.0
      %v2230 = vadd.f32 %v2228, %v2229
      %v2231 = vsel %vm965, %v2098, 0.0
      %v2232 = vadd.f32 %v2230, %v2231
      %v2233 = vsel %vm965, %v2099, 0.0
      %v2234 = vadd.f32 %v2232, %v2233
      %v2235 = vsel %vm965, %v2100, 0.0
      %v2236 = vadd.f32 %v2234, %v2235
      %v2237 = vsel %vm965, %v2101, 0.0
      %v2238 = vadd.f32 %v2236, %v2237
      %v2239 = vsel %vm965, %v2102, 0.0
      %v2240 = vadd.f32 %v2238, %v2239
      %v2241 = vsel %vm965, %v2103, 0.0
      %v2242 = vadd.f32 %v2240, %v2241
      %v2243 = vsel %vm965, %v2104, 0.0
      %v2244 = vadd.f32 %v2242, %v2243
      %v2245 = vsel %vm965, %v2105, 0.0
      %v2246 = vadd.f32 %v2244, %v2245
      %v2247 = vsel %vm965, %v2106, 0.0
      %v2248 = vadd.f32 %v2246, %v2247
      %v2249 = vsel %vm965, %v2107, 0.0
      %v2250 = vadd.f32 %v2248, %v2249
      %v2251 = vsel %vm965, %v2108, 0.0
      %v2252 = vadd.f32 %v2250, %v2251
      %v2253 = vsel %vm965, %v2109, 0.0
      %v2254 = vadd.f32 %v2252, %v2253
      %v2255 = vsel %vm965, %v2110, 0.0
      %v2256 = vadd.f32 %v2254, %v2255
      %v2257 = vsel %vm965, %v2111, 0.0
      %v2258 = vadd.f32 %v2256, %v2257
      %v2259 = vsel %vm965, %v2112, 0.0
      %v2260 = vadd.f32 %v2258, %v2259
      %v2261 = vsel %vm965, %v2113, 0.0
      %v2262 = vadd.f32 %v2260, %v2261
      %v2263 = vsel %vm965, %v2114, 0.0
      %v2264 = vadd.f32 %v2262, %v2263
      %v2265 = vsel %vm965, %v2115, 0.0
      %v2266 = vadd.f32 %v2264, %v2265
      %v2267 = vsel %vm965, %v2116, 0.0
      %v2268 = vadd.f32 %v2266, %v2267
      %v2269 = vsel %vm965, %v2117, 0.0
      %v2270 = vadd.f32 %v2268, %v2269
      %v2271 = vsel %vm965, %v2118, 0.0
      %v2272 = vadd.f32 %v2270, %v2271
      %v2273 = vsel %vm965, %v2119, 0.0
      %v2274 = vadd.f32 %v2272, %v2273
      %v2275 = vsel %vm965, %v2120, 0.0
      %v2276 = vadd.f32 %v2274, %v2275
      %v2277 = vsel %vm965, %v2121, 0.0
      %v2278 = vadd.f32 %v2276, %v2277
      %v2279 = vsel %vm965, %v2122, 0.0
      %v2280 = vadd.f32 %v2278, %v2279
      %v2281 = vsel %vm965, %v2123, 0.0
      %v2282 = vadd.f32 %v2280, %v2281
      %v2283 = vsel %vm965, %v2124, 0.0
      %v2284 = vadd.f32 %v2282, %v2283
      %v2285 = vsel %vm965, %v2125, 0.0
      %v2286 = vadd.f32 %v2284, %v2285
      %v2287 = vsel %vm965, %v2126, 0.0
      %v2288 = vadd.f32 %v2286, %v2287
      %v2289 = vsel %vm965, %v2127, 0.0
      %v2290 = vadd.f32 %v2288, %v2289
      %v2291 = vsel %vm965, %v2128, 0.0
      %v2292 = vadd.f32 %v2290, %v2291
      %v2293 = vsel %vm965, %v2129, 0.0
      %v2294 = vadd.f32 %v2292, %v2293
      %v2295 = vsel %vm965, %v2130, 0.0
      %v2296 = vadd.f32 %v2294, %v2295
      %v2297 = vsel %vm965, %v2131, 0.0
      %v2298 = vadd.f32 %v2296, %v2297
      %v2299 = vsel %vm965, %v2132, 0.0
      %v2300 = vadd.f32 %v2298, %v2299
      %v2301 = vsel %vm965, %v2133, 0.0
      %v2302 = vadd.f32 %v2300, %v2301
      %v2303 = vsel %vm965, %v2134, 0.0
      %v2304 = vadd.f32 %v2302, %v2303
      %v2305 = vsel %vm965, %v2135, 0.0
      %v2306 = vadd.f32 %v2304, %v2305
      %v2307 = vsel %vm965, %v2136, 0.0
      %v2308 = vadd.f32 %v2306, %v2307
      %v2309 = vsel %vm965, %v2137, 0.0
      %v2310 = vadd.f32 %v2308, %v2309
      %v2311 = vsel %vm965, %v2138, 0.0
      %v2312 = vadd.f32 %v2310, %v2311
      %v2313 = vsel %vm965, %v2139, 0.0
      %v2314 = vadd.f32 %v2312, %v2313
      %v2315 = vsel %vm965, %v2140, 0.0
      %v2316 = vadd.f32 %v2314, %v2315
      %v2317 = vsel %vm965, %v2141, 0.0
      %v2318 = vadd.f32 %v2316, %v2317
      %v2319 = vsel %vm965, %v2142, 0.0
      %v2320 = vadd.f32 %v2318, %v2319
      %v2321 = vsel %vm965, %v2143, 0.0
      %v2322 = vadd.f32 %v2320, %v2321
      %v2323 = vsel %vm965, %v2144, 0.0
      %v2324 = vadd.f32 %v2322, %v2323
      %v2325 = vsel %vm965, %v2145, 0.0
      %v2326 = vadd.f32 %v2324, %v2325
      %v2327 = vsel %vm965, %v2146, 0.0
      %v2328 = vadd.f32 %v2326, %v2327
      %v2329 = vsel %vm965, %v2147, 0.0
      %v2330 = vadd.f32 %v2328, %v2329
      %v2331 = vsel %vm965, %v2148, 0.0
      %v2332 = vadd.f32 %v2330, %v2331
      %v2333 = vsel %vm965, %v2149, 0.0
      %v2334 = vadd.f32 %v2332, %v2333
      %v2335 = vsel %vm965, %v2150, 0.0
      %v2336 = vadd.f32 %v2334, %v2335
      %v2337 = vsel %vm965, %v2151, 0.0
      %v2338 = vadd.f32 %v2336, %v2337
      %v2339 = vsel %vm965, %v2152, 0.0
      %v2340 = vadd.f32 %v2338, %v2339
      %v2341 = vsel %vm965, %v2153, 0.0
      %v2342 = vadd.f32 %v2340, %v2341
      %v2343 = vsel %vm965, %v2154, 0.0
      %v2344 = vadd.f32 %v2342, %v2343
      %v2345 = vsel %vm965, %v2155, 0.0
      %v2346 = vadd.f32 %v2344, %v2345
      %v2347 = vsel %vm965, %v2156, 0.0
      %v2348 = vadd.f32 %v2346, %v2347
      %v2349 = vsel %vm965, %v2157, 0.0
      %v2350 = vadd.f32 %v2348, %v2349
      %v2351 = vsel %vm965, %v2158, 0.0
      %v2352 = vadd.f32 %v2350, %v2351
      %v2353 = vsel %vm965, %v2159, 0.0
      %v2354 = vadd.f32 %v2352, %v2353
      %v2355 = vsel %vm965, %v2160, 0.0
      %v2356 = vadd.f32 %v2354, %v2355
      %v2357 = vsel %vm965, %v2161, 0.0
      %v2358 = vadd.f32 %v2356, %v2357
      %v2359 = vsel %vm965, %v2162, 0.0
      %v2360 = vadd.f32 %v2358, %v2359
      %v2361 = vsel %vm965, %v2163, 0.0
      %v2362 = vadd.f32 %v2360, %v2361
      %v2363 = vsel %vm965, %v2164, 0.0
      %v2364 = vadd.f32 %v2362, %v2363
      %v2365 = vsel %vm965, %v2165, 0.0
      %v2366 = vadd.f32 %v2364, %v2365
      %v2367 = vsel %vm965, %v2166, 0.0
      %v2368 = vadd.f32 %v2366, %v2367
      %v2369 = vsel %vm965, %v2167, 0.0
      %v2370 = vadd.f32 %v2368, %v2369
      %v2371 = vsel %vm965, %v2168, 0.0
      %v2372 = vadd.f32 %v2370, %v2371
      %v2373 = vsel %vm965, %v2169, 0.0
      %v2374 = vadd.f32 %v2372, %v2373
      %v2375 = vsel %vm965, %v2170, 0.0
      %v2376 = vadd.f32 %v2374, %v2375
      %v2377 = vsel %vm965, %v2171, 0.0
      %v2378 = vadd.f32 %v2376, %v2377
      %v2379 = vsel %vm965, %v2172, 0.0
      %v2380 = vadd.f32 %v2378, %v2379
      %v2381 = vsel %vm965, %v2173, 0.0
      %v2382 = vadd.f32 %v2380, %v2381
      %v2383 = vsel %vm965, %v2174, 0.0
      %v2384 = vadd.f32 %v2382, %v2383
      %v2385 = vsel %vm965, %v2175, 0.0
      %v2386 = vadd.f32 %v2384, %v2385
      %v2387 = vsel %vm965, %v2176, 0.0
      %v2388 = vadd.f32 %v2386, %v2387
      %v2389 = vsel %vm965, %v2177, 0.0
      %v2390 = vadd.f32 %v2388, %v2389
      %v2391 = vsel %vm965, %v2178, 0.0
      %v2392 = vadd.f32 %v2390, %v2391
      %v2393 = vsel %vm965, %v2179, 0.0
      %v2394 = vadd.f32 %v2392, %v2393
      %v2395 = vsel %vm965, %v2180, 0.0
      %v2396 = vadd.f32 %v2394, %v2395
      %v2397 = vsel %vm965, %v2181, 0.0
      %v2398 = vadd.f32 %v2396, %v2397
      %v2399 = vsel %vm965, %v2182, 0.0
      %v2400 = vadd.f32 %v2398, %v2399
      %v2401 = vsel %vm965, %v2183, 0.0
      %v2402 = vadd.f32 %v2400, %v2401
      %v2403 = vsel %vm965, %v2184, 0.0
      %v2404 = vadd.f32 %v2402, %v2403
      %v2405 = vsel %vm965, %v2185, 0.0
      %v2406 = vadd.f32 %v2404, %v2405
      %v2407 = vsel %vm965, %v2186, 0.0
      %v2408 = vadd.f32 %v2406, %v2407
      %v2409 = vsel %vm965, %v2187, 0.0
      %v2410 = vadd.f32 %v2408, %v2409
      %v2411 = vsel %vm965, %v2188, 0.0
      %v2412 = vadd.f32 %v2410, %v2411
      %v2413 = vsel %vm965, %v2189, 0.0
      %v2414 = vadd.f32 %v2412, %v2413
      %v2415 = vsel %vm965, %v2190, 0.0
      %v2416 = vadd.f32 %v2414, %v2415
      %v2417 = vsel %vm965, %v2191, 0.0
      %v2418 = vadd.f32 %v2416, %v2417
      %v2419 = vsel %vm965, %v2192, 0.0
      %v2420 = vadd.f32 %v2418, %v2419
      %v2421 = vsel %vm965, %v2193, 0.0
      %v2422 = vadd.f32 %v2420, %v2421
      %v2423 = vsel %vm965, %v2194, 0.0
      %v2424 = vadd.f32 %v2422, %v2423
      %v2425 = vsel %vm965, %v2195, 0.0
      %v2426 = vadd.f32 %v2424, %v2425
      %v2427 = vsel %vm965, %v2196, 0.0
      %v2428 = vadd.f32 %v2426, %v2427
      %v2429 = vsel %vm965, %v2197, 0.0
      %v2430 = vadd.f32 %v2428, %v2429
      %v2431 = vsel %vm965, %v2198, 0.0
      %v2432 = vadd.f32 %v2430, %v2431
      %v2433 = vsel %vm965, %v2199, 0.0
      %v2434 = vadd.f32 %v2432, %v2433
      %v2435 = vsel %vm965, %v2200, 0.0
      %v2436 = vadd.f32 %v2434, %v2435
      %v2437 = vsel %vm965, %v2201, 0.0
      %v2438 = vadd.f32 %v2436, %v2437
      %v2439 = vsel %vm965, %v2202, 0.0
      %v2440 = vadd.f32 %v2438, %v2439
      %v2441 = vsel %vm965, %v2203, 0.0
      %v2442 = vadd.f32 %v2440, %v2441
      %v2443 = vsel %vm965, %v2204, 0.0
      %v2444 = vadd.f32 %v2442, %v2443
      %v2445 = vsel %vm965, %v2205, 0.0
      %v2446 = vadd.f32 %v2444, %v2445
      %v2447 = vsel %vm965, %v2206, 0.0
      %v2448 = vadd.f32 %v2446, %v2447
      %v2449 = vsel %vm965, %v2207, 0.0
      %v2450 = vadd.f32 %v2448, %v2449
      %v2451 = vsel %vm965, %v2208, 0.0
      %v2452 = vadd.f32 %v2450, %v2451
      %v2453 = vsel %vm965, %v2209, 0.0
      %v2454 = vadd.f32 %v2452, %v2453
      %v2455 = vsel %vm965, %v2210, 0.0
      %v2456 = vadd.f32 %v2454, %v2455
      %v2457 = vsel %vm965, %v2211, 0.0
      %v2458 = vadd.f32 %v2456, %v2457
      %v2459 = vsel %vm965, %v2212, 0.0
      %v2460 = vadd.f32 %v2458, %v2459
      %v2461 = vsel %vm965, %v2213, 0.0
      %v2462 = vadd.f32 %v2460, %v2461
      %v2463 = vsel %vm965, %v2214, 0.0
      %v2464 = vadd.f32 %v2462, %v2463
      %v2465 = vsel %vm965, %v2215, 0.0
      %v2466 = vadd.f32 %v2464, %v2465
      %v2467 = vsel %vm965, %v2216, 0.0
      %v2468 = vadd.f32 %v2466, %v2467
      %v2469 = vsel %vm965, %v2217, 0.0
      %v2470 = vadd.f32 %v2468, %v2469
      %v2471 = vsel %vm965, %v2218, 0.0
      %v2472 = vadd.f32 %v2470, %v2471
      %v2473 = vsel %vm965, %v2219, 0.0
      %v2474 = vadd.f32 %v2472, %v2473
      %v2475 = vrot.slane %v2474, 4
      %v2476 = vadd.f32 %v2474, %v2475
      %v2477 = vrot.slane %v2476, 2
      %v2478 = vadd.f32 %v2476, %v2477
      %v2479 = vrot.slane %v2478, 1
      %v2480 = vadd.f32 %v2478, %v2479
      %vm2481 = vcmask 1040384
      %v2482 = vsel %vm2481, %v2091, %v2480
      %vm2483 = vcmask 1041408
      %v2484 = vsel %vm2483, %v2482, 0.0
      %2485 = vst.msk [vmem:[%s187] sm:$0xff] %vm965, %v2484
      %s2486 = smul.u32 128, %s15
      %p2487 = scmp.lt.s32.totalorder %s2486, 255
      %s2488 = scalar_select %p2487, %s2486, 255
      %s2489 = smul.addr %s2488, 8
      %s2490 = scalar_lea.vmem %s2, %s2489
      %p2491 = scmp.lt.s32.totalorder %s15, 1
      %s2492 = scalar_select %p2491, %s15, 1
      %s2493 = smul.addr %s2492, 8
      %s2494 = scalar_lea.vmem %s3, %s2493
      // Predicated region
      $region29: #{resnet2_forward.17} parent=27 // pred_check
        %p2495 = pneg %p80
      $region30: #{resnet2_forward.17} parent=27 // pred_check_branch
        %2497 = sbr.rel (%p2495) target = $region32
      $region31: #{resnet2_forward.17} parent=27 // pred_region
        %s2498 = smul.u32 128, %s15
      $region32: #{resnet2_forward.17} parent=27 // pred_fallthru
        _
      // Predicated region
      $region33: #{resnet2_forward.17} parent=27 // pred_check
        %p2499 = pneg %p106
      $region34: #{resnet2_forward.17} parent=27 // pred_check_branch
        %2501 = sbr.rel (%p2499) target = $region36
      $region35: #{resnet2_forward.17} parent=27 // pred_region
        _
      $region36: #{resnet2_forward.17} parent=27 // pred_fallthru
        _
    $region28: #{resnet2_forward.17} parent=5 // pred_fallthru
      _
    %p2502 = scmp.le.s32.totalorder 2, %s10
    // Predicated region
    $region37: #{resnet2_forward.17} parent=5 // pred_check
      %p2503 = pneg %p2502
    $region38: #{resnet2_forward.17} parent=5 // pred_check_branch
      %2505 = sbr.rel (%p2503) target = $region40
    $region39: #{resnet2_forward.17} parent=5 // pred_region
      %s2506 = ssub.s32 %s10, 2
      // Predicated region
      $region41: #{resnet2_forward.17} parent=39 // pred_check
        %p2507 = pneg %p86
      $region42: #{resnet2_forward.17} parent=39 // pred_check_branch
        %2509 = sbr.rel (%p2507) target = $region44
      $region43: #{resnet2_forward.17} parent=39 // pred_region
        %s2510 = smul.u32 128, %s16
        %p2511 = scmp.lt.s32.totalorder %s2510, 255
        %s2512 = scalar_select %p2511, %s2510, 255
        %s2513 = smul.addr %s2512, 8
        %s2514 = scalar_lea.vmem %s2, %s2513
      $region44: #{resnet2_forward.17} parent=39 // pred_fallthru
        _
      // Predicated region
      $region45: #{resnet2_forward.17} parent=39 // pred_check
        %p2515 = pneg %p112
      $region46: #{resnet2_forward.17} parent=39 // pred_check_branch
        %2517 = sbr.rel (%p2515) target = $region48
      $region47: #{resnet2_forward.17} parent=39 // pred_region
        %p2518 = scmp.lt.s32.totalorder %s16, 1
        %s2519 = scalar_select %p2518, %s16, 1
        %s2520 = smul.addr %s2519, 8
        %s2521 = scalar_lea.vmem %s3, %s2520
      $region48: #{resnet2_forward.17} parent=39 // pred_fallthru
        _
    $region40: #{resnet2_forward.17} parent=5 // pred_fallthru
      _
  $region6: #{resnet2_forward.17} parent=0 // loop_footer
    %s14 = sadd.s32 1, %s10
  $region7: #{resnet2_forward.17} parent=0 // loop_footer_branch
    %9 = sbr.rel target = $region3
  $region8: #{resnet2_forward.17} parent=0 // loop_exit
    _

// kernel: tile.92
$region0: #{tile.92}
  #allocation0 [shape = 's32[1]{0}', space=sflag, size = 0x4, scoped, tag = 'scoped memory for tile.92']
  %s0 = inlined_call_operand.<no memory space> [shape: f32[], index: 0, kind: input, shape index: {}]
  %s1 = inlined_call_operand.vmem [shape: f32[1,128], index: 1, kind: output, shape index: {}]
  %v2 = vstv %s0
  %3 = vst [vmem:[%s1] sm:$0x1] %v2

// kernel: resnet2_forward.20
$region0: #{resnet2_forward.20}
  #allocation0 [shape = 'u32[]', space=smem, size = 0x4, offset = 0x4, fixed_abs, tag = 'smem constant byte address 0x4 - core index']
  #allocation1 [shape = 'u32[144,128]{1,0:T(1,128)}', space=vmem, size = 0x12000, scoped, tag = 'internal scratch']
  %s0 = inlined_call_operand.vmem [shape: f32[256,128], index: 0, kind: input, shape index: {}]
  %s1 = inlined_call_operand.vmem [shape: f32[1,128], index: 1, kind: input, shape index: {}]
  %s2 = inlined_call_operand.vmem [shape: f32[1,128], index: 2, kind: input, shape index: {}]
  %s3 = inlined_call_operand.vmem [shape: bf16[256,128], index: 3, kind: input, shape index: {}]
  %s4 = inlined_call_operand.vmem [shape: f32[1,128], index: 4, kind: input, shape index: {}]
  %s5 = inlined_call_operand.vmem [shape: f32[1,128], index: 5, kind: input, shape index: {}]
  %s6 = inlined_call_operand.vmem [shape: bf16[256,128], index: 6, kind: output, shape index: {}]
  %s7 = sld [smem:[#allocation0]]
  $region57: #{resnet2_forward.20} parent=0
    _
  %s9 = ssub.s32 1, %s7
  %s10 = scalar_select 0, %s9, %s7
  loop: start=0, step=1, limit=4
  $region2: #{resnet2_forward.20} parent=0 // loop_pre_header
    _
  $region3: #{resnet2_forward.20} parent=0 // loop_header
    %s12 = sphi 0, %s16
    %p13 = scmp.ge.s32.totalorder %s12, 4
    %s22 = sphi 0, %s24
    %s25 = sphi 0, %s22
    %s26 = sphi 0, %s25
    %s42 = sphi 0, %s26
    %s46 = sphi 0, %s46
    %s48 = sphi 0, %s46
    %s49 = sphi 0, %s48
    %s63 = sphi 0, %s49
    %s67 = sphi 0, %s67
    %s69 = sphi 0, %s67
    %s70 = sphi 0, %s69
    %s84 = sphi 0, %s70
    %s90 = sphi 0, %s92
    %s93 = sphi 0, %s90
    %s94 = sphi 0, %s93
    %s110 = sphi 0, %s94
    %s114 = sphi 0, %s114
    %s116 = sphi 0, %s114
    %s117 = sphi 0, %s116
    %s131 = sphi 0, %s117
    %s135 = sphi 0, %s135
    %s137 = sphi 0, %s135
    %s138 = sphi 0, %s137
    %s152 = sphi 0, %s138
    %s158 = sphi 0, %s160
    %s161 = sphi 0, %s158
    %s162 = sphi 0, %s161
    %s178 = sphi 0, %s162
  $region4: #{resnet2_forward.20} parent=0 // loop_header_branch
    %15 = sbr.rel (%p13) target = $region8
  $region5: #{resnet2_forward.20} parent=0 // loop_body
    %s17 = ssub.s32 %s12, 1
    %s18 = ssub.s32 %s12, 2
    %s19 = sadd.s32 %s12, 1
    %s20 = ssub.s32 %s12, %s19
    %p21 = scmp.eq.s32.totalorder %s20, 0
    %s23 = sadd.s32 %s22, 1
    %s24 = scalar_select %p21, %s22, %s23
    %p27 = pneg %p21
    %p28 = scmp.eq.s32.totalorder %s12, 1
    %p29 = por %p27, %p28
    %p30 = scmp.ne.s32.totalorder %s22, %s25
    %p31 = scmp.eq.s32.totalorder %s12, 0
    %p32 = por %p30, %p31
    %p33 = scmp.ne.s32.totalorder %s22, %s25
    %p34 = scmp.eq.s32.totalorder %s17, 1
    %p35 = por %p33, %p34
    %p36 = scmp.ne.s32.totalorder %s25, %s26
    %p37 = scmp.eq.s32.totalorder %s17, 0
    %p38 = por %p36, %p37
    %p39 = scmp.ne.s32.totalorder %s25, %s26
    %p40 = scmp.eq.s32.totalorder %s18, 1
    %p41 = por %p39, %p40
    %p43 = scmp.ne.s32.totalorder %s26, %s42
    %p44 = scmp.eq.s32.totalorder %s18, 0
    %p45 = por %p43, %p44
    %s47 = sadd.s32 %s46, 1
    %p50 = scmp.eq.s32.totalorder %s12, 1
    %p51 = scmp.ne.s32.totalorder %s46, %s48
    %p52 = scmp.eq.s32.totalorder %s12, 0
    %p53 = por %p51, %p52
    %p54 = scmp.ne.s32.totalorder %s46, %s48
    %p55 = scmp.eq.s32.totalorder %s17, 1
    %p56 = por %p54, %p55
    %p57 = scmp.ne.s32.totalorder %s48, %s49
    %p58 = scmp.eq.s32.totalorder %s17, 0
    %p59 = por %p57, %p58
    %p60 = scmp.ne.s32.totalorder %s48, %s49
    %p61 = scmp.eq.s32.totalorder %s18, 1
    %p62 = por %p60, %p61
    %p64 = scmp.ne.s32.totalorder %s49, %s63
    %p65 = scmp.eq.s32.totalorder %s18, 0
    %p66 = por %p64, %p65
    %s68 = sadd.s32 %s67, 1
    %p71 = scmp.eq.s32.totalorder %s12, 1
    %p72 = scmp.ne.s32.totalorder %s67, %s69
    %p73 = scmp.eq.s32.totalorder %s12, 0
    %p74 = por %p72, %p73
    %p75 = scmp.ne.s32.totalorder %s67, %s69
    %p76 = scmp.eq.s32.totalorder %s17, 1
    %p77 = por %p75, %p76
    %p78 = scmp.ne.s32.totalorder %s69, %s70
    %p79 = scmp.eq.s32.totalorder %s17, 0
    %p80 = por %p78, %p79
    %p81 = scmp.ne.s32.totalorder %s69, %s70
    %p82 = scmp.eq.s32.totalorder %s18, 1
    %p83 = por %p81, %p82
    %p85 = scmp.ne.s32.totalorder %s70, %s84
    %p86 = scmp.eq.s32.totalorder %s18, 0
    %p87 = por %p85, %p86
    %s88 = ssub.s32 %s12, %s19
    %p89 = scmp.eq.s32.totalorder %s88, 0
    %s91 = sadd.s32 %s90, 1
    %s92 = scalar_select %p89, %s90, %s91
    %p95 = pneg %p89
    %p96 = scmp.eq.s32.totalorder %s12, 1
    %p97 = por %p95, %p96
    %p98 = scmp.ne.s32.totalorder %s90, %s93
    %p99 = scmp.eq.s32.totalorder %s12, 0
    %p100 = por %p98, %p99
    %p101 = scmp.ne.s32.totalorder %s90, %s93
    %p102 = scmp.eq.s32.totalorder %s17, 1
    %p103 = por %p101, %p102
    %p104 = scmp.ne.s32.totalorder %s93, %s94
    %p105 = scmp.eq.s32.totalorder %s17, 0
    %p106 = por %p104, %p105
    %p107 = scmp.ne.s32.totalorder %s93, %s94
    %p108 = scmp.eq.s32.totalorder %s18, 1
    %p109 = por %p107, %p108
    %p111 = scmp.ne.s32.totalorder %s94, %s110
    %p112 = scmp.eq.s32.totalorder %s18, 0
    %p113 = por %p111, %p112
    %s115 = sadd.s32 %s114, 1
    %p118 = scmp.eq.s32.totalorder %s12, 1
    %p119 = scmp.ne.s32.totalorder %s114, %s116
    %p120 = scmp.eq.s32.totalorder %s12, 0
    %p121 = por %p119, %p120
    %p122 = scmp.ne.s32.totalorder %s114, %s116
    %p123 = scmp.eq.s32.totalorder %s17, 1
    %p124 = por %p122, %p123
    %p125 = scmp.ne.s32.totalorder %s116, %s117
    %p126 = scmp.eq.s32.totalorder %s17, 0
    %p127 = por %p125, %p126
    %p128 = scmp.ne.s32.totalorder %s116, %s117
    %p129 = scmp.eq.s32.totalorder %s18, 1
    %p130 = por %p128, %p129
    %p132 = scmp.ne.s32.totalorder %s117, %s131
    %p133 = scmp.eq.s32.totalorder %s18, 0
    %p134 = por %p132, %p133
    %s136 = sadd.s32 %s135, 1
    %p139 = scmp.eq.s32.totalorder %s12, 1
    %p140 = scmp.ne.s32.totalorder %s135, %s137
    %p141 = scmp.eq.s32.totalorder %s12, 0
    %p142 = por %p140, %p141
    %p143 = scmp.ne.s32.totalorder %s135, %s137
    %p144 = scmp.eq.s32.totalorder %s17, 1
    %p145 = por %p143, %p144
    %p146 = scmp.ne.s32.totalorder %s137, %s138
    %p147 = scmp.eq.s32.totalorder %s17, 0
    %p148 = por %p146, %p147
    %p149 = scmp.ne.s32.totalorder %s137, %s138
    %p150 = scmp.eq.s32.totalorder %s18, 1
    %p151 = por %p149, %p150
    %p153 = scmp.ne.s32.totalorder %s138, %s152
    %p154 = scmp.eq.s32.totalorder %s18, 0
    %p155 = por %p153, %p154
    %s156 = ssub.s32 %s12, %s19
    %p157 = scmp.eq.s32.totalorder %s156, 0
    %s159 = sadd.s32 %s158, 1
    %s160 = scalar_select %p157, %s158, %s159
    %p163 = pneg %p157
    %p164 = scmp.eq.s32.totalorder %s12, 1
    %p165 = por %p163, %p164
    %p166 = scmp.ne.s32.totalorder %s158, %s161
    %p167 = scmp.eq.s32.totalorder %s12, 0
    %p168 = por %p166, %p167
    %p169 = scmp.ne.s32.totalorder %s158, %s161
    %p170 = scmp.eq.s32.totalorder %s17, 1
    %p171 = por %p169, %p170
    %p172 = scmp.ne.s32.totalorder %s161, %s162
    %p173 = scmp.eq.s32.totalorder %s17, 0
    %p174 = por %p172, %p173
    %p175 = scmp.ne.s32.totalorder %s161, %s162
    %p176 = scmp.eq.s32.totalorder %s18, 1
    %p177 = por %p175, %p176
    %p179 = scmp.ne.s32.totalorder %s162, %s178
    %p180 = scmp.eq.s32.totalorder %s18, 0
    %p181 = por %p179, %p180
    %p182 = scmp.le.s32.totalorder 1, %s12
    %p183 = scmp.lt.s32.totalorder %s12, 3
    %p184 = pnand %p182, %p183
    %p185 = pneg %p184
    // Predicated region
    $region9: #{resnet2_forward.20} parent=5 // pred_check
      _
    $region10: #{resnet2_forward.20} parent=5 // pred_check_branch
      %187 = sbr.rel (%p184) target = $region12
    $region11: #{resnet2_forward.20} parent=5 // pred_region
      %s188 = ssub.s32 %s12, 1
      // Predicated region
      $region13: #{resnet2_forward.20} parent=11 // pred_check
        %p189 = pneg %p59
      $region14: #{resnet2_forward.20} parent=11 // pred_check_branch
        %191 = sbr.rel (%p189) target = $region16
      $region15: #{resnet2_forward.20} parent=11 // pred_region
        _
      $region16: #{resnet2_forward.20} parent=11 // pred_fallthru
        _
      // Predicated region
      $region17: #{resnet2_forward.20} parent=11 // pred_check
        %p192 = pneg %p80
      $region18: #{resnet2_forward.20} parent=11 // pred_check_branch
        %194 = sbr.rel (%p192) target = $region20
      $region19: #{resnet2_forward.20} parent=11 // pred_region
        _
      $region20: #{resnet2_forward.20} parent=11 // pred_fallthru
        _
      // Predicated region
      $region21: #{resnet2_forward.20} parent=11 // pred_check
        %p195 = pneg %p127
      $region22: #{resnet2_forward.20} parent=11 // pred_check_branch
        %197 = sbr.rel (%p195) target = $region24
      $region23: #{resnet2_forward.20} parent=11 // pred_region
        _
      $region24: #{resnet2_forward.20} parent=11 // pred_fallthru
        _
      // Predicated region
      $region25: #{resnet2_forward.20} parent=11 // pred_check
        %p198 = pneg %p148
      $region26: #{resnet2_forward.20} parent=11 // pred_check_branch
        %200 = sbr.rel (%p198) target = $region28
      $region27: #{resnet2_forward.20} parent=11 // pred_region
        _
      $region28: #{resnet2_forward.20} parent=11 // pred_fallthru
        _
    $region12: #{resnet2_forward.20} parent=5 // pred_fallthru
      _
    %p201 = scmp.lt.s32.totalorder %s12, 2
    // Predicated region
    $region29: #{resnet2_forward.20} parent=5 // pred_check
      %p202 = pneg %p201
    $region30: #{resnet2_forward.20} parent=5 // pred_check_branch
      %204 = sbr.rel (%p202) target = $region32
    $region31: #{resnet2_forward.20} parent=5 // pred_region
      // Predicated region
      $region33: #{resnet2_forward.20} parent=31 // pred_check
        %p205 = pneg %p32
      $region34: #{resnet2_forward.20} parent=31 // pred_check_branch
        %207 = sbr.rel (%p205) target = $region36
      $region35: #{resnet2_forward.20} parent=31 // pred_region
        %s208 = smul.u32 16, %s12
        %p209 = scmp.lt.s32.totalorder %s208, 31
        %s210 = scalar_select %p209, %s208, 31
        %s211 = smul.addr %s210, 8
        %s212 = scalar_lea.vmem %s0, %s211
        %s213 = smul.u32 16, %s12
      $region36: #{resnet2_forward.20} parent=31 // pred_fallthru
        _
      // Predicated region
      $region37: #{resnet2_forward.20} parent=31 // pred_check
        %p214 = pneg %p100
      $region38: #{resnet2_forward.20} parent=31 // pred_check_branch
        %216 = sbr.rel (%p214) target = $region40
      $region39: #{resnet2_forward.20} parent=31 // pred_region
        %s217 = smul.u32 16, %s12
        %p218 = scmp.lt.s32.totalorder %s217, 31
        %s219 = scalar_select %p218, %s217, 31
        %s220 = smul.addr %s219, 4
        %s221 = scalar_lea.vmem %s3, %s220
        %s222 = smul.u32 16, %s12
      $region40: #{resnet2_forward.20} parent=31 // pred_fallthru
        _
    $region32: #{resnet2_forward.20} parent=5 // pred_fallthru
      _
    %p223 = scmp.le.s32.totalorder 1, %s12
    %p224 = scmp.lt.s32.totalorder %s12, 3
    %p225 = pnand %p223, %p224
    %p226 = pneg %p225
    // Predicated region
    $region41: #{resnet2_forward.20} parent=5 // pred_check
      _
    $region42: #{resnet2_forward.20} parent=5 // pred_check_branch
      %228 = sbr.rel (%p225) target = $region44
    $region43: #{resnet2_forward.20} parent=5 // pred_region
      %s229 = ssub.s32 %s12, 1
      %s230 = smul.u32 16, %s17
      %p231 = scmp.lt.s32.totalorder %s230, 31
      %s232 = scalar_select %p231, %s230, 31
      %s233 = smul.addr %s232, 8
      %s234 = scalar_lea.vmem %s0, %s233
      %p235 = pneg %p38
      %p236 = pneg %p35
      %p237 = pneg %p59
      %p238 = pneg %p56
      %p239 = pneg %p80
      %p240 = pneg %p77
      %s241 = smul.u32 16, %s17
      %p242 = scmp.lt.s32.totalorder %s241, 31
      %s243 = scalar_select %p242, %s241, 31
      %s244 = smul.addr %s243, 4
      %s245 = scalar_lea.vmem %s3, %s244
      %p246 = pneg %p106
      %p247 = pneg %p103
      %p248 = pneg %p127
      %p249 = pneg %p124
      %p250 = pneg %p148
      %p251 = pneg %p145
      %p252 = pneg %p174
      %p253 = pneg %p171
      %s254 = smul.u32 16, %s17
      %p255 = scmp.lt.s32.totalorder %s254, 31
      %s256 = scalar_select %p255, %s254, 31
      %s257 = smul.addr %s256, 4
      %s258 = scalar_lea.vmem %s6, %s257
      %s259 = smul.u32 16, %s17
      %p260 = scmp.lt.s32.totalorder %s259, 31
      %s261 = scalar_select %p260, %s259, 31
      %s262 = smul.addr %s261, 8
      %s263 = scalar_lea.vmem %s0, %s262
      %s264 = smul.u32 16, %s17
      %s265 = smul.u32 16, %s17
      %p266 = scmp.lt.s32.totalorder %s265, 31
      %s267 = scalar_select %p266, %s265, 31
      %s268 = smul.addr %s267, 4
      %s269 = scalar_lea.vmem %s3, %s268
      %s270 = smul.u32 16, %s17
      %s271 = smul.u32 16, %s17
      %p272 = scmp.lt.s32.totalorder %s271, 31
      %s273 = scalar_select %p272, %s271, 31
      %s274 = smul.addr %s273, 4
      %s275 = scalar_lea.vmem %s6, %s274
      %s276 = smul.u32 16, %s17
      %v277 = vld [vmem:[%s263] sm:$0xff]
      %v278 = vld [vmem:[%s263 + $0x8] sm:$0xff]
      %v279 = vld [vmem:[%s263 + $0x10] sm:$0xff]
      %v280 = vld [vmem:[%s263 + $0x18] sm:$0xff]
      %v281 = vld [vmem:[%s263 + $0x20] sm:$0xff]
      %v282 = vld [vmem:[%s263 + $0x28] sm:$0xff]
      %v283 = vld [vmem:[%s263 + $0x30] sm:$0xff]
      %v284 = vld [vmem:[%s263 + $0x38] sm:$0xff]
      %v285 = vld [vmem:[%s263 + $0x40] sm:$0xff]
      %v286 = vld [vmem:[%s263 + $0x48] sm:$0xff]
      %v287 = vld [vmem:[%s263 + $0x50] sm:$0xff]
      %v288 = vld [vmem:[%s263 + $0x58] sm:$0xff]
      %v289 = vld [vmem:[%s263 + $0x60] sm:$0xff]
      %v290 = vld [vmem:[%s263 + $0x68] sm:$0xff]
      %v291 = vld [vmem:[%s263 + $0x70] sm:$0xff]
      %v292 = vld [vmem:[%s263 + $0x78] sm:$0xff]
      %v293 = vld [vmem:[%s1] sm:$0x1]
      %v295 = vlaneseq
      %v296 = vshrl.u32 %v295, 7
      %v297 = vsub.s32 0, %v296
      %v298 = vrot.slane %v293, %v297
      %v300 = vmul.f32 %v277, %v298
      %v301 = vmul.f32 %v278, %v298
      %v302 = vmul.f32 %v279, %v298
      %v303 = vmul.f32 %v280, %v298
      %v304 = vmul.f32 %v281, %v298
      %v305 = vmul.f32 %v282, %v298
      %v306 = vmul.f32 %v283, %v298
      %v307 = vmul.f32 %v284, %v298
      %v308 = vmul.f32 %v285, %v298
      %v309 = vmul.f32 %v286, %v298
      %v310 = vmul.f32 %v287, %v298
      %v311 = vmul.f32 %v288, %v298
      %v312 = vmul.f32 %v289, %v298
      %v313 = vmul.f32 %v290, %v298
      %v314 = vmul.f32 %v291, %v298
      %v315 = vmul.f32 %v292, %v298
      %v316 = vld [vmem:[%s2] sm:$0x1]
      %v318 = vlaneseq
      %v319 = vshrl.u32 %v318, 7
      %v320 = vsub.s32 0, %v319
      %v321 = vrot.slane %v316, %v320
      %v323 = vadd.f32 %v300, %v321
      %v324 = vadd.f32 %v301, %v321
      %v325 = vadd.f32 %v302, %v321
      %v326 = vadd.f32 %v303, %v321
      %v327 = vadd.f32 %v304, %v321
      %v328 = vadd.f32 %v305, %v321
      %v329 = vadd.f32 %v306, %v321
      %v330 = vadd.f32 %v307, %v321
      %v331 = vadd.f32 %v308, %v321
      %v332 = vadd.f32 %v309, %v321
      %v333 = vadd.f32 %v310, %v321
      %v334 = vadd.f32 %v311, %v321
      %v335 = vadd.f32 %v312, %v321
      %v336 = vadd.f32 %v313, %v321
      %v337 = vadd.f32 %v314, %v321
      %v338 = vadd.f32 %v315, %v321
      %v339 = vld [vmem:[%s269] sm:$0xf]
      %v340 = vld [vmem:[%s269 + $0x4] sm:$0xf]
      %v341 = vld [vmem:[%s269 + $0x8] sm:$0xf]
      %v342 = vld [vmem:[%s269 + $0xc] sm:$0xf]
      %v343 = vld [vmem:[%s269 + $0x10] sm:$0xf]
      %v344 = vld [vmem:[%s269 + $0x14] sm:$0xf]
      %v345 = vld [vmem:[%s269 + $0x18] sm:$0xf]
      %v346 = vld [vmem:[%s269 + $0x1c] sm:$0xf]
      %v347 = vld [vmem:[%s269 + $0x20] sm:$0xf]
      %v348 = vld [vmem:[%s269 + $0x24] sm:$0xf]
      %v349 = vld [vmem:[%s269 + $0x28] sm:$0xf]
      %v350 = vld [vmem:[%s269 + $0x2c] sm:$0xf]
      %v351 = vld [vmem:[%s269 + $0x30] sm:$0xf]
      %v352 = vld [vmem:[%s269 + $0x34] sm:$0xf]
      %v353 = vld [vmem:[%s269 + $0x38] sm:$0xf]
      %v354 = vld [vmem:[%s269 + $0x3c] sm:$0xf]
      %v355 = vunpack.c.l.bf16 %v339
      %v356 = vunpack.c.l.bf16 %v340
      %v357 = vunpack.c.l.bf16 %v341
      %v358 = vunpack.c.l.bf16 %v342
      %v359 = vunpack.c.l.bf16 %v343
      %v360 = vunpack.c.l.bf16 %v344
      %v361 = vunpack.c.l.bf16 %v345
      %v362 = vunpack.c.l.bf16 %v346
      %v363 = vunpack.c.l.bf16 %v347
      %v364 = vunpack.c.l.bf16 %v348
      %v365 = vunpack.c.l.bf16 %v349
      %v366 = vunpack.c.l.bf16 %v350
      %v367 = vunpack.c.l.bf16 %v351
      %v368 = vunpack.c.l.bf16 %v352
      %v369 = vunpack.c.l.bf16 %v353
      %v370 = vunpack.c.l.bf16 %v354
      %v371 = vld [vmem:[%s4] sm:$0x1]
      %v373 = vlaneseq
      %v374 = vshrl.u32 %v373, 7
      %v375 = vsub.s32 0, %v374
      %v376 = vrot.slane %v371, %v375
      %v378 = vmul.f32 %v355, %v376
      %v379 = vmul.f32 %v356, %v376
      %v380 = vmul.f32 %v357, %v376
      %v381 = vmul.f32 %v358, %v376
      %v382 = vmul.f32 %v359, %v376
      %v383 = vmul.f32 %v360, %v376
      %v384 = vmul.f32 %v361, %v376
      %v385 = vmul.f32 %v362, %v376
      %v386 = vmul.f32 %v363, %v376
      %v387 = vmul.f32 %v364, %v376
      %v388 = vmul.f32 %v365, %v376
      %v389 = vmul.f32 %v366, %v376
      %v390 = vmul.f32 %v367, %v376
      %v391 = vmul.f32 %v368, %v376
      %v392 = vmul.f32 %v369, %v376
      %v393 = vmul.f32 %v370, %v376
      %v394 = vld [vmem:[%s5] sm:$0x1]
      %v396 = vlaneseq
      %v397 = vshrl.u32 %v396, 7
      %v398 = vsub.s32 0, %v397
      %v399 = vrot.slane %v394, %v398
      %v401 = vadd.f32 %v378, %v399
      %v402 = vadd.f32 %v379, %v399
      %v403 = vadd.f32 %v380, %v399
      %v404 = vadd.f32 %v381, %v399
      %v405 = vadd.f32 %v382, %v399
      %v406 = vadd.f32 %v383, %v399
      %v407 = vadd.f32 %v384, %v399
      %v408 = vadd.f32 %v385, %v399
      %v409 = vadd.f32 %v386, %v399
      %v410 = vadd.f32 %v387, %v399
      %v411 = vadd.f32 %v388, %v399
      %v412 = vadd.f32 %v389, %v399
      %v413 = vadd.f32 %v390, %v399
      %v414 = vadd.f32 %v391, %v399
      %v415 = vadd.f32 %v392, %v399
      %v416 = vadd.f32 %v393, %v399
      %v417 = vadd.f32 %v323, %v401
      %v418 = vadd.f32 %v324, %v402
      %v419 = vadd.f32 %v325, %v403
      %v420 = vadd.f32 %v326, %v404
      %v421 = vadd.f32 %v327, %v405
      %v422 = vadd.f32 %v328, %v406
      %v423 = vadd.f32 %v329, %v407
      %v424 = vadd.f32 %v330, %v408
      %v425 = vadd.f32 %v331, %v409
      %v426 = vadd.f32 %v332, %v410
      %v427 = vadd.f32 %v333, %v411
      %v428 = vadd.f32 %v334, %v412
      %v429 = vadd.f32 %v335, %v413
      %v430 = vadd.f32 %v336, %v414
      %v431 = vadd.f32 %v337, %v415
      %v432 = vadd.f32 %v338, %v416
      %v433 = vmax.f32 %v417, 0.0
      %v434 = vmax.f32 %v418, 0.0
      %v435 = vmax.f32 %v419, 0.0
      %v436 = vmax.f32 %v420, 0.0
      %v437 = vmax.f32 %v421, 0.0
      %v438 = vmax.f32 %v422, 0.0
      %v439 = vmax.f32 %v423, 0.0
      %v440 = vmax.f32 %v424, 0.0
      %v441 = vmax.f32 %v425, 0.0
      %v442 = vmax.f32 %v426, 0.0
      %v443 = vmax.f32 %v427, 0.0
      %v444 = vmax.f32 %v428, 0.0
      %v445 = vmax.f32 %v429, 0.0
      %v446 = vmax.f32 %v430, 0.0
      %v447 = vmax.f32 %v431, 0.0
      %v448 = vmax.f32 %v432, 0.0
      %v449 = vpack.c.bf16 %v434, %v433
      %v450 = vpack.c.bf16 %v436, %v435
      %v451 = vpack.c.bf16 %v438, %v437
      %v452 = vpack.c.bf16 %v440, %v439
      %v453 = vpack.c.bf16 %v442, %v441
      %v454 = vpack.c.bf16 %v444, %v443
      %v455 = vpack.c.bf16 %v446, %v445
      %v456 = vpack.c.bf16 %v448, %v447
      %v465 = vunpack.c.l.b16 %v449
      %v466 = vunpack.c.h.b16 %v449
      %v467 = vunpack.c.l.b16 %v450
      %v468 = vunpack.c.h.b16 %v450
      %v469 = vunpack.c.l.b16 %v451
      %v470 = vunpack.c.h.b16 %v451
      %v471 = vunpack.c.l.b16 %v452
      %v472 = vunpack.c.h.b16 %v452
      %v473 = vunpack.c.l.b16 %v453
      %v474 = vunpack.c.h.b16 %v453
      %v475 = vunpack.c.l.b16 %v454
      %v476 = vunpack.c.h.b16 %v454
      %v477 = vunpack.c.l.b16 %v455
      %v478 = vunpack.c.h.b16 %v455
      %v479 = vunpack.c.l.b16 %v456
      %v480 = vunpack.c.h.b16 %v456
      %v481 = vpack.c.b16 %v465, %v465
      %v482 = vpack.c.b16 %v466, %v466
      %v483 = vpack.c.b16 %v467, %v467
      %v484 = vpack.c.b16 %v468, %v468
      %v485 = vpack.c.b16 %v469, %v469
      %v486 = vpack.c.b16 %v470, %v470
      %v487 = vpack.c.b16 %v471, %v471
      %v488 = vpack.c.b16 %v472, %v472
      %v489 = vpack.c.b16 %v473, %v473
      %v490 = vpack.c.b16 %v474, %v474
      %v491 = vpack.c.b16 %v475, %v475
      %v492 = vpack.c.b16 %v476, %v476
      %v493 = vpack.c.b16 %v477, %v477
      %v494 = vpack.c.b16 %v478, %v478
      %v495 = vpack.c.b16 %v479, %v479
      %v496 = vpack.c.b16 %v480, %v480
      %513 = vst [vmem:[%s275] sm:$0xf] %v481
      %514 = vst [vmem:[%s275 + $0x4] sm:$0xf] %v482
      %515 = vst [vmem:[%s275 + $0x8] sm:$0xf] %v483
      %516 = vst [vmem:[%s275 + $0xc] sm:$0xf] %v484
      %517 = vst [vmem:[%s275 + $0x10] sm:$0xf] %v485
      %518 = vst [vmem:[%s275 + $0x14] sm:$0xf] %v486
      %519 = vst [vmem:[%s275 + $0x18] sm:$0xf] %v487
      %520 = vst [vmem:[%s275 + $0x1c] sm:$0xf] %v488
      %521 = vst [vmem:[%s275 + $0x20] sm:$0xf] %v489
      %522 = vst [vmem:[%s275 + $0x24] sm:$0xf] %v490
      %523 = vst [vmem:[%s275 + $0x28] sm:$0xf] %v491
      %524 = vst [vmem:[%s275 + $0x2c] sm:$0xf] %v492
      %525 = vst [vmem:[%s275 + $0x30] sm:$0xf] %v493
      %526 = vst [vmem:[%s275 + $0x34] sm:$0xf] %v494
      %527 = vst [vmem:[%s275 + $0x38] sm:$0xf] %v495
      %528 = vst [vmem:[%s275 + $0x3c] sm:$0xf] %v496
      %s529 = smul.u32 16, %s17
      %p530 = scmp.lt.s32.totalorder %s529, 31
      %s531 = scalar_select %p530, %s529, 31
      %s532 = smul.addr %s531, 4
      %s533 = scalar_lea.vmem %s6, %s532
      // Predicated region
      $region45: #{resnet2_forward.20} parent=43 // pred_check
        %p534 = pneg %p171
      $region46: #{resnet2_forward.20} parent=43 // pred_check_branch
        %536 = sbr.rel (%p534) target = $region48
      $region47: #{resnet2_forward.20} parent=43 // pred_region
        %s537 = smul.u32 16, %s17
      $region48: #{resnet2_forward.20} parent=43 // pred_fallthru
        _
    $region44: #{resnet2_forward.20} parent=5 // pred_fallthru
      _
    %p538 = scmp.le.s32.totalorder 2, %s12
    // Predicated region
    $region49: #{resnet2_forward.20} parent=5 // pred_check
      %p539 = pneg %p538
    $region50: #{resnet2_forward.20} parent=5 // pred_check_branch
      %541 = sbr.rel (%p539) target = $region52
    $region51: #{resnet2_forward.20} parent=5 // pred_region
      %s542 = ssub.s32 %s12, 2
      // Predicated region
      $region53: #{resnet2_forward.20} parent=51 // pred_check
        %p543 = pneg %p177
      $region54: #{resnet2_forward.20} parent=51 // pred_check_branch
        %545 = sbr.rel (%p543) target = $region56
      $region55: #{resnet2_forward.20} parent=51 // pred_region
        %s546 = smul.u32 16, %s18
        %p547 = scmp.lt.s32.totalorder %s546, 31
        %s548 = scalar_select %p547, %s546, 31
        %s549 = smul.addr %s548, 4
        %s550 = scalar_lea.vmem %s6, %s549
      $region56: #{resnet2_forward.20} parent=51 // pred_fallthru
        _
    $region52: #{resnet2_forward.20} parent=5 // pred_fallthru
      _
  $region6: #{resnet2_forward.20} parent=0 // loop_footer
    %s16 = sadd.s32 1, %s12
  $region7: #{resnet2_forward.20} parent=0 // loop_footer_branch
    %11 = sbr.rel target = $region3
  $region8: #{resnet2_forward.20} parent=0 // loop_exit
    _

// kernel: tile.147
$region0: #{tile.147}
  #allocation0 [shape = 's32[1]{0}', space=sflag, size = 0x4, scoped, tag = 'scoped memory for tile.147']
  %s0 = inlined_call_operand.vmem [shape: f32[32], index: 0, kind: input, shape index: {}]
  %s1 = inlined_call_operand.vmem [shape: f32[4,32], index: 1, kind: output, shape index: {}]
  // Predicated region
  $region2: #{tile.147} parent=0 // pred_check
    _
  $region3: #{tile.147} parent=0 // pred_check_branch
    %3 = sbr.rel (0) target = $region5
  $region4: #{tile.147} parent=0 // pred_region
    _
  $region5: #{tile.147} parent=0 // pred_fallthru
    _
  %v4 = vld [vmem:[%s0] ss:$0 sm:$0xff]
  %5 = vst [vmem:[%s1] sm:$0xf] %v4

// kernel: tile.148
$region0: #{tile.148}
  %s0 = inlined_call_operand.vmem [shape: f32[4,32], index: 0, kind: input, shape index: {}]
  %s1 = inlined_call_operand.vmem [shape: f32[1,128], index: 1, kind: output, shape index: {}]
  $region1: #{tile.148} parent=0
    #allocation0 [shape = 'u8[4096]{0}', space=vmem, size = 0x1000, scoped, tag = 'scoped mem for output reshape']
    #allocation1 [shape = 'u8[4096]{0}', space=vmem, size = 0x1000, scoped, tag = 'scoped mem for input reshape']
    %s3 = sshll.u32 1, 4
    %s4 = ssub.s32 %s3, 1
    %v5 = vld [vmem:[%s0] sm:%s4]
    %6 = vst [vmem:[#allocation1] sm:%s4] %v5
    %v7 = vld [vmem:[#allocation1] sm:$0x1]
    %vm8 = vcmask 261120
    %9 = vst.msk [vmem:[#allocation0] sm:$0x1] %vm8, %v7
    %s10 = scalar_lea.vmem [#allocation1], 3
    %v11 = vld [vmem:[%s10] sm:$0x1]
    %12 = vrot.lane.b32.xlu0 %v11, 96
    %v13 = vpop.permute.xlu0 %12
    %vm14 = vcmask 1048320
    %15 = vst.msk [vmem:[#allocation0] sm:$0x1] %vm14, %v13
    %s16 = scalar_lea.vmem [#allocation1], 2
    %v17 = vld [vmem:[%s16] sm:$0x1]
    %18 = vrot.lane.b32.xlu0 %v17, 64
    %v19 = vpop.permute.xlu0 %18
    %vm20 = vcmask 785920
    %21 = vst.msk [vmem:[#allocation0] sm:$0x1] %vm20, %v19
    %s22 = scalar_lea.vmem [#allocation1], 1
    %v23 = vld [vmem:[%s22] sm:$0x1]
    %24 = vrot.lane.b32.xlu0 %v23, 32
    %v25 = vpop.permute.xlu0 %24
    %vm26 = vcmask 523520
    %27 = vst.msk [vmem:[#allocation0] sm:$0x1] %vm26, %v25
    %s29 = sshll.u32 1, 1
    %s30 = ssub.s32 %s29, 1
    %v32 = vld [vmem:[#allocation0] sm:%s30]
    %s33 = sshll.u32 1, 1
    %s34 = ssub.s32 %s33, 1
    %35 = vst [vmem:[%s1] sm:%s34] %v32

// kernel: resnet2_forward.21
$region0: #{resnet2_forward.21}
  #allocation0 [shape = 'u32[]', space=smem, size = 0x4, offset = 0x4, fixed_abs, tag = 'smem constant byte address 0x4 - core index']
  #allocation1 [shape = 'u32[144,128]{1,0:T(1,128)}', space=vmem, size = 0x12000, scoped, tag = 'internal scratch']
  %s0 = inlined_call_operand.vmem [shape: bf16[512,144], index: 0, kind: input, shape index: {}]
  %s1 = inlined_call_operand.vmem [shape: bf16[144,64], index: 1, kind: input, shape index: {}]
  %s2 = inlined_call_operand.vmem [shape: f32[512,64], index: 2, kind: output, shape index: {0}]
  %s3 = inlined_call_operand.vmem [shape: f32[16,64], index: 3, kind: output, shape index: {1}]
  %4 = xla_tuple %s2, %s3
  %s5 = sld [smem:[#allocation0]]
  $region49: #{resnet2_forward.21} parent=0
    _
  %s7 = ssub.s32 1, %s5
  %s8 = scalar_select 0, %s7, %s5
  loop: start=0, step=1, limit=4
  $region2: #{resnet2_forward.21} parent=0 // loop_pre_header
    _
  $region3: #{resnet2_forward.21} parent=0 // loop_header
    %s10 = sphi 0, %s14
    %p11 = scmp.ge.s32.totalorder %s10, 4
    %s20 = sphi 0, %s22
    %s23 = sphi 0, %s20
    %s24 = sphi 0, %s23
    %s40 = sphi 0, %s24
    %s44 = sphi 0, %s44
    %s46 = sphi 0, %s44
    %s47 = sphi 0, %s46
    %s61 = sphi 0, %s47
    %s67 = sphi 0, %s69
    %s70 = sphi 0, %s67
    %s71 = sphi 0, %s70
    %s87 = sphi 0, %s71
    %s93 = sphi 0, %s95
    %s96 = sphi 0, %s93
    %s97 = sphi 0, %s96
    %s113 = sphi 0, %s97
  $region4: #{resnet2_forward.21} parent=0 // loop_header_branch
    %13 = sbr.rel (%p11) target = $region8
  $region5: #{resnet2_forward.21} parent=0 // loop_body
    %s15 = ssub.s32 %s10, 1
    %s16 = ssub.s32 %s10, 2
    %s17 = sadd.s32 %s10, 1
    %s18 = ssub.s32 %s10, %s17
    %p19 = scmp.eq.s32.totalorder %s18, 0
    %s21 = sadd.s32 %s20, 1
    %s22 = scalar_select %p19, %s20, %s21
    %p25 = pneg %p19
    %p26 = scmp.eq.s32.totalorder %s10, 1
    %p27 = por %p25, %p26
    %p28 = scmp.ne.s32.totalorder %s20, %s23
    %p29 = scmp.eq.s32.totalorder %s10, 0
    %p30 = por %p28, %p29
    %p31 = scmp.ne.s32.totalorder %s20, %s23
    %p32 = scmp.eq.s32.totalorder %s15, 1
    %p33 = por %p31, %p32
    %p34 = scmp.ne.s32.totalorder %s23, %s24
    %p35 = scmp.eq.s32.totalorder %s15, 0
    %p36 = por %p34, %p35
    %p37 = scmp.ne.s32.totalorder %s23, %s24
    %p38 = scmp.eq.s32.totalorder %s16, 1
    %p39 = por %p37, %p38
    %p41 = scmp.ne.s32.totalorder %s24, %s40
    %p42 = scmp.eq.s32.totalorder %s16, 0
    %p43 = por %p41, %p42
    %s45 = sadd.s32 %s44, 1
    %p48 = scmp.eq.s32.totalorder %s10, 1
    %p49 = scmp.ne.s32.totalorder %s44, %s46
    %p50 = scmp.eq.s32.totalorder %s10, 0
    %p51 = por %p49, %p50
    %p52 = scmp.ne.s32.totalorder %s44, %s46
    %p53 = scmp.eq.s32.totalorder %s15, 1
    %p54 = por %p52, %p53
    %p55 = scmp.ne.s32.totalorder %s46, %s47
    %p56 = scmp.eq.s32.totalorder %s15, 0
    %p57 = por %p55, %p56
    %p58 = scmp.ne.s32.totalorder %s46, %s47
    %p59 = scmp.eq.s32.totalorder %s16, 1
    %p60 = por %p58, %p59
    %p62 = scmp.ne.s32.totalorder %s47, %s61
    %p63 = scmp.eq.s32.totalorder %s16, 0
    %p64 = por %p62, %p63
    %s65 = ssub.s32 %s10, %s17
    %p66 = scmp.eq.s32.totalorder %s65, 0
    %s68 = sadd.s32 %s67, 1
    %s69 = scalar_select %p66, %s67, %s68
    %p72 = pneg %p66
    %p73 = scmp.eq.s32.totalorder %s10, 1
    %p74 = por %p72, %p73
    %p75 = scmp.ne.s32.totalorder %s67, %s70
    %p76 = scmp.eq.s32.totalorder %s10, 0
    %p77 = por %p75, %p76
    %p78 = scmp.ne.s32.totalorder %s67, %s70
    %p79 = scmp.eq.s32.totalorder %s15, 1
    %p80 = por %p78, %p79
    %p81 = scmp.ne.s32.totalorder %s70, %s71
    %p82 = scmp.eq.s32.totalorder %s15, 0
    %p83 = por %p81, %p82
    %p84 = scmp.ne.s32.totalorder %s70, %s71
    %p85 = scmp.eq.s32.totalorder %s16, 1
    %p86 = por %p84, %p85
    %p88 = scmp.ne.s32.totalorder %s71, %s87
    %p89 = scmp.eq.s32.totalorder %s16, 0
    %p90 = por %p88, %p89
    %s91 = ssub.s32 %s10, %s17
    %p92 = scmp.eq.s32.totalorder %s91, 0
    %s94 = sadd.s32 %s93, 1
    %s95 = scalar_select %p92, %s93, %s94
    %p98 = pneg %p92
    %p99 = scmp.eq.s32.totalorder %s10, 1
    %p100 = por %p98, %p99
    %p101 = scmp.ne.s32.totalorder %s93, %s96
    %p102 = scmp.eq.s32.totalorder %s10, 0
    %p103 = por %p101, %p102
    %p104 = scmp.ne.s32.totalorder %s93, %s96
    %p105 = scmp.eq.s32.totalorder %s15, 1
    %p106 = por %p104, %p105
    %p107 = scmp.ne.s32.totalorder %s96, %s97
    %p108 = scmp.eq.s32.totalorder %s15, 0
    %p109 = por %p107, %p108
    %p110 = scmp.ne.s32.totalorder %s96, %s97
    %p111 = scmp.eq.s32.totalorder %s16, 1
    %p112 = por %p110, %p111
    %p114 = scmp.ne.s32.totalorder %s97, %s113
    %p115 = scmp.eq.s32.totalorder %s16, 0
    %p116 = por %p114, %p115
    %p117 = scmp.le.s32.totalorder 1, %s10
    %p118 = scmp.lt.s32.totalorder %s10, 3
    %p119 = pnand %p117, %p118
    %p120 = pneg %p119
    // Predicated region
    $region9: #{resnet2_forward.21} parent=5 // pred_check
      _
    $region10: #{resnet2_forward.21} parent=5 // pred_check_branch
      %122 = sbr.rel (%p119) target = $region12
    $region11: #{resnet2_forward.21} parent=5 // pred_region
      %s123 = ssub.s32 %s10, 1
      // Predicated region
      $region13: #{resnet2_forward.21} parent=11 // pred_check
        %p124 = pneg %p57
      $region14: #{resnet2_forward.21} parent=11 // pred_check_branch
        %126 = sbr.rel (%p124) target = $region16
      $region15: #{resnet2_forward.21} parent=11 // pred_region
        _
      $region16: #{resnet2_forward.21} parent=11 // pred_fallthru
        _
    $region12: #{resnet2_forward.21} parent=5 // pred_fallthru
      _
    %p127 = scmp.lt.s32.totalorder %s10, 2
    // Predicated region
    $region17: #{resnet2_forward.21} parent=5 // pred_check
      %p128 = pneg %p127
    $region18: #{resnet2_forward.21} parent=5 // pred_check_branch
      %130 = sbr.rel (%p128) target = $region20
    $region19: #{resnet2_forward.21} parent=5 // pred_region
      // Predicated region
      $region21: #{resnet2_forward.21} parent=19 // pred_check
        %p131 = pneg %p30
      $region22: #{resnet2_forward.21} parent=19 // pred_check_branch
        %133 = sbr.rel (%p131) target = $region24
      $region23: #{resnet2_forward.21} parent=19 // pred_region
        %s134 = smul.u32 32, %s10
        %p135 = scmp.lt.s32.totalorder %s134, 63
        %s136 = scalar_select %p135, %s134, 63
        %s137 = smul.addr %s136, 2
        %s138 = smul.addr %s137, 4
        %s139 = scalar_lea.vmem %s0, %s138
        %s140 = smul.u32 32, %s10
      $region24: #{resnet2_forward.21} parent=19 // pred_fallthru
        _
    $region20: #{resnet2_forward.21} parent=5 // pred_fallthru
      _
    %p141 = scmp.le.s32.totalorder 1, %s10
    %p142 = scmp.lt.s32.totalorder %s10, 3
    %p143 = pnand %p141, %p142
    %p144 = pneg %p143
    // Predicated region
    $region25: #{resnet2_forward.21} parent=5 // pred_check
      _
    $region26: #{resnet2_forward.21} parent=5 // pred_check_branch
      %146 = sbr.rel (%p143) target = $region28
    $region27: #{resnet2_forward.21} parent=5 // pred_region
      %s147 = ssub.s32 %s10, 1
      %s148 = smul.u32 32, %s15
      %p149 = scmp.lt.s32.totalorder %s148, 63
      %s150 = scalar_select %p149, %s148, 63
      %s151 = smul.addr %s150, 2
      %s152 = smul.addr %s151, 4
      %s153 = scalar_lea.vmem %s0, %s152
      %p154 = pneg %p36
      %p155 = pneg %p33
      %p156 = pneg %p57
      %p157 = pneg %p54
      %p158 = pneg %p83
      %p159 = pneg %p80
      %s160 = smul.u32 32, %s15
      %p161 = scmp.lt.s32.totalorder %s160, 63
      %s162 = scalar_select %p161, %s160, 63
      %s163 = smul.addr %s162, 8
      %s164 = scalar_lea.vmem %s2, %s163
      %p165 = pneg %p109
      %p166 = pneg %p106
      %p167 = scmp.lt.s32.totalorder %s15, 1
      %s168 = scalar_select %p167, %s15, 1
      %s169 = smul.addr %s168, 8
      %s170 = scalar_lea.vmem %s3, %s169
      %s171 = smul.u32 32, %s15
      %p172 = scmp.lt.s32.totalorder %s171, 63
      %s173 = scalar_select %p172, %s171, 63
      %s174 = smul.addr %s173, 2
      %s175 = smul.addr %s174, 4
      %s176 = scalar_lea.vmem %s0, %s175
      %s177 = smul.u32 32, %s15
      %s178 = smul.u32 32, %s15
      %p179 = scmp.lt.s32.totalorder %s178, 63
      %s180 = scalar_select %p179, %s178, 63
      %s181 = smul.addr %s180, 8
      %s182 = scalar_lea.vmem %s2, %s181
      %s183 = smul.u32 32, %s15
      %p184 = scmp.lt.s32.totalorder %s15, 1
      %s185 = scalar_select %p184, %s15, 1
      %s186 = smul.addr %s185, 8
      %s187 = scalar_lea.vmem %s3, %s186
      %v189 = vld [vmem:[%s176] sm:$0xff]
      %v190 = vld [vmem:[%s176 + $0x8] sm:$0xff]
      %v191 = vld [vmem:[%s176 + $0x10] sm:$0xff]
      %v192 = vld [vmem:[%s176 + $0x18] sm:$0xff]
      %v193 = vld [vmem:[%s176 + $0x20] sm:$0xff]
      %v194 = vld [vmem:[%s176 + $0x28] sm:$0xff]
      %v195 = vld [vmem:[%s176 + $0x30] sm:$0xff]
      %v196 = vld [vmem:[%s176 + $0x38] sm:$0xff]
      %v197 = vld [vmem:[%s176 + $0x40] sm:$0xff]
      %v198 = vld [vmem:[%s176 + $0x48] sm:$0xff]
      %v199 = vld [vmem:[%s176 + $0x50] sm:$0xff]
      %v200 = vld [vmem:[%s176 + $0x58] sm:$0xff]
      %v201 = vld [vmem:[%s176 + $0x60] sm:$0xff]
      %v202 = vld [vmem:[%s176 + $0x68] sm:$0xff]
      %v203 = vld [vmem:[%s176 + $0x70] sm:$0xff]
      %v204 = vld [vmem:[%s176 + $0x78] sm:$0xff]
      %v205 = vld [vmem:[%s176 + $0x80] sm:$0xff]
      %v206 = vld [vmem:[%s176 + $0x88] sm:$0xff]
      %v207 = vld [vmem:[%s176 + $0x90] sm:$0xff]
      %v208 = vld [vmem:[%s176 + $0x98] sm:$0xff]
      %v209 = vld [vmem:[%s176 + $0xa0] sm:$0xff]
      %v210 = vld [vmem:[%s176 + $0xa8] sm:$0xff]
      %v211 = vld [vmem:[%s176 + $0xb0] sm:$0xff]
      %v212 = vld [vmem:[%s176 + $0xb8] sm:$0xff]
      %v213 = vld [vmem:[%s176 + $0xc0] sm:$0xff]
      %v214 = vld [vmem:[%s176 + $0xc8] sm:$0xff]
      %v215 = vld [vmem:[%s176 + $0xd0] sm:$0xff]
      %v216 = vld [vmem:[%s176 + $0xd8] sm:$0xff]
      %v217 = vld [vmem:[%s176 + $0xe0] sm:$0xff]
      %v218 = vld [vmem:[%s176 + $0xe8] sm:$0xff]
      %v219 = vld [vmem:[%s176 + $0xf0] sm:$0xff]
      %v220 = vld [vmem:[%s176 + $0xf8] sm:$0xff]
      %v221 = vld [vmem:[%s1] sm:$0xf]
      %v222 = vld [vmem:[%s1 + $0x4] sm:$0xf]
      %v223 = vld [vmem:[%s1 + $0x8] sm:$0xf]
      %v224 = vld [vmem:[%s1 + $0xc] sm:$0xf]
      %v225 = vld [vmem:[%s1 + $0x10] sm:$0xf]
      %v226 = vld [vmem:[%s1 + $0x14] sm:$0xf]
      %v227 = vld [vmem:[%s1 + $0x18] sm:$0xf]
      %v228 = vld [vmem:[%s1 + $0x1c] sm:$0xf]
      %v229 = vld [vmem:[%s1 + $0x20] sm:$0xf]
      %v230 = vld [vmem:[%s1 + $0x24] sm:$0xf]
      %v231 = vld [vmem:[%s1 + $0x28] sm:$0xf]
      %v232 = vld [vmem:[%s1 + $0x2c] sm:$0xf]
      %v233 = vld [vmem:[%s1 + $0x30] sm:$0xf]
      %v234 = vld [vmem:[%s1 + $0x34] sm:$0xf]
      %v235 = vld [vmem:[%s1 + $0x38] sm:$0xf]
      %v236 = vld [vmem:[%s1 + $0x3c] sm:$0xf]
      %v237 = vld [vmem:[%s1 + $0x40] sm:$0xf]
      %v238 = vld [vmem:[%s1 + $0x44] sm:$0xf]
      %v271 = vunpack.c.l.b16 %v189
      %v272 = vunpack.c.h.b16 %v189
      %v273 = vunpack.c.l.b16 %v190
      %v274 = vunpack.c.h.b16 %v190
      %v275 = vunpack.c.l.b16 %v191
      %v276 = vunpack.c.h.b16 %v191
      %v277 = vunpack.c.l.b16 %v192
      %v278 = vunpack.c.h.b16 %v192
      %v279 = vunpack.c.l.b16 %v193
      %v280 = vunpack.c.h.b16 %v193
      %v281 = vunpack.c.l.b16 %v194
      %v282 = vunpack.c.h.b16 %v194
      %v283 = vunpack.c.l.b16 %v195
      %v284 = vunpack.c.h.b16 %v195
      %v285 = vunpack.c.l.b16 %v196
      %v286 = vunpack.c.h.b16 %v196
      %v287 = vunpack.c.l.b16 %v197
      %v288 = vunpack.c.h.b16 %v197
      %v289 = vunpack.c.l.b16 %v198
      %v290 = vunpack.c.h.b16 %v198
      %v291 = vunpack.c.l.b16 %v199
      %v292 = vunpack.c.h.b16 %v199
      %v293 = vunpack.c.l.b16 %v200
      %v294 = vunpack.c.h.b16 %v200
      %v295 = vunpack.c.l.b16 %v201
      %v296 = vunpack.c.h.b16 %v201
      %v297 = vunpack.c.l.b16 %v202
      %v298 = vunpack.c.h.b16 %v202
      %v299 = vunpack.c.l.b16 %v203
      %v300 = vunpack.c.h.b16 %v203
      %v301 = vunpack.c.l.b16 %v204
      %v302 = vunpack.c.h.b16 %v204
      %v303 = vunpack.c.l.b16 %v205
      %v304 = vunpack.c.h.b16 %v205
      %v305 = vunpack.c.l.b16 %v206
      %v306 = vunpack.c.h.b16 %v206
      %v307 = vunpack.c.l.b16 %v207
      %v308 = vunpack.c.h.b16 %v207
      %v309 = vunpack.c.l.b16 %v208
      %v310 = vunpack.c.h.b16 %v208
      %v311 = vunpack.c.l.b16 %v209
      %v312 = vunpack.c.h.b16 %v209
      %v313 = vunpack.c.l.b16 %v210
      %v314 = vunpack.c.h.b16 %v210
      %v315 = vunpack.c.l.b16 %v211
      %v316 = vunpack.c.h.b16 %v211
      %v317 = vunpack.c.l.b16 %v212
      %v318 = vunpack.c.h.b16 %v212
      %v319 = vunpack.c.l.b16 %v213
      %v320 = vunpack.c.h.b16 %v213
      %v321 = vunpack.c.l.b16 %v214
      %v322 = vunpack.c.h.b16 %v214
      %v323 = vunpack.c.l.b16 %v215
      %v324 = vunpack.c.h.b16 %v215
      %v325 = vunpack.c.l.b16 %v216
      %v326 = vunpack.c.h.b16 %v216
      %v327 = vunpack.c.l.b16 %v217
      %v328 = vunpack.c.h.b16 %v217
      %v329 = vunpack.c.l.b16 %v218
      %v330 = vunpack.c.h.b16 %v218
      %v331 = vunpack.c.l.b16 %v219
      %v332 = vunpack.c.h.b16 %v219
      %v333 = vunpack.c.l.b16 %v220
      %v334 = vunpack.c.h.b16 %v220
      %v335 = vpack.c.b16 %v273, %v271
      %v336 = vpack.c.b16 %v274, %v272
      %v337 = vpack.c.b16 %v277, %v275
      %v338 = vpack.c.b16 %v278, %v276
      %v339 = vpack.c.b16 %v281, %v279
      %v340 = vpack.c.b16 %v282, %v280
      %v341 = vpack.c.b16 %v285, %v283
      %v342 = vpack.c.b16 %v286, %v284
      %v343 = vpack.c.b16 %v289, %v287
      %v344 = vpack.c.b16 %v290, %v288
      %v345 = vpack.c.b16 %v293, %v291
      %v346 = vpack.c.b16 %v294, %v292
      %v347 = vpack.c.b16 %v297, %v295
      %v348 = vpack.c.b16 %v298, %v296
      %v349 = vpack.c.b16 %v301, %v299
      %v350 = vpack.c.b16 %v302, %v300
      %v351 = vpack.c.b16 %v305, %v303
      %v352 = vpack.c.b16 %v306, %v304
      %v353 = vpack.c.b16 %v309, %v307
      %v354 = vpack.c.b16 %v310, %v308
      %v355 = vpack.c.b16 %v313, %v311
      %v356 = vpack.c.b16 %v314, %v312
      %v357 = vpack.c.b16 %v317, %v315
      %v358 = vpack.c.b16 %v318, %v316
      %v359 = vpack.c.b16 %v321, %v319
      %v360 = vpack.c.b16 %v322, %v320
      %v361 = vpack.c.b16 %v325, %v323
      %v362 = vpack.c.b16 %v326, %v324
      %v363 = vpack.c.b16 %v329, %v327
      %v364 = vpack.c.b16 %v330, %v328
      %v365 = vpack.c.b16 %v333, %v331
      %v366 = vpack.c.b16 %v334, %v332
      %v401 = vunpack.c.l.b16 %v221
      %v402 = vunpack.c.l.b16 %v222
      %v403 = vunpack.c.l.b16 %v223
      %v404 = vunpack.c.l.b16 %v224
      %v405 = vunpack.c.l.b16 %v225
      %v406 = vunpack.c.l.b16 %v226
      %v407 = vunpack.c.l.b16 %v227
      %v408 = vunpack.c.l.b16 %v228
      %v409 = vunpack.c.l.b16 %v229
      %v410 = vunpack.c.l.b16 %v230
      %v411 = vunpack.c.l.b16 %v231
      %v412 = vunpack.c.l.b16 %v232
      %v413 = vunpack.c.l.b16 %v233
      %v414 = vunpack.c.l.b16 %v234
      %v415 = vunpack.c.l.b16 %v235
      %v416 = vunpack.c.l.b16 %v236
      %v417 = vunpack.c.l.b16 %v237
      %v418 = vunpack.c.l.b16 %v238
      %v419 = vpack.c.b16 %v402, %v401
      %v420 = vpack.c.b16 %v404, %v403
      %v421 = vpack.c.b16 %v406, %v405
      %v422 = vpack.c.b16 %v408, %v407
      %v423 = vpack.c.b16 %v410, %v409
      %v424 = vpack.c.b16 %v412, %v411
      %v425 = vpack.c.b16 %v414, %v413
      %v426 = vpack.c.b16 %v416, %v415
      %v427 = vpack.c.b16 %v418, %v417
      %vm437 = vcmask 130048
      %v439 = vsel %vm437, %v336, 0
      %v442 = vsel %vm437, %v338, 0
      %v445 = vsel %vm437, %v340, 0
      %v448 = vsel %vm437, %v342, 0
      %v451 = vsel %vm437, %v344, 0
      %v454 = vsel %vm437, %v346, 0
      %v457 = vsel %vm437, %v348, 0
      %v460 = vsel %vm437, %v350, 0
      %v463 = vsel %vm437, %v352, 0
      %v466 = vsel %vm437, %v354, 0
      %v469 = vsel %vm437, %v356, 0
      %v472 = vsel %vm437, %v358, 0
      %v475 = vsel %vm437, %v360, 0
      %v478 = vsel %vm437, %v362, 0
      %v481 = vsel %vm437, %v364, 0
      %v484 = vsel %vm437, %v366, 0
      %486 = vmatprep.subr.bf16.mxu0 0
      %487 = vmatpush1.bf16.msra.mxu0 %v426
      %488 = vmatprep.subr.bf16.mxu0 0
      %489 = vmatpush1.bf16.msra.mxu0 %v425
      %490 = vmatprep.subr.bf16.mxu0 0
      %491 = vmatpush1.bf16.msra.mxu0 %v424
      %492 = vmatprep.subr.bf16.mxu0 0
      %493 = vmatpush1.bf16.msra.mxu0 %v423
      %494 = vmatprep.subr.bf16.mxu0 0
      %495 = vmatpush1.bf16.msra.mxu0 %v422
      %496 = vmatprep.subr.bf16.mxu0 0
      %497 = vmatpush1.bf16.msra.mxu0 %v421
      %498 = vmatprep.subr.bf16.mxu0 0
      %499 = vmatpush1.bf16.msra.mxu0 %v420
      %500 = vmatprep.subr.bf16.mxu0 0
      %501 = vmatpush1.bf16.msra.mxu0 %v419
      %502 = vmatprep.subr.bf16.mxu0 0
      %503 = vmatpush2.bf16.msra.mxu0 0
      %504 = vmatprep.subr.bf16.mxu0 0
      %505 = vmatpush2.bf16.msra.mxu0 0
      %506 = vmatprep.subr.bf16.mxu0 0
      %507 = vmatpush2.bf16.msra.mxu0 0
      %508 = vmatprep.subr.bf16.mxu0 0
      %509 = vmatpush2.bf16.msra.mxu0 0
      %510 = vmatprep.subr.bf16.mxu0 0
      %511 = vmatpush2.bf16.msra.mxu0 0
      %512 = vmatprep.subr.bf16.mxu0 0
      %513 = vmatpush2.bf16.msra.mxu0 0
      %514 = vmatprep.subr.bf16.mxu0 0
      %515 = vmatpush2.bf16.msra.mxu0 0
      %516 = vmatprep.subr.bf16.mxu0 0
      %517 = vmatpush2.bf16.msra.mxu0 %v427
      %518 = vmatprep.mubr.bf16.mxu0 %v439
      %519 = vmatmul.mubr.bf16.gmra.mxu0 %v335
      %v520 = vpop.f32.mrf.mxu0
      %v521 = vadd.f32 0.0, %v520
      %v522 = vpop.f32.mrf.mxu0
      %v523 = vpop.f32.mrf.mxu0
      %v524 = vadd.f32 0.0, %v523
      %v525 = vpop.f32.mrf.mxu0
      %526 = vmatprep.mubr.bf16.mxu0 %v442
      %527 = vmatmul.mubr.bf16.gmra.mxu0 %v337
      %v528 = vpop.f32.mrf.mxu0
      %v529 = vadd.f32 0.0, %v528
      %v530 = vpop.f32.mrf.mxu0
      %v531 = vpop.f32.mrf.mxu0
      %v532 = vadd.f32 0.0, %v531
      %v533 = vpop.f32.mrf.mxu0
      %534 = vmatprep.mubr.bf16.mxu0 %v445
      %535 = vmatmul.mubr.bf16.gmra.mxu0 %v339
      %v536 = vpop.f32.mrf.mxu0
      %v537 = vadd.f32 0.0, %v536
      %v538 = vpop.f32.mrf.mxu0
      %v539 = vpop.f32.mrf.mxu0
      %v540 = vadd.f32 0.0, %v539
      %v541 = vpop.f32.mrf.mxu0
      %542 = vmatprep.mubr.bf16.mxu0 %v448
      %543 = vmatmul.mubr.bf16.gmra.mxu0 %v341
      %v544 = vpop.f32.mrf.mxu0
      %v545 = vadd.f32 0.0, %v544
      %v546 = vpop.f32.mrf.mxu0
      %v547 = vpop.f32.mrf.mxu0
      %v548 = vadd.f32 0.0, %v547
      %v549 = vpop.f32.mrf.mxu0
      %550 = vmatprep.mubr.bf16.mxu0 %v451
      %551 = vmatmul.mubr.bf16.gmra.mxu0 %v343
      %v552 = vpop.f32.mrf.mxu0
      %v553 = vadd.f32 0.0, %v552
      %v554 = vpop.f32.mrf.mxu0
      %v555 = vpop.f32.mrf.mxu0
      %v556 = vadd.f32 0.0, %v555
      %v557 = vpop.f32.mrf.mxu0
      %558 = vmatprep.mubr.bf16.mxu0 %v454
      %559 = vmatmul.mubr.bf16.gmra.mxu0 %v345
      %v560 = vpop.f32.mrf.mxu0
      %v561 = vadd.f32 0.0, %v560
      %v562 = vpop.f32.mrf.mxu0
      %v563 = vpop.f32.mrf.mxu0
      %v564 = vadd.f32 0.0, %v563
      %v565 = vpop.f32.mrf.mxu0
      %566 = vmatprep.mubr.bf16.mxu0 %v457
      %567 = vmatmul.mubr.bf16.gmra.mxu0 %v347
      %v568 = vpop.f32.mrf.mxu0
      %v569 = vadd.f32 0.0, %v568
      %v570 = vpop.f32.mrf.mxu0
      %v571 = vpop.f32.mrf.mxu0
      %v572 = vadd.f32 0.0, %v571
      %v573 = vpop.f32.mrf.mxu0
      %574 = vmatprep.mubr.bf16.mxu0 %v460
      %575 = vmatmul.mubr.bf16.gmra.mxu0 %v349
      %v576 = vpop.f32.mrf.mxu0
      %v577 = vadd.f32 0.0, %v576
      %v578 = vpop.f32.mrf.mxu0
      %v579 = vpop.f32.mrf.mxu0
      %v580 = vadd.f32 0.0, %v579
      %v581 = vpop.f32.mrf.mxu0
      %582 = vmatprep.mubr.bf16.mxu0 %v463
      %583 = vmatmul.mubr.bf16.gmra.mxu0 %v351
      %v584 = vpop.f32.mrf.mxu0
      %v585 = vadd.f32 0.0, %v584
      %v586 = vpop.f32.mrf.mxu0
      %v587 = vpop.f32.mrf.mxu0
      %v588 = vadd.f32 0.0, %v587
      %v589 = vpop.f32.mrf.mxu0
      %590 = vmatprep.mubr.bf16.mxu0 %v466
      %591 = vmatmul.mubr.bf16.gmra.mxu0 %v353
      %v592 = vpop.f32.mrf.mxu0
      %v593 = vadd.f32 0.0, %v592
      %v594 = vpop.f32.mrf.mxu0
      %v595 = vpop.f32.mrf.mxu0
      %v596 = vadd.f32 0.0, %v595
      %v597 = vpop.f32.mrf.mxu0
      %598 = vmatprep.mubr.bf16.mxu0 %v469
      %599 = vmatmul.mubr.bf16.gmra.mxu0 %v355
      %v600 = vpop.f32.mrf.mxu0
      %v601 = vadd.f32 0.0, %v600
      %v602 = vpop.f32.mrf.mxu0
      %v603 = vpop.f32.mrf.mxu0
      %v604 = vadd.f32 0.0, %v603
      %v605 = vpop.f32.mrf.mxu0
      %606 = vmatprep.mubr.bf16.mxu0 %v472
      %607 = vmatmul.mubr.bf16.gmra.mxu0 %v357
      %v608 = vpop.f32.mrf.mxu0
      %v609 = vadd.f32 0.0, %v608
      %v610 = vpop.f32.mrf.mxu0
      %v611 = vpop.f32.mrf.mxu0
      %v612 = vadd.f32 0.0, %v611
      %v613 = vpop.f32.mrf.mxu0
      %614 = vmatprep.mubr.bf16.mxu0 %v475
      %615 = vmatmul.mubr.bf16.gmra.mxu0 %v359
      %v616 = vpop.f32.mrf.mxu0
      %v617 = vadd.f32 0.0, %v616
      %v618 = vpop.f32.mrf.mxu0
      %v619 = vpop.f32.mrf.mxu0
      %v620 = vadd.f32 0.0, %v619
      %v621 = vpop.f32.mrf.mxu0
      %622 = vmatprep.mubr.bf16.mxu0 %v478
      %623 = vmatmul.mubr.bf16.gmra.mxu0 %v361
      %v624 = vpop.f32.mrf.mxu0
      %v625 = vadd.f32 0.0, %v624
      %v626 = vpop.f32.mrf.mxu0
      %v627 = vpop.f32.mrf.mxu0
      %v628 = vadd.f32 0.0, %v627
      %v629 = vpop.f32.mrf.mxu0
      %630 = vmatprep.mubr.bf16.mxu0 %v481
      %631 = vmatmul.mubr.bf16.gmra.mxu0 %v363
      %v632 = vpop.f32.mrf.mxu0
      %v633 = vadd.f32 0.0, %v632
      %v634 = vpop.f32.mrf.mxu0
      %v635 = vpop.f32.mrf.mxu0
      %v636 = vadd.f32 0.0, %v635
      %v637 = vpop.f32.mrf.mxu0
      %638 = vmatprep.mubr.bf16.mxu0 %v484
      %639 = vmatmul.mubr.bf16.gmra.mxu0 %v365
      %v640 = vpop.f32.mrf.mxu0
      %v641 = vadd.f32 0.0, %v640
      %v642 = vpop.f32.mrf.mxu0
      %v643 = vpop.f32.mrf.mxu0
      %v644 = vadd.f32 0.0, %v643
      %v645 = vpop.f32.mrf.mxu0
      %646 = vdwg.mxu0
      %vm647 = vcmask 523264
      %648 = vst.msk [vmem:[%s182] sm:$0xff] %vm647, %v521
      %649 = vst.msk [vmem:[%s182 + $0x8] sm:$0xff] %vm647, %v524
      %650 = vst.msk [vmem:[%s182 + $0x10] sm:$0xff] %vm647, %v529
      %651 = vst.msk [vmem:[%s182 + $0x18] sm:$0xff] %vm647, %v532
      %652 = vst.msk [vmem:[%s182 + $0x20] sm:$0xff] %vm647, %v537
      %653 = vst.msk [vmem:[%s182 + $0x28] sm:$0xff] %vm647, %v540
      %654 = vst.msk [vmem:[%s182 + $0x30] sm:$0xff] %vm647, %v545
      %655 = vst.msk [vmem:[%s182 + $0x38] sm:$0xff] %vm647, %v548
      %656 = vst.msk [vmem:[%s182 + $0x40] sm:$0xff] %vm647, %v553
      %657 = vst.msk [vmem:[%s182 + $0x48] sm:$0xff] %vm647, %v556
      %658 = vst.msk [vmem:[%s182 + $0x50] sm:$0xff] %vm647, %v561
      %659 = vst.msk [vmem:[%s182 + $0x58] sm:$0xff] %vm647, %v564
      %660 = vst.msk [vmem:[%s182 + $0x60] sm:$0xff] %vm647, %v569
      %661 = vst.msk [vmem:[%s182 + $0x68] sm:$0xff] %vm647, %v572
      %662 = vst.msk [vmem:[%s182 + $0x70] sm:$0xff] %vm647, %v577
      %663 = vst.msk [vmem:[%s182 + $0x78] sm:$0xff] %vm647, %v580
      %664 = vst.msk [vmem:[%s182 + $0x80] sm:$0xff] %vm647, %v585
      %665 = vst.msk [vmem:[%s182 + $0x88] sm:$0xff] %vm647, %v588
      %666 = vst.msk [vmem:[%s182 + $0x90] sm:$0xff] %vm647, %v593
      %667 = vst.msk [vmem:[%s182 + $0x98] sm:$0xff] %vm647, %v596
      %668 = vst.msk [vmem:[%s182 + $0xa0] sm:$0xff] %vm647, %v601
      %669 = vst.msk [vmem:[%s182 + $0xa8] sm:$0xff] %vm647, %v604
      %670 = vst.msk [vmem:[%s182 + $0xb0] sm:$0xff] %vm647, %v609
      %671 = vst.msk [vmem:[%s182 + $0xb8] sm:$0xff] %vm647, %v612
      %672 = vst.msk [vmem:[%s182 + $0xc0] sm:$0xff] %vm647, %v617
      %673 = vst.msk [vmem:[%s182 + $0xc8] sm:$0xff] %vm647, %v620
      %674 = vst.msk [vmem:[%s182 + $0xd0] sm:$0xff] %vm647, %v625
      %675 = vst.msk [vmem:[%s182 + $0xd8] sm:$0xff] %vm647, %v628
      %676 = vst.msk [vmem:[%s182 + $0xe0] sm:$0xff] %vm647, %v633
      %677 = vst.msk [vmem:[%s182 + $0xe8] sm:$0xff] %vm647, %v636
      %678 = vst.msk [vmem:[%s182 + $0xf0] sm:$0xff] %vm647, %v641
      %679 = vst.msk [vmem:[%s182 + $0xf8] sm:$0xff] %vm647, %v644
      %v680 = vsel %vm647, %v521, 0.0
      %v681 = vsel %vm647, %v524, 0.0
      %v682 = vadd.f32 %v680, %v681
      %v683 = vsel %vm647, %v529, 0.0
      %v684 = vadd.f32 %v682, %v683
      %v685 = vsel %vm647, %v532, 0.0
      %v686 = vadd.f32 %v684, %v685
      %v687 = vsel %vm647, %v537, 0.0
      %v688 = vadd.f32 %v686, %v687
      %v689 = vsel %vm647, %v540, 0.0
      %v690 = vadd.f32 %v688, %v689
      %v691 = vsel %vm647, %v545, 0.0
      %v692 = vadd.f32 %v690, %v691
      %v693 = vsel %vm647, %v548, 0.0
      %v694 = vadd.f32 %v692, %v693
      %v695 = vsel %vm647, %v553, 0.0
      %v696 = vadd.f32 %v694, %v695
      %v697 = vsel %vm647, %v556, 0.0
      %v698 = vadd.f32 %v696, %v697
      %v699 = vsel %vm647, %v561, 0.0
      %v700 = vadd.f32 %v698, %v699
      %v701 = vsel %vm647, %v564, 0.0
      %v702 = vadd.f32 %v700, %v701
      %v703 = vsel %vm647, %v569, 0.0
      %v704 = vadd.f32 %v702, %v703
      %v705 = vsel %vm647, %v572, 0.0
      %v706 = vadd.f32 %v704, %v705
      %v707 = vsel %vm647, %v577, 0.0
      %v708 = vadd.f32 %v706, %v707
      %v709 = vsel %vm647, %v580, 0.0
      %v710 = vadd.f32 %v708, %v709
      %v711 = vsel %vm647, %v585, 0.0
      %v712 = vadd.f32 %v710, %v711
      %v713 = vsel %vm647, %v588, 0.0
      %v714 = vadd.f32 %v712, %v713
      %v715 = vsel %vm647, %v593, 0.0
      %v716 = vadd.f32 %v714, %v715
      %v717 = vsel %vm647, %v596, 0.0
      %v718 = vadd.f32 %v716, %v717
      %v719 = vsel %vm647, %v601, 0.0
      %v720 = vadd.f32 %v718, %v719
      %v721 = vsel %vm647, %v604, 0.0
      %v722 = vadd.f32 %v720, %v721
      %v723 = vsel %vm647, %v609, 0.0
      %v724 = vadd.f32 %v722, %v723
      %v725 = vsel %vm647, %v612, 0.0
      %v726 = vadd.f32 %v724, %v725
      %v727 = vsel %vm647, %v617, 0.0
      %v728 = vadd.f32 %v726, %v727
      %v729 = vsel %vm647, %v620, 0.0
      %v730 = vadd.f32 %v728, %v729
      %v731 = vsel %vm647, %v625, 0.0
      %v732 = vadd.f32 %v730, %v731
      %v733 = vsel %vm647, %v628, 0.0
      %v734 = vadd.f32 %v732, %v733
      %v735 = vsel %vm647, %v633, 0.0
      %v736 = vadd.f32 %v734, %v735
      %v737 = vsel %vm647, %v636, 0.0
      %v738 = vadd.f32 %v736, %v737
      %v739 = vsel %vm647, %v641, 0.0
      %v740 = vadd.f32 %v738, %v739
      %v741 = vsel %vm647, %v644, 0.0
      %v742 = vadd.f32 %v740, %v741
      %v743 = vrot.slane %v742, 4
      %v744 = vadd.f32 %v742, %v743
      %v745 = vrot.slane %v744, 2
      %v746 = vadd.f32 %v744, %v745
      %v747 = vrot.slane %v746, 1
      %v748 = vadd.f32 %v746, %v747
      %v749 = vmul.f32 %v521, %v521
      %v750 = vmul.f32 %v524, %v524
      %v751 = vmul.f32 %v529, %v529
      %v752 = vmul.f32 %v532, %v532
      %v753 = vmul.f32 %v537, %v537
      %v754 = vmul.f32 %v540, %v540
      %v755 = vmul.f32 %v545, %v545
      %v756 = vmul.f32 %v548, %v548
      %v757 = vmul.f32 %v553, %v553
      %v758 = vmul.f32 %v556, %v556
      %v759 = vmul.f32 %v561, %v561
      %v760 = vmul.f32 %v564, %v564
      %v761 = vmul.f32 %v569, %v569
      %v762 = vmul.f32 %v572, %v572
      %v763 = vmul.f32 %v577, %v577
      %v764 = vmul.f32 %v580, %v580
      %v765 = vmul.f32 %v585, %v585
      %v766 = vmul.f32 %v588, %v588
      %v767 = vmul.f32 %v593, %v593
      %v768 = vmul.f32 %v596, %v596
      %v769 = vmul.f32 %v601, %v601
      %v770 = vmul.f32 %v604, %v604
      %v771 = vmul.f32 %v609, %v609
      %v772 = vmul.f32 %v612, %v612
      %v773 = vmul.f32 %v617, %v617
      %v774 = vmul.f32 %v620, %v620
      %v775 = vmul.f32 %v625, %v625
      %v776 = vmul.f32 %v628, %v628
      %v777 = vmul.f32 %v633, %v633
      %v778 = vmul.f32 %v636, %v636
      %v779 = vmul.f32 %v641, %v641
      %v780 = vmul.f32 %v644, %v644
      %v781 = vsel %vm647, %v749, 0.0
      %v782 = vsel %vm647, %v750, 0.0
      %v783 = vadd.f32 %v781, %v782
      %v784 = vsel %vm647, %v751, 0.0
      %v785 = vadd.f32 %v783, %v784
      %v786 = vsel %vm647, %v752, 0.0
      %v787 = vadd.f32 %v785, %v786
      %v788 = vsel %vm647, %v753, 0.0
      %v789 = vadd.f32 %v787, %v788
      %v790 = vsel %vm647, %v754, 0.0
      %v791 = vadd.f32 %v789, %v790
      %v792 = vsel %vm647, %v755, 0.0
      %v793 = vadd.f32 %v791, %v792
      %v794 = vsel %vm647, %v756, 0.0
      %v795 = vadd.f32 %v793, %v794
      %v796 = vsel %vm647, %v757, 0.0
      %v797 = vadd.f32 %v795, %v796
      %v798 = vsel %vm647, %v758, 0.0
      %v799 = vadd.f32 %v797, %v798
      %v800 = vsel %vm647, %v759, 0.0
      %v801 = vadd.f32 %v799, %v800
      %v802 = vsel %vm647, %v760, 0.0
      %v803 = vadd.f32 %v801, %v802
      %v804 = vsel %vm647, %v761, 0.0
      %v805 = vadd.f32 %v803, %v804
      %v806 = vsel %vm647, %v762, 0.0
      %v807 = vadd.f32 %v805, %v806
      %v808 = vsel %vm647, %v763, 0.0
      %v809 = vadd.f32 %v807, %v808
      %v810 = vsel %vm647, %v764, 0.0
      %v811 = vadd.f32 %v809, %v810
      %v812 = vsel %vm647, %v765, 0.0
      %v813 = vadd.f32 %v811, %v812
      %v814 = vsel %vm647, %v766, 0.0
      %v815 = vadd.f32 %v813, %v814
      %v816 = vsel %vm647, %v767, 0.0
      %v817 = vadd.f32 %v815, %v816
      %v818 = vsel %vm647, %v768, 0.0
      %v819 = vadd.f32 %v817, %v818
      %v820 = vsel %vm647, %v769, 0.0
      %v821 = vadd.f32 %v819, %v820
      %v822 = vsel %vm647, %v770, 0.0
      %v823 = vadd.f32 %v821, %v822
      %v824 = vsel %vm647, %v771, 0.0
      %v825 = vadd.f32 %v823, %v824
      %v826 = vsel %vm647, %v772, 0.0
      %v827 = vadd.f32 %v825, %v826
      %v828 = vsel %vm647, %v773, 0.0
      %v829 = vadd.f32 %v827, %v828
      %v830 = vsel %vm647, %v774, 0.0
      %v831 = vadd.f32 %v829, %v830
      %v832 = vsel %vm647, %v775, 0.0
      %v833 = vadd.f32 %v831, %v832
      %v834 = vsel %vm647, %v776, 0.0
      %v835 = vadd.f32 %v833, %v834
      %v836 = vsel %vm647, %v777, 0.0
      %v837 = vadd.f32 %v835, %v836
      %v838 = vsel %vm647, %v778, 0.0
      %v839 = vadd.f32 %v837, %v838
      %v840 = vsel %vm647, %v779, 0.0
      %v841 = vadd.f32 %v839, %v840
      %v842 = vsel %vm647, %v780, 0.0
      %v843 = vadd.f32 %v841, %v842
      %v844 = vrot.slane %v843, 4
      %v845 = vadd.f32 %v843, %v844
      %v846 = vrot.slane %v845, 2
      %v847 = vadd.f32 %v845, %v846
      %v848 = vrot.slane %v847, 1
      %v849 = vadd.f32 %v847, %v848
      %vm850 = vcmask 1040384
      %v851 = vsel %vm850, %v748, %v849
      %vm852 = vcmask 1041408
      %v853 = vsel %vm852, %v851, 0.0
      %854 = vst.msk [vmem:[%s187] sm:$0xff] %vm647, %v853
      %s855 = smul.u32 32, %s15
      %p856 = scmp.lt.s32.totalorder %s855, 63
      %s857 = scalar_select %p856, %s855, 63
      %s858 = smul.addr %s857, 8
      %s859 = scalar_lea.vmem %s2, %s858
      %p860 = scmp.lt.s32.totalorder %s15, 1
      %s861 = scalar_select %p860, %s15, 1
      %s862 = smul.addr %s861, 8
      %s863 = scalar_lea.vmem %s3, %s862
      // Predicated region
      $region29: #{resnet2_forward.21} parent=27 // pred_check
        %p864 = pneg %p80
      $region30: #{resnet2_forward.21} parent=27 // pred_check_branch
        %866 = sbr.rel (%p864) target = $region32
      $region31: #{resnet2_forward.21} parent=27 // pred_region
        %s867 = smul.u32 32, %s15
      $region32: #{resnet2_forward.21} parent=27 // pred_fallthru
        _
      // Predicated region
      $region33: #{resnet2_forward.21} parent=27 // pred_check
        %p868 = pneg %p106
      $region34: #{resnet2_forward.21} parent=27 // pred_check_branch
        %870 = sbr.rel (%p868) target = $region36
      $region35: #{resnet2_forward.21} parent=27 // pred_region
        _
      $region36: #{resnet2_forward.21} parent=27 // pred_fallthru
        _
    $region28: #{resnet2_forward.21} parent=5 // pred_fallthru
      _
    %p871 = scmp.le.s32.totalorder 2, %s10
    // Predicated region
    $region37: #{resnet2_forward.21} parent=5 // pred_check
      %p872 = pneg %p871
    $region38: #{resnet2_forward.21} parent=5 // pred_check_branch
      %874 = sbr.rel (%p872) target = $region40
    $region39: #{resnet2_forward.21} parent=5 // pred_region
      %s875 = ssub.s32 %s10, 2
      // Predicated region
      $region41: #{resnet2_forward.21} parent=39 // pred_check
        %p876 = pneg %p86
      $region42: #{resnet2_forward.21} parent=39 // pred_check_branch
        %878 = sbr.rel (%p876) target = $region44
      $region43: #{resnet2_forward.21} parent=39 // pred_region
        %s879 = smul.u32 32, %s16
        %p880 = scmp.lt.s32.totalorder %s879, 63
        %s881 = scalar_select %p880, %s879, 63
        %s882 = smul.addr %s881, 8
        %s883 = scalar_lea.vmem %s2, %s882
      $region44: #{resnet2_forward.21} parent=39 // pred_fallthru
        _
      // Predicated region
      $region45: #{resnet2_forward.21} parent=39 // pred_check
        %p884 = pneg %p112
      $region46: #{resnet2_forward.21} parent=39 // pred_check_branch
        %886 = sbr.rel (%p884) target = $region48
      $region47: #{resnet2_forward.21} parent=39 // pred_region
        %p887 = scmp.lt.s32.totalorder %s16, 1
        %s888 = scalar_select %p887, %s16, 1
        %s889 = smul.addr %s888, 8
        %s890 = scalar_lea.vmem %s3, %s889
      $region48: #{resnet2_forward.21} parent=39 // pred_fallthru
        _
    $region40: #{resnet2_forward.21} parent=5 // pred_fallthru
      _
  $region6: #{resnet2_forward.21} parent=0 // loop_footer
    %s14 = sadd.s32 1, %s10
  $region7: #{resnet2_forward.21} parent=0 // loop_footer_branch
    %9 = sbr.rel target = $region3
  $region8: #{resnet2_forward.21} parent=0 // loop_exit
    _

// kernel: resnet2_forward.22
$region0: #{resnet2_forward.22}
  #allocation0 [shape = 'u32[]', space=smem, size = 0x4, offset = 0x4, fixed_abs, tag = 'smem constant byte address 0x4 - core index']
  #allocation1 [shape = 'u32[144,128]{1,0:T(1,128)}', space=vmem, size = 0x12000, scoped, tag = 'internal scratch']
  %s0 = inlined_call_operand.vmem [shape: f32[128,128], index: 0, kind: input, shape index: {}]
  %s1 = inlined_call_operand.vmem [shape: f32[1,128], index: 1, kind: input, shape index: {}]
  %s2 = inlined_call_operand.vmem [shape: f32[1,128], index: 2, kind: input, shape index: {}]
  %s3 = inlined_call_operand.vmem [shape: bf16[128,128], index: 3, kind: output, shape index: {}]
  %s4 = sld [smem:[#allocation0]]
  $region22: #{resnet2_forward.22} parent=0
    _
  %s6 = ssub.s32 1, %s4
  %s7 = scalar_select 0, %s6, %s4
  // Predicated region
  $region2: #{resnet2_forward.22} parent=0 // pred_check
    _
  $region3: #{resnet2_forward.22} parent=0 // pred_check_branch
    %9 = sbr.rel (0) target = $region5
  $region4: #{resnet2_forward.22} parent=0 // pred_region
    _
  $region5: #{resnet2_forward.22} parent=0 // pred_fallthru
    _
  // Predicated region
  $region6: #{resnet2_forward.22} parent=0 // pred_check
    _
  $region7: #{resnet2_forward.22} parent=0 // pred_check_branch
    %11 = sbr.rel (0) target = $region9
  $region8: #{resnet2_forward.22} parent=0 // pred_region
    _
  $region9: #{resnet2_forward.22} parent=0 // pred_fallthru
    _
  // Predicated region
  $region10: #{resnet2_forward.22} parent=0 // pred_check
    _
  $region11: #{resnet2_forward.22} parent=0 // pred_check_branch
    %13 = sbr.rel (0) target = $region13
  $region12: #{resnet2_forward.22} parent=0 // pred_region
    _
  $region13: #{resnet2_forward.22} parent=0 // pred_fallthru
    _
  %v14 = vld [vmem:[%s0] sm:$0xff]
  %v15 = vld [vmem:[%s0 + $0x8] sm:$0xff]
  %v16 = vld [vmem:[%s0 + $0x10] sm:$0xff]
  %v17 = vld [vmem:[%s0 + $0x18] sm:$0xff]
  %v18 = vld [vmem:[%s0 + $0x20] sm:$0xff]
  %v19 = vld [vmem:[%s0 + $0x28] sm:$0xff]
  %v20 = vld [vmem:[%s0 + $0x30] sm:$0xff]
  %v21 = vld [vmem:[%s0 + $0x38] sm:$0xff]
  %v22 = vld [vmem:[%s0 + $0x40] sm:$0xff]
  %v23 = vld [vmem:[%s0 + $0x48] sm:$0xff]
  %v24 = vld [vmem:[%s0 + $0x50] sm:$0xff]
  %v25 = vld [vmem:[%s0 + $0x58] sm:$0xff]
  %v26 = vld [vmem:[%s0 + $0x60] sm:$0xff]
  %v27 = vld [vmem:[%s0 + $0x68] sm:$0xff]
  %v28 = vld [vmem:[%s0 + $0x70] sm:$0xff]
  %v29 = vld [vmem:[%s0 + $0x78] sm:$0xff]
  %v30 = vld [vmem:[%s1] sm:$0x1]
  %v32 = vlaneseq
  %v33 = vshrl.u32 %v32, 7
  %v34 = vsub.s32 0, %v33
  %v35 = vrot.slane %v30, %v34
  %v37 = vmul.f32 %v14, %v35
  %v38 = vmul.f32 %v15, %v35
  %v39 = vmul.f32 %v16, %v35
  %v40 = vmul.f32 %v17, %v35
  %v41 = vmul.f32 %v18, %v35
  %v42 = vmul.f32 %v19, %v35
  %v43 = vmul.f32 %v20, %v35
  %v44 = vmul.f32 %v21, %v35
  %v45 = vmul.f32 %v22, %v35
  %v46 = vmul.f32 %v23, %v35
  %v47 = vmul.f32 %v24, %v35
  %v48 = vmul.f32 %v25, %v35
  %v49 = vmul.f32 %v26, %v35
  %v50 = vmul.f32 %v27, %v35
  %v51 = vmul.f32 %v28, %v35
  %v52 = vmul.f32 %v29, %v35
  %v53 = vld [vmem:[%s2] sm:$0x1]
  %v55 = vlaneseq
  %v56 = vshrl.u32 %v55, 7
  %v57 = vsub.s32 0, %v56
  %v58 = vrot.slane %v53, %v57
  %v60 = vadd.f32 %v37, %v58
  %v61 = vadd.f32 %v38, %v58
  %v62 = vadd.f32 %v39, %v58
  %v63 = vadd.f32 %v40, %v58
  %v64 = vadd.f32 %v41, %v58
  %v65 = vadd.f32 %v42, %v58
  %v66 = vadd.f32 %v43, %v58
  %v67 = vadd.f32 %v44, %v58
  %v68 = vadd.f32 %v45, %v58
  %v69 = vadd.f32 %v46, %v58
  %v70 = vadd.f32 %v47, %v58
  %v71 = vadd.f32 %v48, %v58
  %v72 = vadd.f32 %v49, %v58
  %v73 = vadd.f32 %v50, %v58
  %v74 = vadd.f32 %v51, %v58
  %v75 = vadd.f32 %v52, %v58
  %v76 = vmax.f32 %v60, 0.0
  %v77 = vmax.f32 %v61, 0.0
  %v78 = vmax.f32 %v62, 0.0
  %v79 = vmax.f32 %v63, 0.0
  %v80 = vmax.f32 %v64, 0.0
  %v81 = vmax.f32 %v65, 0.0
  %v82 = vmax.f32 %v66, 0.0
  %v83 = vmax.f32 %v67, 0.0
  %v84 = vmax.f32 %v68, 0.0
  %v85 = vmax.f32 %v69, 0.0
  %v86 = vmax.f32 %v70, 0.0
  %v87 = vmax.f32 %v71, 0.0
  %v88 = vmax.f32 %v72, 0.0
  %v89 = vmax.f32 %v73, 0.0
  %v90 = vmax.f32 %v74, 0.0
  %v91 = vmax.f32 %v75, 0.0
  %v92 = vpack.c.bf16 %v77, %v76
  %v93 = vpack.c.bf16 %v79, %v78
  %v94 = vpack.c.bf16 %v81, %v80
  %v95 = vpack.c.bf16 %v83, %v82
  %v96 = vpack.c.bf16 %v85, %v84
  %v97 = vpack.c.bf16 %v87, %v86
  %v98 = vpack.c.bf16 %v89, %v88
  %v99 = vpack.c.bf16 %v91, %v90
  %v108 = vunpack.c.l.b16 %v92
  %v109 = vunpack.c.h.b16 %v92
  %v110 = vunpack.c.l.b16 %v93
  %v111 = vunpack.c.h.b16 %v93
  %v112 = vunpack.c.l.b16 %v94
  %v113 = vunpack.c.h.b16 %v94
  %v114 = vunpack.c.l.b16 %v95
  %v115 = vunpack.c.h.b16 %v95
  %v116 = vunpack.c.l.b16 %v96
  %v117 = vunpack.c.h.b16 %v96
  %v118 = vunpack.c.l.b16 %v97
  %v119 = vunpack.c.h.b16 %v97
  %v120 = vunpack.c.l.b16 %v98
  %v121 = vunpack.c.h.b16 %v98
  %v122 = vunpack.c.l.b16 %v99
  %v123 = vunpack.c.h.b16 %v99
  %v124 = vpack.c.b16 %v108, %v108
  %v125 = vpack.c.b16 %v109, %v109
  %v126 = vpack.c.b16 %v110, %v110
  %v127 = vpack.c.b16 %v111, %v111
  %v128 = vpack.c.b16 %v112, %v112
  %v129 = vpack.c.b16 %v113, %v113
  %v130 = vpack.c.b16 %v114, %v114
  %v131 = vpack.c.b16 %v115, %v115
  %v132 = vpack.c.b16 %v116, %v116
  %v133 = vpack.c.b16 %v117, %v117
  %v134 = vpack.c.b16 %v118, %v118
  %v135 = vpack.c.b16 %v119, %v119
  %v136 = vpack.c.b16 %v120, %v120
  %v137 = vpack.c.b16 %v121, %v121
  %v138 = vpack.c.b16 %v122, %v122
  %v139 = vpack.c.b16 %v123, %v123
  %156 = vst [vmem:[%s3] sm:$0xf] %v124
  %157 = vst [vmem:[%s3 + $0x4] sm:$0xf] %v125
  %158 = vst [vmem:[%s3 + $0x8] sm:$0xf] %v126
  %159 = vst [vmem:[%s3 + $0xc] sm:$0xf] %v127
  %160 = vst [vmem:[%s3 + $0x10] sm:$0xf] %v128
  %161 = vst [vmem:[%s3 + $0x14] sm:$0xf] %v129
  %162 = vst [vmem:[%s3 + $0x18] sm:$0xf] %v130
  %163 = vst [vmem:[%s3 + $0x1c] sm:$0xf] %v131
  %164 = vst [vmem:[%s3 + $0x20] sm:$0xf] %v132
  %165 = vst [vmem:[%s3 + $0x24] sm:$0xf] %v133
  %166 = vst [vmem:[%s3 + $0x28] sm:$0xf] %v134
  %167 = vst [vmem:[%s3 + $0x2c] sm:$0xf] %v135
  %168 = vst [vmem:[%s3 + $0x30] sm:$0xf] %v136
  %169 = vst [vmem:[%s3 + $0x34] sm:$0xf] %v137
  %170 = vst [vmem:[%s3 + $0x38] sm:$0xf] %v138
  %171 = vst [vmem:[%s3 + $0x3c] sm:$0xf] %v139
  // Predicated region
  $region14: #{resnet2_forward.22} parent=0 // pred_check
    _
  $region15: #{resnet2_forward.22} parent=0 // pred_check_branch
    %173 = sbr.rel (0) target = $region17
  $region16: #{resnet2_forward.22} parent=0 // pred_region
    _
  $region17: #{resnet2_forward.22} parent=0 // pred_fallthru
    _
  // Predicated region
  $region18: #{resnet2_forward.22} parent=0 // pred_check
    _
  $region19: #{resnet2_forward.22} parent=0 // pred_check_branch
    %175 = sbr.rel (0) target = $region21
  $region20: #{resnet2_forward.22} parent=0 // pred_region
    _
  $region21: #{resnet2_forward.22} parent=0 // pred_fallthru
    _

// kernel: resnet2_forward.23
$region0: #{resnet2_forward.23}
  #allocation0 [shape = 'u32[]', space=smem, size = 0x4, offset = 0x4, fixed_abs, tag = 'smem constant byte address 0x4 - core index']
  #allocation1 [shape = 'u32[144,128]{1,0:T(1,128)}', space=vmem, size = 0x12000, scoped, tag = 'internal scratch']
  %s0 = inlined_call_operand.vmem [shape: bf16[512,288], index: 0, kind: input, shape index: {}]
  %s1 = inlined_call_operand.vmem [shape: bf16[288,32], index: 1, kind: input, shape index: {}]
  %s2 = inlined_call_operand.vmem [shape: f32[512,32], index: 2, kind: output, shape index: {0}]
  %s3 = inlined_call_operand.vmem [shape: f32[16,32], index: 3, kind: output, shape index: {1}]
  %4 = xla_tuple %s2, %s3
  %s5 = sld [smem:[#allocation0]]
  $region49: #{resnet2_forward.23} parent=0
    _
  %s7 = ssub.s32 1, %s5
  %s8 = scalar_select 0, %s7, %s5
  loop: start=0, step=1, limit=4
  $region2: #{resnet2_forward.23} parent=0 // loop_pre_header
    _
  $region3: #{resnet2_forward.23} parent=0 // loop_header
    %s10 = sphi 0, %s14
    %p11 = scmp.ge.s32.totalorder %s10, 4
    %s20 = sphi 0, %s22
    %s23 = sphi 0, %s20
    %s24 = sphi 0, %s23
    %s40 = sphi 0, %s24
    %s44 = sphi 0, %s44
    %s46 = sphi 0, %s44
    %s47 = sphi 0, %s46
    %s61 = sphi 0, %s47
    %s67 = sphi 0, %s69
    %s70 = sphi 0, %s67
    %s71 = sphi 0, %s70
    %s87 = sphi 0, %s71
    %s93 = sphi 0, %s95
    %s96 = sphi 0, %s93
    %s97 = sphi 0, %s96
    %s113 = sphi 0, %s97
  $region4: #{resnet2_forward.23} parent=0 // loop_header_branch
    %13 = sbr.rel (%p11) target = $region8
  $region5: #{resnet2_forward.23} parent=0 // loop_body
    %s15 = ssub.s32 %s10, 1
    %s16 = ssub.s32 %s10, 2
    %s17 = sadd.s32 %s10, 1
    %s18 = ssub.s32 %s10, %s17
    %p19 = scmp.eq.s32.totalorder %s18, 0
    %s21 = sadd.s32 %s20, 1
    %s22 = scalar_select %p19, %s20, %s21
    %p25 = pneg %p19
    %p26 = scmp.eq.s32.totalorder %s10, 1
    %p27 = por %p25, %p26
    %p28 = scmp.ne.s32.totalorder %s20, %s23
    %p29 = scmp.eq.s32.totalorder %s10, 0
    %p30 = por %p28, %p29
    %p31 = scmp.ne.s32.totalorder %s20, %s23
    %p32 = scmp.eq.s32.totalorder %s15, 1
    %p33 = por %p31, %p32
    %p34 = scmp.ne.s32.totalorder %s23, %s24
    %p35 = scmp.eq.s32.totalorder %s15, 0
    %p36 = por %p34, %p35
    %p37 = scmp.ne.s32.totalorder %s23, %s24
    %p38 = scmp.eq.s32.totalorder %s16, 1
    %p39 = por %p37, %p38
    %p41 = scmp.ne.s32.totalorder %s24, %s40
    %p42 = scmp.eq.s32.totalorder %s16, 0
    %p43 = por %p41, %p42
    %s45 = sadd.s32 %s44, 1
    %p48 = scmp.eq.s32.totalorder %s10, 1
    %p49 = scmp.ne.s32.totalorder %s44, %s46
    %p50 = scmp.eq.s32.totalorder %s10, 0
    %p51 = por %p49, %p50
    %p52 = scmp.ne.s32.totalorder %s44, %s46
    %p53 = scmp.eq.s32.totalorder %s15, 1
    %p54 = por %p52, %p53
    %p55 = scmp.ne.s32.totalorder %s46, %s47
    %p56 = scmp.eq.s32.totalorder %s15, 0
    %p57 = por %p55, %p56
    %p58 = scmp.ne.s32.totalorder %s46, %s47
    %p59 = scmp.eq.s32.totalorder %s16, 1
    %p60 = por %p58, %p59
    %p62 = scmp.ne.s32.totalorder %s47, %s61
    %p63 = scmp.eq.s32.totalorder %s16, 0
    %p64 = por %p62, %p63
    %s65 = ssub.s32 %s10, %s17
    %p66 = scmp.eq.s32.totalorder %s65, 0
    %s68 = sadd.s32 %s67, 1
    %s69 = scalar_select %p66, %s67, %s68
    %p72 = pneg %p66
    %p73 = scmp.eq.s32.totalorder %s10, 1
    %p74 = por %p72, %p73
    %p75 = scmp.ne.s32.totalorder %s67, %s70
    %p76 = scmp.eq.s32.totalorder %s10, 0
    %p77 = por %p75, %p76
    %p78 = scmp.ne.s32.totalorder %s67, %s70
    %p79 = scmp.eq.s32.totalorder %s15, 1
    %p80 = por %p78, %p79
    %p81 = scmp.ne.s32.totalorder %s70, %s71
    %p82 = scmp.eq.s32.totalorder %s15, 0
    %p83 = por %p81, %p82
    %p84 = scmp.ne.s32.totalorder %s70, %s71
    %p85 = scmp.eq.s32.totalorder %s16, 1
    %p86 = por %p84, %p85
    %p88 = scmp.ne.s32.totalorder %s71, %s87
    %p89 = scmp.eq.s32.totalorder %s16, 0
    %p90 = por %p88, %p89
    %s91 = ssub.s32 %s10, %s17
    %p92 = scmp.eq.s32.totalorder %s91, 0
    %s94 = sadd.s32 %s93, 1
    %s95 = scalar_select %p92, %s93, %s94
    %p98 = pneg %p92
    %p99 = scmp.eq.s32.totalorder %s10, 1
    %p100 = por %p98, %p99
    %p101 = scmp.ne.s32.totalorder %s93, %s96
    %p102 = scmp.eq.s32.totalorder %s10, 0
    %p103 = por %p101, %p102
    %p104 = scmp.ne.s32.totalorder %s93, %s96
    %p105 = scmp.eq.s32.totalorder %s15, 1
    %p106 = por %p104, %p105
    %p107 = scmp.ne.s32.totalorder %s96, %s97
    %p108 = scmp.eq.s32.totalorder %s15, 0
    %p109 = por %p107, %p108
    %p110 = scmp.ne.s32.totalorder %s96, %s97
    %p111 = scmp.eq.s32.totalorder %s16, 1
    %p112 = por %p110, %p111
    %p114 = scmp.ne.s32.totalorder %s97, %s113
    %p115 = scmp.eq.s32.totalorder %s16, 0
    %p116 = por %p114, %p115
    %p117 = scmp.le.s32.totalorder 1, %s10
    %p118 = scmp.lt.s32.totalorder %s10, 3
    %p119 = pnand %p117, %p118
    %p120 = pneg %p119
    // Predicated region
    $region9: #{resnet2_forward.23} parent=5 // pred_check
      _
    $region10: #{resnet2_forward.23} parent=5 // pred_check_branch
      %122 = sbr.rel (%p119) target = $region12
    $region11: #{resnet2_forward.23} parent=5 // pred_region
      %s123 = ssub.s32 %s10, 1
      // Predicated region
      $region13: #{resnet2_forward.23} parent=11 // pred_check
        %p124 = pneg %p57
      $region14: #{resnet2_forward.23} parent=11 // pred_check_branch
        %126 = sbr.rel (%p124) target = $region16
      $region15: #{resnet2_forward.23} parent=11 // pred_region
        _
      $region16: #{resnet2_forward.23} parent=11 // pred_fallthru
        _
    $region12: #{resnet2_forward.23} parent=5 // pred_fallthru
      _
    %p127 = scmp.lt.s32.totalorder %s10, 2
    // Predicated region
    $region17: #{resnet2_forward.23} parent=5 // pred_check
      %p128 = pneg %p127
    $region18: #{resnet2_forward.23} parent=5 // pred_check_branch
      %130 = sbr.rel (%p128) target = $region20
    $region19: #{resnet2_forward.23} parent=5 // pred_region
      // Predicated region
      $region21: #{resnet2_forward.23} parent=19 // pred_check
        %p131 = pneg %p30
      $region22: #{resnet2_forward.23} parent=19 // pred_check_branch
        %133 = sbr.rel (%p131) target = $region24
      $region23: #{resnet2_forward.23} parent=19 // pred_region
        %s134 = smul.u32 32, %s10
        %p135 = scmp.lt.s32.totalorder %s134, 63
        %s136 = scalar_select %p135, %s134, 63
        %s137 = smul.addr %s136, 3
        %s138 = smul.addr %s137, 4
        %s139 = scalar_lea.vmem %s0, %s138
        %s140 = smul.u32 32, %s10
      $region24: #{resnet2_forward.23} parent=19 // pred_fallthru
        _
    $region20: #{resnet2_forward.23} parent=5 // pred_fallthru
      _
    %p141 = scmp.le.s32.totalorder 1, %s10
    %p142 = scmp.lt.s32.totalorder %s10, 3
    %p143 = pnand %p141, %p142
    %p144 = pneg %p143
    // Predicated region
    $region25: #{resnet2_forward.23} parent=5 // pred_check
      _
    $region26: #{resnet2_forward.23} parent=5 // pred_check_branch
      %146 = sbr.rel (%p143) target = $region28
    $region27: #{resnet2_forward.23} parent=5 // pred_region
      %s147 = ssub.s32 %s10, 1
      %s148 = smul.u32 32, %s15
      %p149 = scmp.lt.s32.totalorder %s148, 63
      %s150 = scalar_select %p149, %s148, 63
      %s151 = smul.addr %s150, 3
      %s152 = smul.addr %s151, 4
      %s153 = scalar_lea.vmem %s0, %s152
      %p154 = pneg %p36
      %p155 = pneg %p33
      %p156 = pneg %p57
      %p157 = pneg %p54
      %p158 = pneg %p83
      %p159 = pneg %p80
      %s160 = smul.u32 32, %s15
      %p161 = scmp.lt.s32.totalorder %s160, 63
      %s162 = scalar_select %p161, %s160, 63
      %s163 = smul.addr %s162, 8
      %s164 = scalar_lea.vmem %s2, %s163
      %p165 = pneg %p109
      %p166 = pneg %p106
      %p167 = scmp.lt.s32.totalorder %s15, 1
      %s168 = scalar_select %p167, %s15, 1
      %s169 = smul.addr %s168, 8
      %s170 = scalar_lea.vmem %s3, %s169
      %s171 = smul.u32 32, %s15
      %p172 = scmp.lt.s32.totalorder %s171, 63
      %s173 = scalar_select %p172, %s171, 63
      %s174 = smul.addr %s173, 3
      %s175 = smul.addr %s174, 4
      %s176 = scalar_lea.vmem %s0, %s175
      %s177 = smul.u32 32, %s15
      %s178 = smul.u32 32, %s15
      %p179 = scmp.lt.s32.totalorder %s178, 63
      %s180 = scalar_select %p179, %s178, 63
      %s181 = smul.addr %s180, 8
      %s182 = scalar_lea.vmem %s2, %s181
      %s183 = smul.u32 32, %s15
      %p184 = scmp.lt.s32.totalorder %s15, 1
      %s185 = scalar_select %p184, %s15, 1
      %s186 = smul.addr %s185, 8
      %s187 = scalar_lea.vmem %s3, %s186
      %v189 = vld [vmem:[%s176] sm:$0xff]
      %v190 = vld [vmem:[%s176 + $0x8] sm:$0xf]
      %v191 = vld [vmem:[%s176 + $0xc] sm:$0xff]
      %v192 = vld [vmem:[%s176 + $0x14] sm:$0xf]
      %v193 = vld [vmem:[%s176 + $0x18] sm:$0xff]
      %v194 = vld [vmem:[%s176 + $0x20] sm:$0xf]
      %v195 = vld [vmem:[%s176 + $0x24] sm:$0xff]
      %v196 = vld [vmem:[%s176 + $0x2c] sm:$0xf]
      %v197 = vld [vmem:[%s176 + $0x30] sm:$0xff]
      %v198 = vld [vmem:[%s176 + $0x38] sm:$0xf]
      %v199 = vld [vmem:[%s176 + $0x3c] sm:$0xff]
      %v200 = vld [vmem:[%s176 + $0x44] sm:$0xf]
      %v201 = vld [vmem:[%s176 + $0x48] sm:$0xff]
      %v202 = vld [vmem:[%s176 + $0x50] sm:$0xf]
      %v203 = vld [vmem:[%s176 + $0x54] sm:$0xff]
      %v204 = vld [vmem:[%s176 + $0x5c] sm:$0xf]
      %v205 = vld [vmem:[%s176 + $0x60] sm:$0xff]
      %v206 = vld [vmem:[%s176 + $0x68] sm:$0xf]
      %v207 = vld [vmem:[%s176 + $0x6c] sm:$0xff]
      %v208 = vld [vmem:[%s176 + $0x74] sm:$0xf]
      %v209 = vld [vmem:[%s176 + $0x78] sm:$0xff]
      %v210 = vld [vmem:[%s176 + $0x80] sm:$0xf]
      %v211 = vld [vmem:[%s176 + $0x84] sm:$0xff]
      %v212 = vld [vmem:[%s176 + $0x8c] sm:$0xf]
      %v213 = vld [vmem:[%s176 + $0x90] sm:$0xff]
      %v214 = vld [vmem:[%s176 + $0x98] sm:$0xf]
      %v215 = vld [vmem:[%s176 + $0x9c] sm:$0xff]
      %v216 = vld [vmem:[%s176 + $0xa4] sm:$0xf]
      %v217 = vld [vmem:[%s176 + $0xa8] sm:$0xff]
      %v218 = vld [vmem:[%s176 + $0xb0] sm:$0xf]
      %v219 = vld [vmem:[%s176 + $0xb4] sm:$0xff]
      %v220 = vld [vmem:[%s176 + $0xbc] sm:$0xf]
      %v221 = vld [vmem:[%s176 + $0xc0] sm:$0xff]
      %v222 = vld [vmem:[%s176 + $0xc8] sm:$0xf]
      %v223 = vld [vmem:[%s176 + $0xcc] sm:$0xff]
      %v224 = vld [vmem:[%s176 + $0xd4] sm:$0xf]
      %v225 = vld [vmem:[%s176 + $0xd8] sm:$0xff]
      %v226 = vld [vmem:[%s176 + $0xe0] sm:$0xf]
      %v227 = vld [vmem:[%s176 + $0xe4] sm:$0xff]
      %v228 = vld [vmem:[%s176 + $0xec] sm:$0xf]
      %v229 = vld [vmem:[%s176 + $0xf0] sm:$0xff]
      %v230 = vld [vmem:[%s176 + $0xf8] sm:$0xf]
      %v231 = vld [vmem:[%s176 + $0xfc] sm:$0xff]
      %v232 = vld [vmem:[%s176 + $0x104] sm:$0xf]
      %v233 = vld [vmem:[%s176 + $0x108] sm:$0xff]
      %v234 = vld [vmem:[%s176 + $0x110] sm:$0xf]
      %v235 = vld [vmem:[%s176 + $0x114] sm:$0xff]
      %v236 = vld [vmem:[%s176 + $0x11c] sm:$0xf]
      %v237 = vld [vmem:[%s176 + $0x120] sm:$0xff]
      %v238 = vld [vmem:[%s176 + $0x128] sm:$0xf]
      %v239 = vld [vmem:[%s176 + $0x12c] sm:$0xff]
      %v240 = vld [vmem:[%s176 + $0x134] sm:$0xf]
      %v241 = vld [vmem:[%s176 + $0x138] sm:$0xff]
      %v242 = vld [vmem:[%s176 + $0x140] sm:$0xf]
      %v243 = vld [vmem:[%s176 + $0x144] sm:$0xff]
      %v244 = vld [vmem:[%s176 + $0x14c] sm:$0xf]
      %v245 = vld [vmem:[%s176 + $0x150] sm:$0xff]
      %v246 = vld [vmem:[%s176 + $0x158] sm:$0xf]
      %v247 = vld [vmem:[%s176 + $0x15c] sm:$0xff]
      %v248 = vld [vmem:[%s176 + $0x164] sm:$0xf]
      %v249 = vld [vmem:[%s176 + $0x168] sm:$0xff]
      %v250 = vld [vmem:[%s176 + $0x170] sm:$0xf]
      %v251 = vld [vmem:[%s176 + $0x174] sm:$0xff]
      %v252 = vld [vmem:[%s176 + $0x17c] sm:$0xf]
      %v253 = vld [vmem:[%s1] sm:$0xf]
      %v254 = vld [vmem:[%s1 + $0x4] sm:$0xf]
      %v255 = vld [vmem:[%s1 + $0x8] sm:$0xf]
      %v256 = vld [vmem:[%s1 + $0xc] sm:$0xf]
      %v257 = vld [vmem:[%s1 + $0x10] sm:$0xf]
      %v258 = vld [vmem:[%s1 + $0x14] sm:$0xf]
      %v259 = vld [vmem:[%s1 + $0x18] sm:$0xf]
      %v260 = vld [vmem:[%s1 + $0x1c] sm:$0xf]
      %v261 = vld [vmem:[%s1 + $0x20] sm:$0xf]
      %v262 = vld [vmem:[%s1 + $0x24] sm:$0xf]
      %v263 = vld [vmem:[%s1 + $0x28] sm:$0xf]
      %v264 = vld [vmem:[%s1 + $0x2c] sm:$0xf]
      %v265 = vld [vmem:[%s1 + $0x30] sm:$0xf]
      %v266 = vld [vmem:[%s1 + $0x34] sm:$0xf]
      %v267 = vld [vmem:[%s1 + $0x38] sm:$0xf]
      %v268 = vld [vmem:[%s1 + $0x3c] sm:$0xf]
      %v269 = vld [vmem:[%s1 + $0x40] sm:$0xf]
      %v270 = vld [vmem:[%s1 + $0x44] sm:$0xf]
      %v271 = vld [vmem:[%s1 + $0x48] sm:$0xf]
      %v272 = vld [vmem:[%s1 + $0x4c] sm:$0xf]
      %v273 = vld [vmem:[%s1 + $0x50] sm:$0xf]
      %v274 = vld [vmem:[%s1 + $0x54] sm:$0xf]
      %v275 = vld [vmem:[%s1 + $0x58] sm:$0xf]
      %v276 = vld [vmem:[%s1 + $0x5c] sm:$0xf]
      %v277 = vld [vmem:[%s1 + $0x60] sm:$0xf]
      %v278 = vld [vmem:[%s1 + $0x64] sm:$0xf]
      %v279 = vld [vmem:[%s1 + $0x68] sm:$0xf]
      %v280 = vld [vmem:[%s1 + $0x6c] sm:$0xf]
      %v281 = vld [vmem:[%s1 + $0x70] sm:$0xf]
      %v282 = vld [vmem:[%s1 + $0x74] sm:$0xf]
      %v283 = vld [vmem:[%s1 + $0x78] sm:$0xf]
      %v284 = vld [vmem:[%s1 + $0x7c] sm:$0xf]
      %v285 = vld [vmem:[%s1 + $0x80] sm:$0xf]
      %v286 = vld [vmem:[%s1 + $0x84] sm:$0xf]
      %v287 = vld [vmem:[%s1 + $0x88] sm:$0xf]
      %v288 = vld [vmem:[%s1 + $0x8c] sm:$0xf]
      %v353 = vunpack.c.l.b16 %v189
      %v354 = vunpack.c.h.b16 %v189
      %v355 = vunpack.c.l.b16 %v190
      %v356 = vunpack.c.l.b16 %v191
      %v357 = vunpack.c.h.b16 %v191
      %v358 = vunpack.c.l.b16 %v192
      %v359 = vunpack.c.l.b16 %v193
      %v360 = vunpack.c.h.b16 %v193
      %v361 = vunpack.c.l.b16 %v194
      %v362 = vunpack.c.l.b16 %v195
      %v363 = vunpack.c.h.b16 %v195
      %v364 = vunpack.c.l.b16 %v196
      %v365 = vunpack.c.l.b16 %v197
      %v366 = vunpack.c.h.b16 %v197
      %v367 = vunpack.c.l.b16 %v198
      %v368 = vunpack.c.l.b16 %v199
      %v369 = vunpack.c.h.b16 %v199
      %v370 = vunpack.c.l.b16 %v200
      %v371 = vunpack.c.l.b16 %v201
      %v372 = vunpack.c.h.b16 %v201
      %v373 = vunpack.c.l.b16 %v202
      %v374 = vunpack.c.l.b16 %v203
      %v375 = vunpack.c.h.b16 %v203
      %v376 = vunpack.c.l.b16 %v204
      %v377 = vunpack.c.l.b16 %v205
      %v378 = vunpack.c.h.b16 %v205
      %v379 = vunpack.c.l.b16 %v206
      %v380 = vunpack.c.l.b16 %v207
      %v381 = vunpack.c.h.b16 %v207
      %v382 = vunpack.c.l.b16 %v208
      %v383 = vunpack.c.l.b16 %v209
      %v384 = vunpack.c.h.b16 %v209
      %v385 = vunpack.c.l.b16 %v210
      %v386 = vunpack.c.l.b16 %v211
      %v387 = vunpack.c.h.b16 %v211
      %v388 = vunpack.c.l.b16 %v212
      %v389 = vunpack.c.l.b16 %v213
      %v390 = vunpack.c.h.b16 %v213
      %v391 = vunpack.c.l.b16 %v214
      %v392 = vunpack.c.l.b16 %v215
      %v393 = vunpack.c.h.b16 %v215
      %v394 = vunpack.c.l.b16 %v216
      %v395 = vunpack.c.l.b16 %v217
      %v396 = vunpack.c.h.b16 %v217
      %v397 = vunpack.c.l.b16 %v218
      %v398 = vunpack.c.l.b16 %v219
      %v399 = vunpack.c.h.b16 %v219
      %v400 = vunpack.c.l.b16 %v220
      %v401 = vunpack.c.l.b16 %v221
      %v402 = vunpack.c.h.b16 %v221
      %v403 = vunpack.c.l.b16 %v222
      %v404 = vunpack.c.l.b16 %v223
      %v405 = vunpack.c.h.b16 %v223
      %v406 = vunpack.c.l.b16 %v224
      %v407 = vunpack.c.l.b16 %v225
      %v408 = vunpack.c.h.b16 %v225
      %v409 = vunpack.c.l.b16 %v226
      %v410 = vunpack.c.l.b16 %v227
      %v411 = vunpack.c.h.b16 %v227
      %v412 = vunpack.c.l.b16 %v228
      %v413 = vunpack.c.l.b16 %v229
      %v414 = vunpack.c.h.b16 %v229
      %v415 = vunpack.c.l.b16 %v230
      %v416 = vunpack.c.l.b16 %v231
      %v417 = vunpack.c.h.b16 %v231
      %v418 = vunpack.c.l.b16 %v232
      %v419 = vunpack.c.l.b16 %v233
      %v420 = vunpack.c.h.b16 %v233
      %v421 = vunpack.c.l.b16 %v234
      %v422 = vunpack.c.l.b16 %v235
      %v423 = vunpack.c.h.b16 %v235
      %v424 = vunpack.c.l.b16 %v236
      %v425 = vunpack.c.l.b16 %v237
      %v426 = vunpack.c.h.b16 %v237
      %v427 = vunpack.c.l.b16 %v238
      %v428 = vunpack.c.l.b16 %v239
      %v429 = vunpack.c.h.b16 %v239
      %v430 = vunpack.c.l.b16 %v240
      %v431 = vunpack.c.l.b16 %v241
      %v432 = vunpack.c.h.b16 %v241
      %v433 = vunpack.c.l.b16 %v242
      %v434 = vunpack.c.l.b16 %v243
      %v435 = vunpack.c.h.b16 %v243
      %v436 = vunpack.c.l.b16 %v244
      %v437 = vunpack.c.l.b16 %v245
      %v438 = vunpack.c.h.b16 %v245
      %v439 = vunpack.c.l.b16 %v246
      %v440 = vunpack.c.l.b16 %v247
      %v441 = vunpack.c.h.b16 %v247
      %v442 = vunpack.c.l.b16 %v248
      %v443 = vunpack.c.l.b16 %v249
      %v444 = vunpack.c.h.b16 %v249
      %v445 = vunpack.c.l.b16 %v250
      %v446 = vunpack.c.l.b16 %v251
      %v447 = vunpack.c.h.b16 %v251
      %v448 = vunpack.c.l.b16 %v252
      %v449 = vpack.c.b16 %v356, %v353
      %v450 = vpack.c.b16 %v357, %v354
      %v451 = vpack.c.b16 %v358, %v355
      %v452 = vpack.c.b16 %v362, %v359
      %v453 = vpack.c.b16 %v363, %v360
      %v454 = vpack.c.b16 %v364, %v361
      %v455 = vpack.c.b16 %v368, %v365
      %v456 = vpack.c.b16 %v369, %v366
      %v457 = vpack.c.b16 %v370, %v367
      %v458 = vpack.c.b16 %v374, %v371
      %v459 = vpack.c.b16 %v375, %v372
      %v460 = vpack.c.b16 %v376, %v373
      %v461 = vpack.c.b16 %v380, %v377
      %v462 = vpack.c.b16 %v381, %v378
      %v463 = vpack.c.b16 %v382, %v379
      %v464 = vpack.c.b16 %v386, %v383
      %v465 = vpack.c.b16 %v387, %v384
      %v466 = vpack.c.b16 %v388, %v385
      %v467 = vpack.c.b16 %v392, %v389
      %v468 = vpack.c.b16 %v393, %v390
      %v469 = vpack.c.b16 %v394, %v391
      %v470 = vpack.c.b16 %v398, %v395
      %v471 = vpack.c.b16 %v399, %v396
      %v472 = vpack.c.b16 %v400, %v397
      %v473 = vpack.c.b16 %v404, %v401
      %v474 = vpack.c.b16 %v405, %v402
      %v475 = vpack.c.b16 %v406, %v403
      %v476 = vpack.c.b16 %v410, %v407
      %v477 = vpack.c.b16 %v411, %v408
      %v478 = vpack.c.b16 %v412, %v409
      %v479 = vpack.c.b16 %v416, %v413
      %v480 = vpack.c.b16 %v417, %v414
      %v481 = vpack.c.b16 %v418, %v415
      %v482 = vpack.c.b16 %v422, %v419
      %v483 = vpack.c.b16 %v423, %v420
      %v484 = vpack.c.b16 %v424, %v421
      %v485 = vpack.c.b16 %v428, %v425
      %v486 = vpack.c.b16 %v429, %v426
      %v487 = vpack.c.b16 %v430, %v427
      %v488 = vpack.c.b16 %v434, %v431
      %v489 = vpack.c.b16 %v435, %v432
      %v490 = vpack.c.b16 %v436, %v433
      %v491 = vpack.c.b16 %v440, %v437
      %v492 = vpack.c.b16 %v441, %v438
      %v493 = vpack.c.b16 %v442, %v439
      %v494 = vpack.c.b16 %v446, %v443
      %v495 = vpack.c.b16 %v447, %v444
      %v496 = vpack.c.b16 %v448, %v445
      %v565 = vunpack.c.l.b16 %v253
      %v566 = vunpack.c.l.b16 %v254
      %v567 = vunpack.c.l.b16 %v255
      %v568 = vunpack.c.l.b16 %v256
      %v569 = vunpack.c.l.b16 %v257
      %v570 = vunpack.c.l.b16 %v258
      %v571 = vunpack.c.l.b16 %v259
      %v572 = vunpack.c.l.b16 %v260
      %v573 = vunpack.c.l.b16 %v261
      %v574 = vunpack.c.l.b16 %v262
      %v575 = vunpack.c.l.b16 %v263
      %v576 = vunpack.c.l.b16 %v264
      %v577 = vunpack.c.l.b16 %v265
      %v578 = vunpack.c.l.b16 %v266
      %v579 = vunpack.c.l.b16 %v267
      %v580 = vunpack.c.l.b16 %v268
      %v581 = vunpack.c.l.b16 %v269
      %v582 = vunpack.c.l.b16 %v270
      %v583 = vunpack.c.l.b16 %v271
      %v584 = vunpack.c.l.b16 %v272
      %v585 = vunpack.c.l.b16 %v273
      %v586 = vunpack.c.l.b16 %v274
      %v587 = vunpack.c.l.b16 %v275
      %v588 = vunpack.c.l.b16 %v276
      %v589 = vunpack.c.l.b16 %v277
      %v590 = vunpack.c.l.b16 %v278
      %v591 = vunpack.c.l.b16 %v279
      %v592 = vunpack.c.l.b16 %v280
      %v593 = vunpack.c.l.b16 %v281
      %v594 = vunpack.c.l.b16 %v282
      %v595 = vunpack.c.l.b16 %v283
      %v596 = vunpack.c.l.b16 %v284
      %v597 = vunpack.c.l.b16 %v285
      %v598 = vunpack.c.l.b16 %v286
      %v599 = vunpack.c.l.b16 %v287
      %v600 = vunpack.c.l.b16 %v288
      %v601 = vpack.c.b16 %v566, %v565
      %v602 = vpack.c.b16 %v568, %v567
      %v603 = vpack.c.b16 %v570, %v569
      %v604 = vpack.c.b16 %v572, %v571
      %v605 = vpack.c.b16 %v574, %v573
      %v606 = vpack.c.b16 %v576, %v575
      %v607 = vpack.c.b16 %v578, %v577
      %v608 = vpack.c.b16 %v580, %v579
      %v609 = vpack.c.b16 %v582, %v581
      %v610 = vpack.c.b16 %v584, %v583
      %v611 = vpack.c.b16 %v586, %v585
      %v612 = vpack.c.b16 %v588, %v587
      %v613 = vpack.c.b16 %v590, %v589
      %v614 = vpack.c.b16 %v592, %v591
      %v615 = vpack.c.b16 %v594, %v593
      %v616 = vpack.c.b16 %v596, %v595
      %v617 = vpack.c.b16 %v598, %v597
      %v618 = vpack.c.b16 %v600, %v599
      %vm637 = vcmask 261120
      %v639 = vsel %vm637, %v451, 0
      %v642 = vsel %vm637, %v454, 0
      %v645 = vsel %vm637, %v457, 0
      %v648 = vsel %vm637, %v460, 0
      %v651 = vsel %vm637, %v463, 0
      %v654 = vsel %vm637, %v466, 0
      %v657 = vsel %vm637, %v469, 0
      %v660 = vsel %vm637, %v472, 0
      %v663 = vsel %vm637, %v475, 0
      %v666 = vsel %vm637, %v478, 0
      %v669 = vsel %vm637, %v481, 0
      %v672 = vsel %vm637, %v484, 0
      %v675 = vsel %vm637, %v487, 0
      %v678 = vsel %vm637, %v490, 0
      %v681 = vsel %vm637, %v493, 0
      %v684 = vsel %vm637, %v496, 0
      %686 = vmatprep.subr.bf16.mxu0 0
      %687 = vmatpush1.bf16.msra.mxu0 %v608
      %688 = vmatprep.subr.bf16.mxu0 0
      %689 = vmatpush1.bf16.msra.mxu0 %v607
      %690 = vmatprep.subr.bf16.mxu0 0
      %691 = vmatpush1.bf16.msra.mxu0 %v606
      %692 = vmatprep.subr.bf16.mxu0 0
      %693 = vmatpush1.bf16.msra.mxu0 %v605
      %694 = vmatprep.subr.bf16.mxu0 0
      %695 = vmatpush1.bf16.msra.mxu0 %v604
      %696 = vmatprep.subr.bf16.mxu0 0
      %697 = vmatpush1.bf16.msra.mxu0 %v603
      %698 = vmatprep.subr.bf16.mxu0 0
      %699 = vmatpush1.bf16.msra.mxu0 %v602
      %700 = vmatprep.subr.bf16.mxu0 0
      %701 = vmatpush1.bf16.msra.mxu0 %v601
      %702 = vmatprep.subr.bf16.mxu0 0
      %703 = vmatpush2.bf16.msra.mxu0 %v616
      %704 = vmatprep.subr.bf16.mxu0 0
      %705 = vmatpush2.bf16.msra.mxu0 %v615
      %706 = vmatprep.subr.bf16.mxu0 0
      %707 = vmatpush2.bf16.msra.mxu0 %v614
      %708 = vmatprep.subr.bf16.mxu0 0
      %709 = vmatpush2.bf16.msra.mxu0 %v613
      %710 = vmatprep.subr.bf16.mxu0 0
      %711 = vmatpush2.bf16.msra.mxu0 %v612
      %712 = vmatprep.subr.bf16.mxu0 0
      %713 = vmatpush2.bf16.msra.mxu0 %v611
      %714 = vmatprep.subr.bf16.mxu0 0
      %715 = vmatpush2.bf16.msra.mxu0 %v610
      %716 = vmatprep.subr.bf16.mxu0 0
      %717 = vmatpush2.bf16.msra.mxu0 %v609
      %718 = vmatprep.mubr.bf16.mxu0 %v450
      %719 = vmatmul.mubr.bf16.gmra.mxu0 %v449
      %v720 = vpop.f32.mrf.mxu0
      %v721 = vadd.f32 0.0, %v720
      %v722 = vpop.f32.mrf.mxu0
      %v723 = vpop.f32.mrf.mxu0
      %v724 = vadd.f32 0.0, %v723
      %v725 = vpop.f32.mrf.mxu0
      %726 = vmatprep.mubr.bf16.mxu0 %v453
      %727 = vmatmul.mubr.bf16.gmra.mxu0 %v452
      %v728 = vpop.f32.mrf.mxu0
      %v729 = vadd.f32 0.0, %v728
      %v730 = vpop.f32.mrf.mxu0
      %v731 = vpop.f32.mrf.mxu0
      %v732 = vadd.f32 0.0, %v731
      %v733 = vpop.f32.mrf.mxu0
      %734 = vmatprep.mubr.bf16.mxu0 %v456
      %735 = vmatmul.mubr.bf16.gmra.mxu0 %v455
      %v736 = vpop.f32.mrf.mxu0
      %v737 = vadd.f32 0.0, %v736
      %v738 = vpop.f32.mrf.mxu0
      %v739 = vpop.f32.mrf.mxu0
      %v740 = vadd.f32 0.0, %v739
      %v741 = vpop.f32.mrf.mxu0
      %742 = vmatprep.mubr.bf16.mxu0 %v459
      %743 = vmatmul.mubr.bf16.gmra.mxu0 %v458
      %v744 = vpop.f32.mrf.mxu0
      %v745 = vadd.f32 0.0, %v744
      %v746 = vpop.f32.mrf.mxu0
      %v747 = vpop.f32.mrf.mxu0
      %v748 = vadd.f32 0.0, %v747
      %v749 = vpop.f32.mrf.mxu0
      %750 = vmatprep.mubr.bf16.mxu0 %v462
      %751 = vmatmul.mubr.bf16.gmra.mxu0 %v461
      %v752 = vpop.f32.mrf.mxu0
      %v753 = vadd.f32 0.0, %v752
      %v754 = vpop.f32.mrf.mxu0
      %v755 = vpop.f32.mrf.mxu0
      %v756 = vadd.f32 0.0, %v755
      %v757 = vpop.f32.mrf.mxu0
      %758 = vmatprep.mubr.bf16.mxu0 %v465
      %759 = vmatmul.mubr.bf16.gmra.mxu0 %v464
      %v760 = vpop.f32.mrf.mxu0
      %v761 = vadd.f32 0.0, %v760
      %v762 = vpop.f32.mrf.mxu0
      %v763 = vpop.f32.mrf.mxu0
      %v764 = vadd.f32 0.0, %v763
      %v765 = vpop.f32.mrf.mxu0
      %766 = vmatprep.mubr.bf16.mxu0 %v468
      %767 = vmatmul.mubr.bf16.gmra.mxu0 %v467
      %v768 = vpop.f32.mrf.mxu0
      %v769 = vadd.f32 0.0, %v768
      %v770 = vpop.f32.mrf.mxu0
      %v771 = vpop.f32.mrf.mxu0
      %v772 = vadd.f32 0.0, %v771
      %v773 = vpop.f32.mrf.mxu0
      %774 = vmatprep.mubr.bf16.mxu0 %v471
      %775 = vmatmul.mubr.bf16.gmra.mxu0 %v470
      %v776 = vpop.f32.mrf.mxu0
      %v777 = vadd.f32 0.0, %v776
      %v778 = vpop.f32.mrf.mxu0
      %v779 = vpop.f32.mrf.mxu0
      %v780 = vadd.f32 0.0, %v779
      %v781 = vpop.f32.mrf.mxu0
      %782 = vmatprep.mubr.bf16.mxu0 %v474
      %783 = vmatmul.mubr.bf16.gmra.mxu0 %v473
      %v784 = vpop.f32.mrf.mxu0
      %v785 = vadd.f32 0.0, %v784
      %v786 = vpop.f32.mrf.mxu0
      %v787 = vpop.f32.mrf.mxu0
      %v788 = vadd.f32 0.0, %v787
      %v789 = vpop.f32.mrf.mxu0
      %790 = vmatprep.mubr.bf16.mxu0 %v477
      %791 = vmatmul.mubr.bf16.gmra.mxu0 %v476
      %v792 = vpop.f32.mrf.mxu0
      %v793 = vadd.f32 0.0, %v792
      %v794 = vpop.f32.mrf.mxu0
      %v795 = vpop.f32.mrf.mxu0
      %v796 = vadd.f32 0.0, %v795
      %v797 = vpop.f32.mrf.mxu0
      %798 = vmatprep.mubr.bf16.mxu0 %v480
      %799 = vmatmul.mubr.bf16.gmra.mxu0 %v479
      %v800 = vpop.f32.mrf.mxu0
      %v801 = vadd.f32 0.0, %v800
      %v802 = vpop.f32.mrf.mxu0
      %v803 = vpop.f32.mrf.mxu0
      %v804 = vadd.f32 0.0, %v803
      %v805 = vpop.f32.mrf.mxu0
      %806 = vmatprep.mubr.bf16.mxu0 %v483
      %807 = vmatmul.mubr.bf16.gmra.mxu0 %v482
      %v808 = vpop.f32.mrf.mxu0
      %v809 = vadd.f32 0.0, %v808
      %v810 = vpop.f32.mrf.mxu0
      %v811 = vpop.f32.mrf.mxu0
      %v812 = vadd.f32 0.0, %v811
      %v813 = vpop.f32.mrf.mxu0
      %814 = vmatprep.mubr.bf16.mxu0 %v486
      %815 = vmatmul.mubr.bf16.gmra.mxu0 %v485
      %v816 = vpop.f32.mrf.mxu0
      %v817 = vadd.f32 0.0, %v816
      %v818 = vpop.f32.mrf.mxu0
      %v819 = vpop.f32.mrf.mxu0
      %v820 = vadd.f32 0.0, %v819
      %v821 = vpop.f32.mrf.mxu0
      %822 = vmatprep.mubr.bf16.mxu0 %v489
      %823 = vmatmul.mubr.bf16.gmra.mxu0 %v488
      %v824 = vpop.f32.mrf.mxu0
      %v825 = vadd.f32 0.0, %v824
      %v826 = vpop.f32.mrf.mxu0
      %v827 = vpop.f32.mrf.mxu0
      %v828 = vadd.f32 0.0, %v827
      %v829 = vpop.f32.mrf.mxu0
      %830 = vmatprep.mubr.bf16.mxu0 %v492
      %831 = vmatmul.mubr.bf16.gmra.mxu0 %v491
      %v832 = vpop.f32.mrf.mxu0
      %v833 = vadd.f32 0.0, %v832
      %v834 = vpop.f32.mrf.mxu0
      %v835 = vpop.f32.mrf.mxu0
      %v836 = vadd.f32 0.0, %v835
      %v837 = vpop.f32.mrf.mxu0
      %838 = vmatprep.mubr.bf16.mxu0 %v495
      %839 = vmatmul.mubr.bf16.gmra.mxu0 %v494
      %v840 = vpop.f32.mrf.mxu0
      %v841 = vadd.f32 0.0, %v840
      %v842 = vpop.f32.mrf.mxu0
      %v843 = vpop.f32.mrf.mxu0
      %v844 = vadd.f32 0.0, %v843
      %v845 = vpop.f32.mrf.mxu0
      %846 = vdwg.mxu0
      %847 = vmatprep.subr.bf16.mxu0 0
      %848 = vmatpush1.bf16.msra.mxu0 0
      %849 = vmatprep.subr.bf16.mxu0 0
      %850 = vmatpush1.bf16.msra.mxu0 0
      %851 = vmatprep.subr.bf16.mxu0 0
      %852 = vmatpush1.bf16.msra.mxu0 0
      %853 = vmatprep.subr.bf16.mxu0 0
      %854 = vmatpush1.bf16.msra.mxu0 0
      %855 = vmatprep.subr.bf16.mxu0 0
      %856 = vmatpush1.bf16.msra.mxu0 0
      %857 = vmatprep.subr.bf16.mxu0 0
      %858 = vmatpush1.bf16.msra.mxu0 0
      %859 = vmatprep.subr.bf16.mxu0 0
      %860 = vmatpush1.bf16.msra.mxu0 %v618
      %861 = vmatprep.subr.bf16.mxu0 0
      %862 = vmatpush1.bf16.msra.mxu0 %v617
      %863 = vmatprep.subr.bf16.mxu0 0
      %864 = vmatpush2.bf16.msra.mxu0 0
      %865 = vmatprep.subr.bf16.mxu0 0
      %866 = vmatpush2.bf16.msra.mxu0 0
      %867 = vmatprep.subr.bf16.mxu0 0
      %868 = vmatpush2.bf16.msra.mxu0 0
      %869 = vmatprep.subr.bf16.mxu0 0
      %870 = vmatpush2.bf16.msra.mxu0 0
      %871 = vmatprep.subr.bf16.mxu0 0
      %872 = vmatpush2.bf16.msra.mxu0 0
      %873 = vmatprep.subr.bf16.mxu0 0
      %874 = vmatpush2.bf16.msra.mxu0 0
      %875 = vmatprep.subr.bf16.mxu0 0
      %876 = vmatpush2.bf16.msra.mxu0 0
      %877 = vmatprep.subr.bf16.mxu0 0
      %878 = vmatpush2.bf16.msra.mxu0 0
      %879 = vmatprep.mubr.bf16.mxu0 0
      %880 = vmatmul.mubr.bf16.gmra.mxu0 %v639
      %v881 = vpop.f32.mrf.mxu0
      %v882 = vadd.f32 %v721, %v881
      %v883 = vpop.f32.mrf.mxu0
      %v884 = vpop.f32.mrf.mxu0
      %v885 = vadd.f32 %v724, %v884
      %v886 = vpop.f32.mrf.mxu0
      %887 = vmatprep.mubr.bf16.mxu0 0
      %888 = vmatmul.mubr.bf16.gmra.mxu0 %v642
      %v889 = vpop.f32.mrf.mxu0
      %v890 = vadd.f32 %v729, %v889
      %v891 = vpop.f32.mrf.mxu0
      %v892 = vpop.f32.mrf.mxu0
      %v893 = vadd.f32 %v732, %v892
      %v894 = vpop.f32.mrf.mxu0
      %895 = vmatprep.mubr.bf16.mxu0 0
      %896 = vmatmul.mubr.bf16.gmra.mxu0 %v645
      %v897 = vpop.f32.mrf.mxu0
      %v898 = vadd.f32 %v737, %v897
      %v899 = vpop.f32.mrf.mxu0
      %v900 = vpop.f32.mrf.mxu0
      %v901 = vadd.f32 %v740, %v900
      %v902 = vpop.f32.mrf.mxu0
      %903 = vmatprep.mubr.bf16.mxu0 0
      %904 = vmatmul.mubr.bf16.gmra.mxu0 %v648
      %v905 = vpop.f32.mrf.mxu0
      %v906 = vadd.f32 %v745, %v905
      %v907 = vpop.f32.mrf.mxu0
      %v908 = vpop.f32.mrf.mxu0
      %v909 = vadd.f32 %v748, %v908
      %v910 = vpop.f32.mrf.mxu0
      %911 = vmatprep.mubr.bf16.mxu0 0
      %912 = vmatmul.mubr.bf16.gmra.mxu0 %v651
      %v913 = vpop.f32.mrf.mxu0
      %v914 = vadd.f32 %v753, %v913
      %v915 = vpop.f32.mrf.mxu0
      %v916 = vpop.f32.mrf.mxu0
      %v917 = vadd.f32 %v756, %v916
      %v918 = vpop.f32.mrf.mxu0
      %919 = vmatprep.mubr.bf16.mxu0 0
      %920 = vmatmul.mubr.bf16.gmra.mxu0 %v654
      %v921 = vpop.f32.mrf.mxu0
      %v922 = vadd.f32 %v761, %v921
      %v923 = vpop.f32.mrf.mxu0
      %v924 = vpop.f32.mrf.mxu0
      %v925 = vadd.f32 %v764, %v924
      %v926 = vpop.f32.mrf.mxu0
      %927 = vmatprep.mubr.bf16.mxu0 0
      %928 = vmatmul.mubr.bf16.gmra.mxu0 %v657
      %v929 = vpop.f32.mrf.mxu0
      %v930 = vadd.f32 %v769, %v929
      %v931 = vpop.f32.mrf.mxu0
      %v932 = vpop.f32.mrf.mxu0
      %v933 = vadd.f32 %v772, %v932
      %v934 = vpop.f32.mrf.mxu0
      %935 = vmatprep.mubr.bf16.mxu0 0
      %936 = vmatmul.mubr.bf16.gmra.mxu0 %v660
      %v937 = vpop.f32.mrf.mxu0
      %v938 = vadd.f32 %v777, %v937
      %v939 = vpop.f32.mrf.mxu0
      %v940 = vpop.f32.mrf.mxu0
      %v941 = vadd.f32 %v780, %v940
      %v942 = vpop.f32.mrf.mxu0
      %943 = vmatprep.mubr.bf16.mxu0 0
      %944 = vmatmul.mubr.bf16.gmra.mxu0 %v663
      %v945 = vpop.f32.mrf.mxu0
      %v946 = vadd.f32 %v785, %v945
      %v947 = vpop.f32.mrf.mxu0
      %v948 = vpop.f32.mrf.mxu0
      %v949 = vadd.f32 %v788, %v948
      %v950 = vpop.f32.mrf.mxu0
      %951 = vmatprep.mubr.bf16.mxu0 0
      %952 = vmatmul.mubr.bf16.gmra.mxu0 %v666
      %v953 = vpop.f32.mrf.mxu0
      %v954 = vadd.f32 %v793, %v953
      %v955 = vpop.f32.mrf.mxu0
      %v956 = vpop.f32.mrf.mxu0
      %v957 = vadd.f32 %v796, %v956
      %v958 = vpop.f32.mrf.mxu0
      %959 = vmatprep.mubr.bf16.mxu0 0
      %960 = vmatmul.mubr.bf16.gmra.mxu0 %v669
      %v961 = vpop.f32.mrf.mxu0
      %v962 = vadd.f32 %v801, %v961
      %v963 = vpop.f32.mrf.mxu0
      %v964 = vpop.f32.mrf.mxu0
      %v965 = vadd.f32 %v804, %v964
      %v966 = vpop.f32.mrf.mxu0
      %967 = vmatprep.mubr.bf16.mxu0 0
      %968 = vmatmul.mubr.bf16.gmra.mxu0 %v672
      %v969 = vpop.f32.mrf.mxu0
      %v970 = vadd.f32 %v809, %v969
      %v971 = vpop.f32.mrf.mxu0
      %v972 = vpop.f32.mrf.mxu0
      %v973 = vadd.f32 %v812, %v972
      %v974 = vpop.f32.mrf.mxu0
      %975 = vmatprep.mubr.bf16.mxu0 0
      %976 = vmatmul.mubr.bf16.gmra.mxu0 %v675
      %v977 = vpop.f32.mrf.mxu0
      %v978 = vadd.f32 %v817, %v977
      %v979 = vpop.f32.mrf.mxu0
      %v980 = vpop.f32.mrf.mxu0
      %v981 = vadd.f32 %v820, %v980
      %v982 = vpop.f32.mrf.mxu0
      %983 = vmatprep.mubr.bf16.mxu0 0
      %984 = vmatmul.mubr.bf16.gmra.mxu0 %v678
      %v985 = vpop.f32.mrf.mxu0
      %v986 = vadd.f32 %v825, %v985
      %v987 = vpop.f32.mrf.mxu0
      %v988 = vpop.f32.mrf.mxu0
      %v989 = vadd.f32 %v828, %v988
      %v990 = vpop.f32.mrf.mxu0
      %991 = vmatprep.mubr.bf16.mxu0 0
      %992 = vmatmul.mubr.bf16.gmra.mxu0 %v681
      %v993 = vpop.f32.mrf.mxu0
      %v994 = vadd.f32 %v833, %v993
      %v995 = vpop.f32.mrf.mxu0
      %v996 = vpop.f32.mrf.mxu0
      %v997 = vadd.f32 %v836, %v996
      %v998 = vpop.f32.mrf.mxu0
      %999 = vmatprep.mubr.bf16.mxu0 0
      %1000 = vmatmul.mubr.bf16.gmra.mxu0 %v684
      %v1001 = vpop.f32.mrf.mxu0
      %v1002 = vadd.f32 %v841, %v1001
      %v1003 = vpop.f32.mrf.mxu0
      %v1004 = vpop.f32.mrf.mxu0
      %v1005 = vadd.f32 %v844, %v1004
      %v1006 = vpop.f32.mrf.mxu0
      %1007 = vdwg.mxu0
      %1008 = vst.msk [vmem:[%s182] sm:$0xff] %vm637, %v882
      %1009 = vst.msk [vmem:[%s182 + $0x8] sm:$0xff] %vm637, %v885
      %1010 = vst.msk [vmem:[%s182 + $0x10] sm:$0xff] %vm637, %v890
      %1011 = vst.msk [vmem:[%s182 + $0x18] sm:$0xff] %vm637, %v893
      %1012 = vst.msk [vmem:[%s182 + $0x20] sm:$0xff] %vm637, %v898
      %1013 = vst.msk [vmem:[%s182 + $0x28] sm:$0xff] %vm637, %v901
      %1014 = vst.msk [vmem:[%s182 + $0x30] sm:$0xff] %vm637, %v906
      %1015 = vst.msk [vmem:[%s182 + $0x38] sm:$0xff] %vm637, %v909
      %1016 = vst.msk [vmem:[%s182 + $0x40] sm:$0xff] %vm637, %v914
      %1017 = vst.msk [vmem:[%s182 + $0x48] sm:$0xff] %vm637, %v917
      %1018 = vst.msk [vmem:[%s182 + $0x50] sm:$0xff] %vm637, %v922
      %1019 = vst.msk [vmem:[%s182 + $0x58] sm:$0xff] %vm637, %v925
      %1020 = vst.msk [vmem:[%s182 + $0x60] sm:$0xff] %vm637, %v930
      %1021 = vst.msk [vmem:[%s182 + $0x68] sm:$0xff] %vm637, %v933
      %1022 = vst.msk [vmem:[%s182 + $0x70] sm:$0xff] %vm637, %v938
      %1023 = vst.msk [vmem:[%s182 + $0x78] sm:$0xff] %vm637, %v941
      %1024 = vst.msk [vmem:[%s182 + $0x80] sm:$0xff] %vm637, %v946
      %1025 = vst.msk [vmem:[%s182 + $0x88] sm:$0xff] %vm637, %v949
      %1026 = vst.msk [vmem:[%s182 + $0x90] sm:$0xff] %vm637, %v954
      %1027 = vst.msk [vmem:[%s182 + $0x98] sm:$0xff] %vm637, %v957
      %1028 = vst.msk [vmem:[%s182 + $0xa0] sm:$0xff] %vm637, %v962
      %1029 = vst.msk [vmem:[%s182 + $0xa8] sm:$0xff] %vm637, %v965
      %1030 = vst.msk [vmem:[%s182 + $0xb0] sm:$0xff] %vm637, %v970
      %1031 = vst.msk [vmem:[%s182 + $0xb8] sm:$0xff] %vm637, %v973
      %1032 = vst.msk [vmem:[%s182 + $0xc0] sm:$0xff] %vm637, %v978
      %1033 = vst.msk [vmem:[%s182 + $0xc8] sm:$0xff] %vm637, %v981
      %1034 = vst.msk [vmem:[%s182 + $0xd0] sm:$0xff] %vm637, %v986
      %1035 = vst.msk [vmem:[%s182 + $0xd8] sm:$0xff] %vm637, %v989
      %1036 = vst.msk [vmem:[%s182 + $0xe0] sm:$0xff] %vm637, %v994
      %1037 = vst.msk [vmem:[%s182 + $0xe8] sm:$0xff] %vm637, %v997
      %1038 = vst.msk [vmem:[%s182 + $0xf0] sm:$0xff] %vm637, %v1002
      %1039 = vst.msk [vmem:[%s182 + $0xf8] sm:$0xff] %vm637, %v1005
      %v1040 = vsel %vm637, %v882, 0.0
      %v1041 = vsel %vm637, %v885, 0.0
      %v1042 = vadd.f32 %v1040, %v1041
      %v1043 = vsel %vm637, %v890, 0.0
      %v1044 = vadd.f32 %v1042, %v1043
      %v1045 = vsel %vm637, %v893, 0.0
      %v1046 = vadd.f32 %v1044, %v1045
      %v1047 = vsel %vm637, %v898, 0.0
      %v1048 = vadd.f32 %v1046, %v1047
      %v1049 = vsel %vm637, %v901, 0.0
      %v1050 = vadd.f32 %v1048, %v1049
      %v1051 = vsel %vm637, %v906, 0.0
      %v1052 = vadd.f32 %v1050, %v1051
      %v1053 = vsel %vm637, %v909, 0.0
      %v1054 = vadd.f32 %v1052, %v1053
      %v1055 = vsel %vm637, %v914, 0.0
      %v1056 = vadd.f32 %v1054, %v1055
      %v1057 = vsel %vm637, %v917, 0.0
      %v1058 = vadd.f32 %v1056, %v1057
      %v1059 = vsel %vm637, %v922, 0.0
      %v1060 = vadd.f32 %v1058, %v1059
      %v1061 = vsel %vm637, %v925, 0.0
      %v1062 = vadd.f32 %v1060, %v1061
      %v1063 = vsel %vm637, %v930, 0.0
      %v1064 = vadd.f32 %v1062, %v1063
      %v1065 = vsel %vm637, %v933, 0.0
      %v1066 = vadd.f32 %v1064, %v1065
      %v1067 = vsel %vm637, %v938, 0.0
      %v1068 = vadd.f32 %v1066, %v1067
      %v1069 = vsel %vm637, %v941, 0.0
      %v1070 = vadd.f32 %v1068, %v1069
      %v1071 = vsel %vm637, %v946, 0.0
      %v1072 = vadd.f32 %v1070, %v1071
      %v1073 = vsel %vm637, %v949, 0.0
      %v1074 = vadd.f32 %v1072, %v1073
      %v1075 = vsel %vm637, %v954, 0.0
      %v1076 = vadd.f32 %v1074, %v1075
      %v1077 = vsel %vm637, %v957, 0.0
      %v1078 = vadd.f32 %v1076, %v1077
      %v1079 = vsel %vm637, %v962, 0.0
      %v1080 = vadd.f32 %v1078, %v1079
      %v1081 = vsel %vm637, %v965, 0.0
      %v1082 = vadd.f32 %v1080, %v1081
      %v1083 = vsel %vm637, %v970, 0.0
      %v1084 = vadd.f32 %v1082, %v1083
      %v1085 = vsel %vm637, %v973, 0.0
      %v1086 = vadd.f32 %v1084, %v1085
      %v1087 = vsel %vm637, %v978, 0.0
      %v1088 = vadd.f32 %v1086, %v1087
      %v1089 = vsel %vm637, %v981, 0.0
      %v1090 = vadd.f32 %v1088, %v1089
      %v1091 = vsel %vm637, %v986, 0.0
      %v1092 = vadd.f32 %v1090, %v1091
      %v1093 = vsel %vm637, %v989, 0.0
      %v1094 = vadd.f32 %v1092, %v1093
      %v1095 = vsel %vm637, %v994, 0.0
      %v1096 = vadd.f32 %v1094, %v1095
      %v1097 = vsel %vm637, %v997, 0.0
      %v1098 = vadd.f32 %v1096, %v1097
      %v1099 = vsel %vm637, %v1002, 0.0
      %v1100 = vadd.f32 %v1098, %v1099
      %v1101 = vsel %vm637, %v1005, 0.0
      %v1102 = vadd.f32 %v1100, %v1101
      %v1103 = vrot.slane %v1102, 4
      %v1104 = vadd.f32 %v1102, %v1103
      %v1105 = vrot.slane %v1104, 2
      %v1106 = vadd.f32 %v1104, %v1105
      %v1107 = vrot.slane %v1106, 1
      %v1108 = vadd.f32 %v1106, %v1107
      %v1109 = vmul.f32 %v882, %v882
      %v1110 = vmul.f32 %v885, %v885
      %v1111 = vmul.f32 %v890, %v890
      %v1112 = vmul.f32 %v893, %v893
      %v1113 = vmul.f32 %v898, %v898
      %v1114 = vmul.f32 %v901, %v901
      %v1115 = vmul.f32 %v906, %v906
      %v1116 = vmul.f32 %v909, %v909
      %v1117 = vmul.f32 %v914, %v914
      %v1118 = vmul.f32 %v917, %v917
      %v1119 = vmul.f32 %v922, %v922
      %v1120 = vmul.f32 %v925, %v925
      %v1121 = vmul.f32 %v930, %v930
      %v1122 = vmul.f32 %v933, %v933
      %v1123 = vmul.f32 %v938, %v938
      %v1124 = vmul.f32 %v941, %v941
      %v1125 = vmul.f32 %v946, %v946
      %v1126 = vmul.f32 %v949, %v949
      %v1127 = vmul.f32 %v954, %v954
      %v1128 = vmul.f32 %v957, %v957
      %v1129 = vmul.f32 %v962, %v962
      %v1130 = vmul.f32 %v965, %v965
      %v1131 = vmul.f32 %v970, %v970
      %v1132 = vmul.f32 %v973, %v973
      %v1133 = vmul.f32 %v978, %v978
      %v1134 = vmul.f32 %v981, %v981
      %v1135 = vmul.f32 %v986, %v986
      %v1136 = vmul.f32 %v989, %v989
      %v1137 = vmul.f32 %v994, %v994
      %v1138 = vmul.f32 %v997, %v997
      %v1139 = vmul.f32 %v1002, %v1002
      %v1140 = vmul.f32 %v1005, %v1005
      %v1141 = vsel %vm637, %v1109, 0.0
      %v1142 = vsel %vm637, %v1110, 0.0
      %v1143 = vadd.f32 %v1141, %v1142
      %v1144 = vsel %vm637, %v1111, 0.0
      %v1145 = vadd.f32 %v1143, %v1144
      %v1146 = vsel %vm637, %v1112, 0.0
      %v1147 = vadd.f32 %v1145, %v1146
      %v1148 = vsel %vm637, %v1113, 0.0
      %v1149 = vadd.f32 %v1147, %v1148
      %v1150 = vsel %vm637, %v1114, 0.0
      %v1151 = vadd.f32 %v1149, %v1150
      %v1152 = vsel %vm637, %v1115, 0.0
      %v1153 = vadd.f32 %v1151, %v1152
      %v1154 = vsel %vm637, %v1116, 0.0
      %v1155 = vadd.f32 %v1153, %v1154
      %v1156 = vsel %vm637, %v1117, 0.0
      %v1157 = vadd.f32 %v1155, %v1156
      %v1158 = vsel %vm637, %v1118, 0.0
      %v1159 = vadd.f32 %v1157, %v1158
      %v1160 = vsel %vm637, %v1119, 0.0
      %v1161 = vadd.f32 %v1159, %v1160
      %v1162 = vsel %vm637, %v1120, 0.0
      %v1163 = vadd.f32 %v1161, %v1162
      %v1164 = vsel %vm637, %v1121, 0.0
      %v1165 = vadd.f32 %v1163, %v1164
      %v1166 = vsel %vm637, %v1122, 0.0
      %v1167 = vadd.f32 %v1165, %v1166
      %v1168 = vsel %vm637, %v1123, 0.0
      %v1169 = vadd.f32 %v1167, %v1168
      %v1170 = vsel %vm637, %v1124, 0.0
      %v1171 = vadd.f32 %v1169, %v1170
      %v1172 = vsel %vm637, %v1125, 0.0
      %v1173 = vadd.f32 %v1171, %v1172
      %v1174 = vsel %vm637, %v1126, 0.0
      %v1175 = vadd.f32 %v1173, %v1174
      %v1176 = vsel %vm637, %v1127, 0.0
      %v1177 = vadd.f32 %v1175, %v1176
      %v1178 = vsel %vm637, %v1128, 0.0
      %v1179 = vadd.f32 %v1177, %v1178
      %v1180 = vsel %vm637, %v1129, 0.0
      %v1181 = vadd.f32 %v1179, %v1180
      %v1182 = vsel %vm637, %v1130, 0.0
      %v1183 = vadd.f32 %v1181, %v1182
      %v1184 = vsel %vm637, %v1131, 0.0
      %v1185 = vadd.f32 %v1183, %v1184
      %v1186 = vsel %vm637, %v1132, 0.0
      %v1187 = vadd.f32 %v1185, %v1186
      %v1188 = vsel %vm637, %v1133, 0.0
      %v1189 = vadd.f32 %v1187, %v1188
      %v1190 = vsel %vm637, %v1134, 0.0
      %v1191 = vadd.f32 %v1189, %v1190
      %v1192 = vsel %vm637, %v1135, 0.0
      %v1193 = vadd.f32 %v1191, %v1192
      %v1194 = vsel %vm637, %v1136, 0.0
      %v1195 = vadd.f32 %v1193, %v1194
      %v1196 = vsel %vm637, %v1137, 0.0
      %v1197 = vadd.f32 %v1195, %v1196
      %v1198 = vsel %vm637, %v1138, 0.0
      %v1199 = vadd.f32 %v1197, %v1198
      %v1200 = vsel %vm637, %v1139, 0.0
      %v1201 = vadd.f32 %v1199, %v1200
      %v1202 = vsel %vm637, %v1140, 0.0
      %v1203 = vadd.f32 %v1201, %v1202
      %v1204 = vrot.slane %v1203, 4
      %v1205 = vadd.f32 %v1203, %v1204
      %v1206 = vrot.slane %v1205, 2
      %v1207 = vadd.f32 %v1205, %v1206
      %v1208 = vrot.slane %v1207, 1
      %v1209 = vadd.f32 %v1207, %v1208
      %vm1210 = vcmask 1040384
      %v1211 = vsel %vm1210, %v1108, %v1209
      %vm1212 = vcmask 1041408
      %v1213 = vsel %vm1212, %v1211, 0.0
      %1214 = vst.msk [vmem:[%s187] sm:$0xff] %vm637, %v1213
      %s1215 = smul.u32 32, %s15
      %p1216 = scmp.lt.s32.totalorder %s1215, 63
      %s1217 = scalar_select %p1216, %s1215, 63
      %s1218 = smul.addr %s1217, 8
      %s1219 = scalar_lea.vmem %s2, %s1218
      %p1220 = scmp.lt.s32.totalorder %s15, 1
      %s1221 = scalar_select %p1220, %s15, 1
      %s1222 = smul.addr %s1221, 8
      %s1223 = scalar_lea.vmem %s3, %s1222
      // Predicated region
      $region29: #{resnet2_forward.23} parent=27 // pred_check
        %p1224 = pneg %p80
      $region30: #{resnet2_forward.23} parent=27 // pred_check_branch
        %1226 = sbr.rel (%p1224) target = $region32
      $region31: #{resnet2_forward.23} parent=27 // pred_region
        %s1227 = smul.u32 32, %s15
      $region32: #{resnet2_forward.23} parent=27 // pred_fallthru
        _
      // Predicated region
      $region33: #{resnet2_forward.23} parent=27 // pred_check
        %p1228 = pneg %p106
      $region34: #{resnet2_forward.23} parent=27 // pred_check_branch
        %1230 = sbr.rel (%p1228) target = $region36
      $region35: #{resnet2_forward.23} parent=27 // pred_region
        _
      $region36: #{resnet2_forward.23} parent=27 // pred_fallthru
        _
    $region28: #{resnet2_forward.23} parent=5 // pred_fallthru
      _
    %p1231 = scmp.le.s32.totalorder 2, %s10
    // Predicated region
    $region37: #{resnet2_forward.23} parent=5 // pred_check
      %p1232 = pneg %p1231
    $region38: #{resnet2_forward.23} parent=5 // pred_check_branch
      %1234 = sbr.rel (%p1232) target = $region40
    $region39: #{resnet2_forward.23} parent=5 // pred_region
      %s1235 = ssub.s32 %s10, 2
      // Predicated region
      $region41: #{resnet2_forward.23} parent=39 // pred_check
        %p1236 = pneg %p86
      $region42: #{resnet2_forward.23} parent=39 // pred_check_branch
        %1238 = sbr.rel (%p1236) target = $region44
      $region43: #{resnet2_forward.23} parent=39 // pred_region
        %s1239 = smul.u32 32, %s16
        %p1240 = scmp.lt.s32.totalorder %s1239, 63
        %s1241 = scalar_select %p1240, %s1239, 63
        %s1242 = smul.addr %s1241, 8
        %s1243 = scalar_lea.vmem %s2, %s1242
      $region44: #{resnet2_forward.23} parent=39 // pred_fallthru
        _
      // Predicated region
      $region45: #{resnet2_forward.23} parent=39 // pred_check
        %p1244 = pneg %p112
      $region46: #{resnet2_forward.23} parent=39 // pred_check_branch
        %1246 = sbr.rel (%p1244) target = $region48
      $region47: #{resnet2_forward.23} parent=39 // pred_region
        %p1247 = scmp.lt.s32.totalorder %s16, 1
        %s1248 = scalar_select %p1247, %s16, 1
        %s1249 = smul.addr %s1248, 8
        %s1250 = scalar_lea.vmem %s3, %s1249
      $region48: #{resnet2_forward.23} parent=39 // pred_fallthru
        _
    $region40: #{resnet2_forward.23} parent=5 // pred_fallthru
      _
  $region6: #{resnet2_forward.23} parent=0 // loop_footer
    %s14 = sadd.s32 1, %s10
  $region7: #{resnet2_forward.23} parent=0 // loop_footer_branch
    %9 = sbr.rel target = $region3
  $region8: #{resnet2_forward.23} parent=0 // loop_exit
    _

// kernel: resnet2_forward.24
$region0: #{resnet2_forward.24}
  #allocation0 [shape = 'u32[]', space=smem, size = 0x4, offset = 0x4, fixed_abs, tag = 'smem constant byte address 0x4 - core index']
  #allocation1 [shape = 'u32[144,128]{1,0:T(1,128)}', space=vmem, size = 0x12000, scoped, tag = 'internal scratch']
  %s0 = inlined_call_operand.vmem [shape: f32[128,128], index: 0, kind: input, shape index: {}]
  %s1 = inlined_call_operand.vmem [shape: f32[1,128], index: 1, kind: input, shape index: {}]
  %s2 = inlined_call_operand.vmem [shape: f32[1,128], index: 2, kind: input, shape index: {}]
  %s3 = inlined_call_operand.vmem [shape: f32[128,128], index: 3, kind: input, shape index: {}]
  %s4 = inlined_call_operand.vmem [shape: f32[1,128], index: 4, kind: input, shape index: {}]
  %s5 = inlined_call_operand.vmem [shape: f32[1,128], index: 5, kind: input, shape index: {}]
  %s6 = inlined_call_operand.vmem [shape: bf16[128,128], index: 6, kind: output, shape index: {}]
  %s7 = sld [smem:[#allocation0]]
  $region34: #{resnet2_forward.24} parent=0
    _
  %s9 = ssub.s32 1, %s7
  %s10 = scalar_select 0, %s9, %s7
  // Predicated region
  $region2: #{resnet2_forward.24} parent=0 // pred_check
    _
  $region3: #{resnet2_forward.24} parent=0 // pred_check_branch
    %12 = sbr.rel (0) target = $region5
  $region4: #{resnet2_forward.24} parent=0 // pred_region
    _
  $region5: #{resnet2_forward.24} parent=0 // pred_fallthru
    _
  // Predicated region
  $region6: #{resnet2_forward.24} parent=0 // pred_check
    _
  $region7: #{resnet2_forward.24} parent=0 // pred_check_branch
    %14 = sbr.rel (0) target = $region9
  $region8: #{resnet2_forward.24} parent=0 // pred_region
    _
  $region9: #{resnet2_forward.24} parent=0 // pred_fallthru
    _
  // Predicated region
  $region10: #{resnet2_forward.24} parent=0 // pred_check
    _
  $region11: #{resnet2_forward.24} parent=0 // pred_check_branch
    %16 = sbr.rel (0) target = $region13
  $region12: #{resnet2_forward.24} parent=0 // pred_region
    _
  $region13: #{resnet2_forward.24} parent=0 // pred_fallthru
    _
  // Predicated region
  $region14: #{resnet2_forward.24} parent=0 // pred_check
    _
  $region15: #{resnet2_forward.24} parent=0 // pred_check_branch
    %18 = sbr.rel (0) target = $region17
  $region16: #{resnet2_forward.24} parent=0 // pred_region
    _
  $region17: #{resnet2_forward.24} parent=0 // pred_fallthru
    _
  // Predicated region
  $region18: #{resnet2_forward.24} parent=0 // pred_check
    _
  $region19: #{resnet2_forward.24} parent=0 // pred_check_branch
    %20 = sbr.rel (0) target = $region21
  $region20: #{resnet2_forward.24} parent=0 // pred_region
    _
  $region21: #{resnet2_forward.24} parent=0 // pred_fallthru
    _
  // Predicated region
  $region22: #{resnet2_forward.24} parent=0 // pred_check
    _
  $region23: #{resnet2_forward.24} parent=0 // pred_check_branch
    %22 = sbr.rel (0) target = $region25
  $region24: #{resnet2_forward.24} parent=0 // pred_region
    _
  $region25: #{resnet2_forward.24} parent=0 // pred_fallthru
    _
  %v23 = vld [vmem:[%s0] sm:$0xff]
  %v24 = vld [vmem:[%s0 + $0x8] sm:$0xff]
  %v25 = vld [vmem:[%s0 + $0x10] sm:$0xff]
  %v26 = vld [vmem:[%s0 + $0x18] sm:$0xff]
  %v27 = vld [vmem:[%s0 + $0x20] sm:$0xff]
  %v28 = vld [vmem:[%s0 + $0x28] sm:$0xff]
  %v29 = vld [vmem:[%s0 + $0x30] sm:$0xff]
  %v30 = vld [vmem:[%s0 + $0x38] sm:$0xff]
  %v31 = vld [vmem:[%s0 + $0x40] sm:$0xff]
  %v32 = vld [vmem:[%s0 + $0x48] sm:$0xff]
  %v33 = vld [vmem:[%s0 + $0x50] sm:$0xff]
  %v34 = vld [vmem:[%s0 + $0x58] sm:$0xff]
  %v35 = vld [vmem:[%s0 + $0x60] sm:$0xff]
  %v36 = vld [vmem:[%s0 + $0x68] sm:$0xff]
  %v37 = vld [vmem:[%s0 + $0x70] sm:$0xff]
  %v38 = vld [vmem:[%s0 + $0x78] sm:$0xff]
  %v39 = vld [vmem:[%s1] sm:$0x1]
  %v41 = vlaneseq
  %v42 = vshrl.u32 %v41, 7
  %v43 = vsub.s32 0, %v42
  %v44 = vrot.slane %v39, %v43
  %v46 = vmul.f32 %v23, %v44
  %v47 = vmul.f32 %v24, %v44
  %v48 = vmul.f32 %v25, %v44
  %v49 = vmul.f32 %v26, %v44
  %v50 = vmul.f32 %v27, %v44
  %v51 = vmul.f32 %v28, %v44
  %v52 = vmul.f32 %v29, %v44
  %v53 = vmul.f32 %v30, %v44
  %v54 = vmul.f32 %v31, %v44
  %v55 = vmul.f32 %v32, %v44
  %v56 = vmul.f32 %v33, %v44
  %v57 = vmul.f32 %v34, %v44
  %v58 = vmul.f32 %v35, %v44
  %v59 = vmul.f32 %v36, %v44
  %v60 = vmul.f32 %v37, %v44
  %v61 = vmul.f32 %v38, %v44
  %v62 = vld [vmem:[%s2] sm:$0x1]
  %v64 = vlaneseq
  %v65 = vshrl.u32 %v64, 7
  %v66 = vsub.s32 0, %v65
  %v67 = vrot.slane %v62, %v66
  %v69 = vadd.f32 %v46, %v67
  %v70 = vadd.f32 %v47, %v67
  %v71 = vadd.f32 %v48, %v67
  %v72 = vadd.f32 %v49, %v67
  %v73 = vadd.f32 %v50, %v67
  %v74 = vadd.f32 %v51, %v67
  %v75 = vadd.f32 %v52, %v67
  %v76 = vadd.f32 %v53, %v67
  %v77 = vadd.f32 %v54, %v67
  %v78 = vadd.f32 %v55, %v67
  %v79 = vadd.f32 %v56, %v67
  %v80 = vadd.f32 %v57, %v67
  %v81 = vadd.f32 %v58, %v67
  %v82 = vadd.f32 %v59, %v67
  %v83 = vadd.f32 %v60, %v67
  %v84 = vadd.f32 %v61, %v67
  %v85 = vld [vmem:[%s3] sm:$0xff]
  %v86 = vld [vmem:[%s3 + $0x8] sm:$0xff]
  %v87 = vld [vmem:[%s3 + $0x10] sm:$0xff]
  %v88 = vld [vmem:[%s3 + $0x18] sm:$0xff]
  %v89 = vld [vmem:[%s3 + $0x20] sm:$0xff]
  %v90 = vld [vmem:[%s3 + $0x28] sm:$0xff]
  %v91 = vld [vmem:[%s3 + $0x30] sm:$0xff]
  %v92 = vld [vmem:[%s3 + $0x38] sm:$0xff]
  %v93 = vld [vmem:[%s3 + $0x40] sm:$0xff]
  %v94 = vld [vmem:[%s3 + $0x48] sm:$0xff]
  %v95 = vld [vmem:[%s3 + $0x50] sm:$0xff]
  %v96 = vld [vmem:[%s3 + $0x58] sm:$0xff]
  %v97 = vld [vmem:[%s3 + $0x60] sm:$0xff]
  %v98 = vld [vmem:[%s3 + $0x68] sm:$0xff]
  %v99 = vld [vmem:[%s3 + $0x70] sm:$0xff]
  %v100 = vld [vmem:[%s3 + $0x78] sm:$0xff]
  %v101 = vld [vmem:[%s4] sm:$0x1]
  %v103 = vlaneseq
  %v104 = vshrl.u32 %v103, 7
  %v105 = vsub.s32 0, %v104
  %v106 = vrot.slane %v101, %v105
  %v108 = vmul.f32 %v85, %v106
  %v109 = vmul.f32 %v86, %v106
  %v110 = vmul.f32 %v87, %v106
  %v111 = vmul.f32 %v88, %v106
  %v112 = vmul.f32 %v89, %v106
  %v113 = vmul.f32 %v90, %v106
  %v114 = vmul.f32 %v91, %v106
  %v115 = vmul.f32 %v92, %v106
  %v116 = vmul.f32 %v93, %v106
  %v117 = vmul.f32 %v94, %v106
  %v118 = vmul.f32 %v95, %v106
  %v119 = vmul.f32 %v96, %v106
  %v120 = vmul.f32 %v97, %v106
  %v121 = vmul.f32 %v98, %v106
  %v122 = vmul.f32 %v99, %v106
  %v123 = vmul.f32 %v100, %v106
  %v124 = vld [vmem:[%s5] sm:$0x1]
  %v126 = vlaneseq
  %v127 = vshrl.u32 %v126, 7
  %v128 = vsub.s32 0, %v127
  %v129 = vrot.slane %v124, %v128
  %v131 = vadd.f32 %v108, %v129
  %v132 = vadd.f32 %v109, %v129
  %v133 = vadd.f32 %v110, %v129
  %v134 = vadd.f32 %v111, %v129
  %v135 = vadd.f32 %v112, %v129
  %v136 = vadd.f32 %v113, %v129
  %v137 = vadd.f32 %v114, %v129
  %v138 = vadd.f32 %v115, %v129
  %v139 = vadd.f32 %v116, %v129
  %v140 = vadd.f32 %v117, %v129
  %v141 = vadd.f32 %v118, %v129
  %v142 = vadd.f32 %v119, %v129
  %v143 = vadd.f32 %v120, %v129
  %v144 = vadd.f32 %v121, %v129
  %v145 = vadd.f32 %v122, %v129
  %v146 = vadd.f32 %v123, %v129
  %v147 = vadd.f32 %v69, %v131
  %v148 = vadd.f32 %v70, %v132
  %v149 = vadd.f32 %v71, %v133
  %v150 = vadd.f32 %v72, %v134
  %v151 = vadd.f32 %v73, %v135
  %v152 = vadd.f32 %v74, %v136
  %v153 = vadd.f32 %v75, %v137
  %v154 = vadd.f32 %v76, %v138
  %v155 = vadd.f32 %v77, %v139
  %v156 = vadd.f32 %v78, %v140
  %v157 = vadd.f32 %v79, %v141
  %v158 = vadd.f32 %v80, %v142
  %v159 = vadd.f32 %v81, %v143
  %v160 = vadd.f32 %v82, %v144
  %v161 = vadd.f32 %v83, %v145
  %v162 = vadd.f32 %v84, %v146
  %v163 = vmax.f32 %v147, 0.0
  %v164 = vmax.f32 %v148, 0.0
  %v165 = vmax.f32 %v149, 0.0
  %v166 = vmax.f32 %v150, 0.0
  %v167 = vmax.f32 %v151, 0.0
  %v168 = vmax.f32 %v152, 0.0
  %v169 = vmax.f32 %v153, 0.0
  %v170 = vmax.f32 %v154, 0.0
  %v171 = vmax.f32 %v155, 0.0
  %v172 = vmax.f32 %v156, 0.0
  %v173 = vmax.f32 %v157, 0.0
  %v174 = vmax.f32 %v158, 0.0
  %v175 = vmax.f32 %v159, 0.0
  %v176 = vmax.f32 %v160, 0.0
  %v177 = vmax.f32 %v161, 0.0
  %v178 = vmax.f32 %v162, 0.0
  %v179 = vpack.c.bf16 %v164, %v163
  %v180 = vpack.c.bf16 %v166, %v165
  %v181 = vpack.c.bf16 %v168, %v167
  %v182 = vpack.c.bf16 %v170, %v169
  %v183 = vpack.c.bf16 %v172, %v171
  %v184 = vpack.c.bf16 %v174, %v173
  %v185 = vpack.c.bf16 %v176, %v175
  %v186 = vpack.c.bf16 %v178, %v177
  %v195 = vunpack.c.l.b16 %v179
  %v196 = vunpack.c.h.b16 %v179
  %v197 = vunpack.c.l.b16 %v180
  %v198 = vunpack.c.h.b16 %v180
  %v199 = vunpack.c.l.b16 %v181
  %v200 = vunpack.c.h.b16 %v181
  %v201 = vunpack.c.l.b16 %v182
  %v202 = vunpack.c.h.b16 %v182
  %v203 = vunpack.c.l.b16 %v183
  %v204 = vunpack.c.h.b16 %v183
  %v205 = vunpack.c.l.b16 %v184
  %v206 = vunpack.c.h.b16 %v184
  %v207 = vunpack.c.l.b16 %v185
  %v208 = vunpack.c.h.b16 %v185
  %v209 = vunpack.c.l.b16 %v186
  %v210 = vunpack.c.h.b16 %v186
  %v211 = vpack.c.b16 %v195, %v195
  %v212 = vpack.c.b16 %v196, %v196
  %v213 = vpack.c.b16 %v197, %v197
  %v214 = vpack.c.b16 %v198, %v198
  %v215 = vpack.c.b16 %v199, %v199
  %v216 = vpack.c.b16 %v200, %v200
  %v217 = vpack.c.b16 %v201, %v201
  %v218 = vpack.c.b16 %v202, %v202
  %v219 = vpack.c.b16 %v203, %v203
  %v220 = vpack.c.b16 %v204, %v204
  %v221 = vpack.c.b16 %v205, %v205
  %v222 = vpack.c.b16 %v206, %v206
  %v223 = vpack.c.b16 %v207, %v207
  %v224 = vpack.c.b16 %v208, %v208
  %v225 = vpack.c.b16 %v209, %v209
  %v226 = vpack.c.b16 %v210, %v210
  %243 = vst [vmem:[%s6] sm:$0xf] %v211
  %244 = vst [vmem:[%s6 + $0x4] sm:$0xf] %v212
  %245 = vst [vmem:[%s6 + $0x8] sm:$0xf] %v213
  %246 = vst [vmem:[%s6 + $0xc] sm:$0xf] %v214
  %247 = vst [vmem:[%s6 + $0x10] sm:$0xf] %v215
  %248 = vst [vmem:[%s6 + $0x14] sm:$0xf] %v216
  %249 = vst [vmem:[%s6 + $0x18] sm:$0xf] %v217
  %250 = vst [vmem:[%s6 + $0x1c] sm:$0xf] %v218
  %251 = vst [vmem:[%s6 + $0x20] sm:$0xf] %v219
  %252 = vst [vmem:[%s6 + $0x24] sm:$0xf] %v220
  %253 = vst [vmem:[%s6 + $0x28] sm:$0xf] %v221
  %254 = vst [vmem:[%s6 + $0x2c] sm:$0xf] %v222
  %255 = vst [vmem:[%s6 + $0x30] sm:$0xf] %v223
  %256 = vst [vmem:[%s6 + $0x34] sm:$0xf] %v224
  %257 = vst [vmem:[%s6 + $0x38] sm:$0xf] %v225
  %258 = vst [vmem:[%s6 + $0x3c] sm:$0xf] %v226
  // Predicated region
  $region26: #{resnet2_forward.24} parent=0 // pred_check
    _
  $region27: #{resnet2_forward.24} parent=0 // pred_check_branch
    %260 = sbr.rel (0) target = $region29
  $region28: #{resnet2_forward.24} parent=0 // pred_region
    _
  $region29: #{resnet2_forward.24} parent=0 // pred_fallthru
    _
  // Predicated region
  $region30: #{resnet2_forward.24} parent=0 // pred_check
    _
  $region31: #{resnet2_forward.24} parent=0 // pred_check_branch
    %262 = sbr.rel (0) target = $region33
  $region32: #{resnet2_forward.24} parent=0 // pred_region
    _
  $region33: #{resnet2_forward.24} parent=0 // pred_fallthru
    _

// kernel: tile.157
$region0: #{tile.157}
  #allocation0 [shape = 's32[1]{0}', space=sflag, size = 0x4, scoped, tag = 'scoped memory for tile.157']
  %s0 = inlined_call_operand.vmem [shape: f32[64], index: 0, kind: input, shape index: {}]
  %s1 = inlined_call_operand.vmem [shape: f32[2,64], index: 1, kind: output, shape index: {}]
  // Predicated region
  $region2: #{tile.157} parent=0 // pred_check
    _
  $region3: #{tile.157} parent=0 // pred_check_branch
    %3 = sbr.rel (0) target = $region5
  $region4: #{tile.157} parent=0 // pred_region
    _
  $region5: #{tile.157} parent=0 // pred_fallthru
    _
  %v4 = vld [vmem:[%s0] ss:$0 sm:$0xff]
  %5 = vst [vmem:[%s1] sm:$0x3] %v4

// kernel: tile.158
$region0: #{tile.158}
  %s0 = inlined_call_operand.vmem [shape: f32[2,64], index: 0, kind: input, shape index: {}]
  %s1 = inlined_call_operand.vmem [shape: f32[1,128], index: 1, kind: output, shape index: {}]
  $region1: #{tile.158} parent=0
    #allocation0 [shape = 'u8[4096]{0}', space=vmem, size = 0x1000, scoped, tag = 'scoped mem for output reshape']
    #allocation1 [shape = 'u8[4096]{0}', space=vmem, size = 0x1000, scoped, tag = 'scoped mem for input reshape']
    %s3 = sshll.u32 1, 2
    %s4 = ssub.s32 %s3, 1
    %v5 = vld [vmem:[%s0] sm:%s4]
    %6 = vst [vmem:[#allocation1] sm:%s4] %v5
    %v7 = vld [vmem:[#allocation1] sm:$0x1]
    %vm8 = vcmask 523264
    %9 = vst.msk [vmem:[#allocation0] sm:$0x1] %vm8, %v7
    %s10 = scalar_lea.vmem [#allocation1], 1
    %v11 = vld [vmem:[%s10] sm:$0x1]
    %12 = vrot.lane.b32.xlu0 %v11, 64
    %v13 = vpop.permute.xlu0 %12
    %vm14 = vcmask 1048064
    %15 = vst.msk [vmem:[#allocation0] sm:$0x1] %vm14, %v13
    %s17 = sshll.u32 1, 1
    %s18 = ssub.s32 %s17, 1
    %v20 = vld [vmem:[#allocation0] sm:%s18]
    %s21 = sshll.u32 1, 1
    %s22 = ssub.s32 %s21, 1
    %23 = vst [vmem:[%s1] sm:%s22] %v20

// kernel: resnet2_forward.25
$region0: #{resnet2_forward.25}
  #allocation0 [shape = 'u32[]', space=smem, size = 0x4, offset = 0x4, fixed_abs, tag = 'smem constant byte address 0x4 - core index']
  #allocation1 [shape = 'u32[144,128]{1,0:T(1,128)}', space=vmem, size = 0x12000, scoped, tag = 'internal scratch']
  %s0 = inlined_call_operand.vmem [shape: bf16[128,288], index: 0, kind: input, shape index: {}]
  %s1 = inlined_call_operand.vmem [shape: bf16[288,128], index: 1, kind: input, shape index: {}]
  %s2 = inlined_call_operand.vmem [shape: f32[128,128], index: 2, kind: output, shape index: {0}]
  %s3 = inlined_call_operand.vmem [shape: f32[8,128], index: 3, kind: output, shape index: {1}]
  %4 = xla_tuple %s2, %s3
  %s5 = sld [smem:[#allocation0]]
  $region26: #{resnet2_forward.25} parent=0
    _
  %s7 = ssub.s32 1, %s5
  %s8 = scalar_select 0, %s7, %s5
  // Predicated region
  $region2: #{resnet2_forward.25} parent=0 // pred_check
    _
  $region3: #{resnet2_forward.25} parent=0 // pred_check_branch
    %10 = sbr.rel (0) target = $region5
  $region4: #{resnet2_forward.25} parent=0 // pred_region
    _
  $region5: #{resnet2_forward.25} parent=0 // pred_fallthru
    _
  // Predicated region
  $region6: #{resnet2_forward.25} parent=0 // pred_check
    _
  $region7: #{resnet2_forward.25} parent=0 // pred_check_branch
    %12 = sbr.rel (0) target = $region9
  $region8: #{resnet2_forward.25} parent=0 // pred_region
    _
  $region9: #{resnet2_forward.25} parent=0 // pred_fallthru
    _
  %v14 = vld [vmem:[%s0] sm:$0xff]
  %v15 = vld [vmem:[%s0 + $0x8] sm:$0xf]
  %v16 = vld [vmem:[%s0 + $0xc] sm:$0xff]
  %v17 = vld [vmem:[%s0 + $0x14] sm:$0xf]
  %v18 = vld [vmem:[%s0 + $0x18] sm:$0xff]
  %v19 = vld [vmem:[%s0 + $0x20] sm:$0xf]
  %v20 = vld [vmem:[%s0 + $0x24] sm:$0xff]
  %v21 = vld [vmem:[%s0 + $0x2c] sm:$0xf]
  %v22 = vld [vmem:[%s0 + $0x30] sm:$0xff]
  %v23 = vld [vmem:[%s0 + $0x38] sm:$0xf]
  %v24 = vld [vmem:[%s0 + $0x3c] sm:$0xff]
  %v25 = vld [vmem:[%s0 + $0x44] sm:$0xf]
  %v26 = vld [vmem:[%s0 + $0x48] sm:$0xff]
  %v27 = vld [vmem:[%s0 + $0x50] sm:$0xf]
  %v28 = vld [vmem:[%s0 + $0x54] sm:$0xff]
  %v29 = vld [vmem:[%s0 + $0x5c] sm:$0xf]
  %v30 = vld [vmem:[%s0 + $0x60] sm:$0xff]
  %v31 = vld [vmem:[%s0 + $0x68] sm:$0xf]
  %v32 = vld [vmem:[%s0 + $0x6c] sm:$0xff]
  %v33 = vld [vmem:[%s0 + $0x74] sm:$0xf]
  %v34 = vld [vmem:[%s0 + $0x78] sm:$0xff]
  %v35 = vld [vmem:[%s0 + $0x80] sm:$0xf]
  %v36 = vld [vmem:[%s0 + $0x84] sm:$0xff]
  %v37 = vld [vmem:[%s0 + $0x8c] sm:$0xf]
  %v38 = vld [vmem:[%s0 + $0x90] sm:$0xff]
  %v39 = vld [vmem:[%s0 + $0x98] sm:$0xf]
  %v40 = vld [vmem:[%s0 + $0x9c] sm:$0xff]
  %v41 = vld [vmem:[%s0 + $0xa4] sm:$0xf]
  %v42 = vld [vmem:[%s0 + $0xa8] sm:$0xff]
  %v43 = vld [vmem:[%s0 + $0xb0] sm:$0xf]
  %v44 = vld [vmem:[%s0 + $0xb4] sm:$0xff]
  %v45 = vld [vmem:[%s0 + $0xbc] sm:$0xf]
  %v46 = vld [vmem:[%s1] sm:$0xf]
  %v47 = vld [vmem:[%s1 + $0x4] sm:$0xf]
  %v48 = vld [vmem:[%s1 + $0x8] sm:$0xf]
  %v49 = vld [vmem:[%s1 + $0xc] sm:$0xf]
  %v50 = vld [vmem:[%s1 + $0x10] sm:$0xf]
  %v51 = vld [vmem:[%s1 + $0x14] sm:$0xf]
  %v52 = vld [vmem:[%s1 + $0x18] sm:$0xf]
  %v53 = vld [vmem:[%s1 + $0x1c] sm:$0xf]
  %v54 = vld [vmem:[%s1 + $0x20] sm:$0xf]
  %v55 = vld [vmem:[%s1 + $0x24] sm:$0xf]
  %v56 = vld [vmem:[%s1 + $0x28] sm:$0xf]
  %v57 = vld [vmem:[%s1 + $0x2c] sm:$0xf]
  %v58 = vld [vmem:[%s1 + $0x30] sm:$0xf]
  %v59 = vld [vmem:[%s1 + $0x34] sm:$0xf]
  %v60 = vld [vmem:[%s1 + $0x38] sm:$0xf]
  %v61 = vld [vmem:[%s1 + $0x3c] sm:$0xf]
  %v62 = vld [vmem:[%s1 + $0x40] sm:$0xf]
  %v63 = vld [vmem:[%s1 + $0x44] sm:$0xf]
  %v64 = vld [vmem:[%s1 + $0x48] sm:$0xf]
  %v65 = vld [vmem:[%s1 + $0x4c] sm:$0xf]
  %v66 = vld [vmem:[%s1 + $0x50] sm:$0xf]
  %v67 = vld [vmem:[%s1 + $0x54] sm:$0xf]
  %v68 = vld [vmem:[%s1 + $0x58] sm:$0xf]
  %v69 = vld [vmem:[%s1 + $0x5c] sm:$0xf]
  %v70 = vld [vmem:[%s1 + $0x60] sm:$0xf]
  %v71 = vld [vmem:[%s1 + $0x64] sm:$0xf]
  %v72 = vld [vmem:[%s1 + $0x68] sm:$0xf]
  %v73 = vld [vmem:[%s1 + $0x6c] sm:$0xf]
  %v74 = vld [vmem:[%s1 + $0x70] sm:$0xf]
  %v75 = vld [vmem:[%s1 + $0x74] sm:$0xf]
  %v76 = vld [vmem:[%s1 + $0x78] sm:$0xf]
  %v77 = vld [vmem:[%s1 + $0x7c] sm:$0xf]
  %v78 = vld [vmem:[%s1 + $0x80] sm:$0xf]
  %v79 = vld [vmem:[%s1 + $0x84] sm:$0xf]
  %v80 = vld [vmem:[%s1 + $0x88] sm:$0xf]
  %v81 = vld [vmem:[%s1 + $0x8c] sm:$0xf]
  %v114 = vunpack.c.l.b16 %v14
  %v115 = vunpack.c.h.b16 %v14
  %v116 = vunpack.c.l.b16 %v15
  %v117 = vunpack.c.l.b16 %v16
  %v118 = vunpack.c.h.b16 %v16
  %v119 = vunpack.c.l.b16 %v17
  %v120 = vunpack.c.l.b16 %v18
  %v121 = vunpack.c.h.b16 %v18
  %v122 = vunpack.c.l.b16 %v19
  %v123 = vunpack.c.l.b16 %v20
  %v124 = vunpack.c.h.b16 %v20
  %v125 = vunpack.c.l.b16 %v21
  %v126 = vunpack.c.l.b16 %v22
  %v127 = vunpack.c.h.b16 %v22
  %v128 = vunpack.c.l.b16 %v23
  %v129 = vunpack.c.l.b16 %v24
  %v130 = vunpack.c.h.b16 %v24
  %v131 = vunpack.c.l.b16 %v25
  %v132 = vunpack.c.l.b16 %v26
  %v133 = vunpack.c.h.b16 %v26
  %v134 = vunpack.c.l.b16 %v27
  %v135 = vunpack.c.l.b16 %v28
  %v136 = vunpack.c.h.b16 %v28
  %v137 = vunpack.c.l.b16 %v29
  %v138 = vunpack.c.l.b16 %v30
  %v139 = vunpack.c.h.b16 %v30
  %v140 = vunpack.c.l.b16 %v31
  %v141 = vunpack.c.l.b16 %v32
  %v142 = vunpack.c.h.b16 %v32
  %v143 = vunpack.c.l.b16 %v33
  %v144 = vunpack.c.l.b16 %v34
  %v145 = vunpack.c.h.b16 %v34
  %v146 = vunpack.c.l.b16 %v35
  %v147 = vunpack.c.l.b16 %v36
  %v148 = vunpack.c.h.b16 %v36
  %v149 = vunpack.c.l.b16 %v37
  %v150 = vunpack.c.l.b16 %v38
  %v151 = vunpack.c.h.b16 %v38
  %v152 = vunpack.c.l.b16 %v39
  %v153 = vunpack.c.l.b16 %v40
  %v154 = vunpack.c.h.b16 %v40
  %v155 = vunpack.c.l.b16 %v41
  %v156 = vunpack.c.l.b16 %v42
  %v157 = vunpack.c.h.b16 %v42
  %v158 = vunpack.c.l.b16 %v43
  %v159 = vunpack.c.l.b16 %v44
  %v160 = vunpack.c.h.b16 %v44
  %v161 = vunpack.c.l.b16 %v45
  %v162 = vpack.c.b16 %v117, %v114
  %v163 = vpack.c.b16 %v118, %v115
  %v164 = vpack.c.b16 %v119, %v116
  %v165 = vpack.c.b16 %v123, %v120
  %v166 = vpack.c.b16 %v124, %v121
  %v167 = vpack.c.b16 %v125, %v122
  %v168 = vpack.c.b16 %v129, %v126
  %v169 = vpack.c.b16 %v130, %v127
  %v170 = vpack.c.b16 %v131, %v128
  %v171 = vpack.c.b16 %v135, %v132
  %v172 = vpack.c.b16 %v136, %v133
  %v173 = vpack.c.b16 %v137, %v134
  %v174 = vpack.c.b16 %v141, %v138
  %v175 = vpack.c.b16 %v142, %v139
  %v176 = vpack.c.b16 %v143, %v140
  %v177 = vpack.c.b16 %v147, %v144
  %v178 = vpack.c.b16 %v148, %v145
  %v179 = vpack.c.b16 %v149, %v146
  %v180 = vpack.c.b16 %v153, %v150
  %v181 = vpack.c.b16 %v154, %v151
  %v182 = vpack.c.b16 %v155, %v152
  %v183 = vpack.c.b16 %v159, %v156
  %v184 = vpack.c.b16 %v160, %v157
  %v185 = vpack.c.b16 %v161, %v158
  %v238 = vunpack.c.l.b16 %v46
  %v239 = vunpack.c.l.b16 %v47
  %v240 = vunpack.c.l.b16 %v48
  %v241 = vunpack.c.l.b16 %v49
  %v242 = vunpack.c.l.b16 %v50
  %v243 = vunpack.c.l.b16 %v51
  %v244 = vunpack.c.l.b16 %v52
  %v245 = vunpack.c.l.b16 %v53
  %v246 = vunpack.c.l.b16 %v54
  %v247 = vunpack.c.l.b16 %v55
  %v248 = vunpack.c.l.b16 %v56
  %v249 = vunpack.c.l.b16 %v57
  %v250 = vunpack.c.l.b16 %v58
  %v251 = vunpack.c.l.b16 %v59
  %v252 = vunpack.c.l.b16 %v60
  %v253 = vunpack.c.l.b16 %v61
  %v254 = vunpack.c.l.b16 %v62
  %v255 = vunpack.c.l.b16 %v63
  %v256 = vunpack.c.l.b16 %v64
  %v257 = vunpack.c.l.b16 %v65
  %v258 = vunpack.c.l.b16 %v66
  %v259 = vunpack.c.l.b16 %v67
  %v260 = vunpack.c.l.b16 %v68
  %v261 = vunpack.c.l.b16 %v69
  %v262 = vunpack.c.l.b16 %v70
  %v263 = vunpack.c.l.b16 %v71
  %v264 = vunpack.c.l.b16 %v72
  %v265 = vunpack.c.l.b16 %v73
  %v266 = vunpack.c.l.b16 %v74
  %v267 = vunpack.c.l.b16 %v75
  %v268 = vunpack.c.l.b16 %v76
  %v269 = vunpack.c.l.b16 %v77
  %v270 = vunpack.c.l.b16 %v78
  %v271 = vunpack.c.l.b16 %v79
  %v272 = vunpack.c.l.b16 %v80
  %v273 = vunpack.c.l.b16 %v81
  %v274 = vpack.c.b16 %v239, %v238
  %v275 = vpack.c.b16 %v241, %v240
  %v276 = vpack.c.b16 %v243, %v242
  %v277 = vpack.c.b16 %v245, %v244
  %v278 = vpack.c.b16 %v247, %v246
  %v279 = vpack.c.b16 %v249, %v248
  %v280 = vpack.c.b16 %v251, %v250
  %v281 = vpack.c.b16 %v253, %v252
  %v282 = vpack.c.b16 %v255, %v254
  %v283 = vpack.c.b16 %v257, %v256
  %v284 = vpack.c.b16 %v259, %v258
  %v285 = vpack.c.b16 %v261, %v260
  %v286 = vpack.c.b16 %v263, %v262
  %v287 = vpack.c.b16 %v265, %v264
  %v288 = vpack.c.b16 %v267, %v266
  %v289 = vpack.c.b16 %v269, %v268
  %v290 = vpack.c.b16 %v271, %v270
  %v291 = vpack.c.b16 %v273, %v272
  %vm310 = vcmask 261120
  %v312 = vsel %vm310, %v164, 0
  %v315 = vsel %vm310, %v167, 0
  %v318 = vsel %vm310, %v170, 0
  %v321 = vsel %vm310, %v173, 0
  %v324 = vsel %vm310, %v176, 0
  %v327 = vsel %vm310, %v179, 0
  %v330 = vsel %vm310, %v182, 0
  %v333 = vsel %vm310, %v185, 0
  %335 = vmatprep.subr.bf16.mxu0 0
  %336 = vmatpush1.bf16.msra.mxu0 %v281
  %337 = vmatprep.subr.bf16.mxu0 0
  %338 = vmatpush1.bf16.msra.mxu0 %v280
  %339 = vmatprep.subr.bf16.mxu0 0
  %340 = vmatpush1.bf16.msra.mxu0 %v279
  %341 = vmatprep.subr.bf16.mxu0 0
  %342 = vmatpush1.bf16.msra.mxu0 %v278
  %343 = vmatprep.subr.bf16.mxu0 0
  %344 = vmatpush1.bf16.msra.mxu0 %v277
  %345 = vmatprep.subr.bf16.mxu0 0
  %346 = vmatpush1.bf16.msra.mxu0 %v276
  %347 = vmatprep.subr.bf16.mxu0 0
  %348 = vmatpush1.bf16.msra.mxu0 %v275
  %349 = vmatprep.subr.bf16.mxu0 0
  %350 = vmatpush1.bf16.msra.mxu0 %v274
  %351 = vmatprep.subr.bf16.mxu0 0
  %352 = vmatpush2.bf16.msra.mxu0 %v289
  %353 = vmatprep.subr.bf16.mxu0 0
  %354 = vmatpush2.bf16.msra.mxu0 %v288
  %355 = vmatprep.subr.bf16.mxu0 0
  %356 = vmatpush2.bf16.msra.mxu0 %v287
  %357 = vmatprep.subr.bf16.mxu0 0
  %358 = vmatpush2.bf16.msra.mxu0 %v286
  %359 = vmatprep.subr.bf16.mxu0 0
  %360 = vmatpush2.bf16.msra.mxu0 %v285
  %361 = vmatprep.subr.bf16.mxu0 0
  %362 = vmatpush2.bf16.msra.mxu0 %v284
  %363 = vmatprep.subr.bf16.mxu0 0
  %364 = vmatpush2.bf16.msra.mxu0 %v283
  %365 = vmatprep.subr.bf16.mxu0 0
  %366 = vmatpush2.bf16.msra.mxu0 %v282
  %367 = vmatprep.mubr.bf16.mxu0 %v163
  %368 = vmatmul.mubr.bf16.gmra.mxu0 %v162
  %v369 = vpop.f32.mrf.mxu0
  %v370 = vadd.f32 0.0, %v369
  %v371 = vpop.f32.mrf.mxu0
  %v372 = vpop.f32.mrf.mxu0
  %v373 = vadd.f32 0.0, %v372
  %v374 = vpop.f32.mrf.mxu0
  %375 = vmatprep.mubr.bf16.mxu0 %v166
  %376 = vmatmul.mubr.bf16.gmra.mxu0 %v165
  %v377 = vpop.f32.mrf.mxu0
  %v378 = vadd.f32 0.0, %v377
  %v379 = vpop.f32.mrf.mxu0
  %v380 = vpop.f32.mrf.mxu0
  %v381 = vadd.f32 0.0, %v380
  %v382 = vpop.f32.mrf.mxu0
  %383 = vmatprep.mubr.bf16.mxu0 %v169
  %384 = vmatmul.mubr.bf16.gmra.mxu0 %v168
  %v385 = vpop.f32.mrf.mxu0
  %v386 = vadd.f32 0.0, %v385
  %v387 = vpop.f32.mrf.mxu0
  %v388 = vpop.f32.mrf.mxu0
  %v389 = vadd.f32 0.0, %v388
  %v390 = vpop.f32.mrf.mxu0
  %391 = vmatprep.mubr.bf16.mxu0 %v172
  %392 = vmatmul.mubr.bf16.gmra.mxu0 %v171
  %v393 = vpop.f32.mrf.mxu0
  %v394 = vadd.f32 0.0, %v393
  %v395 = vpop.f32.mrf.mxu0
  %v396 = vpop.f32.mrf.mxu0
  %v397 = vadd.f32 0.0, %v396
  %v398 = vpop.f32.mrf.mxu0
  %399 = vmatprep.mubr.bf16.mxu0 %v175
  %400 = vmatmul.mubr.bf16.gmra.mxu0 %v174
  %v401 = vpop.f32.mrf.mxu0
  %v402 = vadd.f32 0.0, %v401
  %v403 = vpop.f32.mrf.mxu0
  %v404 = vpop.f32.mrf.mxu0
  %v405 = vadd.f32 0.0, %v404
  %v406 = vpop.f32.mrf.mxu0
  %407 = vmatprep.mubr.bf16.mxu0 %v178
  %408 = vmatmul.mubr.bf16.gmra.mxu0 %v177
  %v409 = vpop.f32.mrf.mxu0
  %v410 = vadd.f32 0.0, %v409
  %v411 = vpop.f32.mrf.mxu0
  %v412 = vpop.f32.mrf.mxu0
  %v413 = vadd.f32 0.0, %v412
  %v414 = vpop.f32.mrf.mxu0
  %415 = vmatprep.mubr.bf16.mxu0 %v181
  %416 = vmatmul.mubr.bf16.gmra.mxu0 %v180
  %v417 = vpop.f32.mrf.mxu0
  %v418 = vadd.f32 0.0, %v417
  %v419 = vpop.f32.mrf.mxu0
  %v420 = vpop.f32.mrf.mxu0
  %v421 = vadd.f32 0.0, %v420
  %v422 = vpop.f32.mrf.mxu0
  %423 = vmatprep.mubr.bf16.mxu0 %v184
  %424 = vmatmul.mubr.bf16.gmra.mxu0 %v183
  %v425 = vpop.f32.mrf.mxu0
  %v426 = vadd.f32 0.0, %v425
  %v427 = vpop.f32.mrf.mxu0
  %v428 = vpop.f32.mrf.mxu0
  %v429 = vadd.f32 0.0, %v428
  %v430 = vpop.f32.mrf.mxu0
  %431 = vdwg.mxu0
  %432 = vmatprep.subr.bf16.mxu0 0
  %433 = vmatpush1.bf16.msra.mxu0 0
  %434 = vmatprep.subr.bf16.mxu0 0
  %435 = vmatpush1.bf16.msra.mxu0 0
  %436 = vmatprep.subr.bf16.mxu0 0
  %437 = vmatpush1.bf16.msra.mxu0 0
  %438 = vmatprep.subr.bf16.mxu0 0
  %439 = vmatpush1.bf16.msra.mxu0 0
  %440 = vmatprep.subr.bf16.mxu0 0
  %441 = vmatpush1.bf16.msra.mxu0 0
  %442 = vmatprep.subr.bf16.mxu0 0
  %443 = vmatpush1.bf16.msra.mxu0 0
  %444 = vmatprep.subr.bf16.mxu0 0
  %445 = vmatpush1.bf16.msra.mxu0 %v291
  %446 = vmatprep.subr.bf16.mxu0 0
  %447 = vmatpush1.bf16.msra.mxu0 %v290
  %448 = vmatprep.subr.bf16.mxu0 0
  %449 = vmatpush2.bf16.msra.mxu0 0
  %450 = vmatprep.subr.bf16.mxu0 0
  %451 = vmatpush2.bf16.msra.mxu0 0
  %452 = vmatprep.subr.bf16.mxu0 0
  %453 = vmatpush2.bf16.msra.mxu0 0
  %454 = vmatprep.subr.bf16.mxu0 0
  %455 = vmatpush2.bf16.msra.mxu0 0
  %456 = vmatprep.subr.bf16.mxu0 0
  %457 = vmatpush2.bf16.msra.mxu0 0
  %458 = vmatprep.subr.bf16.mxu0 0
  %459 = vmatpush2.bf16.msra.mxu0 0
  %460 = vmatprep.subr.bf16.mxu0 0
  %461 = vmatpush2.bf16.msra.mxu0 0
  %462 = vmatprep.subr.bf16.mxu0 0
  %463 = vmatpush2.bf16.msra.mxu0 0
  %464 = vmatprep.mubr.bf16.mxu0 0
  %465 = vmatmul.mubr.bf16.gmra.mxu0 %v312
  %v466 = vpop.f32.mrf.mxu0
  %v467 = vadd.f32 %v370, %v466
  %v468 = vpop.f32.mrf.mxu0
  %v469 = vpop.f32.mrf.mxu0
  %v470 = vadd.f32 %v373, %v469
  %v471 = vpop.f32.mrf.mxu0
  %472 = vmatprep.mubr.bf16.mxu0 0
  %473 = vmatmul.mubr.bf16.gmra.mxu0 %v315
  %v474 = vpop.f32.mrf.mxu0
  %v475 = vadd.f32 %v378, %v474
  %v476 = vpop.f32.mrf.mxu0
  %v477 = vpop.f32.mrf.mxu0
  %v478 = vadd.f32 %v381, %v477
  %v479 = vpop.f32.mrf.mxu0
  %480 = vmatprep.mubr.bf16.mxu0 0
  %481 = vmatmul.mubr.bf16.gmra.mxu0 %v318
  %v482 = vpop.f32.mrf.mxu0
  %v483 = vadd.f32 %v386, %v482
  %v484 = vpop.f32.mrf.mxu0
  %v485 = vpop.f32.mrf.mxu0
  %v486 = vadd.f32 %v389, %v485
  %v487 = vpop.f32.mrf.mxu0
  %488 = vmatprep.mubr.bf16.mxu0 0
  %489 = vmatmul.mubr.bf16.gmra.mxu0 %v321
  %v490 = vpop.f32.mrf.mxu0
  %v491 = vadd.f32 %v394, %v490
  %v492 = vpop.f32.mrf.mxu0
  %v493 = vpop.f32.mrf.mxu0
  %v494 = vadd.f32 %v397, %v493
  %v495 = vpop.f32.mrf.mxu0
  %496 = vmatprep.mubr.bf16.mxu0 0
  %497 = vmatmul.mubr.bf16.gmra.mxu0 %v324
  %v498 = vpop.f32.mrf.mxu0
  %v499 = vadd.f32 %v402, %v498
  %v500 = vpop.f32.mrf.mxu0
  %v501 = vpop.f32.mrf.mxu0
  %v502 = vadd.f32 %v405, %v501
  %v503 = vpop.f32.mrf.mxu0
  %504 = vmatprep.mubr.bf16.mxu0 0
  %505 = vmatmul.mubr.bf16.gmra.mxu0 %v327
  %v506 = vpop.f32.mrf.mxu0
  %v507 = vadd.f32 %v410, %v506
  %v508 = vpop.f32.mrf.mxu0
  %v509 = vpop.f32.mrf.mxu0
  %v510 = vadd.f32 %v413, %v509
  %v511 = vpop.f32.mrf.mxu0
  %512 = vmatprep.mubr.bf16.mxu0 0
  %513 = vmatmul.mubr.bf16.gmra.mxu0 %v330
  %v514 = vpop.f32.mrf.mxu0
  %v515 = vadd.f32 %v418, %v514
  %v516 = vpop.f32.mrf.mxu0
  %v517 = vpop.f32.mrf.mxu0
  %v518 = vadd.f32 %v421, %v517
  %v519 = vpop.f32.mrf.mxu0
  %520 = vmatprep.mubr.bf16.mxu0 0
  %521 = vmatmul.mubr.bf16.gmra.mxu0 %v333
  %v522 = vpop.f32.mrf.mxu0
  %v523 = vadd.f32 %v426, %v522
  %v524 = vpop.f32.mrf.mxu0
  %v525 = vpop.f32.mrf.mxu0
  %v526 = vadd.f32 %v429, %v525
  %v527 = vpop.f32.mrf.mxu0
  %528 = vdwg.mxu0
  %529 = vst [vmem:[%s2] sm:$0xff] %v467
  %530 = vst [vmem:[%s2 + $0x8] sm:$0xff] %v470
  %531 = vst [vmem:[%s2 + $0x10] sm:$0xff] %v475
  %532 = vst [vmem:[%s2 + $0x18] sm:$0xff] %v478
  %533 = vst [vmem:[%s2 + $0x20] sm:$0xff] %v483
  %534 = vst [vmem:[%s2 + $0x28] sm:$0xff] %v486
  %535 = vst [vmem:[%s2 + $0x30] sm:$0xff] %v491
  %536 = vst [vmem:[%s2 + $0x38] sm:$0xff] %v494
  %537 = vst [vmem:[%s2 + $0x40] sm:$0xff] %v499
  %538 = vst [vmem:[%s2 + $0x48] sm:$0xff] %v502
  %539 = vst [vmem:[%s2 + $0x50] sm:$0xff] %v507
  %540 = vst [vmem:[%s2 + $0x58] sm:$0xff] %v510
  %541 = vst [vmem:[%s2 + $0x60] sm:$0xff] %v515
  %542 = vst [vmem:[%s2 + $0x68] sm:$0xff] %v518
  %543 = vst [vmem:[%s2 + $0x70] sm:$0xff] %v523
  %544 = vst [vmem:[%s2 + $0x78] sm:$0xff] %v526
  %v545 = vadd.f32 %v467, %v470
  %v546 = vadd.f32 %v545, %v475
  %v547 = vadd.f32 %v546, %v478
  %v548 = vadd.f32 %v547, %v483
  %v549 = vadd.f32 %v548, %v486
  %v550 = vadd.f32 %v549, %v491
  %v551 = vadd.f32 %v550, %v494
  %v552 = vadd.f32 %v551, %v499
  %v553 = vadd.f32 %v552, %v502
  %v554 = vadd.f32 %v553, %v507
  %v555 = vadd.f32 %v554, %v510
  %v556 = vadd.f32 %v555, %v515
  %v557 = vadd.f32 %v556, %v518
  %v558 = vadd.f32 %v557, %v523
  %v559 = vadd.f32 %v558, %v526
  %v560 = vrot.slane %v559, 4
  %v561 = vadd.f32 %v559, %v560
  %v562 = vrot.slane %v561, 2
  %v563 = vadd.f32 %v561, %v562
  %v564 = vrot.slane %v563, 1
  %v565 = vadd.f32 %v563, %v564
  %v566 = vmul.f32 %v467, %v467
  %v567 = vmul.f32 %v470, %v470
  %v568 = vmul.f32 %v475, %v475
  %v569 = vmul.f32 %v478, %v478
  %v570 = vmul.f32 %v483, %v483
  %v571 = vmul.f32 %v486, %v486
  %v572 = vmul.f32 %v491, %v491
  %v573 = vmul.f32 %v494, %v494
  %v574 = vmul.f32 %v499, %v499
  %v575 = vmul.f32 %v502, %v502
  %v576 = vmul.f32 %v507, %v507
  %v577 = vmul.f32 %v510, %v510
  %v578 = vmul.f32 %v515, %v515
  %v579 = vmul.f32 %v518, %v518
  %v580 = vmul.f32 %v523, %v523
  %v581 = vmul.f32 %v526, %v526
  %v582 = vadd.f32 %v566, %v567
  %v583 = vadd.f32 %v582, %v568
  %v584 = vadd.f32 %v583, %v569
  %v585 = vadd.f32 %v584, %v570
  %v586 = vadd.f32 %v585, %v571
  %v587 = vadd.f32 %v586, %v572
  %v588 = vadd.f32 %v587, %v573
  %v589 = vadd.f32 %v588, %v574
  %v590 = vadd.f32 %v589, %v575
  %v591 = vadd.f32 %v590, %v576
  %v592 = vadd.f32 %v591, %v577
  %v593 = vadd.f32 %v592, %v578
  %v594 = vadd.f32 %v593, %v579
  %v595 = vadd.f32 %v594, %v580
  %v596 = vadd.f32 %v595, %v581
  %v597 = vrot.slane %v596, 4
  %v598 = vadd.f32 %v596, %v597
  %v599 = vrot.slane %v598, 2
  %v600 = vadd.f32 %v598, %v599
  %v601 = vrot.slane %v600, 1
  %v602 = vadd.f32 %v600, %v601
  %vm603 = vcmask 1040384
  %v604 = vsel %vm603, %v565, %v602
  %vm605 = vcmask 1041408
  %v606 = vsel %vm605, %v604, 0.0
  %607 = vst [vmem:[%s3] sm:$0xff] %v606
  // Predicated region
  $region10: #{resnet2_forward.25} parent=0 // pred_check
    _
  $region11: #{resnet2_forward.25} parent=0 // pred_check_branch
    %609 = sbr.rel (0) target = $region13
  $region12: #{resnet2_forward.25} parent=0 // pred_region
    _
  $region13: #{resnet2_forward.25} parent=0 // pred_fallthru
    _
  // Predicated region
  $region14: #{resnet2_forward.25} parent=0 // pred_check
    _
  $region15: #{resnet2_forward.25} parent=0 // pred_check_branch
    %611 = sbr.rel (0) target = $region17
  $region16: #{resnet2_forward.25} parent=0 // pred_region
    _
  $region17: #{resnet2_forward.25} parent=0 // pred_fallthru
    _
  // Predicated region
  $region18: #{resnet2_forward.25} parent=0 // pred_check
    _
  $region19: #{resnet2_forward.25} parent=0 // pred_check_branch
    %613 = sbr.rel (0) target = $region21
  $region20: #{resnet2_forward.25} parent=0 // pred_region
    _
  $region21: #{resnet2_forward.25} parent=0 // pred_fallthru
    _
  // Predicated region
  $region22: #{resnet2_forward.25} parent=0 // pred_check
    _
  $region23: #{resnet2_forward.25} parent=0 // pred_check_branch
    %615 = sbr.rel (0) target = $region25
  $region24: #{resnet2_forward.25} parent=0 // pred_region
    _
  $region25: #{resnet2_forward.25} parent=0 // pred_fallthru
    _

// kernel: resnet2_forward.26
$region0: #{resnet2_forward.26}
  #allocation0 [shape = 'u32[]', space=smem, size = 0x4, offset = 0x4, fixed_abs, tag = 'smem constant byte address 0x4 - core index']
  #allocation1 [shape = 'u32[144,128]{1,0:T(1,128)}', space=vmem, size = 0x12000, scoped, tag = 'internal scratch']
  %s0 = inlined_call_operand.vmem [shape: f32[64,128], index: 0, kind: input, shape index: {}]
  %s1 = inlined_call_operand.vmem [shape: f32[1,128], index: 1, kind: input, shape index: {}]
  %s2 = inlined_call_operand.vmem [shape: f32[1,128], index: 2, kind: input, shape index: {}]
  %s3 = inlined_call_operand.vmem [shape: bf16[64,128], index: 3, kind: output, shape index: {}]
  %s4 = sld [smem:[#allocation0]]
  $region22: #{resnet2_forward.26} parent=0
    _
  %s6 = ssub.s32 1, %s4
  %s7 = scalar_select 0, %s6, %s4
  // Predicated region
  $region2: #{resnet2_forward.26} parent=0 // pred_check
    _
  $region3: #{resnet2_forward.26} parent=0 // pred_check_branch
    %9 = sbr.rel (0) target = $region5
  $region4: #{resnet2_forward.26} parent=0 // pred_region
    _
  $region5: #{resnet2_forward.26} parent=0 // pred_fallthru
    _
  // Predicated region
  $region6: #{resnet2_forward.26} parent=0 // pred_check
    _
  $region7: #{resnet2_forward.26} parent=0 // pred_check_branch
    %11 = sbr.rel (0) target = $region9
  $region8: #{resnet2_forward.26} parent=0 // pred_region
    _
  $region9: #{resnet2_forward.26} parent=0 // pred_fallthru
    _
  // Predicated region
  $region10: #{resnet2_forward.26} parent=0 // pred_check
    _
  $region11: #{resnet2_forward.26} parent=0 // pred_check_branch
    %13 = sbr.rel (0) target = $region13
  $region12: #{resnet2_forward.26} parent=0 // pred_region
    _
  $region13: #{resnet2_forward.26} parent=0 // pred_fallthru
    _
  %v14 = vld [vmem:[%s0] sm:$0xff]
  %v15 = vld [vmem:[%s0 + $0x8] sm:$0xff]
  %v16 = vld [vmem:[%s0 + $0x10] sm:$0xff]
  %v17 = vld [vmem:[%s0 + $0x18] sm:$0xff]
  %v18 = vld [vmem:[%s0 + $0x20] sm:$0xff]
  %v19 = vld [vmem:[%s0 + $0x28] sm:$0xff]
  %v20 = vld [vmem:[%s0 + $0x30] sm:$0xff]
  %v21 = vld [vmem:[%s0 + $0x38] sm:$0xff]
  %v22 = vld [vmem:[%s1] sm:$0x1]
  %v24 = vlaneseq
  %v25 = vshrl.u32 %v24, 7
  %v26 = vsub.s32 0, %v25
  %v27 = vrot.slane %v22, %v26
  %v29 = vmul.f32 %v14, %v27
  %v30 = vmul.f32 %v15, %v27
  %v31 = vmul.f32 %v16, %v27
  %v32 = vmul.f32 %v17, %v27
  %v33 = vmul.f32 %v18, %v27
  %v34 = vmul.f32 %v19, %v27
  %v35 = vmul.f32 %v20, %v27
  %v36 = vmul.f32 %v21, %v27
  %v37 = vld [vmem:[%s2] sm:$0x1]
  %v39 = vlaneseq
  %v40 = vshrl.u32 %v39, 7
  %v41 = vsub.s32 0, %v40
  %v42 = vrot.slane %v37, %v41
  %v44 = vadd.f32 %v29, %v42
  %v45 = vadd.f32 %v30, %v42
  %v46 = vadd.f32 %v31, %v42
  %v47 = vadd.f32 %v32, %v42
  %v48 = vadd.f32 %v33, %v42
  %v49 = vadd.f32 %v34, %v42
  %v50 = vadd.f32 %v35, %v42
  %v51 = vadd.f32 %v36, %v42
  %v52 = vmax.f32 %v44, 0.0
  %v53 = vmax.f32 %v45, 0.0
  %v54 = vmax.f32 %v46, 0.0
  %v55 = vmax.f32 %v47, 0.0
  %v56 = vmax.f32 %v48, 0.0
  %v57 = vmax.f32 %v49, 0.0
  %v58 = vmax.f32 %v50, 0.0
  %v59 = vmax.f32 %v51, 0.0
  %v60 = vpack.c.bf16 %v53, %v52
  %v61 = vpack.c.bf16 %v55, %v54
  %v62 = vpack.c.bf16 %v57, %v56
  %v63 = vpack.c.bf16 %v59, %v58
  %v68 = vunpack.c.l.b16 %v60
  %v69 = vunpack.c.h.b16 %v60
  %v70 = vunpack.c.l.b16 %v61
  %v71 = vunpack.c.h.b16 %v61
  %v72 = vunpack.c.l.b16 %v62
  %v73 = vunpack.c.h.b16 %v62
  %v74 = vunpack.c.l.b16 %v63
  %v75 = vunpack.c.h.b16 %v63
  %v76 = vpack.c.b16 %v68, %v68
  %v77 = vpack.c.b16 %v69, %v69
  %v78 = vpack.c.b16 %v70, %v70
  %v79 = vpack.c.b16 %v71, %v71
  %v80 = vpack.c.b16 %v72, %v72
  %v81 = vpack.c.b16 %v73, %v73
  %v82 = vpack.c.b16 %v74, %v74
  %v83 = vpack.c.b16 %v75, %v75
  %92 = vst [vmem:[%s3] sm:$0xf] %v76
  %93 = vst [vmem:[%s3 + $0x4] sm:$0xf] %v77
  %94 = vst [vmem:[%s3 + $0x8] sm:$0xf] %v78
  %95 = vst [vmem:[%s3 + $0xc] sm:$0xf] %v79
  %96 = vst [vmem:[%s3 + $0x10] sm:$0xf] %v80
  %97 = vst [vmem:[%s3 + $0x14] sm:$0xf] %v81
  %98 = vst [vmem:[%s3 + $0x18] sm:$0xf] %v82
  %99 = vst [vmem:[%s3 + $0x1c] sm:$0xf] %v83
  // Predicated region
  $region14: #{resnet2_forward.26} parent=0 // pred_check
    _
  $region15: #{resnet2_forward.26} parent=0 // pred_check_branch
    %101 = sbr.rel (0) target = $region17
  $region16: #{resnet2_forward.26} parent=0 // pred_region
    _
  $region17: #{resnet2_forward.26} parent=0 // pred_fallthru
    _
  // Predicated region
  $region18: #{resnet2_forward.26} parent=0 // pred_check
    _
  $region19: #{resnet2_forward.26} parent=0 // pred_check_branch
    %103 = sbr.rel (0) target = $region21
  $region20: #{resnet2_forward.26} parent=0 // pred_region
    _
  $region21: #{resnet2_forward.26} parent=0 // pred_fallthru
    _

// kernel: resnet2_forward.28
$region0: #{resnet2_forward.28}
  #allocation0 [shape = 'u32[]', space=smem, size = 0x4, offset = 0x4, fixed_abs, tag = 'smem constant byte address 0x4 - core index']
  #allocation1 [shape = 'u32[144,128]{1,0:T(1,128)}', space=vmem, size = 0x12000, scoped, tag = 'internal scratch']
  %s0 = inlined_call_operand.vmem [shape: f32[64,128], index: 0, kind: input, shape index: {}]
  %s1 = inlined_call_operand.vmem [shape: f32[1,128], index: 1, kind: input, shape index: {}]
  %s2 = inlined_call_operand.vmem [shape: f32[1,128], index: 2, kind: input, shape index: {}]
  %s3 = inlined_call_operand.vmem [shape: f32[64,128], index: 3, kind: input, shape index: {}]
  %s4 = inlined_call_operand.vmem [shape: f32[1,128], index: 4, kind: input, shape index: {}]
  %s5 = inlined_call_operand.vmem [shape: f32[1,128], index: 5, kind: input, shape index: {}]
  %s6 = inlined_call_operand.vmem [shape: bf16[64,128], index: 6, kind: output, shape index: {}]
  %s7 = sld [smem:[#allocation0]]
  $region34: #{resnet2_forward.28} parent=0
    _
  %s9 = ssub.s32 1, %s7
  %s10 = scalar_select 0, %s9, %s7
  // Predicated region
  $region2: #{resnet2_forward.28} parent=0 // pred_check
    _
  $region3: #{resnet2_forward.28} parent=0 // pred_check_branch
    %12 = sbr.rel (0) target = $region5
  $region4: #{resnet2_forward.28} parent=0 // pred_region
    _
  $region5: #{resnet2_forward.28} parent=0 // pred_fallthru
    _
  // Predicated region
  $region6: #{resnet2_forward.28} parent=0 // pred_check
    _
  $region7: #{resnet2_forward.28} parent=0 // pred_check_branch
    %14 = sbr.rel (0) target = $region9
  $region8: #{resnet2_forward.28} parent=0 // pred_region
    _
  $region9: #{resnet2_forward.28} parent=0 // pred_fallthru
    _
  // Predicated region
  $region10: #{resnet2_forward.28} parent=0 // pred_check
    _
  $region11: #{resnet2_forward.28} parent=0 // pred_check_branch
    %16 = sbr.rel (0) target = $region13
  $region12: #{resnet2_forward.28} parent=0 // pred_region
    _
  $region13: #{resnet2_forward.28} parent=0 // pred_fallthru
    _
  // Predicated region
  $region14: #{resnet2_forward.28} parent=0 // pred_check
    _
  $region15: #{resnet2_forward.28} parent=0 // pred_check_branch
    %18 = sbr.rel (0) target = $region17
  $region16: #{resnet2_forward.28} parent=0 // pred_region
    _
  $region17: #{resnet2_forward.28} parent=0 // pred_fallthru
    _
  // Predicated region
  $region18: #{resnet2_forward.28} parent=0 // pred_check
    _
  $region19: #{resnet2_forward.28} parent=0 // pred_check_branch
    %20 = sbr.rel (0) target = $region21
  $region20: #{resnet2_forward.28} parent=0 // pred_region
    _
  $region21: #{resnet2_forward.28} parent=0 // pred_fallthru
    _
  // Predicated region
  $region22: #{resnet2_forward.28} parent=0 // pred_check
    _
  $region23: #{resnet2_forward.28} parent=0 // pred_check_branch
    %22 = sbr.rel (0) target = $region25
  $region24: #{resnet2_forward.28} parent=0 // pred_region
    _
  $region25: #{resnet2_forward.28} parent=0 // pred_fallthru
    _
  %v23 = vld [vmem:[%s0] sm:$0xff]
  %v24 = vld [vmem:[%s0 + $0x8] sm:$0xff]
  %v25 = vld [vmem:[%s0 + $0x10] sm:$0xff]
  %v26 = vld [vmem:[%s0 + $0x18] sm:$0xff]
  %v27 = vld [vmem:[%s0 + $0x20] sm:$0xff]
  %v28 = vld [vmem:[%s0 + $0x28] sm:$0xff]
  %v29 = vld [vmem:[%s0 + $0x30] sm:$0xff]
  %v30 = vld [vmem:[%s0 + $0x38] sm:$0xff]
  %v31 = vld [vmem:[%s1] sm:$0x1]
  %v33 = vlaneseq
  %v34 = vshrl.u32 %v33, 7
  %v35 = vsub.s32 0, %v34
  %v36 = vrot.slane %v31, %v35
  %v38 = vmul.f32 %v23, %v36
  %v39 = vmul.f32 %v24, %v36
  %v40 = vmul.f32 %v25, %v36
  %v41 = vmul.f32 %v26, %v36
  %v42 = vmul.f32 %v27, %v36
  %v43 = vmul.f32 %v28, %v36
  %v44 = vmul.f32 %v29, %v36
  %v45 = vmul.f32 %v30, %v36
  %v46 = vld [vmem:[%s2] sm:$0x1]
  %v48 = vlaneseq
  %v49 = vshrl.u32 %v48, 7
  %v50 = vsub.s32 0, %v49
  %v51 = vrot.slane %v46, %v50
  %v53 = vadd.f32 %v38, %v51
  %v54 = vadd.f32 %v39, %v51
  %v55 = vadd.f32 %v40, %v51
  %v56 = vadd.f32 %v41, %v51
  %v57 = vadd.f32 %v42, %v51
  %v58 = vadd.f32 %v43, %v51
  %v59 = vadd.f32 %v44, %v51
  %v60 = vadd.f32 %v45, %v51
  %v61 = vld [vmem:[%s3] sm:$0xff]
  %v62 = vld [vmem:[%s3 + $0x8] sm:$0xff]
  %v63 = vld [vmem:[%s3 + $0x10] sm:$0xff]
  %v64 = vld [vmem:[%s3 + $0x18] sm:$0xff]
  %v65 = vld [vmem:[%s3 + $0x20] sm:$0xff]
  %v66 = vld [vmem:[%s3 + $0x28] sm:$0xff]
  %v67 = vld [vmem:[%s3 + $0x30] sm:$0xff]
  %v68 = vld [vmem:[%s3 + $0x38] sm:$0xff]
  %v69 = vld [vmem:[%s4] sm:$0x1]
  %v71 = vlaneseq
  %v72 = vshrl.u32 %v71, 7
  %v73 = vsub.s32 0, %v72
  %v74 = vrot.slane %v69, %v73
  %v76 = vmul.f32 %v61, %v74
  %v77 = vmul.f32 %v62, %v74
  %v78 = vmul.f32 %v63, %v74
  %v79 = vmul.f32 %v64, %v74
  %v80 = vmul.f32 %v65, %v74
  %v81 = vmul.f32 %v66, %v74
  %v82 = vmul.f32 %v67, %v74
  %v83 = vmul.f32 %v68, %v74
  %v84 = vld [vmem:[%s5] sm:$0x1]
  %v86 = vlaneseq
  %v87 = vshrl.u32 %v86, 7
  %v88 = vsub.s32 0, %v87
  %v89 = vrot.slane %v84, %v88
  %v91 = vadd.f32 %v76, %v89
  %v92 = vadd.f32 %v77, %v89
  %v93 = vadd.f32 %v78, %v89
  %v94 = vadd.f32 %v79, %v89
  %v95 = vadd.f32 %v80, %v89
  %v96 = vadd.f32 %v81, %v89
  %v97 = vadd.f32 %v82, %v89
  %v98 = vadd.f32 %v83, %v89
  %v99 = vadd.f32 %v53, %v91
  %v100 = vadd.f32 %v54, %v92
  %v101 = vadd.f32 %v55, %v93
  %v102 = vadd.f32 %v56, %v94
  %v103 = vadd.f32 %v57, %v95
  %v104 = vadd.f32 %v58, %v96
  %v105 = vadd.f32 %v59, %v97
  %v106 = vadd.f32 %v60, %v98
  %v107 = vmax.f32 %v99, 0.0
  %v108 = vmax.f32 %v100, 0.0
  %v109 = vmax.f32 %v101, 0.0
  %v110 = vmax.f32 %v102, 0.0
  %v111 = vmax.f32 %v103, 0.0
  %v112 = vmax.f32 %v104, 0.0
  %v113 = vmax.f32 %v105, 0.0
  %v114 = vmax.f32 %v106, 0.0
  %v115 = vpack.c.bf16 %v108, %v107
  %v116 = vpack.c.bf16 %v110, %v109
  %v117 = vpack.c.bf16 %v112, %v111
  %v118 = vpack.c.bf16 %v114, %v113
  %v123 = vunpack.c.l.b16 %v115
  %v124 = vunpack.c.h.b16 %v115
  %v125 = vunpack.c.l.b16 %v116
  %v126 = vunpack.c.h.b16 %v116
  %v127 = vunpack.c.l.b16 %v117
  %v128 = vunpack.c.h.b16 %v117
  %v129 = vunpack.c.l.b16 %v118
  %v130 = vunpack.c.h.b16 %v118
  %v131 = vpack.c.b16 %v123, %v123
  %v132 = vpack.c.b16 %v124, %v124
  %v133 = vpack.c.b16 %v125, %v125
  %v134 = vpack.c.b16 %v126, %v126
  %v135 = vpack.c.b16 %v127, %v127
  %v136 = vpack.c.b16 %v128, %v128
  %v137 = vpack.c.b16 %v129, %v129
  %v138 = vpack.c.b16 %v130, %v130
  %147 = vst [vmem:[%s6] sm:$0xf] %v131
  %148 = vst [vmem:[%s6 + $0x4] sm:$0xf] %v132
  %149 = vst [vmem:[%s6 + $0x8] sm:$0xf] %v133
  %150 = vst [vmem:[%s6 + $0xc] sm:$0xf] %v134
  %151 = vst [vmem:[%s6 + $0x10] sm:$0xf] %v135
  %152 = vst [vmem:[%s6 + $0x14] sm:$0xf] %v136
  %153 = vst [vmem:[%s6 + $0x18] sm:$0xf] %v137
  %154 = vst [vmem:[%s6 + $0x1c] sm:$0xf] %v138
  // Predicated region
  $region26: #{resnet2_forward.28} parent=0 // pred_check
    _
  $region27: #{resnet2_forward.28} parent=0 // pred_check_branch
    %156 = sbr.rel (0) target = $region29
  $region28: #{resnet2_forward.28} parent=0 // pred_region
    _
  $region29: #{resnet2_forward.28} parent=0 // pred_fallthru
    _
  // Predicated region
  $region30: #{resnet2_forward.28} parent=0 // pred_check
    _
  $region31: #{resnet2_forward.28} parent=0 // pred_check_branch
    %158 = sbr.rel (0) target = $region33
  $region32: #{resnet2_forward.28} parent=0 // pred_region
    _
  $region33: #{resnet2_forward.28} parent=0 // pred_fallthru
    _

// kernel: resnet2_forward.27
$region0: #{resnet2_forward.27}
  #allocation0 [shape = 'u32[]', space=smem, size = 0x4, offset = 0x4, fixed_abs, tag = 'smem constant byte address 0x4 - core index']
  #allocation1 [shape = 'u32[144,128]{1,0:T(1,128)}', space=vmem, size = 0x12000, scoped, tag = 'internal scratch']
  %s0 = inlined_call_operand.vmem [shape: bf16[128,576], index: 0, kind: input, shape index: {}]
  %s1 = inlined_call_operand.vmem [shape: bf16[576,64], index: 1, kind: input, shape index: {}]
  %s2 = inlined_call_operand.vmem [shape: f32[128,64], index: 2, kind: output, shape index: {0}]
  %s3 = inlined_call_operand.vmem [shape: f32[8,64], index: 3, kind: output, shape index: {1}]
  %4 = xla_tuple %s2, %s3
  %s5 = sld [smem:[#allocation0]]
  $region26: #{resnet2_forward.27} parent=0
    _
  %s7 = ssub.s32 1, %s5
  %s8 = scalar_select 0, %s7, %s5
  // Predicated region
  $region2: #{resnet2_forward.27} parent=0 // pred_check
    _
  $region3: #{resnet2_forward.27} parent=0 // pred_check_branch
    %10 = sbr.rel (0) target = $region5
  $region4: #{resnet2_forward.27} parent=0 // pred_region
    _
  $region5: #{resnet2_forward.27} parent=0 // pred_fallthru
    _
  // Predicated region
  $region6: #{resnet2_forward.27} parent=0 // pred_check
    _
  $region7: #{resnet2_forward.27} parent=0 // pred_check_branch
    %12 = sbr.rel (0) target = $region9
  $region8: #{resnet2_forward.27} parent=0 // pred_region
    _
  $region9: #{resnet2_forward.27} parent=0 // pred_fallthru
    _
  %v14 = vld [vmem:[%s0] sm:$0xff]
  %v15 = vld [vmem:[%s0 + $0x8] sm:$0xff]
  %v16 = vld [vmem:[%s0 + $0x10] sm:$0xf]
  %v17 = vld [vmem:[%s0 + $0x14] sm:$0xff]
  %v18 = vld [vmem:[%s0 + $0x1c] sm:$0xff]
  %v19 = vld [vmem:[%s0 + $0x24] sm:$0xf]
  %v20 = vld [vmem:[%s0 + $0x28] sm:$0xff]
  %v21 = vld [vmem:[%s0 + $0x30] sm:$0xff]
  %v22 = vld [vmem:[%s0 + $0x38] sm:$0xf]
  %v23 = vld [vmem:[%s0 + $0x3c] sm:$0xff]
  %v24 = vld [vmem:[%s0 + $0x44] sm:$0xff]
  %v25 = vld [vmem:[%s0 + $0x4c] sm:$0xf]
  %v26 = vld [vmem:[%s0 + $0x50] sm:$0xff]
  %v27 = vld [vmem:[%s0 + $0x58] sm:$0xff]
  %v28 = vld [vmem:[%s0 + $0x60] sm:$0xf]
  %v29 = vld [vmem:[%s0 + $0x64] sm:$0xff]
  %v30 = vld [vmem:[%s0 + $0x6c] sm:$0xff]
  %v31 = vld [vmem:[%s0 + $0x74] sm:$0xf]
  %v32 = vld [vmem:[%s0 + $0x78] sm:$0xff]
  %v33 = vld [vmem:[%s0 + $0x80] sm:$0xff]
  %v34 = vld [vmem:[%s0 + $0x88] sm:$0xf]
  %v35 = vld [vmem:[%s0 + $0x8c] sm:$0xff]
  %v36 = vld [vmem:[%s0 + $0x94] sm:$0xff]
  %v37 = vld [vmem:[%s0 + $0x9c] sm:$0xf]
  %v38 = vld [vmem:[%s0 + $0xa0] sm:$0xff]
  %v39 = vld [vmem:[%s0 + $0xa8] sm:$0xff]
  %v40 = vld [vmem:[%s0 + $0xb0] sm:$0xf]
  %v41 = vld [vmem:[%s0 + $0xb4] sm:$0xff]
  %v42 = vld [vmem:[%s0 + $0xbc] sm:$0xff]
  %v43 = vld [vmem:[%s0 + $0xc4] sm:$0xf]
  %v44 = vld [vmem:[%s0 + $0xc8] sm:$0xff]
  %v45 = vld [vmem:[%s0 + $0xd0] sm:$0xff]
  %v46 = vld [vmem:[%s0 + $0xd8] sm:$0xf]
  %v47 = vld [vmem:[%s0 + $0xdc] sm:$0xff]
  %v48 = vld [vmem:[%s0 + $0xe4] sm:$0xff]
  %v49 = vld [vmem:[%s0 + $0xec] sm:$0xf]
  %v50 = vld [vmem:[%s0 + $0xf0] sm:$0xff]
  %v51 = vld [vmem:[%s0 + $0xf8] sm:$0xff]
  %v52 = vld [vmem:[%s0 + $0x100] sm:$0xf]
  %v53 = vld [vmem:[%s0 + $0x104] sm:$0xff]
  %v54 = vld [vmem:[%s0 + $0x10c] sm:$0xff]
  %v55 = vld [vmem:[%s0 + $0x114] sm:$0xf]
  %v56 = vld [vmem:[%s0 + $0x118] sm:$0xff]
  %v57 = vld [vmem:[%s0 + $0x120] sm:$0xff]
  %v58 = vld [vmem:[%s0 + $0x128] sm:$0xf]
  %v59 = vld [vmem:[%s0 + $0x12c] sm:$0xff]
  %v60 = vld [vmem:[%s0 + $0x134] sm:$0xff]
  %v61 = vld [vmem:[%s0 + $0x13c] sm:$0xf]
  %v62 = vld [vmem:[%s1] sm:$0xf]
  %v63 = vld [vmem:[%s1 + $0x4] sm:$0xf]
  %v64 = vld [vmem:[%s1 + $0x8] sm:$0xf]
  %v65 = vld [vmem:[%s1 + $0xc] sm:$0xf]
  %v66 = vld [vmem:[%s1 + $0x10] sm:$0xf]
  %v67 = vld [vmem:[%s1 + $0x14] sm:$0xf]
  %v68 = vld [vmem:[%s1 + $0x18] sm:$0xf]
  %v69 = vld [vmem:[%s1 + $0x1c] sm:$0xf]
  %v70 = vld [vmem:[%s1 + $0x20] sm:$0xf]
  %v71 = vld [vmem:[%s1 + $0x24] sm:$0xf]
  %v72 = vld [vmem:[%s1 + $0x28] sm:$0xf]
  %v73 = vld [vmem:[%s1 + $0x2c] sm:$0xf]
  %v74 = vld [vmem:[%s1 + $0x30] sm:$0xf]
  %v75 = vld [vmem:[%s1 + $0x34] sm:$0xf]
  %v76 = vld [vmem:[%s1 + $0x38] sm:$0xf]
  %v77 = vld [vmem:[%s1 + $0x3c] sm:$0xf]
  %v78 = vld [vmem:[%s1 + $0x40] sm:$0xf]
  %v79 = vld [vmem:[%s1 + $0x44] sm:$0xf]
  %v80 = vld [vmem:[%s1 + $0x48] sm:$0xf]
  %v81 = vld [vmem:[%s1 + $0x4c] sm:$0xf]
  %v82 = vld [vmem:[%s1 + $0x50] sm:$0xf]
  %v83 = vld [vmem:[%s1 + $0x54] sm:$0xf]
  %v84 = vld [vmem:[%s1 + $0x58] sm:$0xf]
  %v85 = vld [vmem:[%s1 + $0x5c] sm:$0xf]
  %v86 = vld [vmem:[%s1 + $0x60] sm:$0xf]
  %v87 = vld [vmem:[%s1 + $0x64] sm:$0xf]
  %v88 = vld [vmem:[%s1 + $0x68] sm:$0xf]
  %v89 = vld [vmem:[%s1 + $0x6c] sm:$0xf]
  %v90 = vld [vmem:[%s1 + $0x70] sm:$0xf]
  %v91 = vld [vmem:[%s1 + $0x74] sm:$0xf]
  %v92 = vld [vmem:[%s1 + $0x78] sm:$0xf]
  %v93 = vld [vmem:[%s1 + $0x7c] sm:$0xf]
  %v94 = vld [vmem:[%s1 + $0x80] sm:$0xf]
  %v95 = vld [vmem:[%s1 + $0x84] sm:$0xf]
  %v96 = vld [vmem:[%s1 + $0x88] sm:$0xf]
  %v97 = vld [vmem:[%s1 + $0x8c] sm:$0xf]
  %v98 = vld [vmem:[%s1 + $0x90] sm:$0xf]
  %v99 = vld [vmem:[%s1 + $0x94] sm:$0xf]
  %v100 = vld [vmem:[%s1 + $0x98] sm:$0xf]
  %v101 = vld [vmem:[%s1 + $0x9c] sm:$0xf]
  %v102 = vld [vmem:[%s1 + $0xa0] sm:$0xf]
  %v103 = vld [vmem:[%s1 + $0xa4] sm:$0xf]
  %v104 = vld [vmem:[%s1 + $0xa8] sm:$0xf]
  %v105 = vld [vmem:[%s1 + $0xac] sm:$0xf]
  %v106 = vld [vmem:[%s1 + $0xb0] sm:$0xf]
  %v107 = vld [vmem:[%s1 + $0xb4] sm:$0xf]
  %v108 = vld [vmem:[%s1 + $0xb8] sm:$0xf]
  %v109 = vld [vmem:[%s1 + $0xbc] sm:$0xf]
  %v110 = vld [vmem:[%s1 + $0xc0] sm:$0xf]
  %v111 = vld [vmem:[%s1 + $0xc4] sm:$0xf]
  %v112 = vld [vmem:[%s1 + $0xc8] sm:$0xf]
  %v113 = vld [vmem:[%s1 + $0xcc] sm:$0xf]
  %v114 = vld [vmem:[%s1 + $0xd0] sm:$0xf]
  %v115 = vld [vmem:[%s1 + $0xd4] sm:$0xf]
  %v116 = vld [vmem:[%s1 + $0xd8] sm:$0xf]
  %v117 = vld [vmem:[%s1 + $0xdc] sm:$0xf]
  %v118 = vld [vmem:[%s1 + $0xe0] sm:$0xf]
  %v119 = vld [vmem:[%s1 + $0xe4] sm:$0xf]
  %v120 = vld [vmem:[%s1 + $0xe8] sm:$0xf]
  %v121 = vld [vmem:[%s1 + $0xec] sm:$0xf]
  %v122 = vld [vmem:[%s1 + $0xf0] sm:$0xf]
  %v123 = vld [vmem:[%s1 + $0xf4] sm:$0xf]
  %v124 = vld [vmem:[%s1 + $0xf8] sm:$0xf]
  %v125 = vld [vmem:[%s1 + $0xfc] sm:$0xf]
  %v126 = vld [vmem:[%s1 + $0x100] sm:$0xf]
  %v127 = vld [vmem:[%s1 + $0x104] sm:$0xf]
  %v128 = vld [vmem:[%s1 + $0x108] sm:$0xf]
  %v129 = vld [vmem:[%s1 + $0x10c] sm:$0xf]
  %v130 = vld [vmem:[%s1 + $0x110] sm:$0xf]
  %v131 = vld [vmem:[%s1 + $0x114] sm:$0xf]
  %v132 = vld [vmem:[%s1 + $0x118] sm:$0xf]
  %v133 = vld [vmem:[%s1 + $0x11c] sm:$0xf]
  %v182 = vunpack.c.l.b16 %v14
  %v183 = vunpack.c.h.b16 %v14
  %v184 = vunpack.c.l.b16 %v15
  %v185 = vunpack.c.h.b16 %v15
  %v186 = vunpack.c.l.b16 %v16
  %v187 = vunpack.c.l.b16 %v17
  %v188 = vunpack.c.h.b16 %v17
  %v189 = vunpack.c.l.b16 %v18
  %v190 = vunpack.c.h.b16 %v18
  %v191 = vunpack.c.l.b16 %v19
  %v192 = vunpack.c.l.b16 %v20
  %v193 = vunpack.c.h.b16 %v20
  %v194 = vunpack.c.l.b16 %v21
  %v195 = vunpack.c.h.b16 %v21
  %v196 = vunpack.c.l.b16 %v22
  %v197 = vunpack.c.l.b16 %v23
  %v198 = vunpack.c.h.b16 %v23
  %v199 = vunpack.c.l.b16 %v24
  %v200 = vunpack.c.h.b16 %v24
  %v201 = vunpack.c.l.b16 %v25
  %v202 = vunpack.c.l.b16 %v26
  %v203 = vunpack.c.h.b16 %v26
  %v204 = vunpack.c.l.b16 %v27
  %v205 = vunpack.c.h.b16 %v27
  %v206 = vunpack.c.l.b16 %v28
  %v207 = vunpack.c.l.b16 %v29
  %v208 = vunpack.c.h.b16 %v29
  %v209 = vunpack.c.l.b16 %v30
  %v210 = vunpack.c.h.b16 %v30
  %v211 = vunpack.c.l.b16 %v31
  %v212 = vunpack.c.l.b16 %v32
  %v213 = vunpack.c.h.b16 %v32
  %v214 = vunpack.c.l.b16 %v33
  %v215 = vunpack.c.h.b16 %v33
  %v216 = vunpack.c.l.b16 %v34
  %v217 = vunpack.c.l.b16 %v35
  %v218 = vunpack.c.h.b16 %v35
  %v219 = vunpack.c.l.b16 %v36
  %v220 = vunpack.c.h.b16 %v36
  %v221 = vunpack.c.l.b16 %v37
  %v222 = vunpack.c.l.b16 %v38
  %v223 = vunpack.c.h.b16 %v38
  %v224 = vunpack.c.l.b16 %v39
  %v225 = vunpack.c.h.b16 %v39
  %v226 = vunpack.c.l.b16 %v40
  %v227 = vunpack.c.l.b16 %v41
  %v228 = vunpack.c.h.b16 %v41
  %v229 = vunpack.c.l.b16 %v42
  %v230 = vunpack.c.h.b16 %v42
  %v231 = vunpack.c.l.b16 %v43
  %v232 = vunpack.c.l.b16 %v44
  %v233 = vunpack.c.h.b16 %v44
  %v234 = vunpack.c.l.b16 %v45
  %v235 = vunpack.c.h.b16 %v45
  %v236 = vunpack.c.l.b16 %v46
  %v237 = vunpack.c.l.b16 %v47
  %v238 = vunpack.c.h.b16 %v47
  %v239 = vunpack.c.l.b16 %v48
  %v240 = vunpack.c.h.b16 %v48
  %v241 = vunpack.c.l.b16 %v49
  %v242 = vunpack.c.l.b16 %v50
  %v243 = vunpack.c.h.b16 %v50
  %v244 = vunpack.c.l.b16 %v51
  %v245 = vunpack.c.h.b16 %v51
  %v246 = vunpack.c.l.b16 %v52
  %v247 = vunpack.c.l.b16 %v53
  %v248 = vunpack.c.h.b16 %v53
  %v249 = vunpack.c.l.b16 %v54
  %v250 = vunpack.c.h.b16 %v54
  %v251 = vunpack.c.l.b16 %v55
  %v252 = vunpack.c.l.b16 %v56
  %v253 = vunpack.c.h.b16 %v56
  %v254 = vunpack.c.l.b16 %v57
  %v255 = vunpack.c.h.b16 %v57
  %v256 = vunpack.c.l.b16 %v58
  %v257 = vunpack.c.l.b16 %v59
  %v258 = vunpack.c.h.b16 %v59
  %v259 = vunpack.c.l.b16 %v60
  %v260 = vunpack.c.h.b16 %v60
  %v261 = vunpack.c.l.b16 %v61
  %v262 = vpack.c.b16 %v187, %v182
  %v263 = vpack.c.b16 %v188, %v183
  %v264 = vpack.c.b16 %v189, %v184
  %v265 = vpack.c.b16 %v190, %v185
  %v266 = vpack.c.b16 %v191, %v186
  %v267 = vpack.c.b16 %v197, %v192
  %v268 = vpack.c.b16 %v198, %v193
  %v269 = vpack.c.b16 %v199, %v194
  %v270 = vpack.c.b16 %v200, %v195
  %v271 = vpack.c.b16 %v201, %v196
  %v272 = vpack.c.b16 %v207, %v202
  %v273 = vpack.c.b16 %v208, %v203
  %v274 = vpack.c.b16 %v209, %v204
  %v275 = vpack.c.b16 %v210, %v205
  %v276 = vpack.c.b16 %v211, %v206
  %v277 = vpack.c.b16 %v217, %v212
  %v278 = vpack.c.b16 %v218, %v213
  %v279 = vpack.c.b16 %v219, %v214
  %v280 = vpack.c.b16 %v220, %v215
  %v281 = vpack.c.b16 %v221, %v216
  %v282 = vpack.c.b16 %v227, %v222
  %v283 = vpack.c.b16 %v228, %v223
  %v284 = vpack.c.b16 %v229, %v224
  %v285 = vpack.c.b16 %v230, %v225
  %v286 = vpack.c.b16 %v231, %v226
  %v287 = vpack.c.b16 %v237, %v232
  %v288 = vpack.c.b16 %v238, %v233
  %v289 = vpack.c.b16 %v239, %v234
  %v290 = vpack.c.b16 %v240, %v235
  %v291 = vpack.c.b16 %v241, %v236
  %v292 = vpack.c.b16 %v247, %v242
  %v293 = vpack.c.b16 %v248, %v243
  %v294 = vpack.c.b16 %v249, %v244
  %v295 = vpack.c.b16 %v250, %v245
  %v296 = vpack.c.b16 %v251, %v246
  %v297 = vpack.c.b16 %v257, %v252
  %v298 = vpack.c.b16 %v258, %v253
  %v299 = vpack.c.b16 %v259, %v254
  %v300 = vpack.c.b16 %v260, %v255
  %v301 = vpack.c.b16 %v261, %v256
  %v406 = vunpack.c.l.b16 %v62
  %v407 = vunpack.c.l.b16 %v63
  %v408 = vunpack.c.l.b16 %v64
  %v409 = vunpack.c.l.b16 %v65
  %v410 = vunpack.c.l.b16 %v66
  %v411 = vunpack.c.l.b16 %v67
  %v412 = vunpack.c.l.b16 %v68
  %v413 = vunpack.c.l.b16 %v69
  %v414 = vunpack.c.l.b16 %v70
  %v415 = vunpack.c.l.b16 %v71
  %v416 = vunpack.c.l.b16 %v72
  %v417 = vunpack.c.l.b16 %v73
  %v418 = vunpack.c.l.b16 %v74
  %v419 = vunpack.c.l.b16 %v75
  %v420 = vunpack.c.l.b16 %v76
  %v421 = vunpack.c.l.b16 %v77
  %v422 = vunpack.c.l.b16 %v78
  %v423 = vunpack.c.l.b16 %v79
  %v424 = vunpack.c.l.b16 %v80
  %v425 = vunpack.c.l.b16 %v81
  %v426 = vunpack.c.l.b16 %v82
  %v427 = vunpack.c.l.b16 %v83
  %v428 = vunpack.c.l.b16 %v84
  %v429 = vunpack.c.l.b16 %v85
  %v430 = vunpack.c.l.b16 %v86
  %v431 = vunpack.c.l.b16 %v87
  %v432 = vunpack.c.l.b16 %v88
  %v433 = vunpack.c.l.b16 %v89
  %v434 = vunpack.c.l.b16 %v90
  %v435 = vunpack.c.l.b16 %v91
  %v436 = vunpack.c.l.b16 %v92
  %v437 = vunpack.c.l.b16 %v93
  %v438 = vunpack.c.l.b16 %v94
  %v439 = vunpack.c.l.b16 %v95
  %v440 = vunpack.c.l.b16 %v96
  %v441 = vunpack.c.l.b16 %v97
  %v442 = vunpack.c.l.b16 %v98
  %v443 = vunpack.c.l.b16 %v99
  %v444 = vunpack.c.l.b16 %v100
  %v445 = vunpack.c.l.b16 %v101
  %v446 = vunpack.c.l.b16 %v102
  %v447 = vunpack.c.l.b16 %v103
  %v448 = vunpack.c.l.b16 %v104
  %v449 = vunpack.c.l.b16 %v105
  %v450 = vunpack.c.l.b16 %v106
  %v451 = vunpack.c.l.b16 %v107
  %v452 = vunpack.c.l.b16 %v108
  %v453 = vunpack.c.l.b16 %v109
  %v454 = vunpack.c.l.b16 %v110
  %v455 = vunpack.c.l.b16 %v111
  %v456 = vunpack.c.l.b16 %v112
  %v457 = vunpack.c.l.b16 %v113
  %v458 = vunpack.c.l.b16 %v114
  %v459 = vunpack.c.l.b16 %v115
  %v460 = vunpack.c.l.b16 %v116
  %v461 = vunpack.c.l.b16 %v117
  %v462 = vunpack.c.l.b16 %v118
  %v463 = vunpack.c.l.b16 %v119
  %v464 = vunpack.c.l.b16 %v120
  %v465 = vunpack.c.l.b16 %v121
  %v466 = vunpack.c.l.b16 %v122
  %v467 = vunpack.c.l.b16 %v123
  %v468 = vunpack.c.l.b16 %v124
  %v469 = vunpack.c.l.b16 %v125
  %v470 = vunpack.c.l.b16 %v126
  %v471 = vunpack.c.l.b16 %v127
  %v472 = vunpack.c.l.b16 %v128
  %v473 = vunpack.c.l.b16 %v129
  %v474 = vunpack.c.l.b16 %v130
  %v475 = vunpack.c.l.b16 %v131
  %v476 = vunpack.c.l.b16 %v132
  %v477 = vunpack.c.l.b16 %v133
  %v478 = vpack.c.b16 %v407, %v406
  %v479 = vpack.c.b16 %v409, %v408
  %v480 = vpack.c.b16 %v411, %v410
  %v481 = vpack.c.b16 %v413, %v412
  %v482 = vpack.c.b16 %v415, %v414
  %v483 = vpack.c.b16 %v417, %v416
  %v484 = vpack.c.b16 %v419, %v418
  %v485 = vpack.c.b16 %v421, %v420
  %v486 = vpack.c.b16 %v423, %v422
  %v487 = vpack.c.b16 %v425, %v424
  %v488 = vpack.c.b16 %v427, %v426
  %v489 = vpack.c.b16 %v429, %v428
  %v490 = vpack.c.b16 %v431, %v430
  %v491 = vpack.c.b16 %v433, %v432
  %v492 = vpack.c.b16 %v435, %v434
  %v493 = vpack.c.b16 %v437, %v436
  %v494 = vpack.c.b16 %v439, %v438
  %v495 = vpack.c.b16 %v441, %v440
  %v496 = vpack.c.b16 %v443, %v442
  %v497 = vpack.c.b16 %v445, %v444
  %v498 = vpack.c.b16 %v447, %v446
  %v499 = vpack.c.b16 %v449, %v448
  %v500 = vpack.c.b16 %v451, %v450
  %v501 = vpack.c.b16 %v453, %v452
  %v502 = vpack.c.b16 %v455, %v454
  %v503 = vpack.c.b16 %v457, %v456
  %v504 = vpack.c.b16 %v459, %v458
  %v505 = vpack.c.b16 %v461, %v460
  %v506 = vpack.c.b16 %v463, %v462
  %v507 = vpack.c.b16 %v465, %v464
  %v508 = vpack.c.b16 %v467, %v466
  %v509 = vpack.c.b16 %v469, %v468
  %v510 = vpack.c.b16 %v471, %v470
  %v511 = vpack.c.b16 %v473, %v472
  %v512 = vpack.c.b16 %v475, %v474
  %v513 = vpack.c.b16 %v477, %v476
  %vm550 = vcmask 523264
  %v552 = vsel %vm550, %v266, 0
  %v555 = vsel %vm550, %v271, 0
  %v558 = vsel %vm550, %v276, 0
  %v561 = vsel %vm550, %v281, 0
  %v564 = vsel %vm550, %v286, 0
  %v567 = vsel %vm550, %v291, 0
  %v570 = vsel %vm550, %v296, 0
  %v573 = vsel %vm550, %v301, 0
  %575 = vmatprep.subr.bf16.mxu0 0
  %576 = vmatpush1.bf16.msra.mxu0 %v485
  %577 = vmatprep.subr.bf16.mxu0 0
  %578 = vmatpush1.bf16.msra.mxu0 %v484
  %579 = vmatprep.subr.bf16.mxu0 0
  %580 = vmatpush1.bf16.msra.mxu0 %v483
  %581 = vmatprep.subr.bf16.mxu0 0
  %582 = vmatpush1.bf16.msra.mxu0 %v482
  %583 = vmatprep.subr.bf16.mxu0 0
  %584 = vmatpush1.bf16.msra.mxu0 %v481
  %585 = vmatprep.subr.bf16.mxu0 0
  %586 = vmatpush1.bf16.msra.mxu0 %v480
  %587 = vmatprep.subr.bf16.mxu0 0
  %588 = vmatpush1.bf16.msra.mxu0 %v479
  %589 = vmatprep.subr.bf16.mxu0 0
  %590 = vmatpush1.bf16.msra.mxu0 %v478
  %591 = vmatprep.subr.bf16.mxu0 0
  %592 = vmatpush2.bf16.msra.mxu0 %v493
  %593 = vmatprep.subr.bf16.mxu0 0
  %594 = vmatpush2.bf16.msra.mxu0 %v492
  %595 = vmatprep.subr.bf16.mxu0 0
  %596 = vmatpush2.bf16.msra.mxu0 %v491
  %597 = vmatprep.subr.bf16.mxu0 0
  %598 = vmatpush2.bf16.msra.mxu0 %v490
  %599 = vmatprep.subr.bf16.mxu0 0
  %600 = vmatpush2.bf16.msra.mxu0 %v489
  %601 = vmatprep.subr.bf16.mxu0 0
  %602 = vmatpush2.bf16.msra.mxu0 %v488
  %603 = vmatprep.subr.bf16.mxu0 0
  %604 = vmatpush2.bf16.msra.mxu0 %v487
  %605 = vmatprep.subr.bf16.mxu0 0
  %606 = vmatpush2.bf16.msra.mxu0 %v486
  %607 = vmatprep.mubr.bf16.mxu0 %v263
  %608 = vmatmul.mubr.bf16.gmra.mxu0 %v262
  %v609 = vpop.f32.mrf.mxu0
  %v610 = vadd.f32 0.0, %v609
  %v611 = vpop.f32.mrf.mxu0
  %v612 = vpop.f32.mrf.mxu0
  %v613 = vadd.f32 0.0, %v612
  %v614 = vpop.f32.mrf.mxu0
  %615 = vmatprep.mubr.bf16.mxu0 %v268
  %616 = vmatmul.mubr.bf16.gmra.mxu0 %v267
  %v617 = vpop.f32.mrf.mxu0
  %v618 = vadd.f32 0.0, %v617
  %v619 = vpop.f32.mrf.mxu0
  %v620 = vpop.f32.mrf.mxu0
  %v621 = vadd.f32 0.0, %v620
  %v622 = vpop.f32.mrf.mxu0
  %623 = vmatprep.mubr.bf16.mxu0 %v273
  %624 = vmatmul.mubr.bf16.gmra.mxu0 %v272
  %v625 = vpop.f32.mrf.mxu0
  %v626 = vadd.f32 0.0, %v625
  %v627 = vpop.f32.mrf.mxu0
  %v628 = vpop.f32.mrf.mxu0
  %v629 = vadd.f32 0.0, %v628
  %v630 = vpop.f32.mrf.mxu0
  %631 = vmatprep.mubr.bf16.mxu0 %v278
  %632 = vmatmul.mubr.bf16.gmra.mxu0 %v277
  %v633 = vpop.f32.mrf.mxu0
  %v634 = vadd.f32 0.0, %v633
  %v635 = vpop.f32.mrf.mxu0
  %v636 = vpop.f32.mrf.mxu0
  %v637 = vadd.f32 0.0, %v636
  %v638 = vpop.f32.mrf.mxu0
  %639 = vmatprep.mubr.bf16.mxu0 %v283
  %640 = vmatmul.mubr.bf16.gmra.mxu0 %v282
  %v641 = vpop.f32.mrf.mxu0
  %v642 = vadd.f32 0.0, %v641
  %v643 = vpop.f32.mrf.mxu0
  %v644 = vpop.f32.mrf.mxu0
  %v645 = vadd.f32 0.0, %v644
  %v646 = vpop.f32.mrf.mxu0
  %647 = vmatprep.mubr.bf16.mxu0 %v288
  %648 = vmatmul.mubr.bf16.gmra.mxu0 %v287
  %v649 = vpop.f32.mrf.mxu0
  %v650 = vadd.f32 0.0, %v649
  %v651 = vpop.f32.mrf.mxu0
  %v652 = vpop.f32.mrf.mxu0
  %v653 = vadd.f32 0.0, %v652
  %v654 = vpop.f32.mrf.mxu0
  %655 = vmatprep.mubr.bf16.mxu0 %v293
  %656 = vmatmul.mubr.bf16.gmra.mxu0 %v292
  %v657 = vpop.f32.mrf.mxu0
  %v658 = vadd.f32 0.0, %v657
  %v659 = vpop.f32.mrf.mxu0
  %v660 = vpop.f32.mrf.mxu0
  %v661 = vadd.f32 0.0, %v660
  %v662 = vpop.f32.mrf.mxu0
  %663 = vmatprep.mubr.bf16.mxu0 %v298
  %664 = vmatmul.mubr.bf16.gmra.mxu0 %v297
  %v665 = vpop.f32.mrf.mxu0
  %v666 = vadd.f32 0.0, %v665
  %v667 = vpop.f32.mrf.mxu0
  %v668 = vpop.f32.mrf.mxu0
  %v669 = vadd.f32 0.0, %v668
  %v670 = vpop.f32.mrf.mxu0
  %671 = vdwg.mxu0
  %672 = vmatprep.subr.bf16.mxu0 0
  %673 = vmatpush1.bf16.msra.mxu0 %v501
  %674 = vmatprep.subr.bf16.mxu0 0
  %675 = vmatpush1.bf16.msra.mxu0 %v500
  %676 = vmatprep.subr.bf16.mxu0 0
  %677 = vmatpush1.bf16.msra.mxu0 %v499
  %678 = vmatprep.subr.bf16.mxu0 0
  %679 = vmatpush1.bf16.msra.mxu0 %v498
  %680 = vmatprep.subr.bf16.mxu0 0
  %681 = vmatpush1.bf16.msra.mxu0 %v497
  %682 = vmatprep.subr.bf16.mxu0 0
  %683 = vmatpush1.bf16.msra.mxu0 %v496
  %684 = vmatprep.subr.bf16.mxu0 0
  %685 = vmatpush1.bf16.msra.mxu0 %v495
  %686 = vmatprep.subr.bf16.mxu0 0
  %687 = vmatpush1.bf16.msra.mxu0 %v494
  %688 = vmatprep.subr.bf16.mxu0 0
  %689 = vmatpush2.bf16.msra.mxu0 %v509
  %690 = vmatprep.subr.bf16.mxu0 0
  %691 = vmatpush2.bf16.msra.mxu0 %v508
  %692 = vmatprep.subr.bf16.mxu0 0
  %693 = vmatpush2.bf16.msra.mxu0 %v507
  %694 = vmatprep.subr.bf16.mxu0 0
  %695 = vmatpush2.bf16.msra.mxu0 %v506
  %696 = vmatprep.subr.bf16.mxu0 0
  %697 = vmatpush2.bf16.msra.mxu0 %v505
  %698 = vmatprep.subr.bf16.mxu0 0
  %699 = vmatpush2.bf16.msra.mxu0 %v504
  %700 = vmatprep.subr.bf16.mxu0 0
  %701 = vmatpush2.bf16.msra.mxu0 %v503
  %702 = vmatprep.subr.bf16.mxu0 0
  %703 = vmatpush2.bf16.msra.mxu0 %v502
  %704 = vmatprep.mubr.bf16.mxu0 %v265
  %705 = vmatmul.mubr.bf16.gmra.mxu0 %v264
  %v706 = vpop.f32.mrf.mxu0
  %v707 = vadd.f32 %v610, %v706
  %v708 = vpop.f32.mrf.mxu0
  %v709 = vpop.f32.mrf.mxu0
  %v710 = vadd.f32 %v613, %v709
  %v711 = vpop.f32.mrf.mxu0
  %712 = vmatprep.mubr.bf16.mxu0 %v270
  %713 = vmatmul.mubr.bf16.gmra.mxu0 %v269
  %v714 = vpop.f32.mrf.mxu0
  %v715 = vadd.f32 %v618, %v714
  %v716 = vpop.f32.mrf.mxu0
  %v717 = vpop.f32.mrf.mxu0
  %v718 = vadd.f32 %v621, %v717
  %v719 = vpop.f32.mrf.mxu0
  %720 = vmatprep.mubr.bf16.mxu0 %v275
  %721 = vmatmul.mubr.bf16.gmra.mxu0 %v274
  %v722 = vpop.f32.mrf.mxu0
  %v723 = vadd.f32 %v626, %v722
  %v724 = vpop.f32.mrf.mxu0
  %v725 = vpop.f32.mrf.mxu0
  %v726 = vadd.f32 %v629, %v725
  %v727 = vpop.f32.mrf.mxu0
  %728 = vmatprep.mubr.bf16.mxu0 %v280
  %729 = vmatmul.mubr.bf16.gmra.mxu0 %v279
  %v730 = vpop.f32.mrf.mxu0
  %v731 = vadd.f32 %v634, %v730
  %v732 = vpop.f32.mrf.mxu0
  %v733 = vpop.f32.mrf.mxu0
  %v734 = vadd.f32 %v637, %v733
  %v735 = vpop.f32.mrf.mxu0
  %736 = vmatprep.mubr.bf16.mxu0 %v285
  %737 = vmatmul.mubr.bf16.gmra.mxu0 %v284
  %v738 = vpop.f32.mrf.mxu0
  %v739 = vadd.f32 %v642, %v738
  %v740 = vpop.f32.mrf.mxu0
  %v741 = vpop.f32.mrf.mxu0
  %v742 = vadd.f32 %v645, %v741
  %v743 = vpop.f32.mrf.mxu0
  %744 = vmatprep.mubr.bf16.mxu0 %v290
  %745 = vmatmul.mubr.bf16.gmra.mxu0 %v289
  %v746 = vpop.f32.mrf.mxu0
  %v747 = vadd.f32 %v650, %v746
  %v748 = vpop.f32.mrf.mxu0
  %v749 = vpop.f32.mrf.mxu0
  %v750 = vadd.f32 %v653, %v749
  %v751 = vpop.f32.mrf.mxu0
  %752 = vmatprep.mubr.bf16.mxu0 %v295
  %753 = vmatmul.mubr.bf16.gmra.mxu0 %v294
  %v754 = vpop.f32.mrf.mxu0
  %v755 = vadd.f32 %v658, %v754
  %v756 = vpop.f32.mrf.mxu0
  %v757 = vpop.f32.mrf.mxu0
  %v758 = vadd.f32 %v661, %v757
  %v759 = vpop.f32.mrf.mxu0
  %760 = vmatprep.mubr.bf16.mxu0 %v300
  %761 = vmatmul.mubr.bf16.gmra.mxu0 %v299
  %v762 = vpop.f32.mrf.mxu0
  %v763 = vadd.f32 %v666, %v762
  %v764 = vpop.f32.mrf.mxu0
  %v765 = vpop.f32.mrf.mxu0
  %v766 = vadd.f32 %v669, %v765
  %v767 = vpop.f32.mrf.mxu0
  %768 = vdwg.mxu0
  %769 = vmatprep.subr.bf16.mxu0 0
  %770 = vmatpush1.bf16.msra.mxu0 0
  %771 = vmatprep.subr.bf16.mxu0 0
  %772 = vmatpush1.bf16.msra.mxu0 0
  %773 = vmatprep.subr.bf16.mxu0 0
  %774 = vmatpush1.bf16.msra.mxu0 0
  %775 = vmatprep.subr.bf16.mxu0 0
  %776 = vmatpush1.bf16.msra.mxu0 0
  %777 = vmatprep.subr.bf16.mxu0 0
  %778 = vmatpush1.bf16.msra.mxu0 %v513
  %779 = vmatprep.subr.bf16.mxu0 0
  %780 = vmatpush1.bf16.msra.mxu0 %v512
  %781 = vmatprep.subr.bf16.mxu0 0
  %782 = vmatpush1.bf16.msra.mxu0 %v511
  %783 = vmatprep.subr.bf16.mxu0 0
  %784 = vmatpush1.bf16.msra.mxu0 %v510
  %785 = vmatprep.subr.bf16.mxu0 0
  %786 = vmatpush2.bf16.msra.mxu0 0
  %787 = vmatprep.subr.bf16.mxu0 0
  %788 = vmatpush2.bf16.msra.mxu0 0
  %789 = vmatprep.subr.bf16.mxu0 0
  %790 = vmatpush2.bf16.msra.mxu0 0
  %791 = vmatprep.subr.bf16.mxu0 0
  %792 = vmatpush2.bf16.msra.mxu0 0
  %793 = vmatprep.subr.bf16.mxu0 0
  %794 = vmatpush2.bf16.msra.mxu0 0
  %795 = vmatprep.subr.bf16.mxu0 0
  %796 = vmatpush2.bf16.msra.mxu0 0
  %797 = vmatprep.subr.bf16.mxu0 0
  %798 = vmatpush2.bf16.msra.mxu0 0
  %799 = vmatprep.subr.bf16.mxu0 0
  %800 = vmatpush2.bf16.msra.mxu0 0
  %801 = vmatprep.mubr.bf16.mxu0 0
  %802 = vmatmul.mubr.bf16.gmra.mxu0 %v552
  %v803 = vpop.f32.mrf.mxu0
  %v804 = vadd.f32 %v707, %v803
  %v805 = vpop.f32.mrf.mxu0
  %v806 = vpop.f32.mrf.mxu0
  %v807 = vadd.f32 %v710, %v806
  %v808 = vpop.f32.mrf.mxu0
  %809 = vmatprep.mubr.bf16.mxu0 0
  %810 = vmatmul.mubr.bf16.gmra.mxu0 %v555
  %v811 = vpop.f32.mrf.mxu0
  %v812 = vadd.f32 %v715, %v811
  %v813 = vpop.f32.mrf.mxu0
  %v814 = vpop.f32.mrf.mxu0
  %v815 = vadd.f32 %v718, %v814
  %v816 = vpop.f32.mrf.mxu0
  %817 = vmatprep.mubr.bf16.mxu0 0
  %818 = vmatmul.mubr.bf16.gmra.mxu0 %v558
  %v819 = vpop.f32.mrf.mxu0
  %v820 = vadd.f32 %v723, %v819
  %v821 = vpop.f32.mrf.mxu0
  %v822 = vpop.f32.mrf.mxu0
  %v823 = vadd.f32 %v726, %v822
  %v824 = vpop.f32.mrf.mxu0
  %825 = vmatprep.mubr.bf16.mxu0 0
  %826 = vmatmul.mubr.bf16.gmra.mxu0 %v561
  %v827 = vpop.f32.mrf.mxu0
  %v828 = vadd.f32 %v731, %v827
  %v829 = vpop.f32.mrf.mxu0
  %v830 = vpop.f32.mrf.mxu0
  %v831 = vadd.f32 %v734, %v830
  %v832 = vpop.f32.mrf.mxu0
  %833 = vmatprep.mubr.bf16.mxu0 0
  %834 = vmatmul.mubr.bf16.gmra.mxu0 %v564
  %v835 = vpop.f32.mrf.mxu0
  %v836 = vadd.f32 %v739, %v835
  %v837 = vpop.f32.mrf.mxu0
  %v838 = vpop.f32.mrf.mxu0
  %v839 = vadd.f32 %v742, %v838
  %v840 = vpop.f32.mrf.mxu0
  %841 = vmatprep.mubr.bf16.mxu0 0
  %842 = vmatmul.mubr.bf16.gmra.mxu0 %v567
  %v843 = vpop.f32.mrf.mxu0
  %v844 = vadd.f32 %v747, %v843
  %v845 = vpop.f32.mrf.mxu0
  %v846 = vpop.f32.mrf.mxu0
  %v847 = vadd.f32 %v750, %v846
  %v848 = vpop.f32.mrf.mxu0
  %849 = vmatprep.mubr.bf16.mxu0 0
  %850 = vmatmul.mubr.bf16.gmra.mxu0 %v570
  %v851 = vpop.f32.mrf.mxu0
  %v852 = vadd.f32 %v755, %v851
  %v853 = vpop.f32.mrf.mxu0
  %v854 = vpop.f32.mrf.mxu0
  %v855 = vadd.f32 %v758, %v854
  %v856 = vpop.f32.mrf.mxu0
  %857 = vmatprep.mubr.bf16.mxu0 0
  %858 = vmatmul.mubr.bf16.gmra.mxu0 %v573
  %v859 = vpop.f32.mrf.mxu0
  %v860 = vadd.f32 %v763, %v859
  %v861 = vpop.f32.mrf.mxu0
  %v862 = vpop.f32.mrf.mxu0
  %v863 = vadd.f32 %v766, %v862
  %v864 = vpop.f32.mrf.mxu0
  %865 = vdwg.mxu0
  %866 = vst.msk [vmem:[%s2] sm:$0xff] %vm550, %v804
  %867 = vst.msk [vmem:[%s2 + $0x8] sm:$0xff] %vm550, %v807
  %868 = vst.msk [vmem:[%s2 + $0x10] sm:$0xff] %vm550, %v812
  %869 = vst.msk [vmem:[%s2 + $0x18] sm:$0xff] %vm550, %v815
  %870 = vst.msk [vmem:[%s2 + $0x20] sm:$0xff] %vm550, %v820
  %871 = vst.msk [vmem:[%s2 + $0x28] sm:$0xff] %vm550, %v823
  %872 = vst.msk [vmem:[%s2 + $0x30] sm:$0xff] %vm550, %v828
  %873 = vst.msk [vmem:[%s2 + $0x38] sm:$0xff] %vm550, %v831
  %874 = vst.msk [vmem:[%s2 + $0x40] sm:$0xff] %vm550, %v836
  %875 = vst.msk [vmem:[%s2 + $0x48] sm:$0xff] %vm550, %v839
  %876 = vst.msk [vmem:[%s2 + $0x50] sm:$0xff] %vm550, %v844
  %877 = vst.msk [vmem:[%s2 + $0x58] sm:$0xff] %vm550, %v847
  %878 = vst.msk [vmem:[%s2 + $0x60] sm:$0xff] %vm550, %v852
  %879 = vst.msk [vmem:[%s2 + $0x68] sm:$0xff] %vm550, %v855
  %880 = vst.msk [vmem:[%s2 + $0x70] sm:$0xff] %vm550, %v860
  %881 = vst.msk [vmem:[%s2 + $0x78] sm:$0xff] %vm550, %v863
  %v882 = vsel %vm550, %v804, 0.0
  %v883 = vsel %vm550, %v807, 0.0
  %v884 = vadd.f32 %v882, %v883
  %v885 = vsel %vm550, %v812, 0.0
  %v886 = vadd.f32 %v884, %v885
  %v887 = vsel %vm550, %v815, 0.0
  %v888 = vadd.f32 %v886, %v887
  %v889 = vsel %vm550, %v820, 0.0
  %v890 = vadd.f32 %v888, %v889
  %v891 = vsel %vm550, %v823, 0.0
  %v892 = vadd.f32 %v890, %v891
  %v893 = vsel %vm550, %v828, 0.0
  %v894 = vadd.f32 %v892, %v893
  %v895 = vsel %vm550, %v831, 0.0
  %v896 = vadd.f32 %v894, %v895
  %v897 = vsel %vm550, %v836, 0.0
  %v898 = vadd.f32 %v896, %v897
  %v899 = vsel %vm550, %v839, 0.0
  %v900 = vadd.f32 %v898, %v899
  %v901 = vsel %vm550, %v844, 0.0
  %v902 = vadd.f32 %v900, %v901
  %v903 = vsel %vm550, %v847, 0.0
  %v904 = vadd.f32 %v902, %v903
  %v905 = vsel %vm550, %v852, 0.0
  %v906 = vadd.f32 %v904, %v905
  %v907 = vsel %vm550, %v855, 0.0
  %v908 = vadd.f32 %v906, %v907
  %v909 = vsel %vm550, %v860, 0.0
  %v910 = vadd.f32 %v908, %v909
  %v911 = vsel %vm550, %v863, 0.0
  %v912 = vadd.f32 %v910, %v911
  %v913 = vrot.slane %v912, 4
  %v914 = vadd.f32 %v912, %v913
  %v915 = vrot.slane %v914, 2
  %v916 = vadd.f32 %v914, %v915
  %v917 = vrot.slane %v916, 1
  %v918 = vadd.f32 %v916, %v917
  %v919 = vmul.f32 %v804, %v804
  %v920 = vmul.f32 %v807, %v807
  %v921 = vmul.f32 %v812, %v812
  %v922 = vmul.f32 %v815, %v815
  %v923 = vmul.f32 %v820, %v820
  %v924 = vmul.f32 %v823, %v823
  %v925 = vmul.f32 %v828, %v828
  %v926 = vmul.f32 %v831, %v831
  %v927 = vmul.f32 %v836, %v836
  %v928 = vmul.f32 %v839, %v839
  %v929 = vmul.f32 %v844, %v844
  %v930 = vmul.f32 %v847, %v847
  %v931 = vmul.f32 %v852, %v852
  %v932 = vmul.f32 %v855, %v855
  %v933 = vmul.f32 %v860, %v860
  %v934 = vmul.f32 %v863, %v863
  %v935 = vsel %vm550, %v919, 0.0
  %v936 = vsel %vm550, %v920, 0.0
  %v937 = vadd.f32 %v935, %v936
  %v938 = vsel %vm550, %v921, 0.0
  %v939 = vadd.f32 %v937, %v938
  %v940 = vsel %vm550, %v922, 0.0
  %v941 = vadd.f32 %v939, %v940
  %v942 = vsel %vm550, %v923, 0.0
  %v943 = vadd.f32 %v941, %v942
  %v944 = vsel %vm550, %v924, 0.0
  %v945 = vadd.f32 %v943, %v944
  %v946 = vsel %vm550, %v925, 0.0
  %v947 = vadd.f32 %v945, %v946
  %v948 = vsel %vm550, %v926, 0.0
  %v949 = vadd.f32 %v947, %v948
  %v950 = vsel %vm550, %v927, 0.0
  %v951 = vadd.f32 %v949, %v950
  %v952 = vsel %vm550, %v928, 0.0
  %v953 = vadd.f32 %v951, %v952
  %v954 = vsel %vm550, %v929, 0.0
  %v955 = vadd.f32 %v953, %v954
  %v956 = vsel %vm550, %v930, 0.0
  %v957 = vadd.f32 %v955, %v956
  %v958 = vsel %vm550, %v931, 0.0
  %v959 = vadd.f32 %v957, %v958
  %v960 = vsel %vm550, %v932, 0.0
  %v961 = vadd.f32 %v959, %v960
  %v962 = vsel %vm550, %v933, 0.0
  %v963 = vadd.f32 %v961, %v962
  %v964 = vsel %vm550, %v934, 0.0
  %v965 = vadd.f32 %v963, %v964
  %v966 = vrot.slane %v965, 4
  %v967 = vadd.f32 %v965, %v966
  %v968 = vrot.slane %v967, 2
  %v969 = vadd.f32 %v967, %v968
  %v970 = vrot.slane %v969, 1
  %v971 = vadd.f32 %v969, %v970
  %vm972 = vcmask 1040384
  %v973 = vsel %vm972, %v918, %v971
  %vm974 = vcmask 1041408
  %v975 = vsel %vm974, %v973, 0.0
  %976 = vst.msk [vmem:[%s3] sm:$0xff] %vm550, %v975
  // Predicated region
  $region10: #{resnet2_forward.27} parent=0 // pred_check
    _
  $region11: #{resnet2_forward.27} parent=0 // pred_check_branch
    %978 = sbr.rel (0) target = $region13
  $region12: #{resnet2_forward.27} parent=0 // pred_region
    _
  $region13: #{resnet2_forward.27} parent=0 // pred_fallthru
    _
  // Predicated region
  $region14: #{resnet2_forward.27} parent=0 // pred_check
    _
  $region15: #{resnet2_forward.27} parent=0 // pred_check_branch
    %980 = sbr.rel (0) target = $region17
  $region16: #{resnet2_forward.27} parent=0 // pred_region
    _
  $region17: #{resnet2_forward.27} parent=0 // pred_fallthru
    _
  // Predicated region
  $region18: #{resnet2_forward.27} parent=0 // pred_check
    _
  $region19: #{resnet2_forward.27} parent=0 // pred_check_branch
    %982 = sbr.rel (0) target = $region21
  $region20: #{resnet2_forward.27} parent=0 // pred_region
    _
  $region21: #{resnet2_forward.27} parent=0 // pred_fallthru
    _
  // Predicated region
  $region22: #{resnet2_forward.27} parent=0 // pred_check
    _
  $region23: #{resnet2_forward.27} parent=0 // pred_check_branch
    %984 = sbr.rel (0) target = $region25
  $region24: #{resnet2_forward.27} parent=0 // pred_region
    _
  $region25: #{resnet2_forward.27} parent=0 // pred_fallthru
    _

// kernel: resnet2_forward.29
$region0: #{resnet2_forward.29}
  #allocation0 [shape = 'u32[]', space=smem, size = 0x4, offset = 0x4, fixed_abs, tag = 'smem constant byte address 0x4 - core index']
  #allocation1 [shape = 'u32[144,128]{1,0:T(1,128)}', space=vmem, size = 0x12000, scoped, tag = 'internal scratch']
  %s0 = inlined_call_operand.vmem [shape: bf16[2,64,64], index: 0, kind: input, shape index: {}]
  %s1 = inlined_call_operand.vmem [shape: f32[64,10], index: 1, kind: input, shape index: {}]
  %s2 = inlined_call_operand.vmem [shape: f32[1,10], index: 2, kind: input, shape index: {}]
  %s3 = inlined_call_operand.hbm [shape: f32[2,10], index: 3, kind: output, shape index: {}]
  %s4 = sld [smem:[#allocation0]]
  $region22: #{resnet2_forward.29} parent=0
    _
  %s6 = ssub.s32 1, %s4
  %s7 = scalar_select 0, %s6, %s4
  $region1: #{resnet2_forward.29} parent=0
    #allocation2 [shape = 'u8[1024]{0}', space=vmem, size = 0x400, scoped, tag = 'output window, operand 0, single buffered']
    #allocation3 [shape = 's32[1]{0}', space=sflag, size = 0x4, scoped, tag = 'scoped memory for resnet2_forward.29']
    %8 = vsyncpa [#allocation3], 0
    // Predicated region
    $region2: #{resnet2_forward.29} parent=1 // pred_check
      _
    $region3: #{resnet2_forward.29} parent=1 // pred_check_branch
      %10 = sbr.rel (0) target = $region5
    $region4: #{resnet2_forward.29} parent=1 // pred_region
      _
    $region5: #{resnet2_forward.29} parent=1 // pred_fallthru
      _
    // Predicated region
    $region6: #{resnet2_forward.29} parent=1 // pred_check
      _
    $region7: #{resnet2_forward.29} parent=1 // pred_check_branch
      %12 = sbr.rel (0) target = $region9
    $region8: #{resnet2_forward.29} parent=1 // pred_region
      _
    $region9: #{resnet2_forward.29} parent=1 // pred_fallthru
      _
    // Predicated region
    $region10: #{resnet2_forward.29} parent=1 // pred_check
      _
    $region11: #{resnet2_forward.29} parent=1 // pred_check_branch
      %14 = sbr.rel (0) target = $region13
    $region12: #{resnet2_forward.29} parent=1 // pred_region
      _
    $region13: #{resnet2_forward.29} parent=1 // pred_fallthru
      _
    %v15 = vld [vmem:[%s0] sm:$0xf]
    %v16 = vld [vmem:[%s0 + $0x4] sm:$0xf]
    %v17 = vld [vmem:[%s0 + $0x8] sm:$0xf]
    %v18 = vld [vmem:[%s0 + $0xc] sm:$0xf]
    %v19 = vld [vmem:[%s0 + $0x10] sm:$0xf]
    %v20 = vld [vmem:[%s0 + $0x14] sm:$0xf]
    %v21 = vld [vmem:[%s0 + $0x18] sm:$0xf]
    %v22 = vld [vmem:[%s0 + $0x1c] sm:$0xf]
    %v23 = vld [vmem:[%s0 + $0x20] sm:$0xf]
    %v24 = vld [vmem:[%s0 + $0x24] sm:$0xf]
    %v25 = vld [vmem:[%s0 + $0x28] sm:$0xf]
    %v26 = vld [vmem:[%s0 + $0x2c] sm:$0xf]
    %v27 = vld [vmem:[%s0 + $0x30] sm:$0xf]
    %v28 = vld [vmem:[%s0 + $0x34] sm:$0xf]
    %v29 = vld [vmem:[%s0 + $0x38] sm:$0xf]
    %v30 = vld [vmem:[%s0 + $0x3c] sm:$0xf]
    %v31 = vunpack.c.l.bf16 %v15
    %v32 = vunpack.c.l.bf16 %v16
    %v33 = vunpack.c.l.bf16 %v17
    %v34 = vunpack.c.l.bf16 %v18
    %v35 = vunpack.c.l.bf16 %v19
    %v36 = vunpack.c.l.bf16 %v20
    %v37 = vunpack.c.l.bf16 %v21
    %v38 = vunpack.c.l.bf16 %v22
    %v39 = vunpack.c.l.bf16 %v23
    %v40 = vunpack.c.l.bf16 %v24
    %v41 = vunpack.c.l.bf16 %v25
    %v42 = vunpack.c.l.bf16 %v26
    %v43 = vunpack.c.l.bf16 %v27
    %v44 = vunpack.c.l.bf16 %v28
    %v45 = vunpack.c.l.bf16 %v29
    %v46 = vunpack.c.l.bf16 %v30
    %vm47 = vcmask 523264
    %v48 = vsel %vm47, %v31, 0.0
    %v49 = vsel %vm47, %v32, 0.0
    %v50 = vadd.f32 %v48, %v49
    %v51 = vsel %vm47, %v33, 0.0
    %v52 = vadd.f32 %v50, %v51
    %v53 = vsel %vm47, %v34, 0.0
    %v54 = vadd.f32 %v52, %v53
    %v55 = vsel %vm47, %v35, 0.0
    %v56 = vadd.f32 %v54, %v55
    %v57 = vsel %vm47, %v36, 0.0
    %v58 = vadd.f32 %v56, %v57
    %v59 = vsel %vm47, %v37, 0.0
    %v60 = vadd.f32 %v58, %v59
    %v61 = vsel %vm47, %v38, 0.0
    %v62 = vadd.f32 %v60, %v61
    %v63 = vrot.slane %v62, 4
    %v64 = vadd.f32 %v62, %v63
    %v65 = vrot.slane %v64, 2
    %v66 = vadd.f32 %v64, %v65
    %v67 = vrot.slane %v66, 1
    %v68 = vadd.f32 %v66, %v67
    %v69 = vsel %vm47, %v39, 0.0
    %v70 = vsel %vm47, %v40, 0.0
    %v71 = vadd.f32 %v69, %v70
    %v72 = vsel %vm47, %v41, 0.0
    %v73 = vadd.f32 %v71, %v72
    %v74 = vsel %vm47, %v42, 0.0
    %v75 = vadd.f32 %v73, %v74
    %v76 = vsel %vm47, %v43, 0.0
    %v77 = vadd.f32 %v75, %v76
    %v78 = vsel %vm47, %v44, 0.0
    %v79 = vadd.f32 %v77, %v78
    %v80 = vsel %vm47, %v45, 0.0
    %v81 = vadd.f32 %v79, %v80
    %v82 = vsel %vm47, %v46, 0.0
    %v83 = vadd.f32 %v81, %v82
    %v84 = vrot.slane %v83, 4
    %v85 = vadd.f32 %v83, %v84
    %v86 = vrot.slane %v85, 2
    %v87 = vadd.f32 %v85, %v86
    %v88 = vrot.slane %v87, 1
    %v89 = vadd.f32 %v87, %v88
    %v90 = vrcp.pop 64.0
    %v91 = vmul.f32 %v68, %v90
    %v92 = vmul.f32 %v89, %v90
    %v93 = vld [vmem:[%s1] sm:$0xff]
    %v94 = vld [vmem:[%s1 + $0x8] sm:$0xff]
    %v95 = vld [vmem:[%s1 + $0x10] sm:$0xff]
    %v96 = vld [vmem:[%s1 + $0x18] sm:$0xff]
    %v97 = vld [vmem:[%s1 + $0x20] sm:$0xff]
    %v98 = vld [vmem:[%s1 + $0x28] sm:$0xff]
    %v99 = vld [vmem:[%s1 + $0x30] sm:$0xff]
    %v100 = vld [vmem:[%s1 + $0x38] sm:$0xff]
    %v101 = vld [vmem:[%s2] sm:$0x1]
    %v103 = vlaneseq
    %v104 = vshrl.u32 %v103, 7
    %v105 = vsub.s32 0, %v104
    %v106 = vrot.slane %v101, %v105
    %vm110 = vcmask 1041409
    %v111 = vsel %vm110, %v92, %v91
    %v112 = vsel %vm47, %v111, 0
    %114 = vmatprep.subr.mxu0 0.0
    %115 = vmatpush1.msra.mxu0 0.0
    %116 = vmatprep.subr.mxu0 0.0
    %117 = vmatpush1.msra.mxu0 0.0
    %118 = vmatprep.subr.mxu0 0.0
    %119 = vmatpush1.msra.mxu0 0.0
    %120 = vmatprep.subr.mxu0 0.0
    %121 = vmatpush1.msra.mxu0 0.0
    %122 = vmatprep.subr.mxu0 0.0
    %123 = vmatpush1.msra.mxu0 0.0
    %124 = vmatprep.subr.mxu0 0.0
    %125 = vmatpush1.msra.mxu0 0.0
    %126 = vmatprep.subr.mxu0 0.0
    %127 = vmatpush1.msra.mxu0 0.0
    %128 = vmatprep.subr.mxu0 0.0
    %129 = vmatpush1.msra.mxu0 0.0
    %130 = vmatprep.subr.mxu0 0.0
    %131 = vmatpush1.msra.mxu0 %v100
    %132 = vmatprep.subr.mxu0 0.0
    %133 = vmatpush1.msra.mxu0 %v99
    %134 = vmatprep.subr.mxu0 0.0
    %135 = vmatpush1.msra.mxu0 %v98
    %136 = vmatprep.subr.mxu0 0.0
    %137 = vmatpush1.msra.mxu0 %v97
    %138 = vmatprep.subr.mxu0 0.0
    %139 = vmatpush1.msra.mxu0 %v96
    %140 = vmatprep.subr.mxu0 0.0
    %141 = vmatpush1.msra.mxu0 %v95
    %142 = vmatprep.subr.mxu0 0.0
    %143 = vmatpush1.msra.mxu0 %v94
    %144 = vmatprep.subr.mxu0 0.0
    %145 = vmatpush1.msra.mxu0 %v93
    %146 = vmatprep.subr.mxu0 0.0
    %147 = vmatpush2.msra.mxu0 0.0
    %148 = vmatprep.subr.mxu0 0.0
    %149 = vmatpush2.msra.mxu0 0.0
    %150 = vmatprep.subr.mxu0 0.0
    %151 = vmatpush2.msra.mxu0 0.0
    %152 = vmatprep.subr.mxu0 0.0
    %153 = vmatpush2.msra.mxu0 0.0
    %154 = vmatprep.subr.mxu0 0.0
    %155 = vmatpush2.msra.mxu0 0.0
    %156 = vmatprep.subr.mxu0 0.0
    %157 = vmatpush2.msra.mxu0 0.0
    %158 = vmatprep.subr.mxu0 0.0
    %159 = vmatpush2.msra.mxu0 0.0
    %160 = vmatprep.subr.mxu0 0.0
    %161 = vmatpush2.msra.mxu0 0.0
    %162 = vmatprep.subr.mxu0 0.0
    %163 = vmatpush2.msra.mxu0 0.0
    %164 = vmatprep.subr.mxu0 0.0
    %165 = vmatpush2.msra.mxu0 0.0
    %166 = vmatprep.subr.mxu0 0.0
    %167 = vmatpush2.msra.mxu0 0.0
    %168 = vmatprep.subr.mxu0 0.0
    %169 = vmatpush2.msra.mxu0 0.0
    %170 = vmatprep.subr.mxu0 0.0
    %171 = vmatpush2.msra.mxu0 0.0
    %172 = vmatprep.subr.mxu0 0.0
    %173 = vmatpush2.msra.mxu0 0.0
    %174 = vmatprep.subr.mxu0 0.0
    %175 = vmatpush2.msra.mxu0 0.0
    %176 = vmatprep.subr.mxu0 0.0
    %177 = vmatpush2.msra.mxu0 0.0
    %178 = vmatprep.mubr.f32.mxu0 0.0
    %179 = vmatmul.mubr.f32.gmra.mxu0 %v112
    %v180 = vpop.f32.mrf.mxu0
    %v181 = vadd.f32 %v106, %v180
    %v182 = vpop.f32.mrf.mxu0
    %183 = vdwg.mxu0
    %vm184 = vcmask 74752
    %185 = vst.msk [vmem:[#allocation2] sm:$0x3] %vm184, %v181
    // Predicated region
    $region14: #{resnet2_forward.29} parent=1 // pred_check
      _
    $region15: #{resnet2_forward.29} parent=1 // pred_check_branch
      %187 = sbr.rel (0) target = $region17
    $region16: #{resnet2_forward.29} parent=1 // pred_region
      %s189 = ssub.s32 32, 32
      %190 = vsyncadd [#allocation3], %s189
      %s192 = sshll.u32 [#allocation2], 4
      %s193 = int_to_ptr.vmem [resolvable:$true] %s192
      %195 = dma.vmem_to_hbm [thread:$0]  %s193, 32, %s3, [#allocation3]
    $region17: #{resnet2_forward.29} parent=1 // pred_fallthru
      _
    // Predicated region
    $region18: #{resnet2_forward.29} parent=1 // pred_check
      _
    $region19: #{resnet2_forward.29} parent=1 // pred_check_branch
      %197 = sbr.rel (0) target = $region21
    $region20: #{resnet2_forward.29} parent=1 // pred_region
      %198 = dma.done [#allocation3], 32
    $region21: #{resnet2_forward.29} parent=1 // pred_fallthru
      _
    %199 = vsyncpa [#allocation3], 1

</llo_original>
